<compile_context>
chip_gen: v7x
topology: tpu7x:2x2x1
jax: 0.10.0
libtpu: 0.0.40
codegen_flags: <defaults>
</compile_context>

<pallas_src>
import functools

import jax
import jax.numpy as jnp
import numpy as np
from jax.experimental import pallas as pl
from jax.experimental.pallas import tpu as pltpu

_LANE = 128        # lane width: pad all channel dims to a multiple of this
_SUB = 16          # packed bf16 sublane tile: keep row strides multiples of this
_EPS = 1e-3


def _round_up(x, m):
    return (x + m - 1) // m * m


@functools.lru_cache(maxsize=None)
def _vmem_budget():
    """(vmem_limit_bytes, tile_m_cap) derived from the chip's physical VMEM."""
    try:
        cap = int(pltpu.get_tpu_info().vmem_capacity_bytes)
    except Exception:                      # be conservative if the query is unavailable
        cap = 64 * 1024 * 1024
    limit = int(min(96 * 1024 * 1024, cap * 3 // 4))   # ~48 MiB on v7x, 96 MiB on v5e/v6e
    tile_m_cap = 2048 if cap >= 100 * 1024 * 1024 else 1024
    return limit, tile_m_cap


def _pick_tile_m(m_rows):
    """Large, VMEM-budget-capped row tile; keep a few grid steps for pipelining."""
    _, cap = _vmem_budget()
    t = _round_up(max(m_rows // 4, 256), 256)
    return int(min(cap, t))


def _mosaic_params():
    limit, _ = _vmem_budget()
    return pltpu.CompilerParams(
        dimension_semantics=("parallel",),
        vmem_limit_bytes=limit,
    )


# ---------------------------------------------------------------------------
# Kernel 1: fused multi-output 1x1 conv + BN + ReLU (the three branch 1x1s)
# ---------------------------------------------------------------------------
def _make_fused_1x1_kernel(out_offsets):
    """o[k] = relu(x @ w_fused + shift)[:, off_k:off_{k+1}]  (one wide MXU matmul)."""

    def kernel(x_ref, w_ref, b_ref, *o_refs):
        acc = jnp.dot(x_ref[...], w_ref[...], preferred_element_type=jnp.float32)
        y = jnp.maximum(acc + b_ref[...], 0.0)           # f32 epilogue (v5e-safe)
        for k, o_ref in enumerate(o_refs):
            lo, hi = out_offsets[k], out_offsets[k + 1]
            o_ref[...] = y[:, lo:hi].astype(o_ref.dtype)

    return kernel


def _fused_1x1_bn_relu(x_nhwc, w_fused, shift_fused, out_widths, *, out_dtype=jnp.bfloat16):
    """Several 1x1 conv+BN+ReLU layers sharing the same input, fused into one pallas_call.

    x: (N,H,W,K) bf16.  w_fused: (K, sum(widths)) bf16.  shift: (1, sum(widths)) f32.
    Returns one (N,H,W,width_k) bf16 array per entry of out_widths.
    """
    n, h, w, k = x_nhwc.shape
    m = n * h * w
    tile_m = _pick_tile_m(m)
    m_pad = _round_up(m, tile_m)
    x2d = x_nhwc.reshape(m, k)
    if m_pad > m:
        x2d = jnp.pad(x2d, ((0, m_pad - m), (0, 0)))

    widths = tuple(int(wd) for wd in out_widths)
    c_tot = sum(widths)
    offs = [0]
    for wd in widths:
        offs.append(offs[-1] + wd)

    outs = pl.pallas_call(
        _make_fused_1x1_kernel(tuple(offs)),
        out_shape=tuple(jax.ShapeDtypeStruct((m_pad, wd), out_dtype) for wd in widths),
        grid_spec=pltpu.PrefetchScalarGridSpec(
            num_scalar_prefetch=0,
            grid=(m_pad // tile_m,),
            in_specs=[
                pl.BlockSpec((tile_m, k), lambda i: (i, 0)),    # activation row tile
                pl.BlockSpec((k, c_tot), lambda i: (0, 0)),     # resident fused weights
                pl.BlockSpec((1, c_tot), lambda i: (0, 0)),     # resident BN shift
            ],
            out_specs=[pl.BlockSpec((tile_m, wd), lambda i: (i, 0)) for wd in widths],
        ),
        compiler_params=_mosaic_params(),
    )(x2d, w_fused, shift_fused)

    return [o[:m].reshape(n, h, w, o.shape[-1]) for o in outs]


# ---------------------------------------------------------------------------
# Kernel 2: concat-free multi-input 1x1 conv + BN + ReLU (the output conv)
# ---------------------------------------------------------------------------
def _make_sum_1x1_kernel(n_in):
    """o = relu( sum_t x_t @ w[t] + shift )  -- replaces concat(b1,b2,b3) + 1x1 conv."""

    def kernel(*refs):
        x_refs, (w_ref, b_ref, o_ref) = refs[:n_in], refs[n_in:]
        acc = jnp.dot(x_refs[0][...], w_ref[0], preferred_element_type=jnp.float32)
        for t in range(1, n_in):
            acc = acc + jnp.dot(x_refs[t][...], w_ref[t], preferred_element_type=jnp.float32)
        o_ref[...] = jnp.maximum(acc + b_ref[...], 0.0).astype(o_ref.dtype)

    return kernel


def _sum_1x1_bn_relu(xs_nhwc, w_stacked, shift, *, out_dtype=jnp.bfloat16):
    """Output conv over the (never materialized) concat of the branch activations."""
    n, h, w, k = xs_nhwc[0].shape
    m = n * h * w
    tile_m = _pick_tile_m(m)
    m_pad = _round_up(m, tile_m)
    xs2d = []
    for x in xs_nhwc:
        x2 = x.reshape(m, k)
        if m_pad > m:
            x2 = jnp.pad(x2, ((0, m_pad - m), (0, 0)))
        xs2d.append(x2)
    n_in, _, c_out = w_stacked.shape

    out = pl.pallas_call(
        _make_sum_1x1_kernel(n_in),
        out_shape=jax.ShapeDtypeStruct((m_pad, c_out), out_dtype),
        grid_spec=pltpu.PrefetchScalarGridSpec(
            num_scalar_prefetch=0,
            grid=(m_pad // tile_m,),
            in_specs=[pl.BlockSpec((tile_m, k), lambda i: (i, 0)) for _ in range(n_in)]
            + [
                pl.BlockSpec((n_in, k, c_out), lambda i: (0, 0, 0)),   # resident weights
                pl.BlockSpec((1, c_out), lambda i: (0, 0)),            # resident BN shift
            ],
            out_specs=pl.BlockSpec((tile_m, c_out), lambda i: (i, 0)),
        ),
        compiler_params=_mosaic_params(),
    )(*xs2d, w_stacked, shift)
    return out[:m].reshape(n, h, w, c_out)


# ---------------------------------------------------------------------------
# Kernel 3: 3x3 conv (stride 1, pad 1) + BN + ReLU -- 9-tap implicit GEMM,
# row-tiled over halo'd tiles, no width expansion in HBM.
# ---------------------------------------------------------------------------
def _make_conv3x3_kernel(wp, m_out):
    """Tap (dy, dx) of output flat row r reads input flat row dy*wp + dx + r.

    dy offsets are multiples of wp (a multiple of 16 -> aligned bf16 slices); the +dx shift
    is applied to the f32 matmul result (cheap 32-bit sublane relayout).
    """
    m_mm = m_out + _SUB   # a few spare rows so every dx shift stays in range

    def kernel(x_ref, w_ref, b_ref, o_ref):
        acc = None
        for dy in range(3):
            base = x_ref[0, dy * wp:dy * wp + m_mm, :]          # aligned bf16 slice
            for dx in range(3):
                p = jnp.dot(base, w_ref[3 * dy + dx],
                            preferred_element_type=jnp.float32)  # (m_mm, c_out) f32
                tap = p[dx:dx + m_out, :]                        # dx shift on f32 result
                acc = tap if acc is None else acc + tap
        o_ref[0] = jnp.maximum(acc + b_ref[...], 0.0).astype(o_ref.dtype)

    return kernel


def _conv3x3_bn_relu(x_nhwc, w_eff, shift, *, tile_h=8, out_dtype=jnp.bfloat16):
    """x: (N,H,W,C) bf16.  w_eff: (9, C, C_out) bf16, taps ordered dy*3+dx."""
    n, h, w, c = x_nhwc.shape
    x_nhwc = x_nhwc.astype(jnp.bfloat16)
    th = max(1, min(tile_h, h))
    h_pad = _round_up(h, th)
    n_h = h_pad // th
    wp = _round_up(w + 2, _SUB)                      # 1 left pad + data + >=1 right pad
    # Padded frame: rows = h_pad + 3 (1 top halo, >=2 bottom), cols = wp (zeros outside data).
    xp = jnp.pad(x_nhwc, ((0, 0), (1, h_pad - h + 2), (1, wp - w - 1), (0, 0)))
    # Halo'd row tiles: tile t = padded rows [t*th, t*th + th + 3).  The ~3/th duplicated
    # halo rows are the only extra HBM traffic (replaces the old 3x width expansion).
    xt = jnp.stack([xp[:, t * th:t * th + th + 3] for t in range(n_h)], axis=1)
    xt = xt.reshape(n * n_h, (th + 3) * wp, c)

    m_out = th * wp
    c_out = w_eff.shape[-1]
    grid_n = n * n_h

    out = pl.pallas_call(
        _make_conv3x3_kernel(wp, m_out),
        out_shape=jax.ShapeDtypeStruct((grid_n, m_out, c_out), out_dtype),
        grid_spec=pltpu.PrefetchScalarGridSpec(
            num_scalar_prefetch=0,
            grid=(grid_n,),
            in_specs=[
                pl.BlockSpec((1, (th + 3) * wp, c), lambda i: (i, 0, 0)),   # halo'd row tile
                pl.BlockSpec((9, c, c_out), lambda i: (0, 0, 0)),           # resident weights
                pl.BlockSpec((1, c_out), lambda i: (0, 0)),                 # resident BN shift
            ],
            out_specs=pl.BlockSpec((1, m_out, c_out), lambda i: (i, 0, 0)),
        ),
        compiler_params=_mosaic_params(),
    )(xt, w_eff, shift)

    out = out.reshape(n, n_h, th, wp, c_out)[:, :, :, :w, :]
    return out.reshape(n, h_pad, w, c_out)[:, :h]


# ---------------------------------------------------------------------------
# Parameter folding: Conv weight + BN(running stats) -> scaled weight + shift
# ---------------------------------------------------------------------------
def _fold_conv_bn(p, c_in_pad, c_out_pad, *, eps=_EPS, in_offsets=None):
    """Returns (w_eff bf16 (kh*kw, c_in_pad, c_out_pad), shift f32 (1, c_out_pad))."""
    w, gamma, beta, mean, var = p["w"], p["gamma"], p["beta"], p["mean"], p["var"]
    c_out, c_in, kh, kw = w.shape
    scale = gamma.astype(jnp.float32) / jnp.sqrt(var.astype(jnp.float32) + eps)
    shift = beta.astype(jnp.float32) - mean.astype(jnp.float32) * scale
    # (C_out, C_in, kh, kw) -> (kh, kw, C_in, C_out); fold BN scale into output columns.
    w_k = jnp.transpose(w.astype(jnp.float32), (2, 3, 1, 0)) * scale[None, None, None, :]
    w_full = jnp.zeros((kh, kw, c_in_pad, c_out_pad), jnp.float32)
    if in_offsets is None:
        in_offsets = [(0, 0, c_in)]
    for dst, src, ln in in_offsets:
        w_full = w_full.at[:, :, dst:dst + ln, :c_out].set(w_k[:, :, src:src + ln, :])
    w_full = w_full.reshape(kh * kw, c_in_pad, c_out_pad).astype(jnp.bfloat16)
    shift_pad = jnp.zeros((1, c_out_pad), jnp.float32).at[0, :c_out].set(shift)
    return w_full, shift_pad


# ---------------------------------------------------------------------------
# DenseLayer forward (NCHW in / NCHW out, like the PyTorch module)
# ---------------------------------------------------------------------------
def dense_layer_forward(x_nchw, params, *, growth_rate, out_channels, eps=_EPS, tile_h=8):
    n, c_in, h, w = x_nchw.shape
    g = growth_rate
    cpad = lambda c: _round_up(c, _LANE)
    c_in_p, c4g_p, cg_p = cpad(c_in), cpad(4 * g), cpad(g)

    # Single NCHW -> NHWC transpose; bf16 MXU operands; pad channels to a lane multiple.
    x = jnp.transpose(x_nchw, (0, 2, 3, 1)).astype(jnp.bfloat16)
    x = jnp.pad(x, ((0, 0), (0, 0), (0, 0), (0, c_in_p - c_in)))

    def fold(name, c_in_pad, in_offsets=None):
        p = params[name]
        return _fold_conv_bn(p, c_in_pad, cpad(p["w"].shape[0]), eps=eps,
                             in_offsets=in_offsets)

    # All three branch 1x1 convs fused into one kernel (x is read from HBM once).
    w1, s1 = fold("branch1_1x1", c_in_p)
    w2, s2 = fold("branch2_1x1", c_in_p)
    w3, s3 = fold("branch3_1x1", c_in_p)
    w_fused = jnp.concatenate([w1[0], w2[0], w3[0]], axis=1)    # (c_in_p, 2*c4g_p + cg_p)
    s_fused = jnp.concatenate([s1, s2, s3], axis=1)
    b1, b2, b3 = _fused_1x1_bn_relu(x, w_fused, s_fused, (c4g_p, c4g_p, cg_p))

    # branch 1: -> 3x3 -> 3x3
    we, sh = fold("branch1_3x3", c4g_p)
    b1 = _conv3x3_bn_relu(b1, we, sh, tile_h=tile_h)
    we, sh = fold("branch1_3x3_2", cg_p)
    b1 = _conv3x3_bn_relu(b1, we, sh, tile_h=tile_h)

    # branch 2: -> 3x3
    we, sh = fold("branch2_3x3", c4g_p)
    b2 = _conv3x3_bn_relu(b2, we, sh, tile_h=tile_h)

    # Output 1x1, concat-free: the kernel sums one matmul per branch.  The real g channels of
    # branch k sit at lane offset 0 of its padded buffer, so the folded output-conv weight maps
    # torch input-channel block k onto weight tap k.
    w_out, s_out = fold("output", 3 * cg_p,
                        in_offsets=[(0, 0, g), (cg_p, g, g), (2 * cg_p, 2 * g, g)])
    w_out = w_out[0].reshape(3, cg_p, w_out.shape[-1])
    out = _sum_1x1_bn_relu([b1, b2, b3], w_out, s_out, out_dtype=jnp.bfloat16)

    # bf16 store for the final conv (halves the last HBM write); slice the real channels,
    # then cast back to f32 and return NCHW like the PyTorch module.
    out = out[..., :out_channels].astype(jnp.float32)
    return jnp.transpose(out, (0, 3, 1, 2))


# ---------------------------------------------------------------------------
# Pure-JAX reference (same bf16-operand / f32-accumulate precision choice)
# ---------------------------------------------------------------------------
def _ref_basic_conv(x, p, padding, eps=_EPS):
    scale = p["gamma"] / jnp.sqrt(p["var"] + eps)
    shift = p["beta"] - p["mean"] * scale
    w_eff = (p["w"] * scale[:, None, None, None]).astype(jnp.bfloat16).astype(jnp.float32)
    x16 = x.astype(jnp.bfloat16).astype(jnp.float32)
    y = jax.lax.conv_general_dilated(
        x16, w_eff, (1, 1), [(padding, padding), (padding, padding)],
        dimension_numbers=("NCHW", "OIHW", "NCHW"),
        precision=jax.lax.Precision.HIGHEST)
    y = y + shift[None, :, None, None]
    return jnp.maximum(y, 0.0)


def _ref_dense_layer(x, params, eps=_EPS):
    b1 = _ref_basic_conv(x, params["branch1_1x1"], 0, eps)
    b1 = _ref_basic_conv(b1, params["branch1_3x3"], 1, eps)
    b1 = _ref_basic_conv(b1, params["branch1_3x3_2"], 1, eps)
    b2 = _ref_basic_conv(x, params["branch2_1x1"], 0, eps)
    b2 = _ref_basic_conv(b2, params["branch2_3x3"], 1, eps)
    b3 = _ref_basic_conv(x, params["branch3_1x1"], 0, eps)
    cat = jnp.concatenate([b1, b2, b3], axis=1)
    return _ref_basic_conv(cat, params["output"], 0, eps)


# ---------------------------------------------------------------------------
# Demo / correctness check
# ---------------------------------------------------------------------------
def _init_basic_conv(key, c_in, c_out, k):
    kw_, kg, kb, km, kv = jax.random.split(key, 5)
    w = jax.random.normal(kw_, (c_out, c_in, k, k), jnp.float32) / np.sqrt(c_in * k * k)
    return dict(
        w=w,
        gamma=1.0 + 0.1 * jax.random.normal(kg, (c_out,), jnp.float32),
        beta=0.1 * jax.random.normal(kb, (c_out,), jnp.float32),
        mean=0.1 * jax.random.normal(km, (c_out,), jnp.float32),
        var=jnp.abs(jax.random.normal(kv, (c_out,), jnp.float32)) + 0.5,
    )


if __name__ == "__main__":
    N, C_IN, H, W = 2, 4, 16, 16
    GROWTH, OUT_CH = 8, 8
    g = GROWTH

    key = jax.random.PRNGKey(0)
    keys = jax.random.split(key, 8)
    x = jax.random.normal(keys[0], (N, C_IN, H, W), jnp.float32)

    conv_specs = [
        ("branch1_1x1", C_IN, 4 * g, 1),
        ("branch2_1x1", C_IN, 4 * g, 1),
        ("branch3_1x1", C_IN, g, 1),
        ("branch1_3x3", 4 * g, g, 3),
        ("branch1_3x3_2", g, g, 3),
        ("branch2_3x3", 4 * g, g, 3),
        ("output", 3 * g, OUT_CH, 1),
    ]
    params = {name: _init_basic_conv(k, ci, co, kk)
              for (name, ci, co, kk), k in zip(conv_specs, keys[1:])}

    fwd = jax.jit(functools.partial(dense_layer_forward,
                                    growth_rate=GROWTH, out_channels=OUT_CH))
    out = jax.block_until_ready(fwd(x, params))

    ref = _ref_dense_layer(x, params)
    # bf16 MXU operands + f32 accumulate; tolerance covers bf16-level rounding of
    # intermediates and of the final bf16 store.
    np.testing.assert_allclose(np.asarray(out), np.asarray(ref), rtol=1e-2, atol=1e-2)

    print("KERNEL_OK")
</pallas_src>

<mosaic_0001>
module attributes {stable_mosaic.version = 11 : i64} {
  func.func @kernel(%arg0: i32, %arg1: memref<256x128xbf16, #tpu.memory_space<vmem>>, %arg2: memref<128x384xbf16, #tpu.memory_space<vmem>>, %arg3: memref<1x384xf32, #tpu.memory_space<vmem>>, %arg4: memref<256x128xbf16, #tpu.memory_space<vmem>>, %arg5: memref<256x128xbf16, #tpu.memory_space<vmem>>, %arg6: memref<256x128xbf16, #tpu.memory_space<vmem>>) attributes {dimension_semantics = [#tpu.dimension_semantics<parallel>], iteration_bounds = array<i64: 2>, scalar_prefetch = 0 : i64, scratch_operands = 0 : i64, tpu.core_type = #tpu.core_type<tc>, window_params = [{transform_indices = @transform_0, window_bounds = array<i64: 256, 128>}, {pipeline_mode = #tpu.pipeline_mode<synchronous>, transform_indices = @transform_1, window_bounds = array<i64: 128, 384>}, {pipeline_mode = #tpu.pipeline_mode<synchronous>, transform_indices = @transform_2, window_bounds = array<i64: 1, 384>}, {transform_indices = @transform_3, window_bounds = array<i64: 256, 128>}, {transform_indices = @transform_4, window_bounds = array<i64: 256, 128>}, {transform_indices = @transform_5, window_bounds = array<i64: 256, 128>}]} {
    %c0 = arith.constant 0 : index
    %c0_0 = arith.constant 0 : index
    %0 = vector.load %arg1[%c0, %c0_0] : memref<256x128xbf16, #tpu.memory_space<vmem>>, vector<256x128xbf16>
    %c0_1 = arith.constant 0 : index
    %c0_2 = arith.constant 0 : index
    %1 = vector.load %arg2[%c0_1, %c0_2] : memref<128x384xbf16, #tpu.memory_space<vmem>>, vector<128x384xbf16>
    %cst = arith.constant dense<0.000000e+00> : vector<256x384xf32>
    %2 = tpu.matmul %0, %1, %cst {dimension_numbers = #tpu.dot_dimension_numbers<[1], [0], [0], [1], [0, 0, 1, 1], [], []>} : vector<256x128xbf16>, vector<128x384xbf16>, vector<256x384xf32> -> vector<256x384xf32>
    %c0_3 = arith.constant 0 : index
    %c0_4 = arith.constant 0 : index
    %3 = vector.load %arg3[%c0_3, %c0_4] : memref<1x384xf32, #tpu.memory_space<vmem>>, vector<1x384xf32>
    %4 = vector.broadcast %3 : vector<1x384xf32> to vector<256x384xf32>
    %5 = arith.addf %2, %4 : vector<256x384xf32>
    %cst_5 = arith.constant 0.000000e+00 : f32
    %6 = vector.broadcast %cst_5 : f32 to vector<256x384xf32>
    %7 = arith.maximumf %5, %6 : vector<256x384xf32>
    %8 = vector.extract_strided_slice %7 {offsets = [0, 0], sizes = [256, 128], strides = [1, 1]} : vector<256x384xf32> to vector<256x128xf32>
    %9 = arith.truncf %8 : vector<256x128xf32> to vector<256x128xbf16>
    %c0_6 = arith.constant 0 : index
    %c0_7 = arith.constant 0 : index
    %10 = vector.load %arg4[%c0_6, %c0_7] : memref<256x128xbf16, #tpu.memory_space<vmem>>, vector<256x128xbf16>
    tpu.vector_store %arg4[%c0_6, %c0_7], %9 {strides = array<i32>} : memref<256x128xbf16, #tpu.memory_space<vmem>>, vector<256x128xbf16>,
    %11 = vector.extract_strided_slice %7 {offsets = [0, 128], sizes = [256, 128], strides = [1, 1]} : vector<256x384xf32> to vector<256x128xf32>
    %12 = arith.truncf %11 : vector<256x128xf32> to vector<256x128xbf16>
    %c0_8 = arith.constant 0 : index
    %c0_9 = arith.constant 0 : index
    %13 = vector.load %arg5[%c0_8, %c0_9] : memref<256x128xbf16, #tpu.memory_space<vmem>>, vector<256x128xbf16>
    tpu.vector_store %arg5[%c0_8, %c0_9], %12 {strides = array<i32>} : memref<256x128xbf16, #tpu.memory_space<vmem>>, vector<256x128xbf16>,
    %14 = vector.extract_strided_slice %7 {offsets = [0, 256], sizes = [256, 128], strides = [1, 1]} : vector<256x384xf32> to vector<256x128xf32>
    %15 = arith.truncf %14 : vector<256x128xf32> to vector<256x128xbf16>
    %c0_10 = arith.constant 0 : index
    %c0_11 = arith.constant 0 : index
    %16 = vector.load %arg6[%c0_10, %c0_11] : memref<256x128xbf16, #tpu.memory_space<vmem>>, vector<256x128xbf16>
    tpu.vector_store %arg6[%c0_10, %c0_11], %15 {strides = array<i32>} : memref<256x128xbf16, #tpu.memory_space<vmem>>, vector<256x128xbf16>,
    return
  }
  func.func @transform_0(%arg0: i32) -> (i32, i32) {
    %c0_i32 = arith.constant 0 : i32
    %c0_i32_0 = arith.constant 0 : i32
    return %arg0, %c0_i32 : i32, i32
  }
  func.func @transform_1(%arg0: i32) -> (i32, i32) {
    %c0_i32 = arith.constant 0 : i32
    %c0_i32_0 = arith.constant 0 : i32
    %c0_i32_1 = arith.constant 0 : i32
    return %c0_i32, %c0_i32_0 : i32, i32
  }
  func.func @transform_2(%arg0: i32) -> (i32, i32) {
    %c0_i32 = arith.constant 0 : i32
    %c0_i32_0 = arith.constant 0 : i32
    %c0_i32_1 = arith.constant 0 : i32
    return %c0_i32, %c0_i32_0 : i32, i32
  }
  func.func @transform_3(%arg0: i32) -> (i32, i32) {
    %c0_i32 = arith.constant 0 : i32
    %c0_i32_0 = arith.constant 0 : i32
    return %arg0, %c0_i32 : i32, i32
  }
  func.func @transform_4(%arg0: i32) -> (i32, i32) {
    %c0_i32 = arith.constant 0 : i32
    %c0_i32_0 = arith.constant 0 : i32
    return %arg0, %c0_i32 : i32, i32
  }
  func.func @transform_5(%arg0: i32) -> (i32, i32) {
    %c0_i32 = arith.constant 0 : i32
    %c0_i32_0 = arith.constant 0 : i32
    return %arg0, %c0_i32 : i32, i32
  }
}

module attributes {stable_mosaic.version = 11 : i64} {
  func.func @kernel(%arg0: i32, %arg1: memref<1x352x128xbf16, #tpu.memory_space<vmem>>, %arg2: memref<9x128x128xbf16, #tpu.memory_space<vmem>>, %arg3: memref<1x128xf32, #tpu.memory_space<vmem>>, %arg4: memref<1x256x128xbf16, #tpu.memory_space<vmem>>) attributes {dimension_semantics = [#tpu.dimension_semantics<parallel>], iteration_bounds = array<i64: 4>, scalar_prefetch = 0 : i64, scratch_operands = 0 : i64, tpu.core_type = #tpu.core_type<tc>, window_params = [{transform_indices = @transform_0, window_bounds = array<i64: 1, 352, 128>}, {pipeline_mode = #tpu.pipeline_mode<synchronous>, transform_indices = @transform_1, window_bounds = array<i64: 9, 128, 128>}, {pipeline_mode = #tpu.pipeline_mode<synchronous>, transform_indices = @transform_2, window_bounds = array<i64: 1, 128>}, {transform_indices = @transform_3, window_bounds = array<i64: 1, 256, 128>}]} {
    %c0 = arith.constant 0 : index
    %c0_0 = arith.constant 0 : index
    %c0_1 = arith.constant 0 : index
    %0 = vector.load %arg1[%c0, %c0_0, %c0_1] : memref<1x352x128xbf16, #tpu.memory_space<vmem>>, vector<1x272x128xbf16>
    %1 = vector.shape_cast %0 : vector<1x272x128xbf16> to vector<272x128xbf16>
    %c0_2 = arith.constant 0 : index
    %c0_3 = arith.constant 0 : index
    %c0_4 = arith.constant 0 : index
    %2 = vector.load %arg2[%c0_2, %c0_3, %c0_4] : memref<9x128x128xbf16, #tpu.memory_space<vmem>>, vector<1x128x128xbf16>
    %3 = vector.shape_cast %2 : vector<1x128x128xbf16> to vector<128x128xbf16>
    %cst = arith.constant dense<0.000000e+00> : vector<272x128xf32>
    %4 = tpu.matmul %1, %3, %cst {dimension_numbers = #tpu.dot_dimension_numbers<[1], [0], [0], [1], [0, 0, 1, 1], [], []>} : vector<272x128xbf16>, vector<128x128xbf16>, vector<272x128xf32> -> vector<272x128xf32>
    %5 = vector.extract_strided_slice %4 {offsets = [0, 0], sizes = [256, 128], strides = [1, 1]} : vector<272x128xf32> to vector<256x128xf32>
    %c1 = arith.constant 1 : index
    %c0_5 = arith.constant 0 : index
    %c0_6 = arith.constant 0 : index
    %6 = vector.load %arg2[%c1, %c0_5, %c0_6] : memref<9x128x128xbf16, #tpu.memory_space<vmem>>, vector<1x128x128xbf16>
    %7 = vector.shape_cast %6 : vector<1x128x128xbf16> to vector<128x128xbf16>
    %cst_7 = arith.constant dense<0.000000e+00> : vector<272x128xf32>
    %8 = tpu.matmul %1, %7, %cst_7 {dimension_numbers = #tpu.dot_dimension_numbers<[1], [0], [0], [1], [0, 0, 1, 1], [], []>} : vector<272x128xbf16>, vector<128x128xbf16>, vector<272x128xf32> -> vector<272x128xf32>
    %9 = vector.extract_strided_slice %8 {offsets = [1, 0], sizes = [256, 128], strides = [1, 1]} : vector<272x128xf32> to vector<256x128xf32>
    %10 = arith.addf %5, %9 : vector<256x128xf32>
    %c2 = arith.constant 2 : index
    %c0_8 = arith.constant 0 : index
    %c0_9 = arith.constant 0 : index
    %11 = vector.load %arg2[%c2, %c0_8, %c0_9] : memref<9x128x128xbf16, #tpu.memory_space<vmem>>, vector<1x128x128xbf16>
    %12 = vector.shape_cast %11 : vector<1x128x128xbf16> to vector<128x128xbf16>
    %cst_10 = arith.constant dense<0.000000e+00> : vector<272x128xf32>
    %13 = tpu.matmul %1, %12, %cst_10 {dimension_numbers = #tpu.dot_dimension_numbers<[1], [0], [0], [1], [0, 0, 1, 1], [], []>} : vector<272x128xbf16>, vector<128x128xbf16>, vector<272x128xf32> -> vector<272x128xf32>
    %14 = vector.extract_strided_slice %13 {offsets = [2, 0], sizes = [256, 128], strides = [1, 1]} : vector<272x128xf32> to vector<256x128xf32>
    %15 = arith.addf %10, %14 : vector<256x128xf32>
    %c0_11 = arith.constant 0 : index
    %c32 = arith.constant 32 : index
    %c0_12 = arith.constant 0 : index
    %16 = vector.load %arg1[%c0_11, %c32, %c0_12] : memref<1x352x128xbf16, #tpu.memory_space<vmem>>, vector<1x272x128xbf16>
    %17 = vector.shape_cast %16 : vector<1x272x128xbf16> to vector<272x128xbf16>
    %c3 = arith.constant 3 : index
    %c0_13 = arith.constant 0 : index
    %c0_14 = arith.constant 0 : index
    %18 = vector.load %arg2[%c3, %c0_13, %c0_14] : memref<9x128x128xbf16, #tpu.memory_space<vmem>>, vector<1x128x128xbf16>
    %19 = vector.shape_cast %18 : vector<1x128x128xbf16> to vector<128x128xbf16>
    %cst_15 = arith.constant dense<0.000000e+00> : vector<272x128xf32>
    %20 = tpu.matmul %17, %19, %cst_15 {dimension_numbers = #tpu.dot_dimension_numbers<[1], [0], [0], [1], [0, 0, 1, 1], [], []>} : vector<272x128xbf16>, vector<128x128xbf16>, vector<272x128xf32> -> vector<272x128xf32>
    %21 = vector.extract_strided_slice %20 {offsets = [0, 0], sizes = [256, 128], strides = [1, 1]} : vector<272x128xf32> to vector<256x128xf32>
    %22 = arith.addf %15, %21 : vector<256x128xf32>
    %c4 = arith.constant 4 : index
    %c0_16 = arith.constant 0 : index
    %c0_17 = arith.constant 0 : index
    %23 = vector.load %arg2[%c4, %c0_16, %c0_17] : memref<9x128x128xbf16, #tpu.memory_space<vmem>>, vector<1x128x128xbf16>
    %24 = vector.shape_cast %23 : vector<1x128x128xbf16> to vector<128x128xbf16>
    %cst_18 = arith.constant dense<0.000000e+00> : vector<272x128xf32>
    %25 = tpu.matmul %17, %24, %cst_18 {dimension_numbers = #tpu.dot_dimension_numbers<[1], [0], [0], [1], [0, 0, 1, 1], [], []>} : vector<272x128xbf16>, vector<128x128xbf16>, vector<272x128xf32> -> vector<272x128xf32>
    %26 = vector.extract_strided_slice %25 {offsets = [1, 0], sizes = [256, 128], strides = [1, 1]} : vector<272x128xf32> to vector<256x128xf32>
    %27 = arith.addf %22, %26 : vector<256x128xf32>
    %c5 = arith.constant 5 : index
    %c0_19 = arith.constant 0 : index
    %c0_20 = arith.constant 0 : index
    %28 = vector.load %arg2[%c5, %c0_19, %c0_20] : memref<9x128x128xbf16, #tpu.memory_space<vmem>>, vector<1x128x128xbf16>
    %29 = vector.shape_cast %28 : vector<1x128x128xbf16> to vector<128x128xbf16>
    %cst_21 = arith.constant dense<0.000000e+00> : vector<272x128xf32>
    %30 = tpu.matmul %17, %29, %cst_21 {dimension_numbers = #tpu.dot_dimension_numbers<[1], [0], [0], [1], [0, 0, 1, 1], [], []>} : vector<272x128xbf16>, vector<128x128xbf16>, vector<272x128xf32> -> vector<272x128xf32>
    %31 = vector.extract_strided_slice %30 {offsets = [2, 0], sizes = [256, 128], strides = [1, 1]} : vector<272x128xf32> to vector<256x128xf32>
    %32 = arith.addf %27, %31 : vector<256x128xf32>
    %c0_22 = arith.constant 0 : index
    %c64 = arith.constant 64 : index
    %c0_23 = arith.constant 0 : index
    %33 = vector.load %arg1[%c0_22, %c64, %c0_23] : memref<1x352x128xbf16, #tpu.memory_space<vmem>>, vector<1x272x128xbf16>
    %34 = vector.shape_cast %33 : vector<1x272x128xbf16> to vector<272x128xbf16>
    %c6 = arith.constant 6 : index
    %c0_24 = arith.constant 0 : index
    %c0_25 = arith.constant 0 : index
    %35 = vector.load %arg2[%c6, %c0_24, %c0_25] : memref<9x128x128xbf16, #tpu.memory_space<vmem>>, vector<1x128x128xbf16>
    %36 = vector.shape_cast %35 : vector<1x128x128xbf16> to vector<128x128xbf16>
    %cst_26 = arith.constant dense<0.000000e+00> : vector<272x128xf32>
    %37 = tpu.matmul %34, %36, %cst_26 {dimension_numbers = #tpu.dot_dimension_numbers<[1], [0], [0], [1], [0, 0, 1, 1], [], []>} : vector<272x128xbf16>, vector<128x128xbf16>, vector<272x128xf32> -> vector<272x128xf32>
    %38 = vector.extract_strided_slice %37 {offsets = [0, 0], sizes = [256, 128], strides = [1, 1]} : vector<272x128xf32> to vector<256x128xf32>
    %39 = arith.addf %32, %38 : vector<256x128xf32>
    %c7 = arith.constant 7 : index
    %c0_27 = arith.constant 0 : index
    %c0_28 = arith.constant 0 : index
    %40 = vector.load %arg2[%c7, %c0_27, %c0_28] : memref<9x128x128xbf16, #tpu.memory_space<vmem>>, vector<1x128x128xbf16>
    %41 = vector.shape_cast %40 : vector<1x128x128xbf16> to vector<128x128xbf16>
    %cst_29 = arith.constant dense<0.000000e+00> : vector<272x128xf32>
    %42 = tpu.matmul %34, %41, %cst_29 {dimension_numbers = #tpu.dot_dimension_numbers<[1], [0], [0], [1], [0, 0, 1, 1], [], []>} : vector<272x128xbf16>, vector<128x128xbf16>, vector<272x128xf32> -> vector<272x128xf32>
    %43 = vector.extract_strided_slice %42 {offsets = [1, 0], sizes = [256, 128], strides = [1, 1]} : vector<272x128xf32> to vector<256x128xf32>
    %44 = arith.addf %39, %43 : vector<256x128xf32>
    %c8 = arith.constant 8 : index
    %c0_30 = arith.constant 0 : index
    %c0_31 = arith.constant 0 : index
    %45 = vector.load %arg2[%c8, %c0_30, %c0_31] : memref<9x128x128xbf16, #tpu.memory_space<vmem>>, vector<1x128x128xbf16>
    %46 = vector.shape_cast %45 : vector<1x128x128xbf16> to vector<128x128xbf16>
    %cst_32 = arith.constant dense<0.000000e+00> : vector<272x128xf32>
    %47 = tpu.matmul %34, %46, %cst_32 {dimension_numbers = #tpu.dot_dimension_numbers<[1], [0], [0], [1], [0, 0, 1, 1], [], []>} : vector<272x128xbf16>, vector<128x128xbf16>, vector<272x128xf32> -> vector<272x128xf32>
    %48 = vector.extract_strided_slice %47 {offsets = [2, 0], sizes = [256, 128], strides = [1, 1]} : vector<272x128xf32> to vector<256x128xf32>
    %49 = arith.addf %44, %48 : vector<256x128xf32>
    %c0_33 = arith.constant 0 : index
    %c0_34 = arith.constant 0 : index
    %50 = vector.load %arg3[%c0_33, %c0_34] : memref<1x128xf32, #tpu.memory_space<vmem>>, vector<1x128xf32>
    %51 = vector.broadcast %50 : vector<1x128xf32> to vector<256x128xf32>
    %52 = arith.addf %49, %51 : vector<256x128xf32>
    %cst_35 = arith.constant 0.000000e+00 : f32
    %53 = vector.broadcast %cst_35 : f32 to vector<256x128xf32>
    %54 = arith.maximumf %52, %53 : vector<256x128xf32>
    %55 = arith.truncf %54 : vector<256x128xf32> to vector<256x128xbf16>
    %c0_36 = arith.constant 0 : index
    %c0_37 = arith.constant 0 : index
    %c0_38 = arith.constant 0 : index
    %56 = vector.load %arg4[%c0_36, %c0_37, %c0_38] : memref<1x256x128xbf16, #tpu.memory_space<vmem>>, vector<1x256x128xbf16>
    %57 = vector.shape_cast %56 : vector<1x256x128xbf16> to vector<256x128xbf16>
    %58 = vector.shape_cast %55 : vector<256x128xbf16> to vector<1x256x128xbf16>
    tpu.vector_store %arg4[%c0_36, %c0_37, %c0_38], %58 {strides = array<i32>} : memref<1x256x128xbf16, #tpu.memory_space<vmem>>, vector<1x256x128xbf16>,
    return
  }
  func.func @transform_0(%arg0: i32) -> (i32, i32, i32) {
    %c0_i32 = arith.constant 0 : i32
    %c0_i32_0 = arith.constant 0 : i32
    %c0_i32_1 = arith.constant 0 : i32
    return %arg0, %c0_i32, %c0_i32_0 : i32, i32, i32
  }
  func.func @transform_1(%arg0: i32) -> (i32, i32, i32) {
    %c0_i32 = arith.constant 0 : i32
    %c0_i32_0 = arith.constant 0 : i32
    %c0_i32_1 = arith.constant 0 : i32
    %c0_i32_2 = arith.constant 0 : i32
    return %c0_i32, %c0_i32_0, %c0_i32_1 : i32, i32, i32
  }
  func.func @transform_2(%arg0: i32) -> (i32, i32) {
    %c0_i32 = arith.constant 0 : i32
    %c0_i32_0 = arith.constant 0 : i32
    %c0_i32_1 = arith.constant 0 : i32
    return %c0_i32, %c0_i32_0 : i32, i32
  }
  func.func @transform_3(%arg0: i32) -> (i32, i32, i32) {
    %c0_i32 = arith.constant 0 : i32
    %c0_i32_0 = arith.constant 0 : i32
    %c0_i32_1 = arith.constant 0 : i32
    return %arg0, %c0_i32, %c0_i32_0 : i32, i32, i32
  }
}

module attributes {stable_mosaic.version = 11 : i64} {
  func.func @kernel(%arg0: i32, %arg1: memref<256x128xbf16, #tpu.memory_space<vmem>>, %arg2: memref<256x128xbf16, #tpu.memory_space<vmem>>, %arg3: memref<256x128xbf16, #tpu.memory_space<vmem>>, %arg4: memref<3x128x128xbf16, #tpu.memory_space<vmem>>, %arg5: memref<1x128xf32, #tpu.memory_space<vmem>>, %arg6: memref<256x128xbf16, #tpu.memory_space<vmem>>) attributes {dimension_semantics = [#tpu.dimension_semantics<parallel>], iteration_bounds = array<i64: 2>, scalar_prefetch = 0 : i64, scratch_operands = 0 : i64, tpu.core_type = #tpu.core_type<tc>, window_params = [{transform_indices = @transform_0, window_bounds = array<i64: 256, 128>}, {transform_indices = @transform_1, window_bounds = array<i64: 256, 128>}, {transform_indices = @transform_2, window_bounds = array<i64: 256, 128>}, {pipeline_mode = #tpu.pipeline_mode<synchronous>, transform_indices = @transform_3, window_bounds = array<i64: 3, 128, 128>}, {pipeline_mode = #tpu.pipeline_mode<synchronous>, transform_indices = @transform_4, window_bounds = array<i64: 1, 128>}, {transform_indices = @transform_5, window_bounds = array<i64: 256, 128>}]} {
    %c0 = arith.constant 0 : index
    %c0_0 = arith.constant 0 : index
    %0 = vector.load %arg1[%c0, %c0_0] : memref<256x128xbf16, #tpu.memory_space<vmem>>, vector<256x128xbf16>
    %c0_1 = arith.constant 0 : index
    %c0_2 = arith.constant 0 : index
    %c0_3 = arith.constant 0 : index
    %1 = vector.load %arg4[%c0_1, %c0_2, %c0_3] : memref<3x128x128xbf16, #tpu.memory_space<vmem>>, vector<1x128x128xbf16>
    %2 = vector.shape_cast %1 : vector<1x128x128xbf16> to vector<128x128xbf16>
    %cst = arith.constant dense<0.000000e+00> : vector<256x128xf32>
    %3 = tpu.matmul %0, %2, %cst {dimension_numbers = #tpu.dot_dimension_numbers<[1], [0], [0], [1], [0, 0, 1, 1], [], []>} : vector<256x128xbf16>, vector<128x128xbf16>, vector<256x128xf32> -> vector<256x128xf32>
    %c0_4 = arith.constant 0 : index
    %c0_5 = arith.constant 0 : index
    %4 = vector.load %arg2[%c0_4, %c0_5] : memref<256x128xbf16, #tpu.memory_space<vmem>>, vector<256x128xbf16>
    %c1 = arith.constant 1 : index
    %c0_6 = arith.constant 0 : index
    %c0_7 = arith.constant 0 : index
    %5 = vector.load %arg4[%c1, %c0_6, %c0_7] : memref<3x128x128xbf16, #tpu.memory_space<vmem>>, vector<1x128x128xbf16>
    %6 = vector.shape_cast %5 : vector<1x128x128xbf16> to vector<128x128xbf16>
    %cst_8 = arith.constant dense<0.000000e+00> : vector<256x128xf32>
    %7 = tpu.matmul %4, %6, %cst_8 {dimension_numbers = #tpu.dot_dimension_numbers<[1], [0], [0], [1], [0, 0, 1, 1], [], []>} : vector<256x128xbf16>, vector<128x128xbf16>, vector<256x128xf32> -> vector<256x128xf32>
    %8 = arith.addf %3, %7 : vector<256x128xf32>
    %c0_9 = arith.constant 0 : index
    %c0_10 = arith.constant 0 : index
    %9 = vector.load %arg3[%c0_9, %c0_10] : memref<256x128xbf16, #tpu.memory_space<vmem>>, vector<256x128xbf16>
    %c2 = arith.constant 2 : index
    %c0_11 = arith.constant 0 : index
    %c0_12 = arith.constant 0 : index
    %10 = vector.load %arg4[%c2, %c0_11, %c0_12] : memref<3x128x128xbf16, #tpu.memory_space<vmem>>, vector<1x128x128xbf16>
    %11 = vector.shape_cast %10 : vector<1x128x128xbf16> to vector<128x128xbf16>
    %cst_13 = arith.constant dense<0.000000e+00> : vector<256x128xf32>
    %12 = tpu.matmul %9, %11, %cst_13 {dimension_numbers = #tpu.dot_dimension_numbers<[1], [0], [0], [1], [0, 0, 1, 1], [], []>} : vector<256x128xbf16>, vector<128x128xbf16>, vector<256x128xf32> -> vector<256x128xf32>
    %13 = arith.addf %8, %12 : vector<256x128xf32>
    %c0_14 = arith.constant 0 : index
    %c0_15 = arith.constant 0 : index
    %14 = vector.load %arg5[%c0_14, %c0_15] : memref<1x128xf32, #tpu.memory_space<vmem>>, vector<1x128xf32>
    %15 = vector.broadcast %14 : vector<1x128xf32> to vector<256x128xf32>
    %16 = arith.addf %13, %15 : vector<256x128xf32>
    %cst_16 = arith.constant 0.000000e+00 : f32
    %17 = vector.broadcast %cst_16 : f32 to vector<256x128xf32>
    %18 = arith.maximumf %16, %17 : vector<256x128xf32>
    %19 = arith.truncf %18 : vector<256x128xf32> to vector<256x128xbf16>
    %c0_17 = arith.constant 0 : index
    %c0_18 = arith.constant 0 : index
    %20 = vector.load %arg6[%c0_17, %c0_18] : memref<256x128xbf16, #tpu.memory_space<vmem>>, vector<256x128xbf16>
    tpu.vector_store %arg6[%c0_17, %c0_18], %19 {strides = array<i32>} : memref<256x128xbf16, #tpu.memory_space<vmem>>, vector<256x128xbf16>,
    return
  }
  func.func @transform_0(%arg0: i32) -> (i32, i32) {
    %c0_i32 = arith.constant 0 : i32
    %c0_i32_0 = arith.constant 0 : i32
    return %arg0, %c0_i32 : i32, i32
  }
  func.func @transform_1(%arg0: i32) -> (i32, i32) {
    %c0_i32 = arith.constant 0 : i32
    %c0_i32_0 = arith.constant 0 : i32
    return %arg0, %c0_i32 : i32, i32
  }
  func.func @transform_2(%arg0: i32) -> (i32, i32) {
    %c0_i32 = arith.constant 0 : i32
    %c0_i32_0 = arith.constant 0 : i32
    return %arg0, %c0_i32 : i32, i32
  }
  func.func @transform_3(%arg0: i32) -> (i32, i32, i32) {
    %c0_i32 = arith.constant 0 : i32
    %c0_i32_0 = arith.constant 0 : i32
    %c0_i32_1 = arith.constant 0 : i32
    %c0_i32_2 = arith.constant 0 : i32
    return %c0_i32, %c0_i32_0, %c0_i32_1 : i32, i32, i32
  }
  func.func @transform_4(%arg0: i32) -> (i32, i32) {
    %c0_i32 = arith.constant 0 : i32
    %c0_i32_0 = arith.constant 0 : i32
    %c0_i32_1 = arith.constant 0 : i32
    return %c0_i32, %c0_i32_0 : i32, i32
  }
  func.func @transform_5(%arg0: i32) -> (i32, i32) {
    %c0_i32 = arith.constant 0 : i32
    %c0_i32_0 = arith.constant 0 : i32
    return %arg0, %c0_i32 : i32, i32
  }
}

</mosaic_0001>

<llo_original>
// kernel: dense_layer_forward.5
$region0: #{dense_layer_forward.5}
  #allocation0 [shape = 'u32[]', space=smem, size = 0x4, offset = 0x4, fixed_abs, tag = 'smem constant byte address 0x4 - core index']
  #allocation1 [shape = 'u32[144,128]{1,0:T(1,128)}', space=vmem, size = 0x12000, scoped, tag = 'internal scratch']
  %s0 = inlined_call_operand.vmem [shape: bf16[512,128], index: 0, kind: input, shape index: {}]
  %s1 = inlined_call_operand.vmem [shape: bf16[128,384], index: 1, kind: input, shape index: {}]
  %s2 = inlined_call_operand.vmem [shape: f32[1,384], index: 2, kind: input, shape index: {}]
  %s3 = inlined_call_operand.vmem [shape: bf16[512,128], index: 3, kind: output, shape index: {0}]
  %s4 = inlined_call_operand.vmem [shape: bf16[512,128], index: 4, kind: output, shape index: {1}]
  %s5 = inlined_call_operand.vmem [shape: bf16[512,128], index: 5, kind: output, shape index: {2}]
  %6 = xla_tuple %s3, %s4, %s5
  %s7 = sld [smem:[#allocation0]]
  $region61: #{dense_layer_forward.5} parent=0
    _
  %s9 = ssub.s32 1, %s7
  %s10 = scalar_select 0, %s9, %s7
  loop: start=0, step=1, limit=4
  $region2: #{dense_layer_forward.5} parent=0 // loop_pre_header
    _
  $region3: #{dense_layer_forward.5} parent=0 // loop_header
    %s12 = sphi 0, %s16
    %p13 = scmp.ge.s32.totalorder %s12, 4
    %s22 = sphi 0, %s24
    %s25 = sphi 0, %s22
    %s26 = sphi 0, %s25
    %s42 = sphi 0, %s26
    %s46 = sphi 0, %s46
    %s48 = sphi 0, %s46
    %s49 = sphi 0, %s48
    %s63 = sphi 0, %s49
    %s67 = sphi 0, %s67
    %s69 = sphi 0, %s67
    %s70 = sphi 0, %s69
    %s84 = sphi 0, %s70
    %s90 = sphi 0, %s92
    %s93 = sphi 0, %s90
    %s94 = sphi 0, %s93
    %s110 = sphi 0, %s94
    %s116 = sphi 0, %s118
    %s119 = sphi 0, %s116
    %s120 = sphi 0, %s119
    %s136 = sphi 0, %s120
    %s142 = sphi 0, %s144
    %s145 = sphi 0, %s142
    %s146 = sphi 0, %s145
    %s162 = sphi 0, %s146
  $region4: #{dense_layer_forward.5} parent=0 // loop_header_branch
    %15 = sbr.rel (%p13) target = $region8
  $region5: #{dense_layer_forward.5} parent=0 // loop_body
    %s17 = ssub.s32 %s12, 1
    %s18 = ssub.s32 %s12, 2
    %s19 = sadd.s32 %s12, 1
    %s20 = ssub.s32 %s12, %s19
    %p21 = scmp.eq.s32.totalorder %s20, 0
    %s23 = sadd.s32 %s22, 1
    %s24 = scalar_select %p21, %s22, %s23
    %p27 = pneg %p21
    %p28 = scmp.eq.s32.totalorder %s12, 1
    %p29 = por %p27, %p28
    %p30 = scmp.ne.s32.totalorder %s22, %s25
    %p31 = scmp.eq.s32.totalorder %s12, 0
    %p32 = por %p30, %p31
    %p33 = scmp.ne.s32.totalorder %s22, %s25
    %p34 = scmp.eq.s32.totalorder %s17, 1
    %p35 = por %p33, %p34
    %p36 = scmp.ne.s32.totalorder %s25, %s26
    %p37 = scmp.eq.s32.totalorder %s17, 0
    %p38 = por %p36, %p37
    %p39 = scmp.ne.s32.totalorder %s25, %s26
    %p40 = scmp.eq.s32.totalorder %s18, 1
    %p41 = por %p39, %p40
    %p43 = scmp.ne.s32.totalorder %s26, %s42
    %p44 = scmp.eq.s32.totalorder %s18, 0
    %p45 = por %p43, %p44
    %s47 = sadd.s32 %s46, 1
    %p50 = scmp.eq.s32.totalorder %s12, 1
    %p51 = scmp.ne.s32.totalorder %s46, %s48
    %p52 = scmp.eq.s32.totalorder %s12, 0
    %p53 = por %p51, %p52
    %p54 = scmp.ne.s32.totalorder %s46, %s48
    %p55 = scmp.eq.s32.totalorder %s17, 1
    %p56 = por %p54, %p55
    %p57 = scmp.ne.s32.totalorder %s48, %s49
    %p58 = scmp.eq.s32.totalorder %s17, 0
    %p59 = por %p57, %p58
    %p60 = scmp.ne.s32.totalorder %s48, %s49
    %p61 = scmp.eq.s32.totalorder %s18, 1
    %p62 = por %p60, %p61
    %p64 = scmp.ne.s32.totalorder %s49, %s63
    %p65 = scmp.eq.s32.totalorder %s18, 0
    %p66 = por %p64, %p65
    %s68 = sadd.s32 %s67, 1
    %p71 = scmp.eq.s32.totalorder %s12, 1
    %p72 = scmp.ne.s32.totalorder %s67, %s69
    %p73 = scmp.eq.s32.totalorder %s12, 0
    %p74 = por %p72, %p73
    %p75 = scmp.ne.s32.totalorder %s67, %s69
    %p76 = scmp.eq.s32.totalorder %s17, 1
    %p77 = por %p75, %p76
    %p78 = scmp.ne.s32.totalorder %s69, %s70
    %p79 = scmp.eq.s32.totalorder %s17, 0
    %p80 = por %p78, %p79
    %p81 = scmp.ne.s32.totalorder %s69, %s70
    %p82 = scmp.eq.s32.totalorder %s18, 1
    %p83 = por %p81, %p82
    %p85 = scmp.ne.s32.totalorder %s70, %s84
    %p86 = scmp.eq.s32.totalorder %s18, 0
    %p87 = por %p85, %p86
    %s88 = ssub.s32 %s12, %s19
    %p89 = scmp.eq.s32.totalorder %s88, 0
    %s91 = sadd.s32 %s90, 1
    %s92 = scalar_select %p89, %s90, %s91
    %p95 = pneg %p89
    %p96 = scmp.eq.s32.totalorder %s12, 1
    %p97 = por %p95, %p96
    %p98 = scmp.ne.s32.totalorder %s90, %s93
    %p99 = scmp.eq.s32.totalorder %s12, 0
    %p100 = por %p98, %p99
    %p101 = scmp.ne.s32.totalorder %s90, %s93
    %p102 = scmp.eq.s32.totalorder %s17, 1
    %p103 = por %p101, %p102
    %p104 = scmp.ne.s32.totalorder %s93, %s94
    %p105 = scmp.eq.s32.totalorder %s17, 0
    %p106 = por %p104, %p105
    %p107 = scmp.ne.s32.totalorder %s93, %s94
    %p108 = scmp.eq.s32.totalorder %s18, 1
    %p109 = por %p107, %p108
    %p111 = scmp.ne.s32.totalorder %s94, %s110
    %p112 = scmp.eq.s32.totalorder %s18, 0
    %p113 = por %p111, %p112
    %s114 = ssub.s32 %s12, %s19
    %p115 = scmp.eq.s32.totalorder %s114, 0
    %s117 = sadd.s32 %s116, 1
    %s118 = scalar_select %p115, %s116, %s117
    %p121 = pneg %p115
    %p122 = scmp.eq.s32.totalorder %s12, 1
    %p123 = por %p121, %p122
    %p124 = scmp.ne.s32.totalorder %s116, %s119
    %p125 = scmp.eq.s32.totalorder %s12, 0
    %p126 = por %p124, %p125
    %p127 = scmp.ne.s32.totalorder %s116, %s119
    %p128 = scmp.eq.s32.totalorder %s17, 1
    %p129 = por %p127, %p128
    %p130 = scmp.ne.s32.totalorder %s119, %s120
    %p131 = scmp.eq.s32.totalorder %s17, 0
    %p132 = por %p130, %p131
    %p133 = scmp.ne.s32.totalorder %s119, %s120
    %p134 = scmp.eq.s32.totalorder %s18, 1
    %p135 = por %p133, %p134
    %p137 = scmp.ne.s32.totalorder %s120, %s136
    %p138 = scmp.eq.s32.totalorder %s18, 0
    %p139 = por %p137, %p138
    %s140 = ssub.s32 %s12, %s19
    %p141 = scmp.eq.s32.totalorder %s140, 0
    %s143 = sadd.s32 %s142, 1
    %s144 = scalar_select %p141, %s142, %s143
    %p147 = pneg %p141
    %p148 = scmp.eq.s32.totalorder %s12, 1
    %p149 = por %p147, %p148
    %p150 = scmp.ne.s32.totalorder %s142, %s145
    %p151 = scmp.eq.s32.totalorder %s12, 0
    %p152 = por %p150, %p151
    %p153 = scmp.ne.s32.totalorder %s142, %s145
    %p154 = scmp.eq.s32.totalorder %s17, 1
    %p155 = por %p153, %p154
    %p156 = scmp.ne.s32.totalorder %s145, %s146
    %p157 = scmp.eq.s32.totalorder %s17, 0
    %p158 = por %p156, %p157
    %p159 = scmp.ne.s32.totalorder %s145, %s146
    %p160 = scmp.eq.s32.totalorder %s18, 1
    %p161 = por %p159, %p160
    %p163 = scmp.ne.s32.totalorder %s146, %s162
    %p164 = scmp.eq.s32.totalorder %s18, 0
    %p165 = por %p163, %p164
    %p166 = scmp.le.s32.totalorder 1, %s12
    %p167 = scmp.lt.s32.totalorder %s12, 3
    %p168 = pnand %p166, %p167
    %p169 = pneg %p168
    // Predicated region
    $region9: #{dense_layer_forward.5} parent=5 // pred_check
      _
    $region10: #{dense_layer_forward.5} parent=5 // pred_check_branch
      %171 = sbr.rel (%p168) target = $region12
    $region11: #{dense_layer_forward.5} parent=5 // pred_region
      %s172 = ssub.s32 %s12, 1
      // Predicated region
      $region13: #{dense_layer_forward.5} parent=11 // pred_check
        %p173 = pneg %p59
      $region14: #{dense_layer_forward.5} parent=11 // pred_check_branch
        %175 = sbr.rel (%p173) target = $region16
      $region15: #{dense_layer_forward.5} parent=11 // pred_region
        _
      $region16: #{dense_layer_forward.5} parent=11 // pred_fallthru
        _
      // Predicated region
      $region17: #{dense_layer_forward.5} parent=11 // pred_check
        %p176 = pneg %p80
      $region18: #{dense_layer_forward.5} parent=11 // pred_check_branch
        %178 = sbr.rel (%p176) target = $region20
      $region19: #{dense_layer_forward.5} parent=11 // pred_region
        _
      $region20: #{dense_layer_forward.5} parent=11 // pred_fallthru
        _
    $region12: #{dense_layer_forward.5} parent=5 // pred_fallthru
      _
    %p179 = scmp.lt.s32.totalorder %s12, 2
    // Predicated region
    $region21: #{dense_layer_forward.5} parent=5 // pred_check
      %p180 = pneg %p179
    $region22: #{dense_layer_forward.5} parent=5 // pred_check_branch
      %182 = sbr.rel (%p180) target = $region24
    $region23: #{dense_layer_forward.5} parent=5 // pred_region
      // Predicated region
      $region25: #{dense_layer_forward.5} parent=23 // pred_check
        %p183 = pneg %p32
      $region26: #{dense_layer_forward.5} parent=23 // pred_check_branch
        %185 = sbr.rel (%p183) target = $region28
      $region27: #{dense_layer_forward.5} parent=23 // pred_region
        %s186 = smul.u32 32, %s12
        %p187 = scmp.lt.s32.totalorder %s186, 63
        %s188 = scalar_select %p187, %s186, 63
        %s189 = smul.addr %s188, 4
        %s190 = scalar_lea.vmem %s0, %s189
        %s191 = smul.u32 32, %s12
      $region28: #{dense_layer_forward.5} parent=23 // pred_fallthru
        _
    $region24: #{dense_layer_forward.5} parent=5 // pred_fallthru
      _
    %p192 = scmp.le.s32.totalorder 1, %s12
    %p193 = scmp.lt.s32.totalorder %s12, 3
    %p194 = pnand %p192, %p193
    %p195 = pneg %p194
    // Predicated region
    $region29: #{dense_layer_forward.5} parent=5 // pred_check
      _
    $region30: #{dense_layer_forward.5} parent=5 // pred_check_branch
      %197 = sbr.rel (%p194) target = $region32
    $region31: #{dense_layer_forward.5} parent=5 // pred_region
      %s198 = ssub.s32 %s12, 1
      %s199 = smul.u32 32, %s17
      %p200 = scmp.lt.s32.totalorder %s199, 63
      %s201 = scalar_select %p200, %s199, 63
      %s202 = smul.addr %s201, 4
      %s203 = scalar_lea.vmem %s0, %s202
      %p204 = pneg %p38
      %p205 = pneg %p35
      %p206 = pneg %p59
      %p207 = pneg %p56
      %p208 = pneg %p80
      %p209 = pneg %p77
      %p210 = pneg %p106
      %p211 = pneg %p103
      %s212 = smul.u32 32, %s17
      %p213 = scmp.lt.s32.totalorder %s212, 63
      %s214 = scalar_select %p213, %s212, 63
      %s215 = smul.addr %s214, 4
      %s216 = scalar_lea.vmem %s3, %s215
      %p217 = pneg %p132
      %p218 = pneg %p129
      %s219 = smul.u32 32, %s17
      %p220 = scmp.lt.s32.totalorder %s219, 63
      %s221 = scalar_select %p220, %s219, 63
      %s222 = smul.addr %s221, 4
      %s223 = scalar_lea.vmem %s4, %s222
      %p224 = pneg %p158
      %p225 = pneg %p155
      %s226 = smul.u32 32, %s17
      %p227 = scmp.lt.s32.totalorder %s226, 63
      %s228 = scalar_select %p227, %s226, 63
      %s229 = smul.addr %s228, 4
      %s230 = scalar_lea.vmem %s5, %s229
      %s231 = smul.u32 32, %s17
      %p232 = scmp.lt.s32.totalorder %s231, 63
      %s233 = scalar_select %p232, %s231, 63
      %s234 = smul.addr %s233, 4
      %s235 = scalar_lea.vmem %s0, %s234
      %s236 = smul.u32 32, %s17
      %s237 = smul.u32 32, %s17
      %p238 = scmp.lt.s32.totalorder %s237, 63
      %s239 = scalar_select %p238, %s237, 63
      %s240 = smul.addr %s239, 4
      %s241 = scalar_lea.vmem %s3, %s240
      %s242 = smul.u32 32, %s17
      %s243 = smul.u32 32, %s17
      %p244 = scmp.lt.s32.totalorder %s243, 63
      %s245 = scalar_select %p244, %s243, 63
      %s246 = smul.addr %s245, 4
      %s247 = scalar_lea.vmem %s4, %s246
      %s248 = smul.u32 32, %s17
      %s249 = smul.u32 32, %s17
      %p250 = scmp.lt.s32.totalorder %s249, 63
      %s251 = scalar_select %p250, %s249, 63
      %s252 = smul.addr %s251, 4
      %s253 = scalar_lea.vmem %s5, %s252
      %s254 = smul.u32 32, %s17
      %v256 = vld [vmem:[%s235] sm:$0xf]
      %v257 = vld [vmem:[%s235 + $0x4] sm:$0xf]
      %v258 = vld [vmem:[%s235 + $0x8] sm:$0xf]
      %v259 = vld [vmem:[%s235 + $0xc] sm:$0xf]
      %v260 = vld [vmem:[%s235 + $0x10] sm:$0xf]
      %v261 = vld [vmem:[%s235 + $0x14] sm:$0xf]
      %v262 = vld [vmem:[%s235 + $0x18] sm:$0xf]
      %v263 = vld [vmem:[%s235 + $0x1c] sm:$0xf]
      %v264 = vld [vmem:[%s235 + $0x20] sm:$0xf]
      %v265 = vld [vmem:[%s235 + $0x24] sm:$0xf]
      %v266 = vld [vmem:[%s235 + $0x28] sm:$0xf]
      %v267 = vld [vmem:[%s235 + $0x2c] sm:$0xf]
      %v268 = vld [vmem:[%s235 + $0x30] sm:$0xf]
      %v269 = vld [vmem:[%s235 + $0x34] sm:$0xf]
      %v270 = vld [vmem:[%s235 + $0x38] sm:$0xf]
      %v271 = vld [vmem:[%s235 + $0x3c] sm:$0xf]
      %v272 = vld [vmem:[%s235 + $0x40] sm:$0xf]
      %v273 = vld [vmem:[%s235 + $0x44] sm:$0xf]
      %v274 = vld [vmem:[%s235 + $0x48] sm:$0xf]
      %v275 = vld [vmem:[%s235 + $0x4c] sm:$0xf]
      %v276 = vld [vmem:[%s235 + $0x50] sm:$0xf]
      %v277 = vld [vmem:[%s235 + $0x54] sm:$0xf]
      %v278 = vld [vmem:[%s235 + $0x58] sm:$0xf]
      %v279 = vld [vmem:[%s235 + $0x5c] sm:$0xf]
      %v280 = vld [vmem:[%s235 + $0x60] sm:$0xf]
      %v281 = vld [vmem:[%s235 + $0x64] sm:$0xf]
      %v282 = vld [vmem:[%s235 + $0x68] sm:$0xf]
      %v283 = vld [vmem:[%s235 + $0x6c] sm:$0xf]
      %v284 = vld [vmem:[%s235 + $0x70] sm:$0xf]
      %v285 = vld [vmem:[%s235 + $0x74] sm:$0xf]
      %v286 = vld [vmem:[%s235 + $0x78] sm:$0xf]
      %v287 = vld [vmem:[%s235 + $0x7c] sm:$0xf]
      %v288 = vld [vmem:[%s1] sm:$0xff]
      %v289 = vld [vmem:[%s1 + $0x8] sm:$0xf]
      %v290 = vld [vmem:[%s1 + $0xc] sm:$0xff]
      %v291 = vld [vmem:[%s1 + $0x14] sm:$0xf]
      %v292 = vld [vmem:[%s1 + $0x18] sm:$0xff]
      %v293 = vld [vmem:[%s1 + $0x20] sm:$0xf]
      %v294 = vld [vmem:[%s1 + $0x24] sm:$0xff]
      %v295 = vld [vmem:[%s1 + $0x2c] sm:$0xf]
      %v296 = vld [vmem:[%s1 + $0x30] sm:$0xff]
      %v297 = vld [vmem:[%s1 + $0x38] sm:$0xf]
      %v298 = vld [vmem:[%s1 + $0x3c] sm:$0xff]
      %v299 = vld [vmem:[%s1 + $0x44] sm:$0xf]
      %v300 = vld [vmem:[%s1 + $0x48] sm:$0xff]
      %v301 = vld [vmem:[%s1 + $0x50] sm:$0xf]
      %v302 = vld [vmem:[%s1 + $0x54] sm:$0xff]
      %v303 = vld [vmem:[%s1 + $0x5c] sm:$0xf]
      %v304 = vld [vmem:[%s1 + $0x60] sm:$0xff]
      %v305 = vld [vmem:[%s1 + $0x68] sm:$0xf]
      %v306 = vld [vmem:[%s1 + $0x6c] sm:$0xff]
      %v307 = vld [vmem:[%s1 + $0x74] sm:$0xf]
      %v308 = vld [vmem:[%s1 + $0x78] sm:$0xff]
      %v309 = vld [vmem:[%s1 + $0x80] sm:$0xf]
      %v310 = vld [vmem:[%s1 + $0x84] sm:$0xff]
      %v311 = vld [vmem:[%s1 + $0x8c] sm:$0xf]
      %v312 = vld [vmem:[%s1 + $0x90] sm:$0xff]
      %v313 = vld [vmem:[%s1 + $0x98] sm:$0xf]
      %v314 = vld [vmem:[%s1 + $0x9c] sm:$0xff]
      %v315 = vld [vmem:[%s1 + $0xa4] sm:$0xf]
      %v316 = vld [vmem:[%s1 + $0xa8] sm:$0xff]
      %v317 = vld [vmem:[%s1 + $0xb0] sm:$0xf]
      %v318 = vld [vmem:[%s1 + $0xb4] sm:$0xff]
      %v319 = vld [vmem:[%s1 + $0xbc] sm:$0xf]
      %v320 = vld [vmem:[%s2] sm:$0x7]
      %v322 = vlaneseq
      %v323 = vshrl.u32 %v322, 7
      %v324 = vsub.s32 0, %v323
      %v325 = vrot.slane %v320, %v324
      %v326 = vlaneseq
      %v327 = vshrl.u32 %v326, 7
      %v328 = vsub.s32 1, %v327
      %v329 = vrot.slane %v320, %v328
      %v330 = vlaneseq
      %v331 = vshrl.u32 %v330, 7
      %v332 = vsub.s32 2, %v331
      %v333 = vrot.slane %v320, %v332
      %v369 = vunpack.c.l.b16 %v256
      %v370 = vunpack.c.l.b16 %v257
      %v371 = vunpack.c.l.b16 %v258
      %v372 = vunpack.c.l.b16 %v259
      %v373 = vunpack.c.l.b16 %v260
      %v374 = vunpack.c.l.b16 %v261
      %v375 = vunpack.c.l.b16 %v262
      %v376 = vunpack.c.l.b16 %v263
      %v377 = vunpack.c.l.b16 %v264
      %v378 = vunpack.c.l.b16 %v265
      %v379 = vunpack.c.l.b16 %v266
      %v380 = vunpack.c.l.b16 %v267
      %v381 = vunpack.c.l.b16 %v268
      %v382 = vunpack.c.l.b16 %v269
      %v383 = vunpack.c.l.b16 %v270
      %v384 = vunpack.c.l.b16 %v271
      %v385 = vunpack.c.l.b16 %v272
      %v386 = vunpack.c.l.b16 %v273
      %v387 = vunpack.c.l.b16 %v274
      %v388 = vunpack.c.l.b16 %v275
      %v389 = vunpack.c.l.b16 %v276
      %v390 = vunpack.c.l.b16 %v277
      %v391 = vunpack.c.l.b16 %v278
      %v392 = vunpack.c.l.b16 %v279
      %v393 = vunpack.c.l.b16 %v280
      %v394 = vunpack.c.l.b16 %v281
      %v395 = vunpack.c.l.b16 %v282
      %v396 = vunpack.c.l.b16 %v283
      %v397 = vunpack.c.l.b16 %v284
      %v398 = vunpack.c.l.b16 %v285
      %v399 = vunpack.c.l.b16 %v286
      %v400 = vunpack.c.l.b16 %v287
      %v401 = vpack.c.b16 %v370, %v369
      %v402 = vpack.c.b16 %v372, %v371
      %v403 = vpack.c.b16 %v374, %v373
      %v404 = vpack.c.b16 %v376, %v375
      %v405 = vpack.c.b16 %v378, %v377
      %v406 = vpack.c.b16 %v380, %v379
      %v407 = vpack.c.b16 %v382, %v381
      %v408 = vpack.c.b16 %v384, %v383
      %v409 = vpack.c.b16 %v386, %v385
      %v410 = vpack.c.b16 %v388, %v387
      %v411 = vpack.c.b16 %v390, %v389
      %v412 = vpack.c.b16 %v392, %v391
      %v413 = vpack.c.b16 %v394, %v393
      %v414 = vpack.c.b16 %v396, %v395
      %v415 = vpack.c.b16 %v398, %v397
      %v416 = vpack.c.b16 %v400, %v399
      %v465 = vunpack.c.l.b16 %v288
      %v466 = vunpack.c.h.b16 %v288
      %v467 = vunpack.c.l.b16 %v289
      %v468 = vunpack.c.l.b16 %v290
      %v469 = vunpack.c.h.b16 %v290
      %v470 = vunpack.c.l.b16 %v291
      %v471 = vunpack.c.l.b16 %v292
      %v472 = vunpack.c.h.b16 %v292
      %v473 = vunpack.c.l.b16 %v293
      %v474 = vunpack.c.l.b16 %v294
      %v475 = vunpack.c.h.b16 %v294
      %v476 = vunpack.c.l.b16 %v295
      %v477 = vunpack.c.l.b16 %v296
      %v478 = vunpack.c.h.b16 %v296
      %v479 = vunpack.c.l.b16 %v297
      %v480 = vunpack.c.l.b16 %v298
      %v481 = vunpack.c.h.b16 %v298
      %v482 = vunpack.c.l.b16 %v299
      %v483 = vunpack.c.l.b16 %v300
      %v484 = vunpack.c.h.b16 %v300
      %v485 = vunpack.c.l.b16 %v301
      %v486 = vunpack.c.l.b16 %v302
      %v487 = vunpack.c.h.b16 %v302
      %v488 = vunpack.c.l.b16 %v303
      %v489 = vunpack.c.l.b16 %v304
      %v490 = vunpack.c.h.b16 %v304
      %v491 = vunpack.c.l.b16 %v305
      %v492 = vunpack.c.l.b16 %v306
      %v493 = vunpack.c.h.b16 %v306
      %v494 = vunpack.c.l.b16 %v307
      %v495 = vunpack.c.l.b16 %v308
      %v496 = vunpack.c.h.b16 %v308
      %v497 = vunpack.c.l.b16 %v309
      %v498 = vunpack.c.l.b16 %v310
      %v499 = vunpack.c.h.b16 %v310
      %v500 = vunpack.c.l.b16 %v311
      %v501 = vunpack.c.l.b16 %v312
      %v502 = vunpack.c.h.b16 %v312
      %v503 = vunpack.c.l.b16 %v313
      %v504 = vunpack.c.l.b16 %v314
      %v505 = vunpack.c.h.b16 %v314
      %v506 = vunpack.c.l.b16 %v315
      %v507 = vunpack.c.l.b16 %v316
      %v508 = vunpack.c.h.b16 %v316
      %v509 = vunpack.c.l.b16 %v317
      %v510 = vunpack.c.l.b16 %v318
      %v511 = vunpack.c.h.b16 %v318
      %v512 = vunpack.c.l.b16 %v319
      %v513 = vpack.c.b16 %v468, %v465
      %v514 = vpack.c.b16 %v469, %v466
      %v515 = vpack.c.b16 %v470, %v467
      %v516 = vpack.c.b16 %v474, %v471
      %v517 = vpack.c.b16 %v475, %v472
      %v518 = vpack.c.b16 %v476, %v473
      %v519 = vpack.c.b16 %v480, %v477
      %v520 = vpack.c.b16 %v481, %v478
      %v521 = vpack.c.b16 %v482, %v479
      %v522 = vpack.c.b16 %v486, %v483
      %v523 = vpack.c.b16 %v487, %v484
      %v524 = vpack.c.b16 %v488, %v485
      %v525 = vpack.c.b16 %v492, %v489
      %v526 = vpack.c.b16 %v493, %v490
      %v527 = vpack.c.b16 %v494, %v491
      %v528 = vpack.c.b16 %v498, %v495
      %v529 = vpack.c.b16 %v499, %v496
      %v530 = vpack.c.b16 %v500, %v497
      %v531 = vpack.c.b16 %v504, %v501
      %v532 = vpack.c.b16 %v505, %v502
      %v533 = vpack.c.b16 %v506, %v503
      %v534 = vpack.c.b16 %v510, %v507
      %v535 = vpack.c.b16 %v511, %v508
      %v536 = vpack.c.b16 %v512, %v509
      %561 = vmatprep.subr.bf16.mxu0 %v514
      %562 = vmatpush1.bf16.msra.mxu0 %v513
      %563 = vmatprep.subr.bf16.mxu0 %v517
      %564 = vmatpush1.bf16.msra.mxu0 %v516
      %565 = vmatprep.subr.bf16.mxu0 %v520
      %566 = vmatpush1.bf16.msra.mxu0 %v519
      %567 = vmatprep.subr.bf16.mxu0 %v523
      %568 = vmatpush1.bf16.msra.mxu0 %v522
      %569 = vmatprep.subr.bf16.mxu0 %v526
      %570 = vmatpush1.bf16.msra.mxu0 %v525
      %571 = vmatprep.subr.bf16.mxu0 %v529
      %572 = vmatpush1.bf16.msra.mxu0 %v528
      %573 = vmatprep.subr.bf16.mxu0 %v532
      %574 = vmatpush1.bf16.msra.mxu0 %v531
      %575 = vmatprep.subr.bf16.mxu0 %v535
      %576 = vmatpush1.bf16.msra.mxu0 %v534
      %577 = vmatprep.subr.bf16.mxu0 0
      %578 = vmatpush1.bf16.msra.mxu0 0
      %579 = vmatprep.subr.bf16.mxu0 0
      %580 = vmatpush1.bf16.msra.mxu0 0
      %581 = vmatprep.subr.bf16.mxu0 0
      %582 = vmatpush1.bf16.msra.mxu0 0
      %583 = vmatprep.subr.bf16.mxu0 0
      %584 = vmatpush1.bf16.msra.mxu0 0
      %585 = vmatprep.subr.bf16.mxu0 0
      %586 = vmatpush1.bf16.msra.mxu0 0
      %587 = vmatprep.subr.bf16.mxu0 0
      %588 = vmatpush1.bf16.msra.mxu0 0
      %589 = vmatprep.subr.bf16.mxu0 0
      %590 = vmatpush1.bf16.msra.mxu0 0
      %591 = vmatprep.subr.bf16.mxu0 0
      %592 = vmatpush1.bf16.msra.mxu0 0
      %593 = vmatprep.mubr.bf16.mxu0 0
      %594 = vmatmul.mubr.bf16.gmra.mrb[0].mxu0 %v401
      %v595 = vpop.f32.mrb[0].mxu0
      %v596 = vadd.f32 %v325, %v595
      %v597 = vpop.f32.mrb[0].mxu0
      %v598 = vadd.f32 %v329, %v597
      %v599 = vpop.f32.mrb[0].mxu0
      %v600 = vadd.f32 %v325, %v599
      %v601 = vpop.f32.mrb[0].mxu0
      %v602 = vadd.f32 %v329, %v601
      %603 = vmatprep.mubr.bf16.mxu0 0
      %604 = vmatmul.mubr.bf16.gmra.mrb[0].mxu0 %v402
      %v605 = vpop.f32.mrb[0].mxu0
      %v606 = vadd.f32 %v325, %v605
      %v607 = vpop.f32.mrb[0].mxu0
      %v608 = vadd.f32 %v329, %v607
      %v609 = vpop.f32.mrb[0].mxu0
      %v610 = vadd.f32 %v325, %v609
      %v611 = vpop.f32.mrb[0].mxu0
      %v612 = vadd.f32 %v329, %v611
      %613 = vmatprep.mubr.bf16.mxu0 0
      %614 = vmatmul.mubr.bf16.gmra.mrb[0].mxu0 %v403
      %v615 = vpop.f32.mrb[0].mxu0
      %v616 = vadd.f32 %v325, %v615
      %v617 = vpop.f32.mrb[0].mxu0
      %v618 = vadd.f32 %v329, %v617
      %v619 = vpop.f32.mrb[0].mxu0
      %v620 = vadd.f32 %v325, %v619
      %v621 = vpop.f32.mrb[0].mxu0
      %v622 = vadd.f32 %v329, %v621
      %623 = vmatprep.mubr.bf16.mxu0 0
      %624 = vmatmul.mubr.bf16.gmra.mrb[0].mxu0 %v404
      %v625 = vpop.f32.mrb[0].mxu0
      %v626 = vadd.f32 %v325, %v625
      %v627 = vpop.f32.mrb[0].mxu0
      %v628 = vadd.f32 %v329, %v627
      %v629 = vpop.f32.mrb[0].mxu0
      %v630 = vadd.f32 %v325, %v629
      %v631 = vpop.f32.mrb[0].mxu0
      %v632 = vadd.f32 %v329, %v631
      %633 = vmatprep.mubr.bf16.mxu0 0
      %634 = vmatmul.mubr.bf16.gmra.mrb[0].mxu0 %v405
      %v635 = vpop.f32.mrb[0].mxu0
      %v636 = vadd.f32 %v325, %v635
      %v637 = vpop.f32.mrb[0].mxu0
      %v638 = vadd.f32 %v329, %v637
      %v639 = vpop.f32.mrb[0].mxu0
      %v640 = vadd.f32 %v325, %v639
      %v641 = vpop.f32.mrb[0].mxu0
      %v642 = vadd.f32 %v329, %v641
      %643 = vmatprep.mubr.bf16.mxu0 0
      %644 = vmatmul.mubr.bf16.gmra.mrb[0].mxu0 %v406
      %v645 = vpop.f32.mrb[0].mxu0
      %v646 = vadd.f32 %v325, %v645
      %v647 = vpop.f32.mrb[0].mxu0
      %v648 = vadd.f32 %v329, %v647
      %v649 = vpop.f32.mrb[0].mxu0
      %v650 = vadd.f32 %v325, %v649
      %v651 = vpop.f32.mrb[0].mxu0
      %v652 = vadd.f32 %v329, %v651
      %653 = vmatprep.mubr.bf16.mxu0 0
      %654 = vmatmul.mubr.bf16.gmra.mrb[0].mxu0 %v407
      %v655 = vpop.f32.mrb[0].mxu0
      %v656 = vadd.f32 %v325, %v655
      %v657 = vpop.f32.mrb[0].mxu0
      %v658 = vadd.f32 %v329, %v657
      %v659 = vpop.f32.mrb[0].mxu0
      %v660 = vadd.f32 %v325, %v659
      %v661 = vpop.f32.mrb[0].mxu0
      %v662 = vadd.f32 %v329, %v661
      %663 = vmatprep.mubr.bf16.mxu0 0
      %664 = vmatmul.mubr.bf16.gmra.mrb[0].mxu0 %v408
      %v665 = vpop.f32.mrb[0].mxu0
      %v666 = vadd.f32 %v325, %v665
      %v667 = vpop.f32.mrb[0].mxu0
      %v668 = vadd.f32 %v329, %v667
      %v669 = vpop.f32.mrb[0].mxu0
      %v670 = vadd.f32 %v325, %v669
      %v671 = vpop.f32.mrb[0].mxu0
      %v672 = vadd.f32 %v329, %v671
      %673 = vmatprep.mubr.bf16.mxu0 0
      %674 = vmatmul.mubr.bf16.gmra.mrb[0].mxu0 %v409
      %v675 = vpop.f32.mrb[0].mxu0
      %v676 = vadd.f32 %v325, %v675
      %v677 = vpop.f32.mrb[0].mxu0
      %v678 = vadd.f32 %v329, %v677
      %v679 = vpop.f32.mrb[0].mxu0
      %v680 = vadd.f32 %v325, %v679
      %v681 = vpop.f32.mrb[0].mxu0
      %v682 = vadd.f32 %v329, %v681
      %683 = vmatprep.mubr.bf16.mxu0 0
      %684 = vmatmul.mubr.bf16.gmra.mrb[0].mxu0 %v410
      %v685 = vpop.f32.mrb[0].mxu0
      %v686 = vadd.f32 %v325, %v685
      %v687 = vpop.f32.mrb[0].mxu0
      %v688 = vadd.f32 %v329, %v687
      %v689 = vpop.f32.mrb[0].mxu0
      %v690 = vadd.f32 %v325, %v689
      %v691 = vpop.f32.mrb[0].mxu0
      %v692 = vadd.f32 %v329, %v691
      %693 = vmatprep.mubr.bf16.mxu0 0
      %694 = vmatmul.mubr.bf16.gmra.mrb[0].mxu0 %v411
      %v695 = vpop.f32.mrb[0].mxu0
      %v696 = vadd.f32 %v325, %v695
      %v697 = vpop.f32.mrb[0].mxu0
      %v698 = vadd.f32 %v329, %v697
      %v699 = vpop.f32.mrb[0].mxu0
      %v700 = vadd.f32 %v325, %v699
      %v701 = vpop.f32.mrb[0].mxu0
      %v702 = vadd.f32 %v329, %v701
      %703 = vmatprep.mubr.bf16.mxu0 0
      %704 = vmatmul.mubr.bf16.gmra.mrb[0].mxu0 %v412
      %v705 = vpop.f32.mrb[0].mxu0
      %v706 = vadd.f32 %v325, %v705
      %v707 = vpop.f32.mrb[0].mxu0
      %v708 = vadd.f32 %v329, %v707
      %v709 = vpop.f32.mrb[0].mxu0
      %v710 = vadd.f32 %v325, %v709
      %v711 = vpop.f32.mrb[0].mxu0
      %v712 = vadd.f32 %v329, %v711
      %713 = vmatprep.mubr.bf16.mxu0 0
      %714 = vmatmul.mubr.bf16.gmra.mrb[0].mxu0 %v413
      %v715 = vpop.f32.mrb[0].mxu0
      %v716 = vadd.f32 %v325, %v715
      %v717 = vpop.f32.mrb[0].mxu0
      %v718 = vadd.f32 %v329, %v717
      %v719 = vpop.f32.mrb[0].mxu0
      %v720 = vadd.f32 %v325, %v719
      %v721 = vpop.f32.mrb[0].mxu0
      %v722 = vadd.f32 %v329, %v721
      %723 = vmatprep.mubr.bf16.mxu0 0
      %724 = vmatmul.mubr.bf16.gmra.mrb[0].mxu0 %v414
      %v725 = vpop.f32.mrb[0].mxu0
      %v726 = vadd.f32 %v325, %v725
      %v727 = vpop.f32.mrb[0].mxu0
      %v728 = vadd.f32 %v329, %v727
      %v729 = vpop.f32.mrb[0].mxu0
      %v730 = vadd.f32 %v325, %v729
      %v731 = vpop.f32.mrb[0].mxu0
      %v732 = vadd.f32 %v329, %v731
      %733 = vmatprep.mubr.bf16.mxu0 0
      %734 = vmatmul.mubr.bf16.gmra.mrb[0].mxu0 %v415
      %v735 = vpop.f32.mrb[0].mxu0
      %v736 = vadd.f32 %v325, %v735
      %v737 = vpop.f32.mrb[0].mxu0
      %v738 = vadd.f32 %v329, %v737
      %v739 = vpop.f32.mrb[0].mxu0
      %v740 = vadd.f32 %v325, %v739
      %v741 = vpop.f32.mrb[0].mxu0
      %v742 = vadd.f32 %v329, %v741
      %743 = vmatprep.mubr.bf16.mxu0 0
      %744 = vmatmul.mubr.bf16.gmra.mrb[0].mxu0 %v416
      %v745 = vpop.f32.mrb[0].mxu0
      %v746 = vadd.f32 %v325, %v745
      %v747 = vpop.f32.mrb[0].mxu0
      %v748 = vadd.f32 %v329, %v747
      %v749 = vpop.f32.mrb[0].mxu0
      %v750 = vadd.f32 %v325, %v749
      %v751 = vpop.f32.mrb[0].mxu0
      %v752 = vadd.f32 %v329, %v751
      %753 = vdwg.mxu0
      %754 = vmatprep.subr.bf16.mxu0 0
      %755 = vmatpush1.bf16.msra.mxu0 %v515
      %756 = vmatprep.subr.bf16.mxu0 0
      %757 = vmatpush1.bf16.msra.mxu0 %v518
      %758 = vmatprep.subr.bf16.mxu0 0
      %759 = vmatpush1.bf16.msra.mxu0 %v521
      %760 = vmatprep.subr.bf16.mxu0 0
      %761 = vmatpush1.bf16.msra.mxu0 %v524
      %762 = vmatprep.subr.bf16.mxu0 0
      %763 = vmatpush1.bf16.msra.mxu0 %v527
      %764 = vmatprep.subr.bf16.mxu0 0
      %765 = vmatpush1.bf16.msra.mxu0 %v530
      %766 = vmatprep.subr.bf16.mxu0 0
      %767 = vmatpush1.bf16.msra.mxu0 %v533
      %768 = vmatprep.subr.bf16.mxu0 0
      %769 = vmatpush1.bf16.msra.mxu0 %v536
      %770 = vmatprep.subr.bf16.mxu0 0
      %771 = vmatpush1.bf16.msra.mxu0 0
      %772 = vmatprep.subr.bf16.mxu0 0
      %773 = vmatpush1.bf16.msra.mxu0 0
      %774 = vmatprep.subr.bf16.mxu0 0
      %775 = vmatpush1.bf16.msra.mxu0 0
      %776 = vmatprep.subr.bf16.mxu0 0
      %777 = vmatpush1.bf16.msra.mxu0 0
      %778 = vmatprep.subr.bf16.mxu0 0
      %779 = vmatpush1.bf16.msra.mxu0 0
      %780 = vmatprep.subr.bf16.mxu0 0
      %781 = vmatpush1.bf16.msra.mxu0 0
      %782 = vmatprep.subr.bf16.mxu0 0
      %783 = vmatpush1.bf16.msra.mxu0 0
      %784 = vmatprep.subr.bf16.mxu0 0
      %785 = vmatpush1.bf16.msra.mxu0 0
      %786 = vmatprep.mubr.bf16.mxu0 0
      %787 = vmatmul.mubr.bf16.gmra.mrb[0].mxu0 %v401
      %v788 = vpop.f32.mrb[0].mxu0
      %v789 = vadd.f32 %v333, %v788
      %v790 = vpop.f32.mrb[0].mxu0
      %v791 = vpop.f32.mrb[0].mxu0
      %v792 = vadd.f32 %v333, %v791
      %v793 = vpop.f32.mrb[0].mxu0
      %794 = vmatprep.mubr.bf16.mxu0 0
      %795 = vmatmul.mubr.bf16.gmra.mrb[0].mxu0 %v402
      %v796 = vpop.f32.mrb[0].mxu0
      %v797 = vadd.f32 %v333, %v796
      %v798 = vpop.f32.mrb[0].mxu0
      %v799 = vpop.f32.mrb[0].mxu0
      %v800 = vadd.f32 %v333, %v799
      %v801 = vpop.f32.mrb[0].mxu0
      %802 = vmatprep.mubr.bf16.mxu0 0
      %803 = vmatmul.mubr.bf16.gmra.mrb[0].mxu0 %v403
      %v804 = vpop.f32.mrb[0].mxu0
      %v805 = vadd.f32 %v333, %v804
      %v806 = vpop.f32.mrb[0].mxu0
      %v807 = vpop.f32.mrb[0].mxu0
      %v808 = vadd.f32 %v333, %v807
      %v809 = vpop.f32.mrb[0].mxu0
      %810 = vmatprep.mubr.bf16.mxu0 0
      %811 = vmatmul.mubr.bf16.gmra.mrb[0].mxu0 %v404
      %v812 = vpop.f32.mrb[0].mxu0
      %v813 = vadd.f32 %v333, %v812
      %v814 = vpop.f32.mrb[0].mxu0
      %v815 = vpop.f32.mrb[0].mxu0
      %v816 = vadd.f32 %v333, %v815
      %v817 = vpop.f32.mrb[0].mxu0
      %818 = vmatprep.mubr.bf16.mxu0 0
      %819 = vmatmul.mubr.bf16.gmra.mrb[0].mxu0 %v405
      %v820 = vpop.f32.mrb[0].mxu0
      %v821 = vadd.f32 %v333, %v820
      %v822 = vpop.f32.mrb[0].mxu0
      %v823 = vpop.f32.mrb[0].mxu0
      %v824 = vadd.f32 %v333, %v823
      %v825 = vpop.f32.mrb[0].mxu0
      %826 = vmatprep.mubr.bf16.mxu0 0
      %827 = vmatmul.mubr.bf16.gmra.mrb[0].mxu0 %v406
      %v828 = vpop.f32.mrb[0].mxu0
      %v829 = vadd.f32 %v333, %v828
      %v830 = vpop.f32.mrb[0].mxu0
      %v831 = vpop.f32.mrb[0].mxu0
      %v832 = vadd.f32 %v333, %v831
      %v833 = vpop.f32.mrb[0].mxu0
      %834 = vmatprep.mubr.bf16.mxu0 0
      %835 = vmatmul.mubr.bf16.gmra.mrb[0].mxu0 %v407
      %v836 = vpop.f32.mrb[0].mxu0
      %v837 = vadd.f32 %v333, %v836
      %v838 = vpop.f32.mrb[0].mxu0
      %v839 = vpop.f32.mrb[0].mxu0
      %v840 = vadd.f32 %v333, %v839
      %v841 = vpop.f32.mrb[0].mxu0
      %842 = vmatprep.mubr.bf16.mxu0 0
      %843 = vmatmul.mubr.bf16.gmra.mrb[0].mxu0 %v408
      %v844 = vpop.f32.mrb[0].mxu0
      %v845 = vadd.f32 %v333, %v844
      %v846 = vpop.f32.mrb[0].mxu0
      %v847 = vpop.f32.mrb[0].mxu0
      %v848 = vadd.f32 %v333, %v847
      %v849 = vpop.f32.mrb[0].mxu0
      %850 = vmatprep.mubr.bf16.mxu0 0
      %851 = vmatmul.mubr.bf16.gmra.mrb[0].mxu0 %v409
      %v852 = vpop.f32.mrb[0].mxu0
      %v853 = vadd.f32 %v333, %v852
      %v854 = vpop.f32.mrb[0].mxu0
      %v855 = vpop.f32.mrb[0].mxu0
      %v856 = vadd.f32 %v333, %v855
      %v857 = vpop.f32.mrb[0].mxu0
      %858 = vmatprep.mubr.bf16.mxu0 0
      %859 = vmatmul.mubr.bf16.gmra.mrb[0].mxu0 %v410
      %v860 = vpop.f32.mrb[0].mxu0
      %v861 = vadd.f32 %v333, %v860
      %v862 = vpop.f32.mrb[0].mxu0
      %v863 = vpop.f32.mrb[0].mxu0
      %v864 = vadd.f32 %v333, %v863
      %v865 = vpop.f32.mrb[0].mxu0
      %866 = vmatprep.mubr.bf16.mxu0 0
      %867 = vmatmul.mubr.bf16.gmra.mrb[0].mxu0 %v411
      %v868 = vpop.f32.mrb[0].mxu0
      %v869 = vadd.f32 %v333, %v868
      %v870 = vpop.f32.mrb[0].mxu0
      %v871 = vpop.f32.mrb[0].mxu0
      %v872 = vadd.f32 %v333, %v871
      %v873 = vpop.f32.mrb[0].mxu0
      %874 = vmatprep.mubr.bf16.mxu0 0
      %875 = vmatmul.mubr.bf16.gmra.mrb[0].mxu0 %v412
      %v876 = vpop.f32.mrb[0].mxu0
      %v877 = vadd.f32 %v333, %v876
      %v878 = vpop.f32.mrb[0].mxu0
      %v879 = vpop.f32.mrb[0].mxu0
      %v880 = vadd.f32 %v333, %v879
      %v881 = vpop.f32.mrb[0].mxu0
      %882 = vmatprep.mubr.bf16.mxu0 0
      %883 = vmatmul.mubr.bf16.gmra.mrb[0].mxu0 %v413
      %v884 = vpop.f32.mrb[0].mxu0
      %v885 = vadd.f32 %v333, %v884
      %v886 = vpop.f32.mrb[0].mxu0
      %v887 = vpop.f32.mrb[0].mxu0
      %v888 = vadd.f32 %v333, %v887
      %v889 = vpop.f32.mrb[0].mxu0
      %890 = vmatprep.mubr.bf16.mxu0 0
      %891 = vmatmul.mubr.bf16.gmra.mrb[0].mxu0 %v414
      %v892 = vpop.f32.mrb[0].mxu0
      %v893 = vadd.f32 %v333, %v892
      %v894 = vpop.f32.mrb[0].mxu0
      %v895 = vpop.f32.mrb[0].mxu0
      %v896 = vadd.f32 %v333, %v895
      %v897 = vpop.f32.mrb[0].mxu0
      %898 = vmatprep.mubr.bf16.mxu0 0
      %899 = vmatmul.mubr.bf16.gmra.mrb[0].mxu0 %v415
      %v900 = vpop.f32.mrb[0].mxu0
      %v901 = vadd.f32 %v333, %v900
      %v902 = vpop.f32.mrb[0].mxu0
      %v903 = vpop.f32.mrb[0].mxu0
      %v904 = vadd.f32 %v333, %v903
      %v905 = vpop.f32.mrb[0].mxu0
      %906 = vmatprep.mubr.bf16.mxu0 0
      %907 = vmatmul.mubr.bf16.gmra.mrb[0].mxu0 %v416
      %v908 = vpop.f32.mrb[0].mxu0
      %v909 = vadd.f32 %v333, %v908
      %v910 = vpop.f32.mrb[0].mxu0
      %v911 = vpop.f32.mrb[0].mxu0
      %v912 = vadd.f32 %v333, %v911
      %v913 = vpop.f32.mrb[0].mxu0
      %914 = vdwg.mxu0
      %v915 = vmax.f32 %v596, 0.0
      %v916 = vmax.f32 %v598, 0.0
      %v917 = vmax.f32 %v789, 0.0
      %v918 = vmax.f32 %v600, 0.0
      %v919 = vmax.f32 %v602, 0.0
      %v920 = vmax.f32 %v792, 0.0
      %v921 = vmax.f32 %v606, 0.0
      %v922 = vmax.f32 %v608, 0.0
      %v923 = vmax.f32 %v797, 0.0
      %v924 = vmax.f32 %v610, 0.0
      %v925 = vmax.f32 %v612, 0.0
      %v926 = vmax.f32 %v800, 0.0
      %v927 = vmax.f32 %v616, 0.0
      %v928 = vmax.f32 %v618, 0.0
      %v929 = vmax.f32 %v805, 0.0
      %v930 = vmax.f32 %v620, 0.0
      %v931 = vmax.f32 %v622, 0.0
      %v932 = vmax.f32 %v808, 0.0
      %v933 = vmax.f32 %v626, 0.0
      %v934 = vmax.f32 %v628, 0.0
      %v935 = vmax.f32 %v813, 0.0
      %v936 = vmax.f32 %v630, 0.0
      %v937 = vmax.f32 %v632, 0.0
      %v938 = vmax.f32 %v816, 0.0
      %v939 = vmax.f32 %v636, 0.0
      %v940 = vmax.f32 %v638, 0.0
      %v941 = vmax.f32 %v821, 0.0
      %v942 = vmax.f32 %v640, 0.0
      %v943 = vmax.f32 %v642, 0.0
      %v944 = vmax.f32 %v824, 0.0
      %v945 = vmax.f32 %v646, 0.0
      %v946 = vmax.f32 %v648, 0.0
      %v947 = vmax.f32 %v829, 0.0
      %v948 = vmax.f32 %v650, 0.0
      %v949 = vmax.f32 %v652, 0.0
      %v950 = vmax.f32 %v832, 0.0
      %v951 = vmax.f32 %v656, 0.0
      %v952 = vmax.f32 %v658, 0.0
      %v953 = vmax.f32 %v837, 0.0
      %v954 = vmax.f32 %v660, 0.0
      %v955 = vmax.f32 %v662, 0.0
      %v956 = vmax.f32 %v840, 0.0
      %v957 = vmax.f32 %v666, 0.0
      %v958 = vmax.f32 %v668, 0.0
      %v959 = vmax.f32 %v845, 0.0
      %v960 = vmax.f32 %v670, 0.0
      %v961 = vmax.f32 %v672, 0.0
      %v962 = vmax.f32 %v848, 0.0
      %v963 = vmax.f32 %v676, 0.0
      %v964 = vmax.f32 %v678, 0.0
      %v965 = vmax.f32 %v853, 0.0
      %v966 = vmax.f32 %v680, 0.0
      %v967 = vmax.f32 %v682, 0.0
      %v968 = vmax.f32 %v856, 0.0
      %v969 = vmax.f32 %v686, 0.0
      %v970 = vmax.f32 %v688, 0.0
      %v971 = vmax.f32 %v861, 0.0
      %v972 = vmax.f32 %v690, 0.0
      %v973 = vmax.f32 %v692, 0.0
      %v974 = vmax.f32 %v864, 0.0
      %v975 = vmax.f32 %v696, 0.0
      %v976 = vmax.f32 %v698, 0.0
      %v977 = vmax.f32 %v869, 0.0
      %v978 = vmax.f32 %v700, 0.0
      %v979 = vmax.f32 %v702, 0.0
      %v980 = vmax.f32 %v872, 0.0
      %v981 = vmax.f32 %v706, 0.0
      %v982 = vmax.f32 %v708, 0.0
      %v983 = vmax.f32 %v877, 0.0
      %v984 = vmax.f32 %v710, 0.0
      %v985 = vmax.f32 %v712, 0.0
      %v986 = vmax.f32 %v880, 0.0
      %v987 = vmax.f32 %v716, 0.0
      %v988 = vmax.f32 %v718, 0.0
      %v989 = vmax.f32 %v885, 0.0
      %v990 = vmax.f32 %v720, 0.0
      %v991 = vmax.f32 %v722, 0.0
      %v992 = vmax.f32 %v888, 0.0
      %v993 = vmax.f32 %v726, 0.0
      %v994 = vmax.f32 %v728, 0.0
      %v995 = vmax.f32 %v893, 0.0
      %v996 = vmax.f32 %v730, 0.0
      %v997 = vmax.f32 %v732, 0.0
      %v998 = vmax.f32 %v896, 0.0
      %v999 = vmax.f32 %v736, 0.0
      %v1000 = vmax.f32 %v738, 0.0
      %v1001 = vmax.f32 %v901, 0.0
      %v1002 = vmax.f32 %v740, 0.0
      %v1003 = vmax.f32 %v742, 0.0
      %v1004 = vmax.f32 %v904, 0.0
      %v1005 = vmax.f32 %v746, 0.0
      %v1006 = vmax.f32 %v748, 0.0
      %v1007 = vmax.f32 %v909, 0.0
      %v1008 = vmax.f32 %v750, 0.0
      %v1009 = vmax.f32 %v752, 0.0
      %v1010 = vmax.f32 %v912, 0.0
      %v1011 = vpack.c.bf16 %v918, %v915
      %v1012 = vpack.c.bf16 %v924, %v921
      %v1013 = vpack.c.bf16 %v930, %v927
      %v1014 = vpack.c.bf16 %v936, %v933
      %v1015 = vpack.c.bf16 %v942, %v939
      %v1016 = vpack.c.bf16 %v948, %v945
      %v1017 = vpack.c.bf16 %v954, %v951
      %v1018 = vpack.c.bf16 %v960, %v957
      %v1019 = vpack.c.bf16 %v966, %v963
      %v1020 = vpack.c.bf16 %v972, %v969
      %v1021 = vpack.c.bf16 %v978, %v975
      %v1022 = vpack.c.bf16 %v984, %v981
      %v1023 = vpack.c.bf16 %v990, %v987
      %v1024 = vpack.c.bf16 %v996, %v993
      %v1025 = vpack.c.bf16 %v1002, %v999
      %v1026 = vpack.c.bf16 %v1008, %v1005
      %v1043 = vunpack.c.l.b16 %v1011
      %v1044 = vunpack.c.h.b16 %v1011
      %v1045 = vunpack.c.l.b16 %v1012
      %v1046 = vunpack.c.h.b16 %v1012
      %v1047 = vunpack.c.l.b16 %v1013
      %v1048 = vunpack.c.h.b16 %v1013
      %v1049 = vunpack.c.l.b16 %v1014
      %v1050 = vunpack.c.h.b16 %v1014
      %v1051 = vunpack.c.l.b16 %v1015
      %v1052 = vunpack.c.h.b16 %v1015
      %v1053 = vunpack.c.l.b16 %v1016
      %v1054 = vunpack.c.h.b16 %v1016
      %v1055 = vunpack.c.l.b16 %v1017
      %v1056 = vunpack.c.h.b16 %v1017
      %v1057 = vunpack.c.l.b16 %v1018
      %v1058 = vunpack.c.h.b16 %v1018
      %v1059 = vunpack.c.l.b16 %v1019
      %v1060 = vunpack.c.h.b16 %v1019
      %v1061 = vunpack.c.l.b16 %v1020
      %v1062 = vunpack.c.h.b16 %v1020
      %v1063 = vunpack.c.l.b16 %v1021
      %v1064 = vunpack.c.h.b16 %v1021
      %v1065 = vunpack.c.l.b16 %v1022
      %v1066 = vunpack.c.h.b16 %v1022
      %v1067 = vunpack.c.l.b16 %v1023
      %v1068 = vunpack.c.h.b16 %v1023
      %v1069 = vunpack.c.l.b16 %v1024
      %v1070 = vunpack.c.h.b16 %v1024
      %v1071 = vunpack.c.l.b16 %v1025
      %v1072 = vunpack.c.h.b16 %v1025
      %v1073 = vunpack.c.l.b16 %v1026
      %v1074 = vunpack.c.h.b16 %v1026
      %v1075 = vpack.c.b16 %v1043, %v1043
      %v1076 = vpack.c.b16 %v1044, %v1044
      %v1077 = vpack.c.b16 %v1045, %v1045
      %v1078 = vpack.c.b16 %v1046, %v1046
      %v1079 = vpack.c.b16 %v1047, %v1047
      %v1080 = vpack.c.b16 %v1048, %v1048
      %v1081 = vpack.c.b16 %v1049, %v1049
      %v1082 = vpack.c.b16 %v1050, %v1050
      %v1083 = vpack.c.b16 %v1051, %v1051
      %v1084 = vpack.c.b16 %v1052, %v1052
      %v1085 = vpack.c.b16 %v1053, %v1053
      %v1086 = vpack.c.b16 %v1054, %v1054
      %v1087 = vpack.c.b16 %v1055, %v1055
      %v1088 = vpack.c.b16 %v1056, %v1056
      %v1089 = vpack.c.b16 %v1057, %v1057
      %v1090 = vpack.c.b16 %v1058, %v1058
      %v1091 = vpack.c.b16 %v1059, %v1059
      %v1092 = vpack.c.b16 %v1060, %v1060
      %v1093 = vpack.c.b16 %v1061, %v1061
      %v1094 = vpack.c.b16 %v1062, %v1062
      %v1095 = vpack.c.b16 %v1063, %v1063
      %v1096 = vpack.c.b16 %v1064, %v1064
      %v1097 = vpack.c.b16 %v1065, %v1065
      %v1098 = vpack.c.b16 %v1066, %v1066
      %v1099 = vpack.c.b16 %v1067, %v1067
      %v1100 = vpack.c.b16 %v1068, %v1068
      %v1101 = vpack.c.b16 %v1069, %v1069
      %v1102 = vpack.c.b16 %v1070, %v1070
      %v1103 = vpack.c.b16 %v1071, %v1071
      %v1104 = vpack.c.b16 %v1072, %v1072
      %v1105 = vpack.c.b16 %v1073, %v1073
      %v1106 = vpack.c.b16 %v1074, %v1074
      %1139 = vst [vmem:[%s241] sm:$0xf] %v1075
      %1140 = vst [vmem:[%s241 + $0x4] sm:$0xf] %v1076
      %1141 = vst [vmem:[%s241 + $0x8] sm:$0xf] %v1077
      %1142 = vst [vmem:[%s241 + $0xc] sm:$0xf] %v1078
      %1143 = vst [vmem:[%s241 + $0x10] sm:$0xf] %v1079
      %1144 = vst [vmem:[%s241 + $0x14] sm:$0xf] %v1080
      %1145 = vst [vmem:[%s241 + $0x18] sm:$0xf] %v1081
      %1146 = vst [vmem:[%s241 + $0x1c] sm:$0xf] %v1082
      %1147 = vst [vmem:[%s241 + $0x20] sm:$0xf] %v1083
      %1148 = vst [vmem:[%s241 + $0x24] sm:$0xf] %v1084
      %1149 = vst [vmem:[%s241 + $0x28] sm:$0xf] %v1085
      %1150 = vst [vmem:[%s241 + $0x2c] sm:$0xf] %v1086
      %1151 = vst [vmem:[%s241 + $0x30] sm:$0xf] %v1087
      %1152 = vst [vmem:[%s241 + $0x34] sm:$0xf] %v1088
      %1153 = vst [vmem:[%s241 + $0x38] sm:$0xf] %v1089
      %1154 = vst [vmem:[%s241 + $0x3c] sm:$0xf] %v1090
      %1155 = vst [vmem:[%s241 + $0x40] sm:$0xf] %v1091
      %1156 = vst [vmem:[%s241 + $0x44] sm:$0xf] %v1092
      %1157 = vst [vmem:[%s241 + $0x48] sm:$0xf] %v1093
      %1158 = vst [vmem:[%s241 + $0x4c] sm:$0xf] %v1094
      %1159 = vst [vmem:[%s241 + $0x50] sm:$0xf] %v1095
      %1160 = vst [vmem:[%s241 + $0x54] sm:$0xf] %v1096
      %1161 = vst [vmem:[%s241 + $0x58] sm:$0xf] %v1097
      %1162 = vst [vmem:[%s241 + $0x5c] sm:$0xf] %v1098
      %1163 = vst [vmem:[%s241 + $0x60] sm:$0xf] %v1099
      %1164 = vst [vmem:[%s241 + $0x64] sm:$0xf] %v1100
      %1165 = vst [vmem:[%s241 + $0x68] sm:$0xf] %v1101
      %1166 = vst [vmem:[%s241 + $0x6c] sm:$0xf] %v1102
      %1167 = vst [vmem:[%s241 + $0x70] sm:$0xf] %v1103
      %1168 = vst [vmem:[%s241 + $0x74] sm:$0xf] %v1104
      %1169 = vst [vmem:[%s241 + $0x78] sm:$0xf] %v1105
      %1170 = vst [vmem:[%s241 + $0x7c] sm:$0xf] %v1106
      %v1171 = vpack.c.bf16 %v919, %v916
      %v1172 = vpack.c.bf16 %v925, %v922
      %v1173 = vpack.c.bf16 %v931, %v928
      %v1174 = vpack.c.bf16 %v937, %v934
      %v1175 = vpack.c.bf16 %v943, %v940
      %v1176 = vpack.c.bf16 %v949, %v946
      %v1177 = vpack.c.bf16 %v955, %v952
      %v1178 = vpack.c.bf16 %v961, %v958
      %v1179 = vpack.c.bf16 %v967, %v964
      %v1180 = vpack.c.bf16 %v973, %v970
      %v1181 = vpack.c.bf16 %v979, %v976
      %v1182 = vpack.c.bf16 %v985, %v982
      %v1183 = vpack.c.bf16 %v991, %v988
      %v1184 = vpack.c.bf16 %v997, %v994
      %v1185 = vpack.c.bf16 %v1003, %v1000
      %v1186 = vpack.c.bf16 %v1009, %v1006
      %v1203 = vunpack.c.l.b16 %v1171
      %v1204 = vunpack.c.h.b16 %v1171
      %v1205 = vunpack.c.l.b16 %v1172
      %v1206 = vunpack.c.h.b16 %v1172
      %v1207 = vunpack.c.l.b16 %v1173
      %v1208 = vunpack.c.h.b16 %v1173
      %v1209 = vunpack.c.l.b16 %v1174
      %v1210 = vunpack.c.h.b16 %v1174
      %v1211 = vunpack.c.l.b16 %v1175
      %v1212 = vunpack.c.h.b16 %v1175
      %v1213 = vunpack.c.l.b16 %v1176
      %v1214 = vunpack.c.h.b16 %v1176
      %v1215 = vunpack.c.l.b16 %v1177
      %v1216 = vunpack.c.h.b16 %v1177
      %v1217 = vunpack.c.l.b16 %v1178
      %v1218 = vunpack.c.h.b16 %v1178
      %v1219 = vunpack.c.l.b16 %v1179
      %v1220 = vunpack.c.h.b16 %v1179
      %v1221 = vunpack.c.l.b16 %v1180
      %v1222 = vunpack.c.h.b16 %v1180
      %v1223 = vunpack.c.l.b16 %v1181
      %v1224 = vunpack.c.h.b16 %v1181
      %v1225 = vunpack.c.l.b16 %v1182
      %v1226 = vunpack.c.h.b16 %v1182
      %v1227 = vunpack.c.l.b16 %v1183
      %v1228 = vunpack.c.h.b16 %v1183
      %v1229 = vunpack.c.l.b16 %v1184
      %v1230 = vunpack.c.h.b16 %v1184
      %v1231 = vunpack.c.l.b16 %v1185
      %v1232 = vunpack.c.h.b16 %v1185
      %v1233 = vunpack.c.l.b16 %v1186
      %v1234 = vunpack.c.h.b16 %v1186
      %v1235 = vpack.c.b16 %v1203, %v1203
      %v1236 = vpack.c.b16 %v1204, %v1204
      %v1237 = vpack.c.b16 %v1205, %v1205
      %v1238 = vpack.c.b16 %v1206, %v1206
      %v1239 = vpack.c.b16 %v1207, %v1207
      %v1240 = vpack.c.b16 %v1208, %v1208
      %v1241 = vpack.c.b16 %v1209, %v1209
      %v1242 = vpack.c.b16 %v1210, %v1210
      %v1243 = vpack.c.b16 %v1211, %v1211
      %v1244 = vpack.c.b16 %v1212, %v1212
      %v1245 = vpack.c.b16 %v1213, %v1213
      %v1246 = vpack.c.b16 %v1214, %v1214
      %v1247 = vpack.c.b16 %v1215, %v1215
      %v1248 = vpack.c.b16 %v1216, %v1216
      %v1249 = vpack.c.b16 %v1217, %v1217
      %v1250 = vpack.c.b16 %v1218, %v1218
      %v1251 = vpack.c.b16 %v1219, %v1219
      %v1252 = vpack.c.b16 %v1220, %v1220
      %v1253 = vpack.c.b16 %v1221, %v1221
      %v1254 = vpack.c.b16 %v1222, %v1222
      %v1255 = vpack.c.b16 %v1223, %v1223
      %v1256 = vpack.c.b16 %v1224, %v1224
      %v1257 = vpack.c.b16 %v1225, %v1225
      %v1258 = vpack.c.b16 %v1226, %v1226
      %v1259 = vpack.c.b16 %v1227, %v1227
      %v1260 = vpack.c.b16 %v1228, %v1228
      %v1261 = vpack.c.b16 %v1229, %v1229
      %v1262 = vpack.c.b16 %v1230, %v1230
      %v1263 = vpack.c.b16 %v1231, %v1231
      %v1264 = vpack.c.b16 %v1232, %v1232
      %v1265 = vpack.c.b16 %v1233, %v1233
      %v1266 = vpack.c.b16 %v1234, %v1234
      %1299 = vst [vmem:[%s247] sm:$0xf] %v1235
      %1300 = vst [vmem:[%s247 + $0x4] sm:$0xf] %v1236
      %1301 = vst [vmem:[%s247 + $0x8] sm:$0xf] %v1237
      %1302 = vst [vmem:[%s247 + $0xc] sm:$0xf] %v1238
      %1303 = vst [vmem:[%s247 + $0x10] sm:$0xf] %v1239
      %1304 = vst [vmem:[%s247 + $0x14] sm:$0xf] %v1240
      %1305 = vst [vmem:[%s247 + $0x18] sm:$0xf] %v1241
      %1306 = vst [vmem:[%s247 + $0x1c] sm:$0xf] %v1242
      %1307 = vst [vmem:[%s247 + $0x20] sm:$0xf] %v1243
      %1308 = vst [vmem:[%s247 + $0x24] sm:$0xf] %v1244
      %1309 = vst [vmem:[%s247 + $0x28] sm:$0xf] %v1245
      %1310 = vst [vmem:[%s247 + $0x2c] sm:$0xf] %v1246
      %1311 = vst [vmem:[%s247 + $0x30] sm:$0xf] %v1247
      %1312 = vst [vmem:[%s247 + $0x34] sm:$0xf] %v1248
      %1313 = vst [vmem:[%s247 + $0x38] sm:$0xf] %v1249
      %1314 = vst [vmem:[%s247 + $0x3c] sm:$0xf] %v1250
      %1315 = vst [vmem:[%s247 + $0x40] sm:$0xf] %v1251
      %1316 = vst [vmem:[%s247 + $0x44] sm:$0xf] %v1252
      %1317 = vst [vmem:[%s247 + $0x48] sm:$0xf] %v1253
      %1318 = vst [vmem:[%s247 + $0x4c] sm:$0xf] %v1254
      %1319 = vst [vmem:[%s247 + $0x50] sm:$0xf] %v1255
      %1320 = vst [vmem:[%s247 + $0x54] sm:$0xf] %v1256
      %1321 = vst [vmem:[%s247 + $0x58] sm:$0xf] %v1257
      %1322 = vst [vmem:[%s247 + $0x5c] sm:$0xf] %v1258
      %1323 = vst [vmem:[%s247 + $0x60] sm:$0xf] %v1259
      %1324 = vst [vmem:[%s247 + $0x64] sm:$0xf] %v1260
      %1325 = vst [vmem:[%s247 + $0x68] sm:$0xf] %v1261
      %1326 = vst [vmem:[%s247 + $0x6c] sm:$0xf] %v1262
      %1327 = vst [vmem:[%s247 + $0x70] sm:$0xf] %v1263
      %1328 = vst [vmem:[%s247 + $0x74] sm:$0xf] %v1264
      %1329 = vst [vmem:[%s247 + $0x78] sm:$0xf] %v1265
      %1330 = vst [vmem:[%s247 + $0x7c] sm:$0xf] %v1266
      %v1331 = vpack.c.bf16 %v920, %v917
      %v1332 = vpack.c.bf16 %v926, %v923
      %v1333 = vpack.c.bf16 %v932, %v929
      %v1334 = vpack.c.bf16 %v938, %v935
      %v1335 = vpack.c.bf16 %v944, %v941
      %v1336 = vpack.c.bf16 %v950, %v947
      %v1337 = vpack.c.bf16 %v956, %v953
      %v1338 = vpack.c.bf16 %v962, %v959
      %v1339 = vpack.c.bf16 %v968, %v965
      %v1340 = vpack.c.bf16 %v974, %v971
      %v1341 = vpack.c.bf16 %v980, %v977
      %v1342 = vpack.c.bf16 %v986, %v983
      %v1343 = vpack.c.bf16 %v992, %v989
      %v1344 = vpack.c.bf16 %v998, %v995
      %v1345 = vpack.c.bf16 %v1004, %v1001
      %v1346 = vpack.c.bf16 %v1010, %v1007
      %v1363 = vunpack.c.l.b16 %v1331
      %v1364 = vunpack.c.h.b16 %v1331
      %v1365 = vunpack.c.l.b16 %v1332
      %v1366 = vunpack.c.h.b16 %v1332
      %v1367 = vunpack.c.l.b16 %v1333
      %v1368 = vunpack.c.h.b16 %v1333
      %v1369 = vunpack.c.l.b16 %v1334
      %v1370 = vunpack.c.h.b16 %v1334
      %v1371 = vunpack.c.l.b16 %v1335
      %v1372 = vunpack.c.h.b16 %v1335
      %v1373 = vunpack.c.l.b16 %v1336
      %v1374 = vunpack.c.h.b16 %v1336
      %v1375 = vunpack.c.l.b16 %v1337
      %v1376 = vunpack.c.h.b16 %v1337
      %v1377 = vunpack.c.l.b16 %v1338
      %v1378 = vunpack.c.h.b16 %v1338
      %v1379 = vunpack.c.l.b16 %v1339
      %v1380 = vunpack.c.h.b16 %v1339
      %v1381 = vunpack.c.l.b16 %v1340
      %v1382 = vunpack.c.h.b16 %v1340
      %v1383 = vunpack.c.l.b16 %v1341
      %v1384 = vunpack.c.h.b16 %v1341
      %v1385 = vunpack.c.l.b16 %v1342
      %v1386 = vunpack.c.h.b16 %v1342
      %v1387 = vunpack.c.l.b16 %v1343
      %v1388 = vunpack.c.h.b16 %v1343
      %v1389 = vunpack.c.l.b16 %v1344
      %v1390 = vunpack.c.h.b16 %v1344
      %v1391 = vunpack.c.l.b16 %v1345
      %v1392 = vunpack.c.h.b16 %v1345
      %v1393 = vunpack.c.l.b16 %v1346
      %v1394 = vunpack.c.h.b16 %v1346
      %v1395 = vpack.c.b16 %v1363, %v1363
      %v1396 = vpack.c.b16 %v1364, %v1364
      %v1397 = vpack.c.b16 %v1365, %v1365
      %v1398 = vpack.c.b16 %v1366, %v1366
      %v1399 = vpack.c.b16 %v1367, %v1367
      %v1400 = vpack.c.b16 %v1368, %v1368
      %v1401 = vpack.c.b16 %v1369, %v1369
      %v1402 = vpack.c.b16 %v1370, %v1370
      %v1403 = vpack.c.b16 %v1371, %v1371
      %v1404 = vpack.c.b16 %v1372, %v1372
      %v1405 = vpack.c.b16 %v1373, %v1373
      %v1406 = vpack.c.b16 %v1374, %v1374
      %v1407 = vpack.c.b16 %v1375, %v1375
      %v1408 = vpack.c.b16 %v1376, %v1376
      %v1409 = vpack.c.b16 %v1377, %v1377
      %v1410 = vpack.c.b16 %v1378, %v1378
      %v1411 = vpack.c.b16 %v1379, %v1379
      %v1412 = vpack.c.b16 %v1380, %v1380
      %v1413 = vpack.c.b16 %v1381, %v1381
      %v1414 = vpack.c.b16 %v1382, %v1382
      %v1415 = vpack.c.b16 %v1383, %v1383
      %v1416 = vpack.c.b16 %v1384, %v1384
      %v1417 = vpack.c.b16 %v1385, %v1385
      %v1418 = vpack.c.b16 %v1386, %v1386
      %v1419 = vpack.c.b16 %v1387, %v1387
      %v1420 = vpack.c.b16 %v1388, %v1388
      %v1421 = vpack.c.b16 %v1389, %v1389
      %v1422 = vpack.c.b16 %v1390, %v1390
      %v1423 = vpack.c.b16 %v1391, %v1391
      %v1424 = vpack.c.b16 %v1392, %v1392
      %v1425 = vpack.c.b16 %v1393, %v1393
      %v1426 = vpack.c.b16 %v1394, %v1394
      %1459 = vst [vmem:[%s253] sm:$0xf] %v1395
      %1460 = vst [vmem:[%s253 + $0x4] sm:$0xf] %v1396
      %1461 = vst [vmem:[%s253 + $0x8] sm:$0xf] %v1397
      %1462 = vst [vmem:[%s253 + $0xc] sm:$0xf] %v1398
      %1463 = vst [vmem:[%s253 + $0x10] sm:$0xf] %v1399
      %1464 = vst [vmem:[%s253 + $0x14] sm:$0xf] %v1400
      %1465 = vst [vmem:[%s253 + $0x18] sm:$0xf] %v1401
      %1466 = vst [vmem:[%s253 + $0x1c] sm:$0xf] %v1402
      %1467 = vst [vmem:[%s253 + $0x20] sm:$0xf] %v1403
      %1468 = vst [vmem:[%s253 + $0x24] sm:$0xf] %v1404
      %1469 = vst [vmem:[%s253 + $0x28] sm:$0xf] %v1405
      %1470 = vst [vmem:[%s253 + $0x2c] sm:$0xf] %v1406
      %1471 = vst [vmem:[%s253 + $0x30] sm:$0xf] %v1407
      %1472 = vst [vmem:[%s253 + $0x34] sm:$0xf] %v1408
      %1473 = vst [vmem:[%s253 + $0x38] sm:$0xf] %v1409
      %1474 = vst [vmem:[%s253 + $0x3c] sm:$0xf] %v1410
      %1475 = vst [vmem:[%s253 + $0x40] sm:$0xf] %v1411
      %1476 = vst [vmem:[%s253 + $0x44] sm:$0xf] %v1412
      %1477 = vst [vmem:[%s253 + $0x48] sm:$0xf] %v1413
      %1478 = vst [vmem:[%s253 + $0x4c] sm:$0xf] %v1414
      %1479 = vst [vmem:[%s253 + $0x50] sm:$0xf] %v1415
      %1480 = vst [vmem:[%s253 + $0x54] sm:$0xf] %v1416
      %1481 = vst [vmem:[%s253 + $0x58] sm:$0xf] %v1417
      %1482 = vst [vmem:[%s253 + $0x5c] sm:$0xf] %v1418
      %1483 = vst [vmem:[%s253 + $0x60] sm:$0xf] %v1419
      %1484 = vst [vmem:[%s253 + $0x64] sm:$0xf] %v1420
      %1485 = vst [vmem:[%s253 + $0x68] sm:$0xf] %v1421
      %1486 = vst [vmem:[%s253 + $0x6c] sm:$0xf] %v1422
      %1487 = vst [vmem:[%s253 + $0x70] sm:$0xf] %v1423
      %1488 = vst [vmem:[%s253 + $0x74] sm:$0xf] %v1424
      %1489 = vst [vmem:[%s253 + $0x78] sm:$0xf] %v1425
      %1490 = vst [vmem:[%s253 + $0x7c] sm:$0xf] %v1426
      %s1491 = smul.u32 32, %s17
      %p1492 = scmp.lt.s32.totalorder %s1491, 63
      %s1493 = scalar_select %p1492, %s1491, 63
      %s1494 = smul.addr %s1493, 4
      %s1495 = scalar_lea.vmem %s3, %s1494
      %s1496 = smul.u32 32, %s17
      %p1497 = scmp.lt.s32.totalorder %s1496, 63
      %s1498 = scalar_select %p1497, %s1496, 63
      %s1499 = smul.addr %s1498, 4
      %s1500 = scalar_lea.vmem %s4, %s1499
      %s1501 = smul.u32 32, %s17
      %p1502 = scmp.lt.s32.totalorder %s1501, 63
      %s1503 = scalar_select %p1502, %s1501, 63
      %s1504 = smul.addr %s1503, 4
      %s1505 = scalar_lea.vmem %s5, %s1504
      // Predicated region
      $region33: #{dense_layer_forward.5} parent=31 // pred_check
        %p1506 = pneg %p103
      $region34: #{dense_layer_forward.5} parent=31 // pred_check_branch
        %1508 = sbr.rel (%p1506) target = $region36
      $region35: #{dense_layer_forward.5} parent=31 // pred_region
        %s1509 = smul.u32 32, %s17
      $region36: #{dense_layer_forward.5} parent=31 // pred_fallthru
        _
      // Predicated region
      $region37: #{dense_layer_forward.5} parent=31 // pred_check
        %p1510 = pneg %p129
      $region38: #{dense_layer_forward.5} parent=31 // pred_check_branch
        %1512 = sbr.rel (%p1510) target = $region40
      $region39: #{dense_layer_forward.5} parent=31 // pred_region
        %s1513 = smul.u32 32, %s17
      $region40: #{dense_layer_forward.5} parent=31 // pred_fallthru
        _
      // Predicated region
      $region41: #{dense_layer_forward.5} parent=31 // pred_check
        %p1514 = pneg %p155
      $region42: #{dense_layer_forward.5} parent=31 // pred_check_branch
        %1516 = sbr.rel (%p1514) target = $region44
      $region43: #{dense_layer_forward.5} parent=31 // pred_region
        %s1517 = smul.u32 32, %s17
      $region44: #{dense_layer_forward.5} parent=31 // pred_fallthru
        _
    $region32: #{dense_layer_forward.5} parent=5 // pred_fallthru
      _
    %p1518 = scmp.le.s32.totalorder 2, %s12
    // Predicated region
    $region45: #{dense_layer_forward.5} parent=5 // pred_check
      %p1519 = pneg %p1518
    $region46: #{dense_layer_forward.5} parent=5 // pred_check_branch
      %1521 = sbr.rel (%p1519) target = $region48
    $region47: #{dense_layer_forward.5} parent=5 // pred_region
      %s1522 = ssub.s32 %s12, 2
      // Predicated region
      $region49: #{dense_layer_forward.5} parent=47 // pred_check
        %p1523 = pneg %p109
      $region50: #{dense_layer_forward.5} parent=47 // pred_check_branch
        %1525 = sbr.rel (%p1523) target = $region52
      $region51: #{dense_layer_forward.5} parent=47 // pred_region
        %s1526 = smul.u32 32, %s18
        %p1527 = scmp.lt.s32.totalorder %s1526, 63
        %s1528 = scalar_select %p1527, %s1526, 63
        %s1529 = smul.addr %s1528, 4
        %s1530 = scalar_lea.vmem %s3, %s1529
      $region52: #{dense_layer_forward.5} parent=47 // pred_fallthru
        _
      // Predicated region
      $region53: #{dense_layer_forward.5} parent=47 // pred_check
        %p1531 = pneg %p135
      $region54: #{dense_layer_forward.5} parent=47 // pred_check_branch
        %1533 = sbr.rel (%p1531) target = $region56
      $region55: #{dense_layer_forward.5} parent=47 // pred_region
        %s1534 = smul.u32 32, %s18
        %p1535 = scmp.lt.s32.totalorder %s1534, 63
        %s1536 = scalar_select %p1535, %s1534, 63
        %s1537 = smul.addr %s1536, 4
        %s1538 = scalar_lea.vmem %s4, %s1537
      $region56: #{dense_layer_forward.5} parent=47 // pred_fallthru
        _
      // Predicated region
      $region57: #{dense_layer_forward.5} parent=47 // pred_check
        %p1539 = pneg %p161
      $region58: #{dense_layer_forward.5} parent=47 // pred_check_branch
        %1541 = sbr.rel (%p1539) target = $region60
      $region59: #{dense_layer_forward.5} parent=47 // pred_region
        %s1542 = smul.u32 32, %s18
        %p1543 = scmp.lt.s32.totalorder %s1542, 63
        %s1544 = scalar_select %p1543, %s1542, 63
        %s1545 = smul.addr %s1544, 4
        %s1546 = scalar_lea.vmem %s5, %s1545
      $region60: #{dense_layer_forward.5} parent=47 // pred_fallthru
        _
    $region48: #{dense_layer_forward.5} parent=5 // pred_fallthru
      _
  $region6: #{dense_layer_forward.5} parent=0 // loop_footer
    %s16 = sadd.s32 1, %s12
  $region7: #{dense_layer_forward.5} parent=0 // loop_footer_branch
    %11 = sbr.rel target = $region3
  $region8: #{dense_layer_forward.5} parent=0 // loop_exit
    _

// kernel: dense_layer_forward.6
$region0: #{dense_layer_forward.6}
  #allocation0 [shape = 'u32[]', space=smem, size = 0x4, offset = 0x4, fixed_abs, tag = 'smem constant byte address 0x4 - core index']
  #allocation1 [shape = 'u32[144,128]{1,0:T(1,128)}', space=vmem, size = 0x12000, scoped, tag = 'internal scratch']
  %s0 = inlined_call_operand.vmem [shape: bf16[4,352,128], index: 0, kind: input, shape index: {}]
  %s1 = inlined_call_operand.vmem [shape: bf16[9,128,128], index: 1, kind: input, shape index: {}]
  %s2 = inlined_call_operand.vmem [shape: f32[1,128], index: 2, kind: input, shape index: {}]
  %s3 = inlined_call_operand.vmem [shape: bf16[4,256,128], index: 3, kind: output, shape index: {}]
  %s4 = sld [smem:[#allocation0]]
  $region45: #{dense_layer_forward.6} parent=0
    _
  %s6 = ssub.s32 1, %s4
  %s7 = scalar_select 0, %s6, %s4
  loop: start=0, step=1, limit=6
  $region2: #{dense_layer_forward.6} parent=0 // loop_pre_header
    _
  $region3: #{dense_layer_forward.6} parent=0 // loop_header
    %s9 = sphi 0, %s13
    %p10 = scmp.ge.s32.totalorder %s9, 6
    %s19 = sphi 0, %s21
    %s22 = sphi 0, %s19
    %s23 = sphi 0, %s22
    %s39 = sphi 0, %s23
    %s43 = sphi 0, %s43
    %s45 = sphi 0, %s43
    %s46 = sphi 0, %s45
    %s60 = sphi 0, %s46
    %s64 = sphi 0, %s64
    %s66 = sphi 0, %s64
    %s67 = sphi 0, %s66
    %s81 = sphi 0, %s67
    %s87 = sphi 0, %s89
    %s90 = sphi 0, %s87
    %s91 = sphi 0, %s90
    %s107 = sphi 0, %s91
  $region4: #{dense_layer_forward.6} parent=0 // loop_header_branch
    %12 = sbr.rel (%p10) target = $region8
  $region5: #{dense_layer_forward.6} parent=0 // loop_body
    %s14 = ssub.s32 %s9, 1
    %s15 = ssub.s32 %s9, 2
    %s16 = sadd.s32 %s9, 1
    %s17 = ssub.s32 %s9, %s16
    %p18 = scmp.eq.s32.totalorder %s17, 0
    %s20 = sadd.s32 %s19, 1
    %s21 = scalar_select %p18, %s19, %s20
    %p24 = pneg %p18
    %p25 = scmp.eq.s32.totalorder %s9, 3
    %p26 = por %p24, %p25
    %p27 = scmp.ne.s32.totalorder %s19, %s22
    %p28 = scmp.eq.s32.totalorder %s9, 0
    %p29 = por %p27, %p28
    %p30 = scmp.ne.s32.totalorder %s19, %s22
    %p31 = scmp.eq.s32.totalorder %s14, 3
    %p32 = por %p30, %p31
    %p33 = scmp.ne.s32.totalorder %s22, %s23
    %p34 = scmp.eq.s32.totalorder %s14, 0
    %p35 = por %p33, %p34
    %p36 = scmp.ne.s32.totalorder %s22, %s23
    %p37 = scmp.eq.s32.totalorder %s15, 3
    %p38 = por %p36, %p37
    %p40 = scmp.ne.s32.totalorder %s23, %s39
    %p41 = scmp.eq.s32.totalorder %s15, 0
    %p42 = por %p40, %p41
    %s44 = sadd.s32 %s43, 1
    %p47 = scmp.eq.s32.totalorder %s9, 3
    %p48 = scmp.ne.s32.totalorder %s43, %s45
    %p49 = scmp.eq.s32.totalorder %s9, 0
    %p50 = por %p48, %p49
    %p51 = scmp.ne.s32.totalorder %s43, %s45
    %p52 = scmp.eq.s32.totalorder %s14, 3
    %p53 = por %p51, %p52
    %p54 = scmp.ne.s32.totalorder %s45, %s46
    %p55 = scmp.eq.s32.totalorder %s14, 0
    %p56 = por %p54, %p55
    %p57 = scmp.ne.s32.totalorder %s45, %s46
    %p58 = scmp.eq.s32.totalorder %s15, 3
    %p59 = por %p57, %p58
    %p61 = scmp.ne.s32.totalorder %s46, %s60
    %p62 = scmp.eq.s32.totalorder %s15, 0
    %p63 = por %p61, %p62
    %s65 = sadd.s32 %s64, 1
    %p68 = scmp.eq.s32.totalorder %s9, 3
    %p69 = scmp.ne.s32.totalorder %s64, %s66
    %p70 = scmp.eq.s32.totalorder %s9, 0
    %p71 = por %p69, %p70
    %p72 = scmp.ne.s32.totalorder %s64, %s66
    %p73 = scmp.eq.s32.totalorder %s14, 3
    %p74 = por %p72, %p73
    %p75 = scmp.ne.s32.totalorder %s66, %s67
    %p76 = scmp.eq.s32.totalorder %s14, 0
    %p77 = por %p75, %p76
    %p78 = scmp.ne.s32.totalorder %s66, %s67
    %p79 = scmp.eq.s32.totalorder %s15, 3
    %p80 = por %p78, %p79
    %p82 = scmp.ne.s32.totalorder %s67, %s81
    %p83 = scmp.eq.s32.totalorder %s15, 0
    %p84 = por %p82, %p83
    %s85 = ssub.s32 %s9, %s16
    %p86 = scmp.eq.s32.totalorder %s85, 0
    %s88 = sadd.s32 %s87, 1
    %s89 = scalar_select %p86, %s87, %s88
    %p92 = pneg %p86
    %p93 = scmp.eq.s32.totalorder %s9, 3
    %p94 = por %p92, %p93
    %p95 = scmp.ne.s32.totalorder %s87, %s90
    %p96 = scmp.eq.s32.totalorder %s9, 0
    %p97 = por %p95, %p96
    %p98 = scmp.ne.s32.totalorder %s87, %s90
    %p99 = scmp.eq.s32.totalorder %s14, 3
    %p100 = por %p98, %p99
    %p101 = scmp.ne.s32.totalorder %s90, %s91
    %p102 = scmp.eq.s32.totalorder %s14, 0
    %p103 = por %p101, %p102
    %p104 = scmp.ne.s32.totalorder %s90, %s91
    %p105 = scmp.eq.s32.totalorder %s15, 3
    %p106 = por %p104, %p105
    %p108 = scmp.ne.s32.totalorder %s91, %s107
    %p109 = scmp.eq.s32.totalorder %s15, 0
    %p110 = por %p108, %p109
    %p111 = scmp.le.s32.totalorder 1, %s9
    %p112 = scmp.lt.s32.totalorder %s9, 5
    %p113 = pnand %p111, %p112
    %p114 = pneg %p113
    // Predicated region
    $region9: #{dense_layer_forward.6} parent=5 // pred_check
      _
    $region10: #{dense_layer_forward.6} parent=5 // pred_check_branch
      %116 = sbr.rel (%p113) target = $region12
    $region11: #{dense_layer_forward.6} parent=5 // pred_region
      %s117 = ssub.s32 %s9, 1
      // Predicated region
      $region13: #{dense_layer_forward.6} parent=11 // pred_check
        %p118 = pneg %p56
      $region14: #{dense_layer_forward.6} parent=11 // pred_check_branch
        %120 = sbr.rel (%p118) target = $region16
      $region15: #{dense_layer_forward.6} parent=11 // pred_region
        _
      $region16: #{dense_layer_forward.6} parent=11 // pred_fallthru
        _
      // Predicated region
      $region17: #{dense_layer_forward.6} parent=11 // pred_check
        %p121 = pneg %p77
      $region18: #{dense_layer_forward.6} parent=11 // pred_check_branch
        %123 = sbr.rel (%p121) target = $region20
      $region19: #{dense_layer_forward.6} parent=11 // pred_region
        _
      $region20: #{dense_layer_forward.6} parent=11 // pred_fallthru
        _
    $region12: #{dense_layer_forward.6} parent=5 // pred_fallthru
      _
    %p124 = scmp.lt.s32.totalorder %s9, 4
    // Predicated region
    $region21: #{dense_layer_forward.6} parent=5 // pred_check
      %p125 = pneg %p124
    $region22: #{dense_layer_forward.6} parent=5 // pred_check_branch
      %127 = sbr.rel (%p125) target = $region24
    $region23: #{dense_layer_forward.6} parent=5 // pred_region
      // Predicated region
      $region25: #{dense_layer_forward.6} parent=23 // pred_check
        %p128 = pneg %p29
      $region26: #{dense_layer_forward.6} parent=23 // pred_check_branch
        %130 = sbr.rel (%p128) target = $region28
      $region27: #{dense_layer_forward.6} parent=23 // pred_region
        %p131 = scmp.lt.s32.totalorder %s9, 3
        %s132 = scalar_select %p131, %s9, 3
        %s133 = smul.addr %s132, 44
        %s134 = smul.addr %s133, 4
        %s135 = scalar_lea.vmem %s0, %s134
      $region28: #{dense_layer_forward.6} parent=23 // pred_fallthru
        _
    $region24: #{dense_layer_forward.6} parent=5 // pred_fallthru
      _
    %p136 = scmp.le.s32.totalorder 1, %s9
    %p137 = scmp.lt.s32.totalorder %s9, 5
    %p138 = pnand %p136, %p137
    %p139 = pneg %p138
    // Predicated region
    $region29: #{dense_layer_forward.6} parent=5 // pred_check
      _
    $region30: #{dense_layer_forward.6} parent=5 // pred_check_branch
      %141 = sbr.rel (%p138) target = $region32
    $region31: #{dense_layer_forward.6} parent=5 // pred_region
      %s142 = ssub.s32 %s9, 1
      %p143 = scmp.lt.s32.totalorder %s14, 3
      %s144 = scalar_select %p143, %s14, 3
      %s145 = smul.addr %s144, 44
      %s146 = smul.addr %s145, 4
      %s147 = scalar_lea.vmem %s0, %s146
      %p148 = pneg %p35
      %p149 = pneg %p32
      %p150 = pneg %p56
      %p151 = pneg %p53
      %p152 = pneg %p77
      %p153 = pneg %p74
      %p154 = pneg %p103
      %p155 = pneg %p100
      %p156 = scmp.lt.s32.totalorder %s14, 3
      %s157 = scalar_select %p156, %s14, 3
      %s158 = smul.addr %s157, 32
      %s159 = smul.addr %s158, 4
      %s160 = scalar_lea.vmem %s3, %s159
      %p161 = scmp.lt.s32.totalorder %s14, 3
      %s162 = scalar_select %p161, %s14, 3
      %s163 = smul.addr %s162, 44
      %s164 = smul.addr %s163, 4
      %s165 = scalar_lea.vmem %s0, %s164
      %p166 = scmp.lt.s32.totalorder %s14, 3
      %s167 = scalar_select %p166, %s14, 3
      %s168 = smul.addr %s167, 32
      %s169 = smul.addr %s168, 4
      %s170 = scalar_lea.vmem %s3, %s169
      %v172 = vld [vmem:[%s165] sm:$0xf]
      %v173 = vld [vmem:[%s165 + $0x4] sm:$0xf]
      %v174 = vld [vmem:[%s165 + $0x8] sm:$0xf]
      %v175 = vld [vmem:[%s165 + $0xc] sm:$0xf]
      %v176 = vld [vmem:[%s165 + $0x10] sm:$0xf]
      %v177 = vld [vmem:[%s165 + $0x14] sm:$0xf]
      %v178 = vld [vmem:[%s165 + $0x18] sm:$0xf]
      %v179 = vld [vmem:[%s165 + $0x1c] sm:$0xf]
      %v180 = vld [vmem:[%s165 + $0x20] sm:$0xf]
      %v181 = vld [vmem:[%s165 + $0x24] sm:$0xf]
      %v182 = vld [vmem:[%s165 + $0x28] sm:$0xf]
      %v183 = vld [vmem:[%s165 + $0x2c] sm:$0xf]
      %v184 = vld [vmem:[%s165 + $0x30] sm:$0xf]
      %v185 = vld [vmem:[%s165 + $0x34] sm:$0xf]
      %v186 = vld [vmem:[%s165 + $0x38] sm:$0xf]
      %v187 = vld [vmem:[%s165 + $0x3c] sm:$0xf]
      %v188 = vld [vmem:[%s165 + $0x40] sm:$0xf]
      %v189 = vld [vmem:[%s165 + $0x44] sm:$0xf]
      %v190 = vld [vmem:[%s165 + $0x48] sm:$0xf]
      %v191 = vld [vmem:[%s165 + $0x4c] sm:$0xf]
      %v192 = vld [vmem:[%s165 + $0x50] sm:$0xf]
      %v193 = vld [vmem:[%s165 + $0x54] sm:$0xf]
      %v194 = vld [vmem:[%s165 + $0x58] sm:$0xf]
      %v195 = vld [vmem:[%s165 + $0x5c] sm:$0xf]
      %v196 = vld [vmem:[%s165 + $0x60] sm:$0xf]
      %v197 = vld [vmem:[%s165 + $0x64] sm:$0xf]
      %v198 = vld [vmem:[%s165 + $0x68] sm:$0xf]
      %v199 = vld [vmem:[%s165 + $0x6c] sm:$0xf]
      %v200 = vld [vmem:[%s165 + $0x70] sm:$0xf]
      %v201 = vld [vmem:[%s165 + $0x74] sm:$0xf]
      %v202 = vld [vmem:[%s165 + $0x78] sm:$0xf]
      %v203 = vld [vmem:[%s165 + $0x7c] sm:$0xf]
      %v204 = vld [vmem:[%s165 + $0x80] sm:$0xf]
      %v205 = vld [vmem:[%s165 + $0x84] sm:$0xf]
      %v206 = vld [vmem:[%s1] sm:$0xf]
      %v207 = vld [vmem:[%s1 + $0x4] sm:$0xf]
      %v208 = vld [vmem:[%s1 + $0x8] sm:$0xf]
      %v209 = vld [vmem:[%s1 + $0xc] sm:$0xf]
      %v210 = vld [vmem:[%s1 + $0x10] sm:$0xf]
      %v211 = vld [vmem:[%s1 + $0x14] sm:$0xf]
      %v212 = vld [vmem:[%s1 + $0x18] sm:$0xf]
      %v213 = vld [vmem:[%s1 + $0x1c] sm:$0xf]
      %v214 = vld [vmem:[%s1 + $0x20] sm:$0xf]
      %v215 = vld [vmem:[%s1 + $0x24] sm:$0xf]
      %v216 = vld [vmem:[%s1 + $0x28] sm:$0xf]
      %v217 = vld [vmem:[%s1 + $0x2c] sm:$0xf]
      %v218 = vld [vmem:[%s1 + $0x30] sm:$0xf]
      %v219 = vld [vmem:[%s1 + $0x34] sm:$0xf]
      %v220 = vld [vmem:[%s1 + $0x38] sm:$0xf]
      %v221 = vld [vmem:[%s1 + $0x3c] sm:$0xf]
      %v256 = vunpack.c.l.b16 %v172
      %v257 = vunpack.c.l.b16 %v173
      %v258 = vunpack.c.l.b16 %v174
      %v259 = vunpack.c.l.b16 %v175
      %v260 = vunpack.c.l.b16 %v176
      %v261 = vunpack.c.l.b16 %v177
      %v262 = vunpack.c.l.b16 %v178
      %v263 = vunpack.c.l.b16 %v179
      %v264 = vunpack.c.l.b16 %v180
      %v265 = vunpack.c.l.b16 %v181
      %v266 = vunpack.c.l.b16 %v182
      %v267 = vunpack.c.l.b16 %v183
      %v268 = vunpack.c.l.b16 %v184
      %v269 = vunpack.c.l.b16 %v185
      %v270 = vunpack.c.l.b16 %v186
      %v271 = vunpack.c.l.b16 %v187
      %v272 = vunpack.c.l.b16 %v188
      %v273 = vunpack.c.l.b16 %v189
      %v274 = vunpack.c.l.b16 %v190
      %v275 = vunpack.c.l.b16 %v191
      %v276 = vunpack.c.l.b16 %v192
      %v277 = vunpack.c.l.b16 %v193
      %v278 = vunpack.c.l.b16 %v194
      %v279 = vunpack.c.l.b16 %v195
      %v280 = vunpack.c.l.b16 %v196
      %v281 = vunpack.c.l.b16 %v197
      %v282 = vunpack.c.l.b16 %v198
      %v283 = vunpack.c.l.b16 %v199
      %v284 = vunpack.c.l.b16 %v200
      %v285 = vunpack.c.l.b16 %v201
      %v286 = vunpack.c.l.b16 %v202
      %v287 = vunpack.c.l.b16 %v203
      %v288 = vunpack.c.l.b16 %v204
      %v289 = vunpack.c.l.b16 %v205
      %v290 = vpack.c.b16 %v257, %v256
      %v291 = vpack.c.b16 %v259, %v258
      %v292 = vpack.c.b16 %v261, %v260
      %v293 = vpack.c.b16 %v263, %v262
      %v294 = vpack.c.b16 %v265, %v264
      %v295 = vpack.c.b16 %v267, %v266
      %v296 = vpack.c.b16 %v269, %v268
      %v297 = vpack.c.b16 %v271, %v270
      %v298 = vpack.c.b16 %v273, %v272
      %v299 = vpack.c.b16 %v275, %v274
      %v300 = vpack.c.b16 %v277, %v276
      %v301 = vpack.c.b16 %v279, %v278
      %v302 = vpack.c.b16 %v281, %v280
      %v303 = vpack.c.b16 %v283, %v282
      %v304 = vpack.c.b16 %v285, %v284
      %v305 = vpack.c.b16 %v287, %v286
      %v306 = vpack.c.b16 %v289, %v288
      %v340 = vunpack.c.l.b16 %v206
      %v341 = vunpack.c.l.b16 %v207
      %v342 = vunpack.c.l.b16 %v208
      %v343 = vunpack.c.l.b16 %v209
      %v344 = vunpack.c.l.b16 %v210
      %v345 = vunpack.c.l.b16 %v211
      %v346 = vunpack.c.l.b16 %v212
      %v347 = vunpack.c.l.b16 %v213
      %v348 = vunpack.c.l.b16 %v214
      %v349 = vunpack.c.l.b16 %v215
      %v350 = vunpack.c.l.b16 %v216
      %v351 = vunpack.c.l.b16 %v217
      %v352 = vunpack.c.l.b16 %v218
      %v353 = vunpack.c.l.b16 %v219
      %v354 = vunpack.c.l.b16 %v220
      %v355 = vunpack.c.l.b16 %v221
      %v356 = vpack.c.b16 %v341, %v340
      %v357 = vpack.c.b16 %v343, %v342
      %v358 = vpack.c.b16 %v345, %v344
      %v359 = vpack.c.b16 %v347, %v346
      %v360 = vpack.c.b16 %v349, %v348
      %v361 = vpack.c.b16 %v351, %v350
      %v362 = vpack.c.b16 %v353, %v352
      %v363 = vpack.c.b16 %v355, %v354
      %372 = vmatprep.subr.bf16.mxu0 0
      %373 = vmatpush1.bf16.msra.mxu0 %v356
      %374 = vmatprep.subr.bf16.mxu0 0
      %375 = vmatpush1.bf16.msra.mxu0 %v357
      %376 = vmatprep.subr.bf16.mxu0 0
      %377 = vmatpush1.bf16.msra.mxu0 %v358
      %378 = vmatprep.subr.bf16.mxu0 0
      %379 = vmatpush1.bf16.msra.mxu0 %v359
      %380 = vmatprep.subr.bf16.mxu0 0
      %381 = vmatpush1.bf16.msra.mxu0 %v360
      %382 = vmatprep.subr.bf16.mxu0 0
      %383 = vmatpush1.bf16.msra.mxu0 %v361
      %384 = vmatprep.subr.bf16.mxu0 0
      %385 = vmatpush1.bf16.msra.mxu0 %v362
      %386 = vmatprep.subr.bf16.mxu0 0
      %387 = vmatpush1.bf16.msra.mxu0 %v363
      %388 = vmatprep.subr.bf16.mxu0 0
      %389 = vmatpush1.bf16.msra.mxu0 0
      %390 = vmatprep.subr.bf16.mxu0 0
      %391 = vmatpush1.bf16.msra.mxu0 0
      %392 = vmatprep.subr.bf16.mxu0 0
      %393 = vmatpush1.bf16.msra.mxu0 0
      %394 = vmatprep.subr.bf16.mxu0 0
      %395 = vmatpush1.bf16.msra.mxu0 0
      %396 = vmatprep.subr.bf16.mxu0 0
      %397 = vmatpush1.bf16.msra.mxu0 0
      %398 = vmatprep.subr.bf16.mxu0 0
      %399 = vmatpush1.bf16.msra.mxu0 0
      %400 = vmatprep.subr.bf16.mxu0 0
      %401 = vmatpush1.bf16.msra.mxu0 0
      %402 = vmatprep.subr.bf16.mxu0 0
      %403 = vmatpush1.bf16.msra.mxu0 0
      %404 = vmatprep.mubr.bf16.mxu0 0
      %405 = vmatmul.mubr.bf16.gmra.mrb[0].mxu0 %v290
      %v406 = vpop.f32.mrb[0].mxu0
      %v407 = vadd.f32 0.0, %v406
      %v408 = vpop.f32.mrb[0].mxu0
      %v409 = vpop.f32.mrb[0].mxu0
      %v410 = vadd.f32 0.0, %v409
      %v411 = vpop.f32.mrb[0].mxu0
      %412 = vmatprep.mubr.bf16.mxu0 0
      %413 = vmatmul.mubr.bf16.gmra.mrb[0].mxu0 %v291
      %v414 = vpop.f32.mrb[0].mxu0
      %v415 = vadd.f32 0.0, %v414
      %v416 = vpop.f32.mrb[0].mxu0
      %v417 = vpop.f32.mrb[0].mxu0
      %v418 = vadd.f32 0.0, %v417
      %v419 = vpop.f32.mrb[0].mxu0
      %420 = vmatprep.mubr.bf16.mxu0 0
      %421 = vmatmul.mubr.bf16.gmra.mrb[0].mxu0 %v292
      %v422 = vpop.f32.mrb[0].mxu0
      %v423 = vadd.f32 0.0, %v422
      %v424 = vpop.f32.mrb[0].mxu0
      %v425 = vpop.f32.mrb[0].mxu0
      %v426 = vadd.f32 0.0, %v425
      %v427 = vpop.f32.mrb[0].mxu0
      %428 = vmatprep.mubr.bf16.mxu0 0
      %429 = vmatmul.mubr.bf16.gmra.mrb[0].mxu0 %v293
      %v430 = vpop.f32.mrb[0].mxu0
      %v431 = vadd.f32 0.0, %v430
      %v432 = vpop.f32.mrb[0].mxu0
      %v433 = vpop.f32.mrb[0].mxu0
      %v434 = vadd.f32 0.0, %v433
      %v435 = vpop.f32.mrb[0].mxu0
      %436 = vmatprep.mubr.bf16.mxu0 0
      %437 = vmatmul.mubr.bf16.gmra.mrb[0].mxu0 %v294
      %v438 = vpop.f32.mrb[0].mxu0
      %v439 = vadd.f32 0.0, %v438
      %v440 = vpop.f32.mrb[0].mxu0
      %v441 = vpop.f32.mrb[0].mxu0
      %v442 = vadd.f32 0.0, %v441
      %v443 = vpop.f32.mrb[0].mxu0
      %444 = vmatprep.mubr.bf16.mxu0 0
      %445 = vmatmul.mubr.bf16.gmra.mrb[0].mxu0 %v295
      %v446 = vpop.f32.mrb[0].mxu0
      %v447 = vadd.f32 0.0, %v446
      %v448 = vpop.f32.mrb[0].mxu0
      %v449 = vpop.f32.mrb[0].mxu0
      %v450 = vadd.f32 0.0, %v449
      %v451 = vpop.f32.mrb[0].mxu0
      %452 = vmatprep.mubr.bf16.mxu0 0
      %453 = vmatmul.mubr.bf16.gmra.mrb[0].mxu0 %v296
      %v454 = vpop.f32.mrb[0].mxu0
      %v455 = vadd.f32 0.0, %v454
      %v456 = vpop.f32.mrb[0].mxu0
      %v457 = vpop.f32.mrb[0].mxu0
      %v458 = vadd.f32 0.0, %v457
      %v459 = vpop.f32.mrb[0].mxu0
      %460 = vmatprep.mubr.bf16.mxu0 0
      %461 = vmatmul.mubr.bf16.gmra.mrb[0].mxu0 %v297
      %v462 = vpop.f32.mrb[0].mxu0
      %v463 = vadd.f32 0.0, %v462
      %v464 = vpop.f32.mrb[0].mxu0
      %v465 = vpop.f32.mrb[0].mxu0
      %v466 = vadd.f32 0.0, %v465
      %v467 = vpop.f32.mrb[0].mxu0
      %468 = vmatprep.mubr.bf16.mxu0 0
      %469 = vmatmul.mubr.bf16.gmra.mrb[0].mxu0 %v298
      %v470 = vpop.f32.mrb[0].mxu0
      %v471 = vadd.f32 0.0, %v470
      %v472 = vpop.f32.mrb[0].mxu0
      %v473 = vpop.f32.mrb[0].mxu0
      %v474 = vadd.f32 0.0, %v473
      %v475 = vpop.f32.mrb[0].mxu0
      %476 = vmatprep.mubr.bf16.mxu0 0
      %477 = vmatmul.mubr.bf16.gmra.mrb[0].mxu0 %v299
      %v478 = vpop.f32.mrb[0].mxu0
      %v479 = vadd.f32 0.0, %v478
      %v480 = vpop.f32.mrb[0].mxu0
      %v481 = vpop.f32.mrb[0].mxu0
      %v482 = vadd.f32 0.0, %v481
      %v483 = vpop.f32.mrb[0].mxu0
      %484 = vmatprep.mubr.bf16.mxu0 0
      %485 = vmatmul.mubr.bf16.gmra.mrb[0].mxu0 %v300
      %v486 = vpop.f32.mrb[0].mxu0
      %v487 = vadd.f32 0.0, %v486
      %v488 = vpop.f32.mrb[0].mxu0
      %v489 = vpop.f32.mrb[0].mxu0
      %v490 = vadd.f32 0.0, %v489
      %v491 = vpop.f32.mrb[0].mxu0
      %492 = vmatprep.mubr.bf16.mxu0 0
      %493 = vmatmul.mubr.bf16.gmra.mrb[0].mxu0 %v301
      %v494 = vpop.f32.mrb[0].mxu0
      %v495 = vadd.f32 0.0, %v494
      %v496 = vpop.f32.mrb[0].mxu0
      %v497 = vpop.f32.mrb[0].mxu0
      %v498 = vadd.f32 0.0, %v497
      %v499 = vpop.f32.mrb[0].mxu0
      %500 = vmatprep.mubr.bf16.mxu0 0
      %501 = vmatmul.mubr.bf16.gmra.mrb[0].mxu0 %v302
      %v502 = vpop.f32.mrb[0].mxu0
      %v503 = vadd.f32 0.0, %v502
      %v504 = vpop.f32.mrb[0].mxu0
      %v505 = vpop.f32.mrb[0].mxu0
      %v506 = vadd.f32 0.0, %v505
      %v507 = vpop.f32.mrb[0].mxu0
      %508 = vmatprep.mubr.bf16.mxu0 0
      %509 = vmatmul.mubr.bf16.gmra.mrb[0].mxu0 %v303
      %v510 = vpop.f32.mrb[0].mxu0
      %v511 = vadd.f32 0.0, %v510
      %v512 = vpop.f32.mrb[0].mxu0
      %v513 = vpop.f32.mrb[0].mxu0
      %v514 = vadd.f32 0.0, %v513
      %v515 = vpop.f32.mrb[0].mxu0
      %516 = vmatprep.mubr.bf16.mxu0 0
      %517 = vmatmul.mubr.bf16.gmra.mrb[0].mxu0 %v304
      %v518 = vpop.f32.mrb[0].mxu0
      %v519 = vadd.f32 0.0, %v518
      %v520 = vpop.f32.mrb[0].mxu0
      %v521 = vpop.f32.mrb[0].mxu0
      %v522 = vadd.f32 0.0, %v521
      %v523 = vpop.f32.mrb[0].mxu0
      %524 = vmatprep.mubr.bf16.mxu0 0
      %525 = vmatmul.mubr.bf16.gmra.mrb[0].mxu0 %v305
      %v526 = vpop.f32.mrb[0].mxu0
      %v527 = vadd.f32 0.0, %v526
      %v528 = vpop.f32.mrb[0].mxu0
      %v529 = vpop.f32.mrb[0].mxu0
      %v530 = vadd.f32 0.0, %v529
      %v531 = vpop.f32.mrb[0].mxu0
      %532 = vmatprep.mubr.bf16.mxu0 0
      %533 = vmatmul.mubr.bf16.gmra.mrb[0].mxu0 %v306
      %v534 = vpop.f32.mrb[0].mxu0
      %v535 = vpop.f32.mrb[0].mxu0
      %v536 = vpop.f32.mrb[0].mxu0
      %v537 = vpop.f32.mrb[0].mxu0
      %538 = vdwg.mxu0
      %s539 = scalar_lea.vmem %s1, 64
      %v540 = vld [vmem:[%s539] sm:$0xf]
      %v541 = vld [vmem:[%s539 + $0x4] sm:$0xf]
      %v542 = vld [vmem:[%s539 + $0x8] sm:$0xf]
      %v543 = vld [vmem:[%s539 + $0xc] sm:$0xf]
      %v544 = vld [vmem:[%s539 + $0x10] sm:$0xf]
      %v545 = vld [vmem:[%s539 + $0x14] sm:$0xf]
      %v546 = vld [vmem:[%s539 + $0x18] sm:$0xf]
      %v547 = vld [vmem:[%s539 + $0x1c] sm:$0xf]
      %v548 = vld [vmem:[%s539 + $0x20] sm:$0xf]
      %v549 = vld [vmem:[%s539 + $0x24] sm:$0xf]
      %v550 = vld [vmem:[%s539 + $0x28] sm:$0xf]
      %v551 = vld [vmem:[%s539 + $0x2c] sm:$0xf]
      %v552 = vld [vmem:[%s539 + $0x30] sm:$0xf]
      %v553 = vld [vmem:[%s539 + $0x34] sm:$0xf]
      %v554 = vld [vmem:[%s539 + $0x38] sm:$0xf]
      %v555 = vld [vmem:[%s539 + $0x3c] sm:$0xf]
      %v572 = vunpack.c.l.b16 %v540
      %v573 = vunpack.c.l.b16 %v541
      %v574 = vunpack.c.l.b16 %v542
      %v575 = vunpack.c.l.b16 %v543
      %v576 = vunpack.c.l.b16 %v544
      %v577 = vunpack.c.l.b16 %v545
      %v578 = vunpack.c.l.b16 %v546
      %v579 = vunpack.c.l.b16 %v547
      %v580 = vunpack.c.l.b16 %v548
      %v581 = vunpack.c.l.b16 %v549
      %v582 = vunpack.c.l.b16 %v550
      %v583 = vunpack.c.l.b16 %v551
      %v584 = vunpack.c.l.b16 %v552
      %v585 = vunpack.c.l.b16 %v553
      %v586 = vunpack.c.l.b16 %v554
      %v587 = vunpack.c.l.b16 %v555
      %v588 = vpack.c.b16 %v573, %v572
      %v589 = vpack.c.b16 %v575, %v574
      %v590 = vpack.c.b16 %v577, %v576
      %v591 = vpack.c.b16 %v579, %v578
      %v592 = vpack.c.b16 %v581, %v580
      %v593 = vpack.c.b16 %v583, %v582
      %v594 = vpack.c.b16 %v585, %v584
      %v595 = vpack.c.b16 %v587, %v586
      %604 = vmatprep.subr.bf16.mxu0 0
      %605 = vmatpush1.bf16.msra.mxu0 %v588
      %606 = vmatprep.subr.bf16.mxu0 0
      %607 = vmatpush1.bf16.msra.mxu0 %v589
      %608 = vmatprep.subr.bf16.mxu0 0
      %609 = vmatpush1.bf16.msra.mxu0 %v590
      %610 = vmatprep.subr.bf16.mxu0 0
      %611 = vmatpush1.bf16.msra.mxu0 %v591
      %612 = vmatprep.subr.bf16.mxu0 0
      %613 = vmatpush1.bf16.msra.mxu0 %v592
      %614 = vmatprep.subr.bf16.mxu0 0
      %615 = vmatpush1.bf16.msra.mxu0 %v593
      %616 = vmatprep.subr.bf16.mxu0 0
      %617 = vmatpush1.bf16.msra.mxu0 %v594
      %618 = vmatprep.subr.bf16.mxu0 0
      %619 = vmatpush1.bf16.msra.mxu0 %v595
      %620 = vmatprep.subr.bf16.mxu0 0
      %621 = vmatpush1.bf16.msra.mxu0 0
      %622 = vmatprep.subr.bf16.mxu0 0
      %623 = vmatpush1.bf16.msra.mxu0 0
      %624 = vmatprep.subr.bf16.mxu0 0
      %625 = vmatpush1.bf16.msra.mxu0 0
      %626 = vmatprep.subr.bf16.mxu0 0
      %627 = vmatpush1.bf16.msra.mxu0 0
      %628 = vmatprep.subr.bf16.mxu0 0
      %629 = vmatpush1.bf16.msra.mxu0 0
      %630 = vmatprep.subr.bf16.mxu0 0
      %631 = vmatpush1.bf16.msra.mxu0 0
      %632 = vmatprep.subr.bf16.mxu0 0
      %633 = vmatpush1.bf16.msra.mxu0 0
      %634 = vmatprep.subr.bf16.mxu0 0
      %635 = vmatpush1.bf16.msra.mxu0 0
      %636 = vmatprep.mubr.bf16.mxu0 0
      %637 = vmatmul.mubr.bf16.gmra.mrb[0].mxu0 %v290
      %v638 = vpop.f32.mrb[0].mxu0
      %v639 = vadd.f32 0.0, %v638
      %v640 = vpop.f32.mrb[0].mxu0
      %v641 = vpop.f32.mrb[0].mxu0
      %v642 = vadd.f32 0.0, %v641
      %v643 = vpop.f32.mrb[0].mxu0
      %644 = vmatprep.mubr.bf16.mxu0 0
      %645 = vmatmul.mubr.bf16.gmra.mrb[0].mxu0 %v291
      %v646 = vpop.f32.mrb[0].mxu0
      %v647 = vadd.f32 0.0, %v646
      %v648 = vpop.f32.mrb[0].mxu0
      %v649 = vpop.f32.mrb[0].mxu0
      %v650 = vadd.f32 0.0, %v649
      %v651 = vpop.f32.mrb[0].mxu0
      %652 = vmatprep.mubr.bf16.mxu0 0
      %653 = vmatmul.mubr.bf16.gmra.mrb[0].mxu0 %v292
      %v654 = vpop.f32.mrb[0].mxu0
      %v655 = vadd.f32 0.0, %v654
      %v656 = vpop.f32.mrb[0].mxu0
      %v657 = vpop.f32.mrb[0].mxu0
      %v658 = vadd.f32 0.0, %v657
      %v659 = vpop.f32.mrb[0].mxu0
      %660 = vmatprep.mubr.bf16.mxu0 0
      %661 = vmatmul.mubr.bf16.gmra.mrb[0].mxu0 %v293
      %v662 = vpop.f32.mrb[0].mxu0
      %v663 = vadd.f32 0.0, %v662
      %v664 = vpop.f32.mrb[0].mxu0
      %v665 = vpop.f32.mrb[0].mxu0
      %v666 = vadd.f32 0.0, %v665
      %v667 = vpop.f32.mrb[0].mxu0
      %668 = vmatprep.mubr.bf16.mxu0 0
      %669 = vmatmul.mubr.bf16.gmra.mrb[0].mxu0 %v294
      %v670 = vpop.f32.mrb[0].mxu0
      %v671 = vadd.f32 0.0, %v670
      %v672 = vpop.f32.mrb[0].mxu0
      %v673 = vpop.f32.mrb[0].mxu0
      %v674 = vadd.f32 0.0, %v673
      %v675 = vpop.f32.mrb[0].mxu0
      %676 = vmatprep.mubr.bf16.mxu0 0
      %677 = vmatmul.mubr.bf16.gmra.mrb[0].mxu0 %v295
      %v678 = vpop.f32.mrb[0].mxu0
      %v679 = vadd.f32 0.0, %v678
      %v680 = vpop.f32.mrb[0].mxu0
      %v681 = vpop.f32.mrb[0].mxu0
      %v682 = vadd.f32 0.0, %v681
      %v683 = vpop.f32.mrb[0].mxu0
      %684 = vmatprep.mubr.bf16.mxu0 0
      %685 = vmatmul.mubr.bf16.gmra.mrb[0].mxu0 %v296
      %v686 = vpop.f32.mrb[0].mxu0
      %v687 = vadd.f32 0.0, %v686
      %v688 = vpop.f32.mrb[0].mxu0
      %v689 = vpop.f32.mrb[0].mxu0
      %v690 = vadd.f32 0.0, %v689
      %v691 = vpop.f32.mrb[0].mxu0
      %692 = vmatprep.mubr.bf16.mxu0 0
      %693 = vmatmul.mubr.bf16.gmra.mrb[0].mxu0 %v297
      %v694 = vpop.f32.mrb[0].mxu0
      %v695 = vadd.f32 0.0, %v694
      %v696 = vpop.f32.mrb[0].mxu0
      %v697 = vpop.f32.mrb[0].mxu0
      %v698 = vadd.f32 0.0, %v697
      %v699 = vpop.f32.mrb[0].mxu0
      %700 = vmatprep.mubr.bf16.mxu0 0
      %701 = vmatmul.mubr.bf16.gmra.mrb[0].mxu0 %v298
      %v702 = vpop.f32.mrb[0].mxu0
      %v703 = vadd.f32 0.0, %v702
      %v704 = vpop.f32.mrb[0].mxu0
      %v705 = vpop.f32.mrb[0].mxu0
      %v706 = vadd.f32 0.0, %v705
      %v707 = vpop.f32.mrb[0].mxu0
      %708 = vmatprep.mubr.bf16.mxu0 0
      %709 = vmatmul.mubr.bf16.gmra.mrb[0].mxu0 %v299
      %v710 = vpop.f32.mrb[0].mxu0
      %v711 = vadd.f32 0.0, %v710
      %v712 = vpop.f32.mrb[0].mxu0
      %v713 = vpop.f32.mrb[0].mxu0
      %v714 = vadd.f32 0.0, %v713
      %v715 = vpop.f32.mrb[0].mxu0
      %716 = vmatprep.mubr.bf16.mxu0 0
      %717 = vmatmul.mubr.bf16.gmra.mrb[0].mxu0 %v300
      %v718 = vpop.f32.mrb[0].mxu0
      %v719 = vadd.f32 0.0, %v718
      %v720 = vpop.f32.mrb[0].mxu0
      %v721 = vpop.f32.mrb[0].mxu0
      %v722 = vadd.f32 0.0, %v721
      %v723 = vpop.f32.mrb[0].mxu0
      %724 = vmatprep.mubr.bf16.mxu0 0
      %725 = vmatmul.mubr.bf16.gmra.mrb[0].mxu0 %v301
      %v726 = vpop.f32.mrb[0].mxu0
      %v727 = vadd.f32 0.0, %v726
      %v728 = vpop.f32.mrb[0].mxu0
      %v729 = vpop.f32.mrb[0].mxu0
      %v730 = vadd.f32 0.0, %v729
      %v731 = vpop.f32.mrb[0].mxu0
      %732 = vmatprep.mubr.bf16.mxu0 0
      %733 = vmatmul.mubr.bf16.gmra.mrb[0].mxu0 %v302
      %v734 = vpop.f32.mrb[0].mxu0
      %v735 = vadd.f32 0.0, %v734
      %v736 = vpop.f32.mrb[0].mxu0
      %v737 = vpop.f32.mrb[0].mxu0
      %v738 = vadd.f32 0.0, %v737
      %v739 = vpop.f32.mrb[0].mxu0
      %740 = vmatprep.mubr.bf16.mxu0 0
      %741 = vmatmul.mubr.bf16.gmra.mrb[0].mxu0 %v303
      %v742 = vpop.f32.mrb[0].mxu0
      %v743 = vadd.f32 0.0, %v742
      %v744 = vpop.f32.mrb[0].mxu0
      %v745 = vpop.f32.mrb[0].mxu0
      %v746 = vadd.f32 0.0, %v745
      %v747 = vpop.f32.mrb[0].mxu0
      %748 = vmatprep.mubr.bf16.mxu0 0
      %749 = vmatmul.mubr.bf16.gmra.mrb[0].mxu0 %v304
      %v750 = vpop.f32.mrb[0].mxu0
      %v751 = vadd.f32 0.0, %v750
      %v752 = vpop.f32.mrb[0].mxu0
      %v753 = vpop.f32.mrb[0].mxu0
      %v754 = vadd.f32 0.0, %v753
      %v755 = vpop.f32.mrb[0].mxu0
      %756 = vmatprep.mubr.bf16.mxu0 0
      %757 = vmatmul.mubr.bf16.gmra.mrb[0].mxu0 %v305
      %v758 = vpop.f32.mrb[0].mxu0
      %v759 = vadd.f32 0.0, %v758
      %v760 = vpop.f32.mrb[0].mxu0
      %v761 = vpop.f32.mrb[0].mxu0
      %v762 = vadd.f32 0.0, %v761
      %v763 = vpop.f32.mrb[0].mxu0
      %764 = vmatprep.mubr.bf16.mxu0 0
      %765 = vmatmul.mubr.bf16.gmra.mrb[0].mxu0 %v306
      %v766 = vpop.f32.mrb[0].mxu0
      %v767 = vadd.f32 0.0, %v766
      %v768 = vpop.f32.mrb[0].mxu0
      %v769 = vpop.f32.mrb[0].mxu0
      %v770 = vpop.f32.mrb[0].mxu0
      %771 = vdwg.mxu0
      %vm805 = vcmask 1046528
      %v806 = vrot.slane %v639, 1
      %v807 = vrot.slane %v642, 1
      %v808 = vsel %vm805, %v806, %v807
      %v809 = vrot.slane %v647, 1
      %v810 = vsel %vm805, %v807, %v809
      %v811 = vrot.slane %v650, 1
      %v812 = vsel %vm805, %v809, %v811
      %v813 = vrot.slane %v655, 1
      %v814 = vsel %vm805, %v811, %v813
      %v815 = vrot.slane %v658, 1
      %v816 = vsel %vm805, %v813, %v815
      %v817 = vrot.slane %v663, 1
      %v818 = vsel %vm805, %v815, %v817
      %v819 = vrot.slane %v666, 1
      %v820 = vsel %vm805, %v817, %v819
      %v821 = vrot.slane %v671, 1
      %v822 = vsel %vm805, %v819, %v821
      %v823 = vrot.slane %v674, 1
      %v824 = vsel %vm805, %v821, %v823
      %v825 = vrot.slane %v679, 1
      %v826 = vsel %vm805, %v823, %v825
      %v827 = vrot.slane %v682, 1
      %v828 = vsel %vm805, %v825, %v827
      %v829 = vrot.slane %v687, 1
      %v830 = vsel %vm805, %v827, %v829
      %v831 = vrot.slane %v690, 1
      %v832 = vsel %vm805, %v829, %v831
      %v833 = vrot.slane %v695, 1
      %v834 = vsel %vm805, %v831, %v833
      %v835 = vrot.slane %v698, 1
      %v836 = vsel %vm805, %v833, %v835
      %v837 = vrot.slane %v703, 1
      %v838 = vsel %vm805, %v835, %v837
      %v839 = vrot.slane %v706, 1
      %v840 = vsel %vm805, %v837, %v839
      %v841 = vrot.slane %v711, 1
      %v842 = vsel %vm805, %v839, %v841
      %v843 = vrot.slane %v714, 1
      %v844 = vsel %vm805, %v841, %v843
      %v845 = vrot.slane %v719, 1
      %v846 = vsel %vm805, %v843, %v845
      %v847 = vrot.slane %v722, 1
      %v848 = vsel %vm805, %v845, %v847
      %v849 = vrot.slane %v727, 1
      %v850 = vsel %vm805, %v847, %v849
      %v851 = vrot.slane %v730, 1
      %v852 = vsel %vm805, %v849, %v851
      %v853 = vrot.slane %v735, 1
      %v854 = vsel %vm805, %v851, %v853
      %v855 = vrot.slane %v738, 1
      %v856 = vsel %vm805, %v853, %v855
      %v857 = vrot.slane %v743, 1
      %v858 = vsel %vm805, %v855, %v857
      %v859 = vrot.slane %v746, 1
      %v860 = vsel %vm805, %v857, %v859
      %v861 = vrot.slane %v751, 1
      %v862 = vsel %vm805, %v859, %v861
      %v863 = vrot.slane %v754, 1
      %v864 = vsel %vm805, %v861, %v863
      %v865 = vrot.slane %v759, 1
      %v866 = vsel %vm805, %v863, %v865
      %v867 = vrot.slane %v762, 1
      %v868 = vsel %vm805, %v865, %v867
      %v869 = vrot.slane %v767, 1
      %v870 = vsel %vm805, %v867, %v869
      %v903 = vadd.f32 %v407, %v808
      %v904 = vadd.f32 %v410, %v810
      %v905 = vadd.f32 %v415, %v812
      %v906 = vadd.f32 %v418, %v814
      %v907 = vadd.f32 %v423, %v816
      %v908 = vadd.f32 %v426, %v818
      %v909 = vadd.f32 %v431, %v820
      %v910 = vadd.f32 %v434, %v822
      %v911 = vadd.f32 %v439, %v824
      %v912 = vadd.f32 %v442, %v826
      %v913 = vadd.f32 %v447, %v828
      %v914 = vadd.f32 %v450, %v830
      %v915 = vadd.f32 %v455, %v832
      %v916 = vadd.f32 %v458, %v834
      %v917 = vadd.f32 %v463, %v836
      %v918 = vadd.f32 %v466, %v838
      %v919 = vadd.f32 %v471, %v840
      %v920 = vadd.f32 %v474, %v842
      %v921 = vadd.f32 %v479, %v844
      %v922 = vadd.f32 %v482, %v846
      %v923 = vadd.f32 %v487, %v848
      %v924 = vadd.f32 %v490, %v850
      %v925 = vadd.f32 %v495, %v852
      %v926 = vadd.f32 %v498, %v854
      %v927 = vadd.f32 %v503, %v856
      %v928 = vadd.f32 %v506, %v858
      %v929 = vadd.f32 %v511, %v860
      %v930 = vadd.f32 %v514, %v862
      %v931 = vadd.f32 %v519, %v864
      %v932 = vadd.f32 %v522, %v866
      %v933 = vadd.f32 %v527, %v868
      %v934 = vadd.f32 %v530, %v870
      %s935 = scalar_lea.vmem %s1, 128
      %v936 = vld [vmem:[%s935] sm:$0xf]
      %v937 = vld [vmem:[%s935 + $0x4] sm:$0xf]
      %v938 = vld [vmem:[%s935 + $0x8] sm:$0xf]
      %v939 = vld [vmem:[%s935 + $0xc] sm:$0xf]
      %v940 = vld [vmem:[%s935 + $0x10] sm:$0xf]
      %v941 = vld [vmem:[%s935 + $0x14] sm:$0xf]
      %v942 = vld [vmem:[%s935 + $0x18] sm:$0xf]
      %v943 = vld [vmem:[%s935 + $0x1c] sm:$0xf]
      %v944 = vld [vmem:[%s935 + $0x20] sm:$0xf]
      %v945 = vld [vmem:[%s935 + $0x24] sm:$0xf]
      %v946 = vld [vmem:[%s935 + $0x28] sm:$0xf]
      %v947 = vld [vmem:[%s935 + $0x2c] sm:$0xf]
      %v948 = vld [vmem:[%s935 + $0x30] sm:$0xf]
      %v949 = vld [vmem:[%s935 + $0x34] sm:$0xf]
      %v950 = vld [vmem:[%s935 + $0x38] sm:$0xf]
      %v951 = vld [vmem:[%s935 + $0x3c] sm:$0xf]
      %v968 = vunpack.c.l.b16 %v936
      %v969 = vunpack.c.l.b16 %v937
      %v970 = vunpack.c.l.b16 %v938
      %v971 = vunpack.c.l.b16 %v939
      %v972 = vunpack.c.l.b16 %v940
      %v973 = vunpack.c.l.b16 %v941
      %v974 = vunpack.c.l.b16 %v942
      %v975 = vunpack.c.l.b16 %v943
      %v976 = vunpack.c.l.b16 %v944
      %v977 = vunpack.c.l.b16 %v945
      %v978 = vunpack.c.l.b16 %v946
      %v979 = vunpack.c.l.b16 %v947
      %v980 = vunpack.c.l.b16 %v948
      %v981 = vunpack.c.l.b16 %v949
      %v982 = vunpack.c.l.b16 %v950
      %v983 = vunpack.c.l.b16 %v951
      %v984 = vpack.c.b16 %v969, %v968
      %v985 = vpack.c.b16 %v971, %v970
      %v986 = vpack.c.b16 %v973, %v972
      %v987 = vpack.c.b16 %v975, %v974
      %v988 = vpack.c.b16 %v977, %v976
      %v989 = vpack.c.b16 %v979, %v978
      %v990 = vpack.c.b16 %v981, %v980
      %v991 = vpack.c.b16 %v983, %v982
      %1000 = vmatprep.subr.bf16.mxu0 0
      %1001 = vmatpush1.bf16.msra.mxu0 %v984
      %1002 = vmatprep.subr.bf16.mxu0 0
      %1003 = vmatpush1.bf16.msra.mxu0 %v985
      %1004 = vmatprep.subr.bf16.mxu0 0
      %1005 = vmatpush1.bf16.msra.mxu0 %v986
      %1006 = vmatprep.subr.bf16.mxu0 0
      %1007 = vmatpush1.bf16.msra.mxu0 %v987
      %1008 = vmatprep.subr.bf16.mxu0 0
      %1009 = vmatpush1.bf16.msra.mxu0 %v988
      %1010 = vmatprep.subr.bf16.mxu0 0
      %1011 = vmatpush1.bf16.msra.mxu0 %v989
      %1012 = vmatprep.subr.bf16.mxu0 0
      %1013 = vmatpush1.bf16.msra.mxu0 %v990
      %1014 = vmatprep.subr.bf16.mxu0 0
      %1015 = vmatpush1.bf16.msra.mxu0 %v991
      %1016 = vmatprep.subr.bf16.mxu0 0
      %1017 = vmatpush1.bf16.msra.mxu0 0
      %1018 = vmatprep.subr.bf16.mxu0 0
      %1019 = vmatpush1.bf16.msra.mxu0 0
      %1020 = vmatprep.subr.bf16.mxu0 0
      %1021 = vmatpush1.bf16.msra.mxu0 0
      %1022 = vmatprep.subr.bf16.mxu0 0
      %1023 = vmatpush1.bf16.msra.mxu0 0
      %1024 = vmatprep.subr.bf16.mxu0 0
      %1025 = vmatpush1.bf16.msra.mxu0 0
      %1026 = vmatprep.subr.bf16.mxu0 0
      %1027 = vmatpush1.bf16.msra.mxu0 0
      %1028 = vmatprep.subr.bf16.mxu0 0
      %1029 = vmatpush1.bf16.msra.mxu0 0
      %1030 = vmatprep.subr.bf16.mxu0 0
      %1031 = vmatpush1.bf16.msra.mxu0 0
      %1032 = vmatprep.mubr.bf16.mxu0 0
      %1033 = vmatmul.mubr.bf16.gmra.mrb[0].mxu0 %v290
      %v1034 = vpop.f32.mrb[0].mxu0
      %v1035 = vadd.f32 0.0, %v1034
      %v1036 = vpop.f32.mrb[0].mxu0
      %v1037 = vpop.f32.mrb[0].mxu0
      %v1038 = vadd.f32 0.0, %v1037
      %v1039 = vpop.f32.mrb[0].mxu0
      %1040 = vmatprep.mubr.bf16.mxu0 0
      %1041 = vmatmul.mubr.bf16.gmra.mrb[0].mxu0 %v291
      %v1042 = vpop.f32.mrb[0].mxu0
      %v1043 = vadd.f32 0.0, %v1042
      %v1044 = vpop.f32.mrb[0].mxu0
      %v1045 = vpop.f32.mrb[0].mxu0
      %v1046 = vadd.f32 0.0, %v1045
      %v1047 = vpop.f32.mrb[0].mxu0
      %1048 = vmatprep.mubr.bf16.mxu0 0
      %1049 = vmatmul.mubr.bf16.gmra.mrb[0].mxu0 %v292
      %v1050 = vpop.f32.mrb[0].mxu0
      %v1051 = vadd.f32 0.0, %v1050
      %v1052 = vpop.f32.mrb[0].mxu0
      %v1053 = vpop.f32.mrb[0].mxu0
      %v1054 = vadd.f32 0.0, %v1053
      %v1055 = vpop.f32.mrb[0].mxu0
      %1056 = vmatprep.mubr.bf16.mxu0 0
      %1057 = vmatmul.mubr.bf16.gmra.mrb[0].mxu0 %v293
      %v1058 = vpop.f32.mrb[0].mxu0
      %v1059 = vadd.f32 0.0, %v1058
      %v1060 = vpop.f32.mrb[0].mxu0
      %v1061 = vpop.f32.mrb[0].mxu0
      %v1062 = vadd.f32 0.0, %v1061
      %v1063 = vpop.f32.mrb[0].mxu0
      %1064 = vmatprep.mubr.bf16.mxu0 0
      %1065 = vmatmul.mubr.bf16.gmra.mrb[0].mxu0 %v294
      %v1066 = vpop.f32.mrb[0].mxu0
      %v1067 = vadd.f32 0.0, %v1066
      %v1068 = vpop.f32.mrb[0].mxu0
      %v1069 = vpop.f32.mrb[0].mxu0
      %v1070 = vadd.f32 0.0, %v1069
      %v1071 = vpop.f32.mrb[0].mxu0
      %1072 = vmatprep.mubr.bf16.mxu0 0
      %1073 = vmatmul.mubr.bf16.gmra.mrb[0].mxu0 %v295
      %v1074 = vpop.f32.mrb[0].mxu0
      %v1075 = vadd.f32 0.0, %v1074
      %v1076 = vpop.f32.mrb[0].mxu0
      %v1077 = vpop.f32.mrb[0].mxu0
      %v1078 = vadd.f32 0.0, %v1077
      %v1079 = vpop.f32.mrb[0].mxu0
      %1080 = vmatprep.mubr.bf16.mxu0 0
      %1081 = vmatmul.mubr.bf16.gmra.mrb[0].mxu0 %v296
      %v1082 = vpop.f32.mrb[0].mxu0
      %v1083 = vadd.f32 0.0, %v1082
      %v1084 = vpop.f32.mrb[0].mxu0
      %v1085 = vpop.f32.mrb[0].mxu0
      %v1086 = vadd.f32 0.0, %v1085
      %v1087 = vpop.f32.mrb[0].mxu0
      %1088 = vmatprep.mubr.bf16.mxu0 0
      %1089 = vmatmul.mubr.bf16.gmra.mrb[0].mxu0 %v297
      %v1090 = vpop.f32.mrb[0].mxu0
      %v1091 = vadd.f32 0.0, %v1090
      %v1092 = vpop.f32.mrb[0].mxu0
      %v1093 = vpop.f32.mrb[0].mxu0
      %v1094 = vadd.f32 0.0, %v1093
      %v1095 = vpop.f32.mrb[0].mxu0
      %1096 = vmatprep.mubr.bf16.mxu0 0
      %1097 = vmatmul.mubr.bf16.gmra.mrb[0].mxu0 %v298
      %v1098 = vpop.f32.mrb[0].mxu0
      %v1099 = vadd.f32 0.0, %v1098
      %v1100 = vpop.f32.mrb[0].mxu0
      %v1101 = vpop.f32.mrb[0].mxu0
      %v1102 = vadd.f32 0.0, %v1101
      %v1103 = vpop.f32.mrb[0].mxu0
      %1104 = vmatprep.mubr.bf16.mxu0 0
      %1105 = vmatmul.mubr.bf16.gmra.mrb[0].mxu0 %v299
      %v1106 = vpop.f32.mrb[0].mxu0
      %v1107 = vadd.f32 0.0, %v1106
      %v1108 = vpop.f32.mrb[0].mxu0
      %v1109 = vpop.f32.mrb[0].mxu0
      %v1110 = vadd.f32 0.0, %v1109
      %v1111 = vpop.f32.mrb[0].mxu0
      %1112 = vmatprep.mubr.bf16.mxu0 0
      %1113 = vmatmul.mubr.bf16.gmra.mrb[0].mxu0 %v300
      %v1114 = vpop.f32.mrb[0].mxu0
      %v1115 = vadd.f32 0.0, %v1114
      %v1116 = vpop.f32.mrb[0].mxu0
      %v1117 = vpop.f32.mrb[0].mxu0
      %v1118 = vadd.f32 0.0, %v1117
      %v1119 = vpop.f32.mrb[0].mxu0
      %1120 = vmatprep.mubr.bf16.mxu0 0
      %1121 = vmatmul.mubr.bf16.gmra.mrb[0].mxu0 %v301
      %v1122 = vpop.f32.mrb[0].mxu0
      %v1123 = vadd.f32 0.0, %v1122
      %v1124 = vpop.f32.mrb[0].mxu0
      %v1125 = vpop.f32.mrb[0].mxu0
      %v1126 = vadd.f32 0.0, %v1125
      %v1127 = vpop.f32.mrb[0].mxu0
      %1128 = vmatprep.mubr.bf16.mxu0 0
      %1129 = vmatmul.mubr.bf16.gmra.mrb[0].mxu0 %v302
      %v1130 = vpop.f32.mrb[0].mxu0
      %v1131 = vadd.f32 0.0, %v1130
      %v1132 = vpop.f32.mrb[0].mxu0
      %v1133 = vpop.f32.mrb[0].mxu0
      %v1134 = vadd.f32 0.0, %v1133
      %v1135 = vpop.f32.mrb[0].mxu0
      %1136 = vmatprep.mubr.bf16.mxu0 0
      %1137 = vmatmul.mubr.bf16.gmra.mrb[0].mxu0 %v303
      %v1138 = vpop.f32.mrb[0].mxu0
      %v1139 = vadd.f32 0.0, %v1138
      %v1140 = vpop.f32.mrb[0].mxu0
      %v1141 = vpop.f32.mrb[0].mxu0
      %v1142 = vadd.f32 0.0, %v1141
      %v1143 = vpop.f32.mrb[0].mxu0
      %1144 = vmatprep.mubr.bf16.mxu0 0
      %1145 = vmatmul.mubr.bf16.gmra.mrb[0].mxu0 %v304
      %v1146 = vpop.f32.mrb[0].mxu0
      %v1147 = vadd.f32 0.0, %v1146
      %v1148 = vpop.f32.mrb[0].mxu0
      %v1149 = vpop.f32.mrb[0].mxu0
      %v1150 = vadd.f32 0.0, %v1149
      %v1151 = vpop.f32.mrb[0].mxu0
      %1152 = vmatprep.mubr.bf16.mxu0 0
      %1153 = vmatmul.mubr.bf16.gmra.mrb[0].mxu0 %v305
      %v1154 = vpop.f32.mrb[0].mxu0
      %v1155 = vadd.f32 0.0, %v1154
      %v1156 = vpop.f32.mrb[0].mxu0
      %v1157 = vpop.f32.mrb[0].mxu0
      %v1158 = vadd.f32 0.0, %v1157
      %v1159 = vpop.f32.mrb[0].mxu0
      %1160 = vmatprep.mubr.bf16.mxu0 0
      %1161 = vmatmul.mubr.bf16.gmra.mrb[0].mxu0 %v306
      %v1162 = vpop.f32.mrb[0].mxu0
      %v1163 = vadd.f32 0.0, %v1162
      %v1164 = vpop.f32.mrb[0].mxu0
      %v1165 = vpop.f32.mrb[0].mxu0
      %v1166 = vpop.f32.mrb[0].mxu0
      %1167 = vdwg.mxu0
      %vm1201 = vcmask 1045504
      %v1202 = vrot.slane %v1035, 2
      %v1203 = vrot.slane %v1038, 2
      %v1204 = vsel %vm1201, %v1202, %v1203
      %v1205 = vrot.slane %v1043, 2
      %v1206 = vsel %vm1201, %v1203, %v1205
      %v1207 = vrot.slane %v1046, 2
      %v1208 = vsel %vm1201, %v1205, %v1207
      %v1209 = vrot.slane %v1051, 2
      %v1210 = vsel %vm1201, %v1207, %v1209
      %v1211 = vrot.slane %v1054, 2
      %v1212 = vsel %vm1201, %v1209, %v1211
      %v1213 = vrot.slane %v1059, 2
      %v1214 = vsel %vm1201, %v1211, %v1213
      %v1215 = vrot.slane %v1062, 2
      %v1216 = vsel %vm1201, %v1213, %v1215
      %v1217 = vrot.slane %v1067, 2
      %v1218 = vsel %vm1201, %v1215, %v1217
      %v1219 = vrot.slane %v1070, 2
      %v1220 = vsel %vm1201, %v1217, %v1219
      %v1221 = vrot.slane %v1075, 2
      %v1222 = vsel %vm1201, %v1219, %v1221
      %v1223 = vrot.slane %v1078, 2
      %v1224 = vsel %vm1201, %v1221, %v1223
      %v1225 = vrot.slane %v1083, 2
      %v1226 = vsel %vm1201, %v1223, %v1225
      %v1227 = vrot.slane %v1086, 2
      %v1228 = vsel %vm1201, %v1225, %v1227
      %v1229 = vrot.slane %v1091, 2
      %v1230 = vsel %vm1201, %v1227, %v1229
      %v1231 = vrot.slane %v1094, 2
      %v1232 = vsel %vm1201, %v1229, %v1231
      %v1233 = vrot.slane %v1099, 2
      %v1234 = vsel %vm1201, %v1231, %v1233
      %v1235 = vrot.slane %v1102, 2
      %v1236 = vsel %vm1201, %v1233, %v1235
      %v1237 = vrot.slane %v1107, 2
      %v1238 = vsel %vm1201, %v1235, %v1237
      %v1239 = vrot.slane %v1110, 2
      %v1240 = vsel %vm1201, %v1237, %v1239
      %v1241 = vrot.slane %v1115, 2
      %v1242 = vsel %vm1201, %v1239, %v1241
      %v1243 = vrot.slane %v1118, 2
      %v1244 = vsel %vm1201, %v1241, %v1243
      %v1245 = vrot.slane %v1123, 2
      %v1246 = vsel %vm1201, %v1243, %v1245
      %v1247 = vrot.slane %v1126, 2
      %v1248 = vsel %vm1201, %v1245, %v1247
      %v1249 = vrot.slane %v1131, 2
      %v1250 = vsel %vm1201, %v1247, %v1249
      %v1251 = vrot.slane %v1134, 2
      %v1252 = vsel %vm1201, %v1249, %v1251
      %v1253 = vrot.slane %v1139, 2
      %v1254 = vsel %vm1201, %v1251, %v1253
      %v1255 = vrot.slane %v1142, 2
      %v1256 = vsel %vm1201, %v1253, %v1255
      %v1257 = vrot.slane %v1147, 2
      %v1258 = vsel %vm1201, %v1255, %v1257
      %v1259 = vrot.slane %v1150, 2
      %v1260 = vsel %vm1201, %v1257, %v1259
      %v1261 = vrot.slane %v1155, 2
      %v1262 = vsel %vm1201, %v1259, %v1261
      %v1263 = vrot.slane %v1158, 2
      %v1264 = vsel %vm1201, %v1261, %v1263
      %v1265 = vrot.slane %v1163, 2
      %v1266 = vsel %vm1201, %v1263, %v1265
      %v1299 = vadd.f32 %v903, %v1204
      %v1300 = vadd.f32 %v904, %v1206
      %v1301 = vadd.f32 %v905, %v1208
      %v1302 = vadd.f32 %v906, %v1210
      %v1303 = vadd.f32 %v907, %v1212
      %v1304 = vadd.f32 %v908, %v1214
      %v1305 = vadd.f32 %v909, %v1216
      %v1306 = vadd.f32 %v910, %v1218
      %v1307 = vadd.f32 %v911, %v1220
      %v1308 = vadd.f32 %v912, %v1222
      %v1309 = vadd.f32 %v913, %v1224
      %v1310 = vadd.f32 %v914, %v1226
      %v1311 = vadd.f32 %v915, %v1228
      %v1312 = vadd.f32 %v916, %v1230
      %v1313 = vadd.f32 %v917, %v1232
      %v1314 = vadd.f32 %v918, %v1234
      %v1315 = vadd.f32 %v919, %v1236
      %v1316 = vadd.f32 %v920, %v1238
      %v1317 = vadd.f32 %v921, %v1240
      %v1318 = vadd.f32 %v922, %v1242
      %v1319 = vadd.f32 %v923, %v1244
      %v1320 = vadd.f32 %v924, %v1246
      %v1321 = vadd.f32 %v925, %v1248
      %v1322 = vadd.f32 %v926, %v1250
      %v1323 = vadd.f32 %v927, %v1252
      %v1324 = vadd.f32 %v928, %v1254
      %v1325 = vadd.f32 %v929, %v1256
      %v1326 = vadd.f32 %v930, %v1258
      %v1327 = vadd.f32 %v931, %v1260
      %v1328 = vadd.f32 %v932, %v1262
      %v1329 = vadd.f32 %v933, %v1264
      %v1330 = vadd.f32 %v934, %v1266
      %v1331 = vld [vmem:[%s165 + $0x10] sm:$0xf]
      %v1332 = vld [vmem:[%s165 + $0x14] sm:$0xf]
      %v1333 = vld [vmem:[%s165 + $0x18] sm:$0xf]
      %v1334 = vld [vmem:[%s165 + $0x1c] sm:$0xf]
      %v1335 = vld [vmem:[%s165 + $0x20] sm:$0xf]
      %v1336 = vld [vmem:[%s165 + $0x24] sm:$0xf]
      %v1337 = vld [vmem:[%s165 + $0x28] sm:$0xf]
      %v1338 = vld [vmem:[%s165 + $0x2c] sm:$0xf]
      %v1339 = vld [vmem:[%s165 + $0x30] sm:$0xf]
      %v1340 = vld [vmem:[%s165 + $0x34] sm:$0xf]
      %v1341 = vld [vmem:[%s165 + $0x38] sm:$0xf]
      %v1342 = vld [vmem:[%s165 + $0x3c] sm:$0xf]
      %v1343 = vld [vmem:[%s165 + $0x40] sm:$0xf]
      %v1344 = vld [vmem:[%s165 + $0x44] sm:$0xf]
      %v1345 = vld [vmem:[%s165 + $0x48] sm:$0xf]
      %v1346 = vld [vmem:[%s165 + $0x4c] sm:$0xf]
      %v1347 = vld [vmem:[%s165 + $0x50] sm:$0xf]
      %v1348 = vld [vmem:[%s165 + $0x54] sm:$0xf]
      %v1349 = vld [vmem:[%s165 + $0x58] sm:$0xf]
      %v1350 = vld [vmem:[%s165 + $0x5c] sm:$0xf]
      %v1351 = vld [vmem:[%s165 + $0x60] sm:$0xf]
      %v1352 = vld [vmem:[%s165 + $0x64] sm:$0xf]
      %v1353 = vld [vmem:[%s165 + $0x68] sm:$0xf]
      %v1354 = vld [vmem:[%s165 + $0x6c] sm:$0xf]
      %v1355 = vld [vmem:[%s165 + $0x70] sm:$0xf]
      %v1356 = vld [vmem:[%s165 + $0x74] sm:$0xf]
      %v1357 = vld [vmem:[%s165 + $0x78] sm:$0xf]
      %v1358 = vld [vmem:[%s165 + $0x7c] sm:$0xf]
      %v1359 = vld [vmem:[%s165 + $0x80] sm:$0xf]
      %v1360 = vld [vmem:[%s165 + $0x84] sm:$0xf]
      %v1361 = vld [vmem:[%s165 + $0x88] sm:$0xf]
      %v1362 = vld [vmem:[%s165 + $0x8c] sm:$0xf]
      %v1363 = vld [vmem:[%s165 + $0x90] sm:$0xf]
      %v1364 = vld [vmem:[%s165 + $0x94] sm:$0xf]
      %s1365 = scalar_lea.vmem %s1, 192
      %v1366 = vld [vmem:[%s1365] sm:$0xf]
      %v1367 = vld [vmem:[%s1365 + $0x4] sm:$0xf]
      %v1368 = vld [vmem:[%s1365 + $0x8] sm:$0xf]
      %v1369 = vld [vmem:[%s1365 + $0xc] sm:$0xf]
      %v1370 = vld [vmem:[%s1365 + $0x10] sm:$0xf]
      %v1371 = vld [vmem:[%s1365 + $0x14] sm:$0xf]
      %v1372 = vld [vmem:[%s1365 + $0x18] sm:$0xf]
      %v1373 = vld [vmem:[%s1365 + $0x1c] sm:$0xf]
      %v1374 = vld [vmem:[%s1365 + $0x20] sm:$0xf]
      %v1375 = vld [vmem:[%s1365 + $0x24] sm:$0xf]
      %v1376 = vld [vmem:[%s1365 + $0x28] sm:$0xf]
      %v1377 = vld [vmem:[%s1365 + $0x2c] sm:$0xf]
      %v1378 = vld [vmem:[%s1365 + $0x30] sm:$0xf]
      %v1379 = vld [vmem:[%s1365 + $0x34] sm:$0xf]
      %v1380 = vld [vmem:[%s1365 + $0x38] sm:$0xf]
      %v1381 = vld [vmem:[%s1365 + $0x3c] sm:$0xf]
      %v1416 = vunpack.c.l.b16 %v1331
      %v1417 = vunpack.c.l.b16 %v1332
      %v1418 = vunpack.c.l.b16 %v1333
      %v1419 = vunpack.c.l.b16 %v1334
      %v1420 = vunpack.c.l.b16 %v1335
      %v1421 = vunpack.c.l.b16 %v1336
      %v1422 = vunpack.c.l.b16 %v1337
      %v1423 = vunpack.c.l.b16 %v1338
      %v1424 = vunpack.c.l.b16 %v1339
      %v1425 = vunpack.c.l.b16 %v1340
      %v1426 = vunpack.c.l.b16 %v1341
      %v1427 = vunpack.c.l.b16 %v1342
      %v1428 = vunpack.c.l.b16 %v1343
      %v1429 = vunpack.c.l.b16 %v1344
      %v1430 = vunpack.c.l.b16 %v1345
      %v1431 = vunpack.c.l.b16 %v1346
      %v1432 = vunpack.c.l.b16 %v1347
      %v1433 = vunpack.c.l.b16 %v1348
      %v1434 = vunpack.c.l.b16 %v1349
      %v1435 = vunpack.c.l.b16 %v1350
      %v1436 = vunpack.c.l.b16 %v1351
      %v1437 = vunpack.c.l.b16 %v1352
      %v1438 = vunpack.c.l.b16 %v1353
      %v1439 = vunpack.c.l.b16 %v1354
      %v1440 = vunpack.c.l.b16 %v1355
      %v1441 = vunpack.c.l.b16 %v1356
      %v1442 = vunpack.c.l.b16 %v1357
      %v1443 = vunpack.c.l.b16 %v1358
      %v1444 = vunpack.c.l.b16 %v1359
      %v1445 = vunpack.c.l.b16 %v1360
      %v1446 = vunpack.c.l.b16 %v1361
      %v1447 = vunpack.c.l.b16 %v1362
      %v1448 = vunpack.c.l.b16 %v1363
      %v1449 = vunpack.c.l.b16 %v1364
      %v1450 = vpack.c.b16 %v1417, %v1416
      %v1451 = vpack.c.b16 %v1419, %v1418
      %v1452 = vpack.c.b16 %v1421, %v1420
      %v1453 = vpack.c.b16 %v1423, %v1422
      %v1454 = vpack.c.b16 %v1425, %v1424
      %v1455 = vpack.c.b16 %v1427, %v1426
      %v1456 = vpack.c.b16 %v1429, %v1428
      %v1457 = vpack.c.b16 %v1431, %v1430
      %v1458 = vpack.c.b16 %v1433, %v1432
      %v1459 = vpack.c.b16 %v1435, %v1434
      %v1460 = vpack.c.b16 %v1437, %v1436
      %v1461 = vpack.c.b16 %v1439, %v1438
      %v1462 = vpack.c.b16 %v1441, %v1440
      %v1463 = vpack.c.b16 %v1443, %v1442
      %v1464 = vpack.c.b16 %v1445, %v1444
      %v1465 = vpack.c.b16 %v1447, %v1446
      %v1466 = vpack.c.b16 %v1449, %v1448
      %v1500 = vunpack.c.l.b16 %v1366
      %v1501 = vunpack.c.l.b16 %v1367
      %v1502 = vunpack.c.l.b16 %v1368
      %v1503 = vunpack.c.l.b16 %v1369
      %v1504 = vunpack.c.l.b16 %v1370
      %v1505 = vunpack.c.l.b16 %v1371
      %v1506 = vunpack.c.l.b16 %v1372
      %v1507 = vunpack.c.l.b16 %v1373
      %v1508 = vunpack.c.l.b16 %v1374
      %v1509 = vunpack.c.l.b16 %v1375
      %v1510 = vunpack.c.l.b16 %v1376
      %v1511 = vunpack.c.l.b16 %v1377
      %v1512 = vunpack.c.l.b16 %v1378
      %v1513 = vunpack.c.l.b16 %v1379
      %v1514 = vunpack.c.l.b16 %v1380
      %v1515 = vunpack.c.l.b16 %v1381
      %v1516 = vpack.c.b16 %v1501, %v1500
      %v1517 = vpack.c.b16 %v1503, %v1502
      %v1518 = vpack.c.b16 %v1505, %v1504
      %v1519 = vpack.c.b16 %v1507, %v1506
      %v1520 = vpack.c.b16 %v1509, %v1508
      %v1521 = vpack.c.b16 %v1511, %v1510
      %v1522 = vpack.c.b16 %v1513, %v1512
      %v1523 = vpack.c.b16 %v1515, %v1514
      %1532 = vmatprep.subr.bf16.mxu0 0
      %1533 = vmatpush1.bf16.msra.mxu0 %v1516
      %1534 = vmatprep.subr.bf16.mxu0 0
      %1535 = vmatpush1.bf16.msra.mxu0 %v1517
      %1536 = vmatprep.subr.bf16.mxu0 0
      %1537 = vmatpush1.bf16.msra.mxu0 %v1518
      %1538 = vmatprep.subr.bf16.mxu0 0
      %1539 = vmatpush1.bf16.msra.mxu0 %v1519
      %1540 = vmatprep.subr.bf16.mxu0 0
      %1541 = vmatpush1.bf16.msra.mxu0 %v1520
      %1542 = vmatprep.subr.bf16.mxu0 0
      %1543 = vmatpush1.bf16.msra.mxu0 %v1521
      %1544 = vmatprep.subr.bf16.mxu0 0
      %1545 = vmatpush1.bf16.msra.mxu0 %v1522
      %1546 = vmatprep.subr.bf16.mxu0 0
      %1547 = vmatpush1.bf16.msra.mxu0 %v1523
      %1548 = vmatprep.subr.bf16.mxu0 0
      %1549 = vmatpush1.bf16.msra.mxu0 0
      %1550 = vmatprep.subr.bf16.mxu0 0
      %1551 = vmatpush1.bf16.msra.mxu0 0
      %1552 = vmatprep.subr.bf16.mxu0 0
      %1553 = vmatpush1.bf16.msra.mxu0 0
      %1554 = vmatprep.subr.bf16.mxu0 0
      %1555 = vmatpush1.bf16.msra.mxu0 0
      %1556 = vmatprep.subr.bf16.mxu0 0
      %1557 = vmatpush1.bf16.msra.mxu0 0
      %1558 = vmatprep.subr.bf16.mxu0 0
      %1559 = vmatpush1.bf16.msra.mxu0 0
      %1560 = vmatprep.subr.bf16.mxu0 0
      %1561 = vmatpush1.bf16.msra.mxu0 0
      %1562 = vmatprep.subr.bf16.mxu0 0
      %1563 = vmatpush1.bf16.msra.mxu0 0
      %1564 = vmatprep.mubr.bf16.mxu0 0
      %1565 = vmatmul.mubr.bf16.gmra.mrb[0].mxu0 %v1450
      %v1566 = vpop.f32.mrb[0].mxu0
      %v1567 = vadd.f32 0.0, %v1566
      %v1568 = vpop.f32.mrb[0].mxu0
      %v1569 = vpop.f32.mrb[0].mxu0
      %v1570 = vadd.f32 0.0, %v1569
      %v1571 = vpop.f32.mrb[0].mxu0
      %1572 = vmatprep.mubr.bf16.mxu0 0
      %1573 = vmatmul.mubr.bf16.gmra.mrb[0].mxu0 %v1451
      %v1574 = vpop.f32.mrb[0].mxu0
      %v1575 = vadd.f32 0.0, %v1574
      %v1576 = vpop.f32.mrb[0].mxu0
      %v1577 = vpop.f32.mrb[0].mxu0
      %v1578 = vadd.f32 0.0, %v1577
      %v1579 = vpop.f32.mrb[0].mxu0
      %1580 = vmatprep.mubr.bf16.mxu0 0
      %1581 = vmatmul.mubr.bf16.gmra.mrb[0].mxu0 %v1452
      %v1582 = vpop.f32.mrb[0].mxu0
      %v1583 = vadd.f32 0.0, %v1582
      %v1584 = vpop.f32.mrb[0].mxu0
      %v1585 = vpop.f32.mrb[0].mxu0
      %v1586 = vadd.f32 0.0, %v1585
      %v1587 = vpop.f32.mrb[0].mxu0
      %1588 = vmatprep.mubr.bf16.mxu0 0
      %1589 = vmatmul.mubr.bf16.gmra.mrb[0].mxu0 %v1453
      %v1590 = vpop.f32.mrb[0].mxu0
      %v1591 = vadd.f32 0.0, %v1590
      %v1592 = vpop.f32.mrb[0].mxu0
      %v1593 = vpop.f32.mrb[0].mxu0
      %v1594 = vadd.f32 0.0, %v1593
      %v1595 = vpop.f32.mrb[0].mxu0
      %1596 = vmatprep.mubr.bf16.mxu0 0
      %1597 = vmatmul.mubr.bf16.gmra.mrb[0].mxu0 %v1454
      %v1598 = vpop.f32.mrb[0].mxu0
      %v1599 = vadd.f32 0.0, %v1598
      %v1600 = vpop.f32.mrb[0].mxu0
      %v1601 = vpop.f32.mrb[0].mxu0
      %v1602 = vadd.f32 0.0, %v1601
      %v1603 = vpop.f32.mrb[0].mxu0
      %1604 = vmatprep.mubr.bf16.mxu0 0
      %1605 = vmatmul.mubr.bf16.gmra.mrb[0].mxu0 %v1455
      %v1606 = vpop.f32.mrb[0].mxu0
      %v1607 = vadd.f32 0.0, %v1606
      %v1608 = vpop.f32.mrb[0].mxu0
      %v1609 = vpop.f32.mrb[0].mxu0
      %v1610 = vadd.f32 0.0, %v1609
      %v1611 = vpop.f32.mrb[0].mxu0
      %1612 = vmatprep.mubr.bf16.mxu0 0
      %1613 = vmatmul.mubr.bf16.gmra.mrb[0].mxu0 %v1456
      %v1614 = vpop.f32.mrb[0].mxu0
      %v1615 = vadd.f32 0.0, %v1614
      %v1616 = vpop.f32.mrb[0].mxu0
      %v1617 = vpop.f32.mrb[0].mxu0
      %v1618 = vadd.f32 0.0, %v1617
      %v1619 = vpop.f32.mrb[0].mxu0
      %1620 = vmatprep.mubr.bf16.mxu0 0
      %1621 = vmatmul.mubr.bf16.gmra.mrb[0].mxu0 %v1457
      %v1622 = vpop.f32.mrb[0].mxu0
      %v1623 = vadd.f32 0.0, %v1622
      %v1624 = vpop.f32.mrb[0].mxu0
      %v1625 = vpop.f32.mrb[0].mxu0
      %v1626 = vadd.f32 0.0, %v1625
      %v1627 = vpop.f32.mrb[0].mxu0
      %1628 = vmatprep.mubr.bf16.mxu0 0
      %1629 = vmatmul.mubr.bf16.gmra.mrb[0].mxu0 %v1458
      %v1630 = vpop.f32.mrb[0].mxu0
      %v1631 = vadd.f32 0.0, %v1630
      %v1632 = vpop.f32.mrb[0].mxu0
      %v1633 = vpop.f32.mrb[0].mxu0
      %v1634 = vadd.f32 0.0, %v1633
      %v1635 = vpop.f32.mrb[0].mxu0
      %1636 = vmatprep.mubr.bf16.mxu0 0
      %1637 = vmatmul.mubr.bf16.gmra.mrb[0].mxu0 %v1459
      %v1638 = vpop.f32.mrb[0].mxu0
      %v1639 = vadd.f32 0.0, %v1638
      %v1640 = vpop.f32.mrb[0].mxu0
      %v1641 = vpop.f32.mrb[0].mxu0
      %v1642 = vadd.f32 0.0, %v1641
      %v1643 = vpop.f32.mrb[0].mxu0
      %1644 = vmatprep.mubr.bf16.mxu0 0
      %1645 = vmatmul.mubr.bf16.gmra.mrb[0].mxu0 %v1460
      %v1646 = vpop.f32.mrb[0].mxu0
      %v1647 = vadd.f32 0.0, %v1646
      %v1648 = vpop.f32.mrb[0].mxu0
      %v1649 = vpop.f32.mrb[0].mxu0
      %v1650 = vadd.f32 0.0, %v1649
      %v1651 = vpop.f32.mrb[0].mxu0
      %1652 = vmatprep.mubr.bf16.mxu0 0
      %1653 = vmatmul.mubr.bf16.gmra.mrb[0].mxu0 %v1461
      %v1654 = vpop.f32.mrb[0].mxu0
      %v1655 = vadd.f32 0.0, %v1654
      %v1656 = vpop.f32.mrb[0].mxu0
      %v1657 = vpop.f32.mrb[0].mxu0
      %v1658 = vadd.f32 0.0, %v1657
      %v1659 = vpop.f32.mrb[0].mxu0
      %1660 = vmatprep.mubr.bf16.mxu0 0
      %1661 = vmatmul.mubr.bf16.gmra.mrb[0].mxu0 %v1462
      %v1662 = vpop.f32.mrb[0].mxu0
      %v1663 = vadd.f32 0.0, %v1662
      %v1664 = vpop.f32.mrb[0].mxu0
      %v1665 = vpop.f32.mrb[0].mxu0
      %v1666 = vadd.f32 0.0, %v1665
      %v1667 = vpop.f32.mrb[0].mxu0
      %1668 = vmatprep.mubr.bf16.mxu0 0
      %1669 = vmatmul.mubr.bf16.gmra.mrb[0].mxu0 %v1463
      %v1670 = vpop.f32.mrb[0].mxu0
      %v1671 = vadd.f32 0.0, %v1670
      %v1672 = vpop.f32.mrb[0].mxu0
      %v1673 = vpop.f32.mrb[0].mxu0
      %v1674 = vadd.f32 0.0, %v1673
      %v1675 = vpop.f32.mrb[0].mxu0
      %1676 = vmatprep.mubr.bf16.mxu0 0
      %1677 = vmatmul.mubr.bf16.gmra.mrb[0].mxu0 %v1464
      %v1678 = vpop.f32.mrb[0].mxu0
      %v1679 = vadd.f32 0.0, %v1678
      %v1680 = vpop.f32.mrb[0].mxu0
      %v1681 = vpop.f32.mrb[0].mxu0
      %v1682 = vadd.f32 0.0, %v1681
      %v1683 = vpop.f32.mrb[0].mxu0
      %1684 = vmatprep.mubr.bf16.mxu0 0
      %1685 = vmatmul.mubr.bf16.gmra.mrb[0].mxu0 %v1465
      %v1686 = vpop.f32.mrb[0].mxu0
      %v1687 = vadd.f32 0.0, %v1686
      %v1688 = vpop.f32.mrb[0].mxu0
      %v1689 = vpop.f32.mrb[0].mxu0
      %v1690 = vadd.f32 0.0, %v1689
      %v1691 = vpop.f32.mrb[0].mxu0
      %1692 = vmatprep.mubr.bf16.mxu0 0
      %1693 = vmatmul.mubr.bf16.gmra.mrb[0].mxu0 %v1466
      %v1694 = vpop.f32.mrb[0].mxu0
      %v1695 = vpop.f32.mrb[0].mxu0
      %v1696 = vpop.f32.mrb[0].mxu0
      %v1697 = vpop.f32.mrb[0].mxu0
      %1698 = vdwg.mxu0
      %v1699 = vadd.f32 %v1299, %v1567
      %v1700 = vadd.f32 %v1300, %v1570
      %v1701 = vadd.f32 %v1301, %v1575
      %v1702 = vadd.f32 %v1302, %v1578
      %v1703 = vadd.f32 %v1303, %v1583
      %v1704 = vadd.f32 %v1304, %v1586
      %v1705 = vadd.f32 %v1305, %v1591
      %v1706 = vadd.f32 %v1306, %v1594
      %v1707 = vadd.f32 %v1307, %v1599
      %v1708 = vadd.f32 %v1308, %v1602
      %v1709 = vadd.f32 %v1309, %v1607
      %v1710 = vadd.f32 %v1310, %v1610
      %v1711 = vadd.f32 %v1311, %v1615
      %v1712 = vadd.f32 %v1312, %v1618
      %v1713 = vadd.f32 %v1313, %v1623
      %v1714 = vadd.f32 %v1314, %v1626
      %v1715 = vadd.f32 %v1315, %v1631
      %v1716 = vadd.f32 %v1316, %v1634
      %v1717 = vadd.f32 %v1317, %v1639
      %v1718 = vadd.f32 %v1318, %v1642
      %v1719 = vadd.f32 %v1319, %v1647
      %v1720 = vadd.f32 %v1320, %v1650
      %v1721 = vadd.f32 %v1321, %v1655
      %v1722 = vadd.f32 %v1322, %v1658
      %v1723 = vadd.f32 %v1323, %v1663
      %v1724 = vadd.f32 %v1324, %v1666
      %v1725 = vadd.f32 %v1325, %v1671
      %v1726 = vadd.f32 %v1326, %v1674
      %v1727 = vadd.f32 %v1327, %v1679
      %v1728 = vadd.f32 %v1328, %v1682
      %v1729 = vadd.f32 %v1329, %v1687
      %v1730 = vadd.f32 %v1330, %v1690
      %s1731 = scalar_lea.vmem %s1, 256
      %v1732 = vld [vmem:[%s1731] sm:$0xf]
      %v1733 = vld [vmem:[%s1731 + $0x4] sm:$0xf]
      %v1734 = vld [vmem:[%s1731 + $0x8] sm:$0xf]
      %v1735 = vld [vmem:[%s1731 + $0xc] sm:$0xf]
      %v1736 = vld [vmem:[%s1731 + $0x10] sm:$0xf]
      %v1737 = vld [vmem:[%s1731 + $0x14] sm:$0xf]
      %v1738 = vld [vmem:[%s1731 + $0x18] sm:$0xf]
      %v1739 = vld [vmem:[%s1731 + $0x1c] sm:$0xf]
      %v1740 = vld [vmem:[%s1731 + $0x20] sm:$0xf]
      %v1741 = vld [vmem:[%s1731 + $0x24] sm:$0xf]
      %v1742 = vld [vmem:[%s1731 + $0x28] sm:$0xf]
      %v1743 = vld [vmem:[%s1731 + $0x2c] sm:$0xf]
      %v1744 = vld [vmem:[%s1731 + $0x30] sm:$0xf]
      %v1745 = vld [vmem:[%s1731 + $0x34] sm:$0xf]
      %v1746 = vld [vmem:[%s1731 + $0x38] sm:$0xf]
      %v1747 = vld [vmem:[%s1731 + $0x3c] sm:$0xf]
      %v1764 = vunpack.c.l.b16 %v1732
      %v1765 = vunpack.c.l.b16 %v1733
      %v1766 = vunpack.c.l.b16 %v1734
      %v1767 = vunpack.c.l.b16 %v1735
      %v1768 = vunpack.c.l.b16 %v1736
      %v1769 = vunpack.c.l.b16 %v1737
      %v1770 = vunpack.c.l.b16 %v1738
      %v1771 = vunpack.c.l.b16 %v1739
      %v1772 = vunpack.c.l.b16 %v1740
      %v1773 = vunpack.c.l.b16 %v1741
      %v1774 = vunpack.c.l.b16 %v1742
      %v1775 = vunpack.c.l.b16 %v1743
      %v1776 = vunpack.c.l.b16 %v1744
      %v1777 = vunpack.c.l.b16 %v1745
      %v1778 = vunpack.c.l.b16 %v1746
      %v1779 = vunpack.c.l.b16 %v1747
      %v1780 = vpack.c.b16 %v1765, %v1764
      %v1781 = vpack.c.b16 %v1767, %v1766
      %v1782 = vpack.c.b16 %v1769, %v1768
      %v1783 = vpack.c.b16 %v1771, %v1770
      %v1784 = vpack.c.b16 %v1773, %v1772
      %v1785 = vpack.c.b16 %v1775, %v1774
      %v1786 = vpack.c.b16 %v1777, %v1776
      %v1787 = vpack.c.b16 %v1779, %v1778
      %1796 = vmatprep.subr.bf16.mxu0 0
      %1797 = vmatpush1.bf16.msra.mxu0 %v1780
      %1798 = vmatprep.subr.bf16.mxu0 0
      %1799 = vmatpush1.bf16.msra.mxu0 %v1781
      %1800 = vmatprep.subr.bf16.mxu0 0
      %1801 = vmatpush1.bf16.msra.mxu0 %v1782
      %1802 = vmatprep.subr.bf16.mxu0 0
      %1803 = vmatpush1.bf16.msra.mxu0 %v1783
      %1804 = vmatprep.subr.bf16.mxu0 0
      %1805 = vmatpush1.bf16.msra.mxu0 %v1784
      %1806 = vmatprep.subr.bf16.mxu0 0
      %1807 = vmatpush1.bf16.msra.mxu0 %v1785
      %1808 = vmatprep.subr.bf16.mxu0 0
      %1809 = vmatpush1.bf16.msra.mxu0 %v1786
      %1810 = vmatprep.subr.bf16.mxu0 0
      %1811 = vmatpush1.bf16.msra.mxu0 %v1787
      %1812 = vmatprep.subr.bf16.mxu0 0
      %1813 = vmatpush1.bf16.msra.mxu0 0
      %1814 = vmatprep.subr.bf16.mxu0 0
      %1815 = vmatpush1.bf16.msra.mxu0 0
      %1816 = vmatprep.subr.bf16.mxu0 0
      %1817 = vmatpush1.bf16.msra.mxu0 0
      %1818 = vmatprep.subr.bf16.mxu0 0
      %1819 = vmatpush1.bf16.msra.mxu0 0
      %1820 = vmatprep.subr.bf16.mxu0 0
      %1821 = vmatpush1.bf16.msra.mxu0 0
      %1822 = vmatprep.subr.bf16.mxu0 0
      %1823 = vmatpush1.bf16.msra.mxu0 0
      %1824 = vmatprep.subr.bf16.mxu0 0
      %1825 = vmatpush1.bf16.msra.mxu0 0
      %1826 = vmatprep.subr.bf16.mxu0 0
      %1827 = vmatpush1.bf16.msra.mxu0 0
      %1828 = vmatprep.mubr.bf16.mxu0 0
      %1829 = vmatmul.mubr.bf16.gmra.mrb[0].mxu0 %v1450
      %v1830 = vpop.f32.mrb[0].mxu0
      %v1831 = vadd.f32 0.0, %v1830
      %v1832 = vpop.f32.mrb[0].mxu0
      %v1833 = vpop.f32.mrb[0].mxu0
      %v1834 = vadd.f32 0.0, %v1833
      %v1835 = vpop.f32.mrb[0].mxu0
      %1836 = vmatprep.mubr.bf16.mxu0 0
      %1837 = vmatmul.mubr.bf16.gmra.mrb[0].mxu0 %v1451
      %v1838 = vpop.f32.mrb[0].mxu0
      %v1839 = vadd.f32 0.0, %v1838
      %v1840 = vpop.f32.mrb[0].mxu0
      %v1841 = vpop.f32.mrb[0].mxu0
      %v1842 = vadd.f32 0.0, %v1841
      %v1843 = vpop.f32.mrb[0].mxu0
      %1844 = vmatprep.mubr.bf16.mxu0 0
      %1845 = vmatmul.mubr.bf16.gmra.mrb[0].mxu0 %v1452
      %v1846 = vpop.f32.mrb[0].mxu0
      %v1847 = vadd.f32 0.0, %v1846
      %v1848 = vpop.f32.mrb[0].mxu0
      %v1849 = vpop.f32.mrb[0].mxu0
      %v1850 = vadd.f32 0.0, %v1849
      %v1851 = vpop.f32.mrb[0].mxu0
      %1852 = vmatprep.mubr.bf16.mxu0 0
      %1853 = vmatmul.mubr.bf16.gmra.mrb[0].mxu0 %v1453
      %v1854 = vpop.f32.mrb[0].mxu0
      %v1855 = vadd.f32 0.0, %v1854
      %v1856 = vpop.f32.mrb[0].mxu0
      %v1857 = vpop.f32.mrb[0].mxu0
      %v1858 = vadd.f32 0.0, %v1857
      %v1859 = vpop.f32.mrb[0].mxu0
      %1860 = vmatprep.mubr.bf16.mxu0 0
      %1861 = vmatmul.mubr.bf16.gmra.mrb[0].mxu0 %v1454
      %v1862 = vpop.f32.mrb[0].mxu0
      %v1863 = vadd.f32 0.0, %v1862
      %v1864 = vpop.f32.mrb[0].mxu0
      %v1865 = vpop.f32.mrb[0].mxu0
      %v1866 = vadd.f32 0.0, %v1865
      %v1867 = vpop.f32.mrb[0].mxu0
      %1868 = vmatprep.mubr.bf16.mxu0 0
      %1869 = vmatmul.mubr.bf16.gmra.mrb[0].mxu0 %v1455
      %v1870 = vpop.f32.mrb[0].mxu0
      %v1871 = vadd.f32 0.0, %v1870
      %v1872 = vpop.f32.mrb[0].mxu0
      %v1873 = vpop.f32.mrb[0].mxu0
      %v1874 = vadd.f32 0.0, %v1873
      %v1875 = vpop.f32.mrb[0].mxu0
      %1876 = vmatprep.mubr.bf16.mxu0 0
      %1877 = vmatmul.mubr.bf16.gmra.mrb[0].mxu0 %v1456
      %v1878 = vpop.f32.mrb[0].mxu0
      %v1879 = vadd.f32 0.0, %v1878
      %v1880 = vpop.f32.mrb[0].mxu0
      %v1881 = vpop.f32.mrb[0].mxu0
      %v1882 = vadd.f32 0.0, %v1881
      %v1883 = vpop.f32.mrb[0].mxu0
      %1884 = vmatprep.mubr.bf16.mxu0 0
      %1885 = vmatmul.mubr.bf16.gmra.mrb[0].mxu0 %v1457
      %v1886 = vpop.f32.mrb[0].mxu0
      %v1887 = vadd.f32 0.0, %v1886
      %v1888 = vpop.f32.mrb[0].mxu0
      %v1889 = vpop.f32.mrb[0].mxu0
      %v1890 = vadd.f32 0.0, %v1889
      %v1891 = vpop.f32.mrb[0].mxu0
      %1892 = vmatprep.mubr.bf16.mxu0 0
      %1893 = vmatmul.mubr.bf16.gmra.mrb[0].mxu0 %v1458
      %v1894 = vpop.f32.mrb[0].mxu0
      %v1895 = vadd.f32 0.0, %v1894
      %v1896 = vpop.f32.mrb[0].mxu0
      %v1897 = vpop.f32.mrb[0].mxu0
      %v1898 = vadd.f32 0.0, %v1897
      %v1899 = vpop.f32.mrb[0].mxu0
      %1900 = vmatprep.mubr.bf16.mxu0 0
      %1901 = vmatmul.mubr.bf16.gmra.mrb[0].mxu0 %v1459
      %v1902 = vpop.f32.mrb[0].mxu0
      %v1903 = vadd.f32 0.0, %v1902
      %v1904 = vpop.f32.mrb[0].mxu0
      %v1905 = vpop.f32.mrb[0].mxu0
      %v1906 = vadd.f32 0.0, %v1905
      %v1907 = vpop.f32.mrb[0].mxu0
      %1908 = vmatprep.mubr.bf16.mxu0 0
      %1909 = vmatmul.mubr.bf16.gmra.mrb[0].mxu0 %v1460
      %v1910 = vpop.f32.mrb[0].mxu0
      %v1911 = vadd.f32 0.0, %v1910
      %v1912 = vpop.f32.mrb[0].mxu0
      %v1913 = vpop.f32.mrb[0].mxu0
      %v1914 = vadd.f32 0.0, %v1913
      %v1915 = vpop.f32.mrb[0].mxu0
      %1916 = vmatprep.mubr.bf16.mxu0 0
      %1917 = vmatmul.mubr.bf16.gmra.mrb[0].mxu0 %v1461
      %v1918 = vpop.f32.mrb[0].mxu0
      %v1919 = vadd.f32 0.0, %v1918
      %v1920 = vpop.f32.mrb[0].mxu0
      %v1921 = vpop.f32.mrb[0].mxu0
      %v1922 = vadd.f32 0.0, %v1921
      %v1923 = vpop.f32.mrb[0].mxu0
      %1924 = vmatprep.mubr.bf16.mxu0 0
      %1925 = vmatmul.mubr.bf16.gmra.mrb[0].mxu0 %v1462
      %v1926 = vpop.f32.mrb[0].mxu0
      %v1927 = vadd.f32 0.0, %v1926
      %v1928 = vpop.f32.mrb[0].mxu0
      %v1929 = vpop.f32.mrb[0].mxu0
      %v1930 = vadd.f32 0.0, %v1929
      %v1931 = vpop.f32.mrb[0].mxu0
      %1932 = vmatprep.mubr.bf16.mxu0 0
      %1933 = vmatmul.mubr.bf16.gmra.mrb[0].mxu0 %v1463
      %v1934 = vpop.f32.mrb[0].mxu0
      %v1935 = vadd.f32 0.0, %v1934
      %v1936 = vpop.f32.mrb[0].mxu0
      %v1937 = vpop.f32.mrb[0].mxu0
      %v1938 = vadd.f32 0.0, %v1937
      %v1939 = vpop.f32.mrb[0].mxu0
      %1940 = vmatprep.mubr.bf16.mxu0 0
      %1941 = vmatmul.mubr.bf16.gmra.mrb[0].mxu0 %v1464
      %v1942 = vpop.f32.mrb[0].mxu0
      %v1943 = vadd.f32 0.0, %v1942
      %v1944 = vpop.f32.mrb[0].mxu0
      %v1945 = vpop.f32.mrb[0].mxu0
      %v1946 = vadd.f32 0.0, %v1945
      %v1947 = vpop.f32.mrb[0].mxu0
      %1948 = vmatprep.mubr.bf16.mxu0 0
      %1949 = vmatmul.mubr.bf16.gmra.mrb[0].mxu0 %v1465
      %v1950 = vpop.f32.mrb[0].mxu0
      %v1951 = vadd.f32 0.0, %v1950
      %v1952 = vpop.f32.mrb[0].mxu0
      %v1953 = vpop.f32.mrb[0].mxu0
      %v1954 = vadd.f32 0.0, %v1953
      %v1955 = vpop.f32.mrb[0].mxu0
      %1956 = vmatprep.mubr.bf16.mxu0 0
      %1957 = vmatmul.mubr.bf16.gmra.mrb[0].mxu0 %v1466
      %v1958 = vpop.f32.mrb[0].mxu0
      %v1959 = vadd.f32 0.0, %v1958
      %v1960 = vpop.f32.mrb[0].mxu0
      %v1961 = vpop.f32.mrb[0].mxu0
      %v1962 = vpop.f32.mrb[0].mxu0
      %1963 = vdwg.mxu0
      %v1997 = vrot.slane %v1831, 1
      %v1998 = vrot.slane %v1834, 1
      %v1999 = vsel %vm805, %v1997, %v1998
      %v2000 = vrot.slane %v1839, 1
      %v2001 = vsel %vm805, %v1998, %v2000
      %v2002 = vrot.slane %v1842, 1
      %v2003 = vsel %vm805, %v2000, %v2002
      %v2004 = vrot.slane %v1847, 1
      %v2005 = vsel %vm805, %v2002, %v2004
      %v2006 = vrot.slane %v1850, 1
      %v2007 = vsel %vm805, %v2004, %v2006
      %v2008 = vrot.slane %v1855, 1
      %v2009 = vsel %vm805, %v2006, %v2008
      %v2010 = vrot.slane %v1858, 1
      %v2011 = vsel %vm805, %v2008, %v2010
      %v2012 = vrot.slane %v1863, 1
      %v2013 = vsel %vm805, %v2010, %v2012
      %v2014 = vrot.slane %v1866, 1
      %v2015 = vsel %vm805, %v2012, %v2014
      %v2016 = vrot.slane %v1871, 1
      %v2017 = vsel %vm805, %v2014, %v2016
      %v2018 = vrot.slane %v1874, 1
      %v2019 = vsel %vm805, %v2016, %v2018
      %v2020 = vrot.slane %v1879, 1
      %v2021 = vsel %vm805, %v2018, %v2020
      %v2022 = vrot.slane %v1882, 1
      %v2023 = vsel %vm805, %v2020, %v2022
      %v2024 = vrot.slane %v1887, 1
      %v2025 = vsel %vm805, %v2022, %v2024
      %v2026 = vrot.slane %v1890, 1
      %v2027 = vsel %vm805, %v2024, %v2026
      %v2028 = vrot.slane %v1895, 1
      %v2029 = vsel %vm805, %v2026, %v2028
      %v2030 = vrot.slane %v1898, 1
      %v2031 = vsel %vm805, %v2028, %v2030
      %v2032 = vrot.slane %v1903, 1
      %v2033 = vsel %vm805, %v2030, %v2032
      %v2034 = vrot.slane %v1906, 1
      %v2035 = vsel %vm805, %v2032, %v2034
      %v2036 = vrot.slane %v1911, 1
      %v2037 = vsel %vm805, %v2034, %v2036
      %v2038 = vrot.slane %v1914, 1
      %v2039 = vsel %vm805, %v2036, %v2038
      %v2040 = vrot.slane %v1919, 1
      %v2041 = vsel %vm805, %v2038, %v2040
      %v2042 = vrot.slane %v1922, 1
      %v2043 = vsel %vm805, %v2040, %v2042
      %v2044 = vrot.slane %v1927, 1
      %v2045 = vsel %vm805, %v2042, %v2044
      %v2046 = vrot.slane %v1930, 1
      %v2047 = vsel %vm805, %v2044, %v2046
      %v2048 = vrot.slane %v1935, 1
      %v2049 = vsel %vm805, %v2046, %v2048
      %v2050 = vrot.slane %v1938, 1
      %v2051 = vsel %vm805, %v2048, %v2050
      %v2052 = vrot.slane %v1943, 1
      %v2053 = vsel %vm805, %v2050, %v2052
      %v2054 = vrot.slane %v1946, 1
      %v2055 = vsel %vm805, %v2052, %v2054
      %v2056 = vrot.slane %v1951, 1
      %v2057 = vsel %vm805, %v2054, %v2056
      %v2058 = vrot.slane %v1954, 1
      %v2059 = vsel %vm805, %v2056, %v2058
      %v2060 = vrot.slane %v1959, 1
      %v2061 = vsel %vm805, %v2058, %v2060
      %v2094 = vadd.f32 %v1699, %v1999
      %v2095 = vadd.f32 %v1700, %v2001
      %v2096 = vadd.f32 %v1701, %v2003
      %v2097 = vadd.f32 %v1702, %v2005
      %v2098 = vadd.f32 %v1703, %v2007
      %v2099 = vadd.f32 %v1704, %v2009
      %v2100 = vadd.f32 %v1705, %v2011
      %v2101 = vadd.f32 %v1706, %v2013
      %v2102 = vadd.f32 %v1707, %v2015
      %v2103 = vadd.f32 %v1708, %v2017
      %v2104 = vadd.f32 %v1709, %v2019
      %v2105 = vadd.f32 %v1710, %v2021
      %v2106 = vadd.f32 %v1711, %v2023
      %v2107 = vadd.f32 %v1712, %v2025
      %v2108 = vadd.f32 %v1713, %v2027
      %v2109 = vadd.f32 %v1714, %v2029
      %v2110 = vadd.f32 %v1715, %v2031
      %v2111 = vadd.f32 %v1716, %v2033
      %v2112 = vadd.f32 %v1717, %v2035
      %v2113 = vadd.f32 %v1718, %v2037
      %v2114 = vadd.f32 %v1719, %v2039
      %v2115 = vadd.f32 %v1720, %v2041
      %v2116 = vadd.f32 %v1721, %v2043
      %v2117 = vadd.f32 %v1722, %v2045
      %v2118 = vadd.f32 %v1723, %v2047
      %v2119 = vadd.f32 %v1724, %v2049
      %v2120 = vadd.f32 %v1725, %v2051
      %v2121 = vadd.f32 %v1726, %v2053
      %v2122 = vadd.f32 %v1727, %v2055
      %v2123 = vadd.f32 %v1728, %v2057
      %v2124 = vadd.f32 %v1729, %v2059
      %v2125 = vadd.f32 %v1730, %v2061
      %s2126 = scalar_lea.vmem %s1, 320
      %v2127 = vld [vmem:[%s2126] sm:$0xf]
      %v2128 = vld [vmem:[%s2126 + $0x4] sm:$0xf]
      %v2129 = vld [vmem:[%s2126 + $0x8] sm:$0xf]
      %v2130 = vld [vmem:[%s2126 + $0xc] sm:$0xf]
      %v2131 = vld [vmem:[%s2126 + $0x10] sm:$0xf]
      %v2132 = vld [vmem:[%s2126 + $0x14] sm:$0xf]
      %v2133 = vld [vmem:[%s2126 + $0x18] sm:$0xf]
      %v2134 = vld [vmem:[%s2126 + $0x1c] sm:$0xf]
      %v2135 = vld [vmem:[%s2126 + $0x20] sm:$0xf]
      %v2136 = vld [vmem:[%s2126 + $0x24] sm:$0xf]
      %v2137 = vld [vmem:[%s2126 + $0x28] sm:$0xf]
      %v2138 = vld [vmem:[%s2126 + $0x2c] sm:$0xf]
      %v2139 = vld [vmem:[%s2126 + $0x30] sm:$0xf]
      %v2140 = vld [vmem:[%s2126 + $0x34] sm:$0xf]
      %v2141 = vld [vmem:[%s2126 + $0x38] sm:$0xf]
      %v2142 = vld [vmem:[%s2126 + $0x3c] sm:$0xf]
      %v2159 = vunpack.c.l.b16 %v2127
      %v2160 = vunpack.c.l.b16 %v2128
      %v2161 = vunpack.c.l.b16 %v2129
      %v2162 = vunpack.c.l.b16 %v2130
      %v2163 = vunpack.c.l.b16 %v2131
      %v2164 = vunpack.c.l.b16 %v2132
      %v2165 = vunpack.c.l.b16 %v2133
      %v2166 = vunpack.c.l.b16 %v2134
      %v2167 = vunpack.c.l.b16 %v2135
      %v2168 = vunpack.c.l.b16 %v2136
      %v2169 = vunpack.c.l.b16 %v2137
      %v2170 = vunpack.c.l.b16 %v2138
      %v2171 = vunpack.c.l.b16 %v2139
      %v2172 = vunpack.c.l.b16 %v2140
      %v2173 = vunpack.c.l.b16 %v2141
      %v2174 = vunpack.c.l.b16 %v2142
      %v2175 = vpack.c.b16 %v2160, %v2159
      %v2176 = vpack.c.b16 %v2162, %v2161
      %v2177 = vpack.c.b16 %v2164, %v2163
      %v2178 = vpack.c.b16 %v2166, %v2165
      %v2179 = vpack.c.b16 %v2168, %v2167
      %v2180 = vpack.c.b16 %v2170, %v2169
      %v2181 = vpack.c.b16 %v2172, %v2171
      %v2182 = vpack.c.b16 %v2174, %v2173
      %2191 = vmatprep.subr.bf16.mxu0 0
      %2192 = vmatpush1.bf16.msra.mxu0 %v2175
      %2193 = vmatprep.subr.bf16.mxu0 0
      %2194 = vmatpush1.bf16.msra.mxu0 %v2176
      %2195 = vmatprep.subr.bf16.mxu0 0
      %2196 = vmatpush1.bf16.msra.mxu0 %v2177
      %2197 = vmatprep.subr.bf16.mxu0 0
      %2198 = vmatpush1.bf16.msra.mxu0 %v2178
      %2199 = vmatprep.subr.bf16.mxu0 0
      %2200 = vmatpush1.bf16.msra.mxu0 %v2179
      %2201 = vmatprep.subr.bf16.mxu0 0
      %2202 = vmatpush1.bf16.msra.mxu0 %v2180
      %2203 = vmatprep.subr.bf16.mxu0 0
      %2204 = vmatpush1.bf16.msra.mxu0 %v2181
      %2205 = vmatprep.subr.bf16.mxu0 0
      %2206 = vmatpush1.bf16.msra.mxu0 %v2182
      %2207 = vmatprep.subr.bf16.mxu0 0
      %2208 = vmatpush1.bf16.msra.mxu0 0
      %2209 = vmatprep.subr.bf16.mxu0 0
      %2210 = vmatpush1.bf16.msra.mxu0 0
      %2211 = vmatprep.subr.bf16.mxu0 0
      %2212 = vmatpush1.bf16.msra.mxu0 0
      %2213 = vmatprep.subr.bf16.mxu0 0
      %2214 = vmatpush1.bf16.msra.mxu0 0
      %2215 = vmatprep.subr.bf16.mxu0 0
      %2216 = vmatpush1.bf16.msra.mxu0 0
      %2217 = vmatprep.subr.bf16.mxu0 0
      %2218 = vmatpush1.bf16.msra.mxu0 0
      %2219 = vmatprep.subr.bf16.mxu0 0
      %2220 = vmatpush1.bf16.msra.mxu0 0
      %2221 = vmatprep.subr.bf16.mxu0 0
      %2222 = vmatpush1.bf16.msra.mxu0 0
      %2223 = vmatprep.mubr.bf16.mxu0 0
      %2224 = vmatmul.mubr.bf16.gmra.mrb[0].mxu0 %v1450
      %v2225 = vpop.f32.mrb[0].mxu0
      %v2226 = vadd.f32 0.0, %v2225
      %v2227 = vpop.f32.mrb[0].mxu0
      %v2228 = vpop.f32.mrb[0].mxu0
      %v2229 = vadd.f32 0.0, %v2228
      %v2230 = vpop.f32.mrb[0].mxu0
      %2231 = vmatprep.mubr.bf16.mxu0 0
      %2232 = vmatmul.mubr.bf16.gmra.mrb[0].mxu0 %v1451
      %v2233 = vpop.f32.mrb[0].mxu0
      %v2234 = vadd.f32 0.0, %v2233
      %v2235 = vpop.f32.mrb[0].mxu0
      %v2236 = vpop.f32.mrb[0].mxu0
      %v2237 = vadd.f32 0.0, %v2236
      %v2238 = vpop.f32.mrb[0].mxu0
      %2239 = vmatprep.mubr.bf16.mxu0 0
      %2240 = vmatmul.mubr.bf16.gmra.mrb[0].mxu0 %v1452
      %v2241 = vpop.f32.mrb[0].mxu0
      %v2242 = vadd.f32 0.0, %v2241
      %v2243 = vpop.f32.mrb[0].mxu0
      %v2244 = vpop.f32.mrb[0].mxu0
      %v2245 = vadd.f32 0.0, %v2244
      %v2246 = vpop.f32.mrb[0].mxu0
      %2247 = vmatprep.mubr.bf16.mxu0 0
      %2248 = vmatmul.mubr.bf16.gmra.mrb[0].mxu0 %v1453
      %v2249 = vpop.f32.mrb[0].mxu0
      %v2250 = vadd.f32 0.0, %v2249
      %v2251 = vpop.f32.mrb[0].mxu0
      %v2252 = vpop.f32.mrb[0].mxu0
      %v2253 = vadd.f32 0.0, %v2252
      %v2254 = vpop.f32.mrb[0].mxu0
      %2255 = vmatprep.mubr.bf16.mxu0 0
      %2256 = vmatmul.mubr.bf16.gmra.mrb[0].mxu0 %v1454
      %v2257 = vpop.f32.mrb[0].mxu0
      %v2258 = vadd.f32 0.0, %v2257
      %v2259 = vpop.f32.mrb[0].mxu0
      %v2260 = vpop.f32.mrb[0].mxu0
      %v2261 = vadd.f32 0.0, %v2260
      %v2262 = vpop.f32.mrb[0].mxu0
      %2263 = vmatprep.mubr.bf16.mxu0 0
      %2264 = vmatmul.mubr.bf16.gmra.mrb[0].mxu0 %v1455
      %v2265 = vpop.f32.mrb[0].mxu0
      %v2266 = vadd.f32 0.0, %v2265
      %v2267 = vpop.f32.mrb[0].mxu0
      %v2268 = vpop.f32.mrb[0].mxu0
      %v2269 = vadd.f32 0.0, %v2268
      %v2270 = vpop.f32.mrb[0].mxu0
      %2271 = vmatprep.mubr.bf16.mxu0 0
      %2272 = vmatmul.mubr.bf16.gmra.mrb[0].mxu0 %v1456
      %v2273 = vpop.f32.mrb[0].mxu0
      %v2274 = vadd.f32 0.0, %v2273
      %v2275 = vpop.f32.mrb[0].mxu0
      %v2276 = vpop.f32.mrb[0].mxu0
      %v2277 = vadd.f32 0.0, %v2276
      %v2278 = vpop.f32.mrb[0].mxu0
      %2279 = vmatprep.mubr.bf16.mxu0 0
      %2280 = vmatmul.mubr.bf16.gmra.mrb[0].mxu0 %v1457
      %v2281 = vpop.f32.mrb[0].mxu0
      %v2282 = vadd.f32 0.0, %v2281
      %v2283 = vpop.f32.mrb[0].mxu0
      %v2284 = vpop.f32.mrb[0].mxu0
      %v2285 = vadd.f32 0.0, %v2284
      %v2286 = vpop.f32.mrb[0].mxu0
      %2287 = vmatprep.mubr.bf16.mxu0 0
      %2288 = vmatmul.mubr.bf16.gmra.mrb[0].mxu0 %v1458
      %v2289 = vpop.f32.mrb[0].mxu0
      %v2290 = vadd.f32 0.0, %v2289
      %v2291 = vpop.f32.mrb[0].mxu0
      %v2292 = vpop.f32.mrb[0].mxu0
      %v2293 = vadd.f32 0.0, %v2292
      %v2294 = vpop.f32.mrb[0].mxu0
      %2295 = vmatprep.mubr.bf16.mxu0 0
      %2296 = vmatmul.mubr.bf16.gmra.mrb[0].mxu0 %v1459
      %v2297 = vpop.f32.mrb[0].mxu0
      %v2298 = vadd.f32 0.0, %v2297
      %v2299 = vpop.f32.mrb[0].mxu0
      %v2300 = vpop.f32.mrb[0].mxu0
      %v2301 = vadd.f32 0.0, %v2300
      %v2302 = vpop.f32.mrb[0].mxu0
      %2303 = vmatprep.mubr.bf16.mxu0 0
      %2304 = vmatmul.mubr.bf16.gmra.mrb[0].mxu0 %v1460
      %v2305 = vpop.f32.mrb[0].mxu0
      %v2306 = vadd.f32 0.0, %v2305
      %v2307 = vpop.f32.mrb[0].mxu0
      %v2308 = vpop.f32.mrb[0].mxu0
      %v2309 = vadd.f32 0.0, %v2308
      %v2310 = vpop.f32.mrb[0].mxu0
      %2311 = vmatprep.mubr.bf16.mxu0 0
      %2312 = vmatmul.mubr.bf16.gmra.mrb[0].mxu0 %v1461
      %v2313 = vpop.f32.mrb[0].mxu0
      %v2314 = vadd.f32 0.0, %v2313
      %v2315 = vpop.f32.mrb[0].mxu0
      %v2316 = vpop.f32.mrb[0].mxu0
      %v2317 = vadd.f32 0.0, %v2316
      %v2318 = vpop.f32.mrb[0].mxu0
      %2319 = vmatprep.mubr.bf16.mxu0 0
      %2320 = vmatmul.mubr.bf16.gmra.mrb[0].mxu0 %v1462
      %v2321 = vpop.f32.mrb[0].mxu0
      %v2322 = vadd.f32 0.0, %v2321
      %v2323 = vpop.f32.mrb[0].mxu0
      %v2324 = vpop.f32.mrb[0].mxu0
      %v2325 = vadd.f32 0.0, %v2324
      %v2326 = vpop.f32.mrb[0].mxu0
      %2327 = vmatprep.mubr.bf16.mxu0 0
      %2328 = vmatmul.mubr.bf16.gmra.mrb[0].mxu0 %v1463
      %v2329 = vpop.f32.mrb[0].mxu0
      %v2330 = vadd.f32 0.0, %v2329
      %v2331 = vpop.f32.mrb[0].mxu0
      %v2332 = vpop.f32.mrb[0].mxu0
      %v2333 = vadd.f32 0.0, %v2332
      %v2334 = vpop.f32.mrb[0].mxu0
      %2335 = vmatprep.mubr.bf16.mxu0 0
      %2336 = vmatmul.mubr.bf16.gmra.mrb[0].mxu0 %v1464
      %v2337 = vpop.f32.mrb[0].mxu0
      %v2338 = vadd.f32 0.0, %v2337
      %v2339 = vpop.f32.mrb[0].mxu0
      %v2340 = vpop.f32.mrb[0].mxu0
      %v2341 = vadd.f32 0.0, %v2340
      %v2342 = vpop.f32.mrb[0].mxu0
      %2343 = vmatprep.mubr.bf16.mxu0 0
      %2344 = vmatmul.mubr.bf16.gmra.mrb[0].mxu0 %v1465
      %v2345 = vpop.f32.mrb[0].mxu0
      %v2346 = vadd.f32 0.0, %v2345
      %v2347 = vpop.f32.mrb[0].mxu0
      %v2348 = vpop.f32.mrb[0].mxu0
      %v2349 = vadd.f32 0.0, %v2348
      %v2350 = vpop.f32.mrb[0].mxu0
      %2351 = vmatprep.mubr.bf16.mxu0 0
      %2352 = vmatmul.mubr.bf16.gmra.mrb[0].mxu0 %v1466
      %v2353 = vpop.f32.mrb[0].mxu0
      %v2354 = vadd.f32 0.0, %v2353
      %v2355 = vpop.f32.mrb[0].mxu0
      %v2356 = vpop.f32.mrb[0].mxu0
      %v2357 = vpop.f32.mrb[0].mxu0
      %2358 = vdwg.mxu0
      %v2392 = vrot.slane %v2226, 2
      %v2393 = vrot.slane %v2229, 2
      %v2394 = vsel %vm1201, %v2392, %v2393
      %v2395 = vrot.slane %v2234, 2
      %v2396 = vsel %vm1201, %v2393, %v2395
      %v2397 = vrot.slane %v2237, 2
      %v2398 = vsel %vm1201, %v2395, %v2397
      %v2399 = vrot.slane %v2242, 2
      %v2400 = vsel %vm1201, %v2397, %v2399
      %v2401 = vrot.slane %v2245, 2
      %v2402 = vsel %vm1201, %v2399, %v2401
      %v2403 = vrot.slane %v2250, 2
      %v2404 = vsel %vm1201, %v2401, %v2403
      %v2405 = vrot.slane %v2253, 2
      %v2406 = vsel %vm1201, %v2403, %v2405
      %v2407 = vrot.slane %v2258, 2
      %v2408 = vsel %vm1201, %v2405, %v2407
      %v2409 = vrot.slane %v2261, 2
      %v2410 = vsel %vm1201, %v2407, %v2409
      %v2411 = vrot.slane %v2266, 2
      %v2412 = vsel %vm1201, %v2409, %v2411
      %v2413 = vrot.slane %v2269, 2
      %v2414 = vsel %vm1201, %v2411, %v2413
      %v2415 = vrot.slane %v2274, 2
      %v2416 = vsel %vm1201, %v2413, %v2415
      %v2417 = vrot.slane %v2277, 2
      %v2418 = vsel %vm1201, %v2415, %v2417
      %v2419 = vrot.slane %v2282, 2
      %v2420 = vsel %vm1201, %v2417, %v2419
      %v2421 = vrot.slane %v2285, 2
      %v2422 = vsel %vm1201, %v2419, %v2421
      %v2423 = vrot.slane %v2290, 2
      %v2424 = vsel %vm1201, %v2421, %v2423
      %v2425 = vrot.slane %v2293, 2
      %v2426 = vsel %vm1201, %v2423, %v2425
      %v2427 = vrot.slane %v2298, 2
      %v2428 = vsel %vm1201, %v2425, %v2427
      %v2429 = vrot.slane %v2301, 2
      %v2430 = vsel %vm1201, %v2427, %v2429
      %v2431 = vrot.slane %v2306, 2
      %v2432 = vsel %vm1201, %v2429, %v2431
      %v2433 = vrot.slane %v2309, 2
      %v2434 = vsel %vm1201, %v2431, %v2433
      %v2435 = vrot.slane %v2314, 2
      %v2436 = vsel %vm1201, %v2433, %v2435
      %v2437 = vrot.slane %v2317, 2
      %v2438 = vsel %vm1201, %v2435, %v2437
      %v2439 = vrot.slane %v2322, 2
      %v2440 = vsel %vm1201, %v2437, %v2439
      %v2441 = vrot.slane %v2325, 2
      %v2442 = vsel %vm1201, %v2439, %v2441
      %v2443 = vrot.slane %v2330, 2
      %v2444 = vsel %vm1201, %v2441, %v2443
      %v2445 = vrot.slane %v2333, 2
      %v2446 = vsel %vm1201, %v2443, %v2445
      %v2447 = vrot.slane %v2338, 2
      %v2448 = vsel %vm1201, %v2445, %v2447
      %v2449 = vrot.slane %v2341, 2
      %v2450 = vsel %vm1201, %v2447, %v2449
      %v2451 = vrot.slane %v2346, 2
      %v2452 = vsel %vm1201, %v2449, %v2451
      %v2453 = vrot.slane %v2349, 2
      %v2454 = vsel %vm1201, %v2451, %v2453
      %v2455 = vrot.slane %v2354, 2
      %v2456 = vsel %vm1201, %v2453, %v2455
      %v2489 = vadd.f32 %v2094, %v2394
      %v2490 = vadd.f32 %v2095, %v2396
      %v2491 = vadd.f32 %v2096, %v2398
      %v2492 = vadd.f32 %v2097, %v2400
      %v2493 = vadd.f32 %v2098, %v2402
      %v2494 = vadd.f32 %v2099, %v2404
      %v2495 = vadd.f32 %v2100, %v2406
      %v2496 = vadd.f32 %v2101, %v2408
      %v2497 = vadd.f32 %v2102, %v2410
      %v2498 = vadd.f32 %v2103, %v2412
      %v2499 = vadd.f32 %v2104, %v2414
      %v2500 = vadd.f32 %v2105, %v2416
      %v2501 = vadd.f32 %v2106, %v2418
      %v2502 = vadd.f32 %v2107, %v2420
      %v2503 = vadd.f32 %v2108, %v2422
      %v2504 = vadd.f32 %v2109, %v2424
      %v2505 = vadd.f32 %v2110, %v2426
      %v2506 = vadd.f32 %v2111, %v2428
      %v2507 = vadd.f32 %v2112, %v2430
      %v2508 = vadd.f32 %v2113, %v2432
      %v2509 = vadd.f32 %v2114, %v2434
      %v2510 = vadd.f32 %v2115, %v2436
      %v2511 = vadd.f32 %v2116, %v2438
      %v2512 = vadd.f32 %v2117, %v2440
      %v2513 = vadd.f32 %v2118, %v2442
      %v2514 = vadd.f32 %v2119, %v2444
      %v2515 = vadd.f32 %v2120, %v2446
      %v2516 = vadd.f32 %v2121, %v2448
      %v2517 = vadd.f32 %v2122, %v2450
      %v2518 = vadd.f32 %v2123, %v2452
      %v2519 = vadd.f32 %v2124, %v2454
      %v2520 = vadd.f32 %v2125, %v2456
      %v2521 = vld [vmem:[%s165 + $0x20] sm:$0xf]
      %v2522 = vld [vmem:[%s165 + $0x24] sm:$0xf]
      %v2523 = vld [vmem:[%s165 + $0x28] sm:$0xf]
      %v2524 = vld [vmem:[%s165 + $0x2c] sm:$0xf]
      %v2525 = vld [vmem:[%s165 + $0x30] sm:$0xf]
      %v2526 = vld [vmem:[%s165 + $0x34] sm:$0xf]
      %v2527 = vld [vmem:[%s165 + $0x38] sm:$0xf]
      %v2528 = vld [vmem:[%s165 + $0x3c] sm:$0xf]
      %v2529 = vld [vmem:[%s165 + $0x40] sm:$0xf]
      %v2530 = vld [vmem:[%s165 + $0x44] sm:$0xf]
      %v2531 = vld [vmem:[%s165 + $0x48] sm:$0xf]
      %v2532 = vld [vmem:[%s165 + $0x4c] sm:$0xf]
      %v2533 = vld [vmem:[%s165 + $0x50] sm:$0xf]
      %v2534 = vld [vmem:[%s165 + $0x54] sm:$0xf]
      %v2535 = vld [vmem:[%s165 + $0x58] sm:$0xf]
      %v2536 = vld [vmem:[%s165 + $0x5c] sm:$0xf]
      %v2537 = vld [vmem:[%s165 + $0x60] sm:$0xf]
      %v2538 = vld [vmem:[%s165 + $0x64] sm:$0xf]
      %v2539 = vld [vmem:[%s165 + $0x68] sm:$0xf]
      %v2540 = vld [vmem:[%s165 + $0x6c] sm:$0xf]
      %v2541 = vld [vmem:[%s165 + $0x70] sm:$0xf]
      %v2542 = vld [vmem:[%s165 + $0x74] sm:$0xf]
      %v2543 = vld [vmem:[%s165 + $0x78] sm:$0xf]
      %v2544 = vld [vmem:[%s165 + $0x7c] sm:$0xf]
      %v2545 = vld [vmem:[%s165 + $0x80] sm:$0xf]
      %v2546 = vld [vmem:[%s165 + $0x84] sm:$0xf]
      %v2547 = vld [vmem:[%s165 + $0x88] sm:$0xf]
      %v2548 = vld [vmem:[%s165 + $0x8c] sm:$0xf]
      %v2549 = vld [vmem:[%s165 + $0x90] sm:$0xf]
      %v2550 = vld [vmem:[%s165 + $0x94] sm:$0xf]
      %v2551 = vld [vmem:[%s165 + $0x98] sm:$0xf]
      %v2552 = vld [vmem:[%s165 + $0x9c] sm:$0xf]
      %v2553 = vld [vmem:[%s165 + $0xa0] sm:$0xf]
      %v2554 = vld [vmem:[%s165 + $0xa4] sm:$0xf]
      %s2555 = scalar_lea.vmem %s1, 384
      %v2556 = vld [vmem:[%s2555] sm:$0xf]
      %v2557 = vld [vmem:[%s2555 + $0x4] sm:$0xf]
      %v2558 = vld [vmem:[%s2555 + $0x8] sm:$0xf]
      %v2559 = vld [vmem:[%s2555 + $0xc] sm:$0xf]
      %v2560 = vld [vmem:[%s2555 + $0x10] sm:$0xf]
      %v2561 = vld [vmem:[%s2555 + $0x14] sm:$0xf]
      %v2562 = vld [vmem:[%s2555 + $0x18] sm:$0xf]
      %v2563 = vld [vmem:[%s2555 + $0x1c] sm:$0xf]
      %v2564 = vld [vmem:[%s2555 + $0x20] sm:$0xf]
      %v2565 = vld [vmem:[%s2555 + $0x24] sm:$0xf]
      %v2566 = vld [vmem:[%s2555 + $0x28] sm:$0xf]
      %v2567 = vld [vmem:[%s2555 + $0x2c] sm:$0xf]
      %v2568 = vld [vmem:[%s2555 + $0x30] sm:$0xf]
      %v2569 = vld [vmem:[%s2555 + $0x34] sm:$0xf]
      %v2570 = vld [vmem:[%s2555 + $0x38] sm:$0xf]
      %v2571 = vld [vmem:[%s2555 + $0x3c] sm:$0xf]
      %v2606 = vunpack.c.l.b16 %v2521
      %v2607 = vunpack.c.l.b16 %v2522
      %v2608 = vunpack.c.l.b16 %v2523
      %v2609 = vunpack.c.l.b16 %v2524
      %v2610 = vunpack.c.l.b16 %v2525
      %v2611 = vunpack.c.l.b16 %v2526
      %v2612 = vunpack.c.l.b16 %v2527
      %v2613 = vunpack.c.l.b16 %v2528
      %v2614 = vunpack.c.l.b16 %v2529
      %v2615 = vunpack.c.l.b16 %v2530
      %v2616 = vunpack.c.l.b16 %v2531
      %v2617 = vunpack.c.l.b16 %v2532
      %v2618 = vunpack.c.l.b16 %v2533
      %v2619 = vunpack.c.l.b16 %v2534
      %v2620 = vunpack.c.l.b16 %v2535
      %v2621 = vunpack.c.l.b16 %v2536
      %v2622 = vunpack.c.l.b16 %v2537
      %v2623 = vunpack.c.l.b16 %v2538
      %v2624 = vunpack.c.l.b16 %v2539
      %v2625 = vunpack.c.l.b16 %v2540
      %v2626 = vunpack.c.l.b16 %v2541
      %v2627 = vunpack.c.l.b16 %v2542
      %v2628 = vunpack.c.l.b16 %v2543
      %v2629 = vunpack.c.l.b16 %v2544
      %v2630 = vunpack.c.l.b16 %v2545
      %v2631 = vunpack.c.l.b16 %v2546
      %v2632 = vunpack.c.l.b16 %v2547
      %v2633 = vunpack.c.l.b16 %v2548
      %v2634 = vunpack.c.l.b16 %v2549
      %v2635 = vunpack.c.l.b16 %v2550
      %v2636 = vunpack.c.l.b16 %v2551
      %v2637 = vunpack.c.l.b16 %v2552
      %v2638 = vunpack.c.l.b16 %v2553
      %v2639 = vunpack.c.l.b16 %v2554
      %v2640 = vpack.c.b16 %v2607, %v2606
      %v2641 = vpack.c.b16 %v2609, %v2608
      %v2642 = vpack.c.b16 %v2611, %v2610
      %v2643 = vpack.c.b16 %v2613, %v2612
      %v2644 = vpack.c.b16 %v2615, %v2614
      %v2645 = vpack.c.b16 %v2617, %v2616
      %v2646 = vpack.c.b16 %v2619, %v2618
      %v2647 = vpack.c.b16 %v2621, %v2620
      %v2648 = vpack.c.b16 %v2623, %v2622
      %v2649 = vpack.c.b16 %v2625, %v2624
      %v2650 = vpack.c.b16 %v2627, %v2626
      %v2651 = vpack.c.b16 %v2629, %v2628
      %v2652 = vpack.c.b16 %v2631, %v2630
      %v2653 = vpack.c.b16 %v2633, %v2632
      %v2654 = vpack.c.b16 %v2635, %v2634
      %v2655 = vpack.c.b16 %v2637, %v2636
      %v2656 = vpack.c.b16 %v2639, %v2638
      %v2690 = vunpack.c.l.b16 %v2556
      %v2691 = vunpack.c.l.b16 %v2557
      %v2692 = vunpack.c.l.b16 %v2558
      %v2693 = vunpack.c.l.b16 %v2559
      %v2694 = vunpack.c.l.b16 %v2560
      %v2695 = vunpack.c.l.b16 %v2561
      %v2696 = vunpack.c.l.b16 %v2562
      %v2697 = vunpack.c.l.b16 %v2563
      %v2698 = vunpack.c.l.b16 %v2564
      %v2699 = vunpack.c.l.b16 %v2565
      %v2700 = vunpack.c.l.b16 %v2566
      %v2701 = vunpack.c.l.b16 %v2567
      %v2702 = vunpack.c.l.b16 %v2568
      %v2703 = vunpack.c.l.b16 %v2569
      %v2704 = vunpack.c.l.b16 %v2570
      %v2705 = vunpack.c.l.b16 %v2571
      %v2706 = vpack.c.b16 %v2691, %v2690
      %v2707 = vpack.c.b16 %v2693, %v2692
      %v2708 = vpack.c.b16 %v2695, %v2694
      %v2709 = vpack.c.b16 %v2697, %v2696
      %v2710 = vpack.c.b16 %v2699, %v2698
      %v2711 = vpack.c.b16 %v2701, %v2700
      %v2712 = vpack.c.b16 %v2703, %v2702
      %v2713 = vpack.c.b16 %v2705, %v2704
      %2722 = vmatprep.subr.bf16.mxu0 0
      %2723 = vmatpush1.bf16.msra.mxu0 %v2706
      %2724 = vmatprep.subr.bf16.mxu0 0
      %2725 = vmatpush1.bf16.msra.mxu0 %v2707
      %2726 = vmatprep.subr.bf16.mxu0 0
      %2727 = vmatpush1.bf16.msra.mxu0 %v2708
      %2728 = vmatprep.subr.bf16.mxu0 0
      %2729 = vmatpush1.bf16.msra.mxu0 %v2709
      %2730 = vmatprep.subr.bf16.mxu0 0
      %2731 = vmatpush1.bf16.msra.mxu0 %v2710
      %2732 = vmatprep.subr.bf16.mxu0 0
      %2733 = vmatpush1.bf16.msra.mxu0 %v2711
      %2734 = vmatprep.subr.bf16.mxu0 0
      %2735 = vmatpush1.bf16.msra.mxu0 %v2712
      %2736 = vmatprep.subr.bf16.mxu0 0
      %2737 = vmatpush1.bf16.msra.mxu0 %v2713
      %2738 = vmatprep.subr.bf16.mxu0 0
      %2739 = vmatpush1.bf16.msra.mxu0 0
      %2740 = vmatprep.subr.bf16.mxu0 0
      %2741 = vmatpush1.bf16.msra.mxu0 0
      %2742 = vmatprep.subr.bf16.mxu0 0
      %2743 = vmatpush1.bf16.msra.mxu0 0
      %2744 = vmatprep.subr.bf16.mxu0 0
      %2745 = vmatpush1.bf16.msra.mxu0 0
      %2746 = vmatprep.subr.bf16.mxu0 0
      %2747 = vmatpush1.bf16.msra.mxu0 0
      %2748 = vmatprep.subr.bf16.mxu0 0
      %2749 = vmatpush1.bf16.msra.mxu0 0
      %2750 = vmatprep.subr.bf16.mxu0 0
      %2751 = vmatpush1.bf16.msra.mxu0 0
      %2752 = vmatprep.subr.bf16.mxu0 0
      %2753 = vmatpush1.bf16.msra.mxu0 0
      %2754 = vmatprep.mubr.bf16.mxu0 0
      %2755 = vmatmul.mubr.bf16.gmra.mrb[0].mxu0 %v2640
      %v2756 = vpop.f32.mrb[0].mxu0
      %v2757 = vadd.f32 0.0, %v2756
      %v2758 = vpop.f32.mrb[0].mxu0
      %v2759 = vpop.f32.mrb[0].mxu0
      %v2760 = vadd.f32 0.0, %v2759
      %v2761 = vpop.f32.mrb[0].mxu0
      %2762 = vmatprep.mubr.bf16.mxu0 0
      %2763 = vmatmul.mubr.bf16.gmra.mrb[0].mxu0 %v2641
      %v2764 = vpop.f32.mrb[0].mxu0
      %v2765 = vadd.f32 0.0, %v2764
      %v2766 = vpop.f32.mrb[0].mxu0
      %v2767 = vpop.f32.mrb[0].mxu0
      %v2768 = vadd.f32 0.0, %v2767
      %v2769 = vpop.f32.mrb[0].mxu0
      %2770 = vmatprep.mubr.bf16.mxu0 0
      %2771 = vmatmul.mubr.bf16.gmra.mrb[0].mxu0 %v2642
      %v2772 = vpop.f32.mrb[0].mxu0
      %v2773 = vadd.f32 0.0, %v2772
      %v2774 = vpop.f32.mrb[0].mxu0
      %v2775 = vpop.f32.mrb[0].mxu0
      %v2776 = vadd.f32 0.0, %v2775
      %v2777 = vpop.f32.mrb[0].mxu0
      %2778 = vmatprep.mubr.bf16.mxu0 0
      %2779 = vmatmul.mubr.bf16.gmra.mrb[0].mxu0 %v2643
      %v2780 = vpop.f32.mrb[0].mxu0
      %v2781 = vadd.f32 0.0, %v2780
      %v2782 = vpop.f32.mrb[0].mxu0
      %v2783 = vpop.f32.mrb[0].mxu0
      %v2784 = vadd.f32 0.0, %v2783
      %v2785 = vpop.f32.mrb[0].mxu0
      %2786 = vmatprep.mubr.bf16.mxu0 0
      %2787 = vmatmul.mubr.bf16.gmra.mrb[0].mxu0 %v2644
      %v2788 = vpop.f32.mrb[0].mxu0
      %v2789 = vadd.f32 0.0, %v2788
      %v2790 = vpop.f32.mrb[0].mxu0
      %v2791 = vpop.f32.mrb[0].mxu0
      %v2792 = vadd.f32 0.0, %v2791
      %v2793 = vpop.f32.mrb[0].mxu0
      %2794 = vmatprep.mubr.bf16.mxu0 0
      %2795 = vmatmul.mubr.bf16.gmra.mrb[0].mxu0 %v2645
      %v2796 = vpop.f32.mrb[0].mxu0
      %v2797 = vadd.f32 0.0, %v2796
      %v2798 = vpop.f32.mrb[0].mxu0
      %v2799 = vpop.f32.mrb[0].mxu0
      %v2800 = vadd.f32 0.0, %v2799
      %v2801 = vpop.f32.mrb[0].mxu0
      %2802 = vmatprep.mubr.bf16.mxu0 0
      %2803 = vmatmul.mubr.bf16.gmra.mrb[0].mxu0 %v2646
      %v2804 = vpop.f32.mrb[0].mxu0
      %v2805 = vadd.f32 0.0, %v2804
      %v2806 = vpop.f32.mrb[0].mxu0
      %v2807 = vpop.f32.mrb[0].mxu0
      %v2808 = vadd.f32 0.0, %v2807
      %v2809 = vpop.f32.mrb[0].mxu0
      %2810 = vmatprep.mubr.bf16.mxu0 0
      %2811 = vmatmul.mubr.bf16.gmra.mrb[0].mxu0 %v2647
      %v2812 = vpop.f32.mrb[0].mxu0
      %v2813 = vadd.f32 0.0, %v2812
      %v2814 = vpop.f32.mrb[0].mxu0
      %v2815 = vpop.f32.mrb[0].mxu0
      %v2816 = vadd.f32 0.0, %v2815
      %v2817 = vpop.f32.mrb[0].mxu0
      %2818 = vmatprep.mubr.bf16.mxu0 0
      %2819 = vmatmul.mubr.bf16.gmra.mrb[0].mxu0 %v2648
      %v2820 = vpop.f32.mrb[0].mxu0
      %v2821 = vadd.f32 0.0, %v2820
      %v2822 = vpop.f32.mrb[0].mxu0
      %v2823 = vpop.f32.mrb[0].mxu0
      %v2824 = vadd.f32 0.0, %v2823
      %v2825 = vpop.f32.mrb[0].mxu0
      %2826 = vmatprep.mubr.bf16.mxu0 0
      %2827 = vmatmul.mubr.bf16.gmra.mrb[0].mxu0 %v2649
      %v2828 = vpop.f32.mrb[0].mxu0
      %v2829 = vadd.f32 0.0, %v2828
      %v2830 = vpop.f32.mrb[0].mxu0
      %v2831 = vpop.f32.mrb[0].mxu0
      %v2832 = vadd.f32 0.0, %v2831
      %v2833 = vpop.f32.mrb[0].mxu0
      %2834 = vmatprep.mubr.bf16.mxu0 0
      %2835 = vmatmul.mubr.bf16.gmra.mrb[0].mxu0 %v2650
      %v2836 = vpop.f32.mrb[0].mxu0
      %v2837 = vadd.f32 0.0, %v2836
      %v2838 = vpop.f32.mrb[0].mxu0
      %v2839 = vpop.f32.mrb[0].mxu0
      %v2840 = vadd.f32 0.0, %v2839
      %v2841 = vpop.f32.mrb[0].mxu0
      %2842 = vmatprep.mubr.bf16.mxu0 0
      %2843 = vmatmul.mubr.bf16.gmra.mrb[0].mxu0 %v2651
      %v2844 = vpop.f32.mrb[0].mxu0
      %v2845 = vadd.f32 0.0, %v2844
      %v2846 = vpop.f32.mrb[0].mxu0
      %v2847 = vpop.f32.mrb[0].mxu0
      %v2848 = vadd.f32 0.0, %v2847
      %v2849 = vpop.f32.mrb[0].mxu0
      %2850 = vmatprep.mubr.bf16.mxu0 0
      %2851 = vmatmul.mubr.bf16.gmra.mrb[0].mxu0 %v2652
      %v2852 = vpop.f32.mrb[0].mxu0
      %v2853 = vadd.f32 0.0, %v2852
      %v2854 = vpop.f32.mrb[0].mxu0
      %v2855 = vpop.f32.mrb[0].mxu0
      %v2856 = vadd.f32 0.0, %v2855
      %v2857 = vpop.f32.mrb[0].mxu0
      %2858 = vmatprep.mubr.bf16.mxu0 0
      %2859 = vmatmul.mubr.bf16.gmra.mrb[0].mxu0 %v2653
      %v2860 = vpop.f32.mrb[0].mxu0
      %v2861 = vadd.f32 0.0, %v2860
      %v2862 = vpop.f32.mrb[0].mxu0
      %v2863 = vpop.f32.mrb[0].mxu0
      %v2864 = vadd.f32 0.0, %v2863
      %v2865 = vpop.f32.mrb[0].mxu0
      %2866 = vmatprep.mubr.bf16.mxu0 0
      %2867 = vmatmul.mubr.bf16.gmra.mrb[0].mxu0 %v2654
      %v2868 = vpop.f32.mrb[0].mxu0
      %v2869 = vadd.f32 0.0, %v2868
      %v2870 = vpop.f32.mrb[0].mxu0
      %v2871 = vpop.f32.mrb[0].mxu0
      %v2872 = vadd.f32 0.0, %v2871
      %v2873 = vpop.f32.mrb[0].mxu0
      %2874 = vmatprep.mubr.bf16.mxu0 0
      %2875 = vmatmul.mubr.bf16.gmra.mrb[0].mxu0 %v2655
      %v2876 = vpop.f32.mrb[0].mxu0
      %v2877 = vadd.f32 0.0, %v2876
      %v2878 = vpop.f32.mrb[0].mxu0
      %v2879 = vpop.f32.mrb[0].mxu0
      %v2880 = vadd.f32 0.0, %v2879
      %v2881 = vpop.f32.mrb[0].mxu0
      %2882 = vmatprep.mubr.bf16.mxu0 0
      %2883 = vmatmul.mubr.bf16.gmra.mrb[0].mxu0 %v2656
      %v2884 = vpop.f32.mrb[0].mxu0
      %v2885 = vpop.f32.mrb[0].mxu0
      %v2886 = vpop.f32.mrb[0].mxu0
      %v2887 = vpop.f32.mrb[0].mxu0
      %2888 = vdwg.mxu0
      %v2889 = vadd.f32 %v2489, %v2757
      %v2890 = vadd.f32 %v2490, %v2760
      %v2891 = vadd.f32 %v2491, %v2765
      %v2892 = vadd.f32 %v2492, %v2768
      %v2893 = vadd.f32 %v2493, %v2773
      %v2894 = vadd.f32 %v2494, %v2776
      %v2895 = vadd.f32 %v2495, %v2781
      %v2896 = vadd.f32 %v2496, %v2784
      %v2897 = vadd.f32 %v2497, %v2789
      %v2898 = vadd.f32 %v2498, %v2792
      %v2899 = vadd.f32 %v2499, %v2797
      %v2900 = vadd.f32 %v2500, %v2800
      %v2901 = vadd.f32 %v2501, %v2805
      %v2902 = vadd.f32 %v2502, %v2808
      %v2903 = vadd.f32 %v2503, %v2813
      %v2904 = vadd.f32 %v2504, %v2816
      %v2905 = vadd.f32 %v2505, %v2821
      %v2906 = vadd.f32 %v2506, %v2824
      %v2907 = vadd.f32 %v2507, %v2829
      %v2908 = vadd.f32 %v2508, %v2832
      %v2909 = vadd.f32 %v2509, %v2837
      %v2910 = vadd.f32 %v2510, %v2840
      %v2911 = vadd.f32 %v2511, %v2845
      %v2912 = vadd.f32 %v2512, %v2848
      %v2913 = vadd.f32 %v2513, %v2853
      %v2914 = vadd.f32 %v2514, %v2856
      %v2915 = vadd.f32 %v2515, %v2861
      %v2916 = vadd.f32 %v2516, %v2864
      %v2917 = vadd.f32 %v2517, %v2869
      %v2918 = vadd.f32 %v2518, %v2872
      %v2919 = vadd.f32 %v2519, %v2877
      %v2920 = vadd.f32 %v2520, %v2880
      %s2921 = scalar_lea.vmem %s1, 448
      %v2922 = vld [vmem:[%s2921] sm:$0xf]
      %v2923 = vld [vmem:[%s2921 + $0x4] sm:$0xf]
      %v2924 = vld [vmem:[%s2921 + $0x8] sm:$0xf]
      %v2925 = vld [vmem:[%s2921 + $0xc] sm:$0xf]
      %v2926 = vld [vmem:[%s2921 + $0x10] sm:$0xf]
      %v2927 = vld [vmem:[%s2921 + $0x14] sm:$0xf]
      %v2928 = vld [vmem:[%s2921 + $0x18] sm:$0xf]
      %v2929 = vld [vmem:[%s2921 + $0x1c] sm:$0xf]
      %v2930 = vld [vmem:[%s2921 + $0x20] sm:$0xf]
      %v2931 = vld [vmem:[%s2921 + $0x24] sm:$0xf]
      %v2932 = vld [vmem:[%s2921 + $0x28] sm:$0xf]
      %v2933 = vld [vmem:[%s2921 + $0x2c] sm:$0xf]
      %v2934 = vld [vmem:[%s2921 + $0x30] sm:$0xf]
      %v2935 = vld [vmem:[%s2921 + $0x34] sm:$0xf]
      %v2936 = vld [vmem:[%s2921 + $0x38] sm:$0xf]
      %v2937 = vld [vmem:[%s2921 + $0x3c] sm:$0xf]
      %v2954 = vunpack.c.l.b16 %v2922
      %v2955 = vunpack.c.l.b16 %v2923
      %v2956 = vunpack.c.l.b16 %v2924
      %v2957 = vunpack.c.l.b16 %v2925
      %v2958 = vunpack.c.l.b16 %v2926
      %v2959 = vunpack.c.l.b16 %v2927
      %v2960 = vunpack.c.l.b16 %v2928
      %v2961 = vunpack.c.l.b16 %v2929
      %v2962 = vunpack.c.l.b16 %v2930
      %v2963 = vunpack.c.l.b16 %v2931
      %v2964 = vunpack.c.l.b16 %v2932
      %v2965 = vunpack.c.l.b16 %v2933
      %v2966 = vunpack.c.l.b16 %v2934
      %v2967 = vunpack.c.l.b16 %v2935
      %v2968 = vunpack.c.l.b16 %v2936
      %v2969 = vunpack.c.l.b16 %v2937
      %v2970 = vpack.c.b16 %v2955, %v2954
      %v2971 = vpack.c.b16 %v2957, %v2956
      %v2972 = vpack.c.b16 %v2959, %v2958
      %v2973 = vpack.c.b16 %v2961, %v2960
      %v2974 = vpack.c.b16 %v2963, %v2962
      %v2975 = vpack.c.b16 %v2965, %v2964
      %v2976 = vpack.c.b16 %v2967, %v2966
      %v2977 = vpack.c.b16 %v2969, %v2968
      %2986 = vmatprep.subr.bf16.mxu0 0
      %2987 = vmatpush1.bf16.msra.mxu0 %v2970
      %2988 = vmatprep.subr.bf16.mxu0 0
      %2989 = vmatpush1.bf16.msra.mxu0 %v2971
      %2990 = vmatprep.subr.bf16.mxu0 0
      %2991 = vmatpush1.bf16.msra.mxu0 %v2972
      %2992 = vmatprep.subr.bf16.mxu0 0
      %2993 = vmatpush1.bf16.msra.mxu0 %v2973
      %2994 = vmatprep.subr.bf16.mxu0 0
      %2995 = vmatpush1.bf16.msra.mxu0 %v2974
      %2996 = vmatprep.subr.bf16.mxu0 0
      %2997 = vmatpush1.bf16.msra.mxu0 %v2975
      %2998 = vmatprep.subr.bf16.mxu0 0
      %2999 = vmatpush1.bf16.msra.mxu0 %v2976
      %3000 = vmatprep.subr.bf16.mxu0 0
      %3001 = vmatpush1.bf16.msra.mxu0 %v2977
      %3002 = vmatprep.subr.bf16.mxu0 0
      %3003 = vmatpush1.bf16.msra.mxu0 0
      %3004 = vmatprep.subr.bf16.mxu0 0
      %3005 = vmatpush1.bf16.msra.mxu0 0
      %3006 = vmatprep.subr.bf16.mxu0 0
      %3007 = vmatpush1.bf16.msra.mxu0 0
      %3008 = vmatprep.subr.bf16.mxu0 0
      %3009 = vmatpush1.bf16.msra.mxu0 0
      %3010 = vmatprep.subr.bf16.mxu0 0
      %3011 = vmatpush1.bf16.msra.mxu0 0
      %3012 = vmatprep.subr.bf16.mxu0 0
      %3013 = vmatpush1.bf16.msra.mxu0 0
      %3014 = vmatprep.subr.bf16.mxu0 0
      %3015 = vmatpush1.bf16.msra.mxu0 0
      %3016 = vmatprep.subr.bf16.mxu0 0
      %3017 = vmatpush1.bf16.msra.mxu0 0
      %3018 = vmatprep.mubr.bf16.mxu0 0
      %3019 = vmatmul.mubr.bf16.gmra.mrb[0].mxu0 %v2640
      %v3020 = vpop.f32.mrb[0].mxu0
      %v3021 = vadd.f32 0.0, %v3020
      %v3022 = vpop.f32.mrb[0].mxu0
      %v3023 = vpop.f32.mrb[0].mxu0
      %v3024 = vadd.f32 0.0, %v3023
      %v3025 = vpop.f32.mrb[0].mxu0
      %3026 = vmatprep.mubr.bf16.mxu0 0
      %3027 = vmatmul.mubr.bf16.gmra.mrb[0].mxu0 %v2641
      %v3028 = vpop.f32.mrb[0].mxu0
      %v3029 = vadd.f32 0.0, %v3028
      %v3030 = vpop.f32.mrb[0].mxu0
      %v3031 = vpop.f32.mrb[0].mxu0
      %v3032 = vadd.f32 0.0, %v3031
      %v3033 = vpop.f32.mrb[0].mxu0
      %3034 = vmatprep.mubr.bf16.mxu0 0
      %3035 = vmatmul.mubr.bf16.gmra.mrb[0].mxu0 %v2642
      %v3036 = vpop.f32.mrb[0].mxu0
      %v3037 = vadd.f32 0.0, %v3036
      %v3038 = vpop.f32.mrb[0].mxu0
      %v3039 = vpop.f32.mrb[0].mxu0
      %v3040 = vadd.f32 0.0, %v3039
      %v3041 = vpop.f32.mrb[0].mxu0
      %3042 = vmatprep.mubr.bf16.mxu0 0
      %3043 = vmatmul.mubr.bf16.gmra.mrb[0].mxu0 %v2643
      %v3044 = vpop.f32.mrb[0].mxu0
      %v3045 = vadd.f32 0.0, %v3044
      %v3046 = vpop.f32.mrb[0].mxu0
      %v3047 = vpop.f32.mrb[0].mxu0
      %v3048 = vadd.f32 0.0, %v3047
      %v3049 = vpop.f32.mrb[0].mxu0
      %3050 = vmatprep.mubr.bf16.mxu0 0
      %3051 = vmatmul.mubr.bf16.gmra.mrb[0].mxu0 %v2644
      %v3052 = vpop.f32.mrb[0].mxu0
      %v3053 = vadd.f32 0.0, %v3052
      %v3054 = vpop.f32.mrb[0].mxu0
      %v3055 = vpop.f32.mrb[0].mxu0
      %v3056 = vadd.f32 0.0, %v3055
      %v3057 = vpop.f32.mrb[0].mxu0
      %3058 = vmatprep.mubr.bf16.mxu0 0
      %3059 = vmatmul.mubr.bf16.gmra.mrb[0].mxu0 %v2645
      %v3060 = vpop.f32.mrb[0].mxu0
      %v3061 = vadd.f32 0.0, %v3060
      %v3062 = vpop.f32.mrb[0].mxu0
      %v3063 = vpop.f32.mrb[0].mxu0
      %v3064 = vadd.f32 0.0, %v3063
      %v3065 = vpop.f32.mrb[0].mxu0
      %3066 = vmatprep.mubr.bf16.mxu0 0
      %3067 = vmatmul.mubr.bf16.gmra.mrb[0].mxu0 %v2646
      %v3068 = vpop.f32.mrb[0].mxu0
      %v3069 = vadd.f32 0.0, %v3068
      %v3070 = vpop.f32.mrb[0].mxu0
      %v3071 = vpop.f32.mrb[0].mxu0
      %v3072 = vadd.f32 0.0, %v3071
      %v3073 = vpop.f32.mrb[0].mxu0
      %3074 = vmatprep.mubr.bf16.mxu0 0
      %3075 = vmatmul.mubr.bf16.gmra.mrb[0].mxu0 %v2647
      %v3076 = vpop.f32.mrb[0].mxu0
      %v3077 = vadd.f32 0.0, %v3076
      %v3078 = vpop.f32.mrb[0].mxu0
      %v3079 = vpop.f32.mrb[0].mxu0
      %v3080 = vadd.f32 0.0, %v3079
      %v3081 = vpop.f32.mrb[0].mxu0
      %3082 = vmatprep.mubr.bf16.mxu0 0
      %3083 = vmatmul.mubr.bf16.gmra.mrb[0].mxu0 %v2648
      %v3084 = vpop.f32.mrb[0].mxu0
      %v3085 = vadd.f32 0.0, %v3084
      %v3086 = vpop.f32.mrb[0].mxu0
      %v3087 = vpop.f32.mrb[0].mxu0
      %v3088 = vadd.f32 0.0, %v3087
      %v3089 = vpop.f32.mrb[0].mxu0
      %3090 = vmatprep.mubr.bf16.mxu0 0
      %3091 = vmatmul.mubr.bf16.gmra.mrb[0].mxu0 %v2649
      %v3092 = vpop.f32.mrb[0].mxu0
      %v3093 = vadd.f32 0.0, %v3092
      %v3094 = vpop.f32.mrb[0].mxu0
      %v3095 = vpop.f32.mrb[0].mxu0
      %v3096 = vadd.f32 0.0, %v3095
      %v3097 = vpop.f32.mrb[0].mxu0
      %3098 = vmatprep.mubr.bf16.mxu0 0
      %3099 = vmatmul.mubr.bf16.gmra.mrb[0].mxu0 %v2650
      %v3100 = vpop.f32.mrb[0].mxu0
      %v3101 = vadd.f32 0.0, %v3100
      %v3102 = vpop.f32.mrb[0].mxu0
      %v3103 = vpop.f32.mrb[0].mxu0
      %v3104 = vadd.f32 0.0, %v3103
      %v3105 = vpop.f32.mrb[0].mxu0
      %3106 = vmatprep.mubr.bf16.mxu0 0
      %3107 = vmatmul.mubr.bf16.gmra.mrb[0].mxu0 %v2651
      %v3108 = vpop.f32.mrb[0].mxu0
      %v3109 = vadd.f32 0.0, %v3108
      %v3110 = vpop.f32.mrb[0].mxu0
      %v3111 = vpop.f32.mrb[0].mxu0
      %v3112 = vadd.f32 0.0, %v3111
      %v3113 = vpop.f32.mrb[0].mxu0
      %3114 = vmatprep.mubr.bf16.mxu0 0
      %3115 = vmatmul.mubr.bf16.gmra.mrb[0].mxu0 %v2652
      %v3116 = vpop.f32.mrb[0].mxu0
      %v3117 = vadd.f32 0.0, %v3116
      %v3118 = vpop.f32.mrb[0].mxu0
      %v3119 = vpop.f32.mrb[0].mxu0
      %v3120 = vadd.f32 0.0, %v3119
      %v3121 = vpop.f32.mrb[0].mxu0
      %3122 = vmatprep.mubr.bf16.mxu0 0
      %3123 = vmatmul.mubr.bf16.gmra.mrb[0].mxu0 %v2653
      %v3124 = vpop.f32.mrb[0].mxu0
      %v3125 = vadd.f32 0.0, %v3124
      %v3126 = vpop.f32.mrb[0].mxu0
      %v3127 = vpop.f32.mrb[0].mxu0
      %v3128 = vadd.f32 0.0, %v3127
      %v3129 = vpop.f32.mrb[0].mxu0
      %3130 = vmatprep.mubr.bf16.mxu0 0
      %3131 = vmatmul.mubr.bf16.gmra.mrb[0].mxu0 %v2654
      %v3132 = vpop.f32.mrb[0].mxu0
      %v3133 = vadd.f32 0.0, %v3132
      %v3134 = vpop.f32.mrb[0].mxu0
      %v3135 = vpop.f32.mrb[0].mxu0
      %v3136 = vadd.f32 0.0, %v3135
      %v3137 = vpop.f32.mrb[0].mxu0
      %3138 = vmatprep.mubr.bf16.mxu0 0
      %3139 = vmatmul.mubr.bf16.gmra.mrb[0].mxu0 %v2655
      %v3140 = vpop.f32.mrb[0].mxu0
      %v3141 = vadd.f32 0.0, %v3140
      %v3142 = vpop.f32.mrb[0].mxu0
      %v3143 = vpop.f32.mrb[0].mxu0
      %v3144 = vadd.f32 0.0, %v3143
      %v3145 = vpop.f32.mrb[0].mxu0
      %3146 = vmatprep.mubr.bf16.mxu0 0
      %3147 = vmatmul.mubr.bf16.gmra.mrb[0].mxu0 %v2656
      %v3148 = vpop.f32.mrb[0].mxu0
      %v3149 = vadd.f32 0.0, %v3148
      %v3150 = vpop.f32.mrb[0].mxu0
      %v3151 = vpop.f32.mrb[0].mxu0
      %v3152 = vpop.f32.mrb[0].mxu0
      %3153 = vdwg.mxu0
      %v3187 = vrot.slane %v3021, 1
      %v3188 = vrot.slane %v3024, 1
      %v3189 = vsel %vm805, %v3187, %v3188
      %v3190 = vrot.slane %v3029, 1
      %v3191 = vsel %vm805, %v3188, %v3190
      %v3192 = vrot.slane %v3032, 1
      %v3193 = vsel %vm805, %v3190, %v3192
      %v3194 = vrot.slane %v3037, 1
      %v3195 = vsel %vm805, %v3192, %v3194
      %v3196 = vrot.slane %v3040, 1
      %v3197 = vsel %vm805, %v3194, %v3196
      %v3198 = vrot.slane %v3045, 1
      %v3199 = vsel %vm805, %v3196, %v3198
      %v3200 = vrot.slane %v3048, 1
      %v3201 = vsel %vm805, %v3198, %v3200
      %v3202 = vrot.slane %v3053, 1
      %v3203 = vsel %vm805, %v3200, %v3202
      %v3204 = vrot.slane %v3056, 1
      %v3205 = vsel %vm805, %v3202, %v3204
      %v3206 = vrot.slane %v3061, 1
      %v3207 = vsel %vm805, %v3204, %v3206
      %v3208 = vrot.slane %v3064, 1
      %v3209 = vsel %vm805, %v3206, %v3208
      %v3210 = vrot.slane %v3069, 1
      %v3211 = vsel %vm805, %v3208, %v3210
      %v3212 = vrot.slane %v3072, 1
      %v3213 = vsel %vm805, %v3210, %v3212
      %v3214 = vrot.slane %v3077, 1
      %v3215 = vsel %vm805, %v3212, %v3214
      %v3216 = vrot.slane %v3080, 1
      %v3217 = vsel %vm805, %v3214, %v3216
      %v3218 = vrot.slane %v3085, 1
      %v3219 = vsel %vm805, %v3216, %v3218
      %v3220 = vrot.slane %v3088, 1
      %v3221 = vsel %vm805, %v3218, %v3220
      %v3222 = vrot.slane %v3093, 1
      %v3223 = vsel %vm805, %v3220, %v3222
      %v3224 = vrot.slane %v3096, 1
      %v3225 = vsel %vm805, %v3222, %v3224
      %v3226 = vrot.slane %v3101, 1
      %v3227 = vsel %vm805, %v3224, %v3226
      %v3228 = vrot.slane %v3104, 1
      %v3229 = vsel %vm805, %v3226, %v3228
      %v3230 = vrot.slane %v3109, 1
      %v3231 = vsel %vm805, %v3228, %v3230
      %v3232 = vrot.slane %v3112, 1
      %v3233 = vsel %vm805, %v3230, %v3232
      %v3234 = vrot.slane %v3117, 1
      %v3235 = vsel %vm805, %v3232, %v3234
      %v3236 = vrot.slane %v3120, 1
      %v3237 = vsel %vm805, %v3234, %v3236
      %v3238 = vrot.slane %v3125, 1
      %v3239 = vsel %vm805, %v3236, %v3238
      %v3240 = vrot.slane %v3128, 1
      %v3241 = vsel %vm805, %v3238, %v3240
      %v3242 = vrot.slane %v3133, 1
      %v3243 = vsel %vm805, %v3240, %v3242
      %v3244 = vrot.slane %v3136, 1
      %v3245 = vsel %vm805, %v3242, %v3244
      %v3246 = vrot.slane %v3141, 1
      %v3247 = vsel %vm805, %v3244, %v3246
      %v3248 = vrot.slane %v3144, 1
      %v3249 = vsel %vm805, %v3246, %v3248
      %v3250 = vrot.slane %v3149, 1
      %v3251 = vsel %vm805, %v3248, %v3250
      %v3284 = vadd.f32 %v2889, %v3189
      %v3285 = vadd.f32 %v2890, %v3191
      %v3286 = vadd.f32 %v2891, %v3193
      %v3287 = vadd.f32 %v2892, %v3195
      %v3288 = vadd.f32 %v2893, %v3197
      %v3289 = vadd.f32 %v2894, %v3199
      %v3290 = vadd.f32 %v2895, %v3201
      %v3291 = vadd.f32 %v2896, %v3203
      %v3292 = vadd.f32 %v2897, %v3205
      %v3293 = vadd.f32 %v2898, %v3207
      %v3294 = vadd.f32 %v2899, %v3209
      %v3295 = vadd.f32 %v2900, %v3211
      %v3296 = vadd.f32 %v2901, %v3213
      %v3297 = vadd.f32 %v2902, %v3215
      %v3298 = vadd.f32 %v2903, %v3217
      %v3299 = vadd.f32 %v2904, %v3219
      %v3300 = vadd.f32 %v2905, %v3221
      %v3301 = vadd.f32 %v2906, %v3223
      %v3302 = vadd.f32 %v2907, %v3225
      %v3303 = vadd.f32 %v2908, %v3227
      %v3304 = vadd.f32 %v2909, %v3229
      %v3305 = vadd.f32 %v2910, %v3231
      %v3306 = vadd.f32 %v2911, %v3233
      %v3307 = vadd.f32 %v2912, %v3235
      %v3308 = vadd.f32 %v2913, %v3237
      %v3309 = vadd.f32 %v2914, %v3239
      %v3310 = vadd.f32 %v2915, %v3241
      %v3311 = vadd.f32 %v2916, %v3243
      %v3312 = vadd.f32 %v2917, %v3245
      %v3313 = vadd.f32 %v2918, %v3247
      %v3314 = vadd.f32 %v2919, %v3249
      %v3315 = vadd.f32 %v2920, %v3251
      %s3316 = scalar_lea.vmem %s1, 512
      %v3317 = vld [vmem:[%s3316] sm:$0xf]
      %v3318 = vld [vmem:[%s3316 + $0x4] sm:$0xf]
      %v3319 = vld [vmem:[%s3316 + $0x8] sm:$0xf]
      %v3320 = vld [vmem:[%s3316 + $0xc] sm:$0xf]
      %v3321 = vld [vmem:[%s3316 + $0x10] sm:$0xf]
      %v3322 = vld [vmem:[%s3316 + $0x14] sm:$0xf]
      %v3323 = vld [vmem:[%s3316 + $0x18] sm:$0xf]
      %v3324 = vld [vmem:[%s3316 + $0x1c] sm:$0xf]
      %v3325 = vld [vmem:[%s3316 + $0x20] sm:$0xf]
      %v3326 = vld [vmem:[%s3316 + $0x24] sm:$0xf]
      %v3327 = vld [vmem:[%s3316 + $0x28] sm:$0xf]
      %v3328 = vld [vmem:[%s3316 + $0x2c] sm:$0xf]
      %v3329 = vld [vmem:[%s3316 + $0x30] sm:$0xf]
      %v3330 = vld [vmem:[%s3316 + $0x34] sm:$0xf]
      %v3331 = vld [vmem:[%s3316 + $0x38] sm:$0xf]
      %v3332 = vld [vmem:[%s3316 + $0x3c] sm:$0xf]
      %v3349 = vunpack.c.l.b16 %v3317
      %v3350 = vunpack.c.l.b16 %v3318
      %v3351 = vunpack.c.l.b16 %v3319
      %v3352 = vunpack.c.l.b16 %v3320
      %v3353 = vunpack.c.l.b16 %v3321
      %v3354 = vunpack.c.l.b16 %v3322
      %v3355 = vunpack.c.l.b16 %v3323
      %v3356 = vunpack.c.l.b16 %v3324
      %v3357 = vunpack.c.l.b16 %v3325
      %v3358 = vunpack.c.l.b16 %v3326
      %v3359 = vunpack.c.l.b16 %v3327
      %v3360 = vunpack.c.l.b16 %v3328
      %v3361 = vunpack.c.l.b16 %v3329
      %v3362 = vunpack.c.l.b16 %v3330
      %v3363 = vunpack.c.l.b16 %v3331
      %v3364 = vunpack.c.l.b16 %v3332
      %v3365 = vpack.c.b16 %v3350, %v3349
      %v3366 = vpack.c.b16 %v3352, %v3351
      %v3367 = vpack.c.b16 %v3354, %v3353
      %v3368 = vpack.c.b16 %v3356, %v3355
      %v3369 = vpack.c.b16 %v3358, %v3357
      %v3370 = vpack.c.b16 %v3360, %v3359
      %v3371 = vpack.c.b16 %v3362, %v3361
      %v3372 = vpack.c.b16 %v3364, %v3363
      %3381 = vmatprep.subr.bf16.mxu0 0
      %3382 = vmatpush1.bf16.msra.mxu0 %v3365
      %3383 = vmatprep.subr.bf16.mxu0 0
      %3384 = vmatpush1.bf16.msra.mxu0 %v3366
      %3385 = vmatprep.subr.bf16.mxu0 0
      %3386 = vmatpush1.bf16.msra.mxu0 %v3367
      %3387 = vmatprep.subr.bf16.mxu0 0
      %3388 = vmatpush1.bf16.msra.mxu0 %v3368
      %3389 = vmatprep.subr.bf16.mxu0 0
      %3390 = vmatpush1.bf16.msra.mxu0 %v3369
      %3391 = vmatprep.subr.bf16.mxu0 0
      %3392 = vmatpush1.bf16.msra.mxu0 %v3370
      %3393 = vmatprep.subr.bf16.mxu0 0
      %3394 = vmatpush1.bf16.msra.mxu0 %v3371
      %3395 = vmatprep.subr.bf16.mxu0 0
      %3396 = vmatpush1.bf16.msra.mxu0 %v3372
      %3397 = vmatprep.subr.bf16.mxu0 0
      %3398 = vmatpush1.bf16.msra.mxu0 0
      %3399 = vmatprep.subr.bf16.mxu0 0
      %3400 = vmatpush1.bf16.msra.mxu0 0
      %3401 = vmatprep.subr.bf16.mxu0 0
      %3402 = vmatpush1.bf16.msra.mxu0 0
      %3403 = vmatprep.subr.bf16.mxu0 0
      %3404 = vmatpush1.bf16.msra.mxu0 0
      %3405 = vmatprep.subr.bf16.mxu0 0
      %3406 = vmatpush1.bf16.msra.mxu0 0
      %3407 = vmatprep.subr.bf16.mxu0 0
      %3408 = vmatpush1.bf16.msra.mxu0 0
      %3409 = vmatprep.subr.bf16.mxu0 0
      %3410 = vmatpush1.bf16.msra.mxu0 0
      %3411 = vmatprep.subr.bf16.mxu0 0
      %3412 = vmatpush1.bf16.msra.mxu0 0
      %3413 = vmatprep.mubr.bf16.mxu0 0
      %3414 = vmatmul.mubr.bf16.gmra.mrb[0].mxu0 %v2640
      %v3415 = vpop.f32.mrb[0].mxu0
      %v3416 = vadd.f32 0.0, %v3415
      %v3417 = vpop.f32.mrb[0].mxu0
      %v3418 = vpop.f32.mrb[0].mxu0
      %v3419 = vadd.f32 0.0, %v3418
      %v3420 = vpop.f32.mrb[0].mxu0
      %3421 = vmatprep.mubr.bf16.mxu0 0
      %3422 = vmatmul.mubr.bf16.gmra.mrb[0].mxu0 %v2641
      %v3423 = vpop.f32.mrb[0].mxu0
      %v3424 = vadd.f32 0.0, %v3423
      %v3425 = vpop.f32.mrb[0].mxu0
      %v3426 = vpop.f32.mrb[0].mxu0
      %v3427 = vadd.f32 0.0, %v3426
      %v3428 = vpop.f32.mrb[0].mxu0
      %3429 = vmatprep.mubr.bf16.mxu0 0
      %3430 = vmatmul.mubr.bf16.gmra.mrb[0].mxu0 %v2642
      %v3431 = vpop.f32.mrb[0].mxu0
      %v3432 = vadd.f32 0.0, %v3431
      %v3433 = vpop.f32.mrb[0].mxu0
      %v3434 = vpop.f32.mrb[0].mxu0
      %v3435 = vadd.f32 0.0, %v3434
      %v3436 = vpop.f32.mrb[0].mxu0
      %3437 = vmatprep.mubr.bf16.mxu0 0
      %3438 = vmatmul.mubr.bf16.gmra.mrb[0].mxu0 %v2643
      %v3439 = vpop.f32.mrb[0].mxu0
      %v3440 = vadd.f32 0.0, %v3439
      %v3441 = vpop.f32.mrb[0].mxu0
      %v3442 = vpop.f32.mrb[0].mxu0
      %v3443 = vadd.f32 0.0, %v3442
      %v3444 = vpop.f32.mrb[0].mxu0
      %3445 = vmatprep.mubr.bf16.mxu0 0
      %3446 = vmatmul.mubr.bf16.gmra.mrb[0].mxu0 %v2644
      %v3447 = vpop.f32.mrb[0].mxu0
      %v3448 = vadd.f32 0.0, %v3447
      %v3449 = vpop.f32.mrb[0].mxu0
      %v3450 = vpop.f32.mrb[0].mxu0
      %v3451 = vadd.f32 0.0, %v3450
      %v3452 = vpop.f32.mrb[0].mxu0
      %3453 = vmatprep.mubr.bf16.mxu0 0
      %3454 = vmatmul.mubr.bf16.gmra.mrb[0].mxu0 %v2645
      %v3455 = vpop.f32.mrb[0].mxu0
      %v3456 = vadd.f32 0.0, %v3455
      %v3457 = vpop.f32.mrb[0].mxu0
      %v3458 = vpop.f32.mrb[0].mxu0
      %v3459 = vadd.f32 0.0, %v3458
      %v3460 = vpop.f32.mrb[0].mxu0
      %3461 = vmatprep.mubr.bf16.mxu0 0
      %3462 = vmatmul.mubr.bf16.gmra.mrb[0].mxu0 %v2646
      %v3463 = vpop.f32.mrb[0].mxu0
      %v3464 = vadd.f32 0.0, %v3463
      %v3465 = vpop.f32.mrb[0].mxu0
      %v3466 = vpop.f32.mrb[0].mxu0
      %v3467 = vadd.f32 0.0, %v3466
      %v3468 = vpop.f32.mrb[0].mxu0
      %3469 = vmatprep.mubr.bf16.mxu0 0
      %3470 = vmatmul.mubr.bf16.gmra.mrb[0].mxu0 %v2647
      %v3471 = vpop.f32.mrb[0].mxu0
      %v3472 = vadd.f32 0.0, %v3471
      %v3473 = vpop.f32.mrb[0].mxu0
      %v3474 = vpop.f32.mrb[0].mxu0
      %v3475 = vadd.f32 0.0, %v3474
      %v3476 = vpop.f32.mrb[0].mxu0
      %3477 = vmatprep.mubr.bf16.mxu0 0
      %3478 = vmatmul.mubr.bf16.gmra.mrb[0].mxu0 %v2648
      %v3479 = vpop.f32.mrb[0].mxu0
      %v3480 = vadd.f32 0.0, %v3479
      %v3481 = vpop.f32.mrb[0].mxu0
      %v3482 = vpop.f32.mrb[0].mxu0
      %v3483 = vadd.f32 0.0, %v3482
      %v3484 = vpop.f32.mrb[0].mxu0
      %3485 = vmatprep.mubr.bf16.mxu0 0
      %3486 = vmatmul.mubr.bf16.gmra.mrb[0].mxu0 %v2649
      %v3487 = vpop.f32.mrb[0].mxu0
      %v3488 = vadd.f32 0.0, %v3487
      %v3489 = vpop.f32.mrb[0].mxu0
      %v3490 = vpop.f32.mrb[0].mxu0
      %v3491 = vadd.f32 0.0, %v3490
      %v3492 = vpop.f32.mrb[0].mxu0
      %3493 = vmatprep.mubr.bf16.mxu0 0
      %3494 = vmatmul.mubr.bf16.gmra.mrb[0].mxu0 %v2650
      %v3495 = vpop.f32.mrb[0].mxu0
      %v3496 = vadd.f32 0.0, %v3495
      %v3497 = vpop.f32.mrb[0].mxu0
      %v3498 = vpop.f32.mrb[0].mxu0
      %v3499 = vadd.f32 0.0, %v3498
      %v3500 = vpop.f32.mrb[0].mxu0
      %3501 = vmatprep.mubr.bf16.mxu0 0
      %3502 = vmatmul.mubr.bf16.gmra.mrb[0].mxu0 %v2651
      %v3503 = vpop.f32.mrb[0].mxu0
      %v3504 = vadd.f32 0.0, %v3503
      %v3505 = vpop.f32.mrb[0].mxu0
      %v3506 = vpop.f32.mrb[0].mxu0
      %v3507 = vadd.f32 0.0, %v3506
      %v3508 = vpop.f32.mrb[0].mxu0
      %3509 = vmatprep.mubr.bf16.mxu0 0
      %3510 = vmatmul.mubr.bf16.gmra.mrb[0].mxu0 %v2652
      %v3511 = vpop.f32.mrb[0].mxu0
      %v3512 = vadd.f32 0.0, %v3511
      %v3513 = vpop.f32.mrb[0].mxu0
      %v3514 = vpop.f32.mrb[0].mxu0
      %v3515 = vadd.f32 0.0, %v3514
      %v3516 = vpop.f32.mrb[0].mxu0
      %3517 = vmatprep.mubr.bf16.mxu0 0
      %3518 = vmatmul.mubr.bf16.gmra.mrb[0].mxu0 %v2653
      %v3519 = vpop.f32.mrb[0].mxu0
      %v3520 = vadd.f32 0.0, %v3519
      %v3521 = vpop.f32.mrb[0].mxu0
      %v3522 = vpop.f32.mrb[0].mxu0
      %v3523 = vadd.f32 0.0, %v3522
      %v3524 = vpop.f32.mrb[0].mxu0
      %3525 = vmatprep.mubr.bf16.mxu0 0
      %3526 = vmatmul.mubr.bf16.gmra.mrb[0].mxu0 %v2654
      %v3527 = vpop.f32.mrb[0].mxu0
      %v3528 = vadd.f32 0.0, %v3527
      %v3529 = vpop.f32.mrb[0].mxu0
      %v3530 = vpop.f32.mrb[0].mxu0
      %v3531 = vadd.f32 0.0, %v3530
      %v3532 = vpop.f32.mrb[0].mxu0
      %3533 = vmatprep.mubr.bf16.mxu0 0
      %3534 = vmatmul.mubr.bf16.gmra.mrb[0].mxu0 %v2655
      %v3535 = vpop.f32.mrb[0].mxu0
      %v3536 = vadd.f32 0.0, %v3535
      %v3537 = vpop.f32.mrb[0].mxu0
      %v3538 = vpop.f32.mrb[0].mxu0
      %v3539 = vadd.f32 0.0, %v3538
      %v3540 = vpop.f32.mrb[0].mxu0
      %3541 = vmatprep.mubr.bf16.mxu0 0
      %3542 = vmatmul.mubr.bf16.gmra.mrb[0].mxu0 %v2656
      %v3543 = vpop.f32.mrb[0].mxu0
      %v3544 = vadd.f32 0.0, %v3543
      %v3545 = vpop.f32.mrb[0].mxu0
      %v3546 = vpop.f32.mrb[0].mxu0
      %v3547 = vpop.f32.mrb[0].mxu0
      %3548 = vdwg.mxu0
      %v3582 = vrot.slane %v3416, 2
      %v3583 = vrot.slane %v3419, 2
      %v3584 = vsel %vm1201, %v3582, %v3583
      %v3585 = vrot.slane %v3424, 2
      %v3586 = vsel %vm1201, %v3583, %v3585
      %v3587 = vrot.slane %v3427, 2
      %v3588 = vsel %vm1201, %v3585, %v3587
      %v3589 = vrot.slane %v3432, 2
      %v3590 = vsel %vm1201, %v3587, %v3589
      %v3591 = vrot.slane %v3435, 2
      %v3592 = vsel %vm1201, %v3589, %v3591
      %v3593 = vrot.slane %v3440, 2
      %v3594 = vsel %vm1201, %v3591, %v3593
      %v3595 = vrot.slane %v3443, 2
      %v3596 = vsel %vm1201, %v3593, %v3595
      %v3597 = vrot.slane %v3448, 2
      %v3598 = vsel %vm1201, %v3595, %v3597
      %v3599 = vrot.slane %v3451, 2
      %v3600 = vsel %vm1201, %v3597, %v3599
      %v3601 = vrot.slane %v3456, 2
      %v3602 = vsel %vm1201, %v3599, %v3601
      %v3603 = vrot.slane %v3459, 2
      %v3604 = vsel %vm1201, %v3601, %v3603
      %v3605 = vrot.slane %v3464, 2
      %v3606 = vsel %vm1201, %v3603, %v3605
      %v3607 = vrot.slane %v3467, 2
      %v3608 = vsel %vm1201, %v3605, %v3607
      %v3609 = vrot.slane %v3472, 2
      %v3610 = vsel %vm1201, %v3607, %v3609
      %v3611 = vrot.slane %v3475, 2
      %v3612 = vsel %vm1201, %v3609, %v3611
      %v3613 = vrot.slane %v3480, 2
      %v3614 = vsel %vm1201, %v3611, %v3613
      %v3615 = vrot.slane %v3483, 2
      %v3616 = vsel %vm1201, %v3613, %v3615
      %v3617 = vrot.slane %v3488, 2
      %v3618 = vsel %vm1201, %v3615, %v3617
      %v3619 = vrot.slane %v3491, 2
      %v3620 = vsel %vm1201, %v3617, %v3619
      %v3621 = vrot.slane %v3496, 2
      %v3622 = vsel %vm1201, %v3619, %v3621
      %v3623 = vrot.slane %v3499, 2
      %v3624 = vsel %vm1201, %v3621, %v3623
      %v3625 = vrot.slane %v3504, 2
      %v3626 = vsel %vm1201, %v3623, %v3625
      %v3627 = vrot.slane %v3507, 2
      %v3628 = vsel %vm1201, %v3625, %v3627
      %v3629 = vrot.slane %v3512, 2
      %v3630 = vsel %vm1201, %v3627, %v3629
      %v3631 = vrot.slane %v3515, 2
      %v3632 = vsel %vm1201, %v3629, %v3631
      %v3633 = vrot.slane %v3520, 2
      %v3634 = vsel %vm1201, %v3631, %v3633
      %v3635 = vrot.slane %v3523, 2
      %v3636 = vsel %vm1201, %v3633, %v3635
      %v3637 = vrot.slane %v3528, 2
      %v3638 = vsel %vm1201, %v3635, %v3637
      %v3639 = vrot.slane %v3531, 2
      %v3640 = vsel %vm1201, %v3637, %v3639
      %v3641 = vrot.slane %v3536, 2
      %v3642 = vsel %vm1201, %v3639, %v3641
      %v3643 = vrot.slane %v3539, 2
      %v3644 = vsel %vm1201, %v3641, %v3643
      %v3645 = vrot.slane %v3544, 2
      %v3646 = vsel %vm1201, %v3643, %v3645
      %v3679 = vadd.f32 %v3284, %v3584
      %v3680 = vadd.f32 %v3285, %v3586
      %v3681 = vadd.f32 %v3286, %v3588
      %v3682 = vadd.f32 %v3287, %v3590
      %v3683 = vadd.f32 %v3288, %v3592
      %v3684 = vadd.f32 %v3289, %v3594
      %v3685 = vadd.f32 %v3290, %v3596
      %v3686 = vadd.f32 %v3291, %v3598
      %v3687 = vadd.f32 %v3292, %v3600
      %v3688 = vadd.f32 %v3293, %v3602
      %v3689 = vadd.f32 %v3294, %v3604
      %v3690 = vadd.f32 %v3295, %v3606
      %v3691 = vadd.f32 %v3296, %v3608
      %v3692 = vadd.f32 %v3297, %v3610
      %v3693 = vadd.f32 %v3298, %v3612
      %v3694 = vadd.f32 %v3299, %v3614
      %v3695 = vadd.f32 %v3300, %v3616
      %v3696 = vadd.f32 %v3301, %v3618
      %v3697 = vadd.f32 %v3302, %v3620
      %v3698 = vadd.f32 %v3303, %v3622
      %v3699 = vadd.f32 %v3304, %v3624
      %v3700 = vadd.f32 %v3305, %v3626
      %v3701 = vadd.f32 %v3306, %v3628
      %v3702 = vadd.f32 %v3307, %v3630
      %v3703 = vadd.f32 %v3308, %v3632
      %v3704 = vadd.f32 %v3309, %v3634
      %v3705 = vadd.f32 %v3310, %v3636
      %v3706 = vadd.f32 %v3311, %v3638
      %v3707 = vadd.f32 %v3312, %v3640
      %v3708 = vadd.f32 %v3313, %v3642
      %v3709 = vadd.f32 %v3314, %v3644
      %v3710 = vadd.f32 %v3315, %v3646
      %v3711 = vld [vmem:[%s2] sm:$0x1]
      %v3713 = vlaneseq
      %v3714 = vshrl.u32 %v3713, 7
      %v3715 = vsub.s32 0, %v3714
      %v3716 = vrot.slane %v3711, %v3715
      %v3718 = vadd.f32 %v3679, %v3716
      %v3719 = vadd.f32 %v3680, %v3716
      %v3720 = vadd.f32 %v3681, %v3716
      %v3721 = vadd.f32 %v3682, %v3716
      %v3722 = vadd.f32 %v3683, %v3716
      %v3723 = vadd.f32 %v3684, %v3716
      %v3724 = vadd.f32 %v3685, %v3716
      %v3725 = vadd.f32 %v3686, %v3716
      %v3726 = vadd.f32 %v3687, %v3716
      %v3727 = vadd.f32 %v3688, %v3716
      %v3728 = vadd.f32 %v3689, %v3716
      %v3729 = vadd.f32 %v3690, %v3716
      %v3730 = vadd.f32 %v3691, %v3716
      %v3731 = vadd.f32 %v3692, %v3716
      %v3732 = vadd.f32 %v3693, %v3716
      %v3733 = vadd.f32 %v3694, %v3716
      %v3734 = vadd.f32 %v3695, %v3716
      %v3735 = vadd.f32 %v3696, %v3716
      %v3736 = vadd.f32 %v3697, %v3716
      %v3737 = vadd.f32 %v3698, %v3716
      %v3738 = vadd.f32 %v3699, %v3716
      %v3739 = vadd.f32 %v3700, %v3716
      %v3740 = vadd.f32 %v3701, %v3716
      %v3741 = vadd.f32 %v3702, %v3716
      %v3742 = vadd.f32 %v3703, %v3716
      %v3743 = vadd.f32 %v3704, %v3716
      %v3744 = vadd.f32 %v3705, %v3716
      %v3745 = vadd.f32 %v3706, %v3716
      %v3746 = vadd.f32 %v3707, %v3716
      %v3747 = vadd.f32 %v3708, %v3716
      %v3748 = vadd.f32 %v3709, %v3716
      %v3749 = vadd.f32 %v3710, %v3716
      %v3750 = vmax.f32 %v3718, 0.0
      %v3751 = vmax.f32 %v3719, 0.0
      %v3752 = vmax.f32 %v3720, 0.0
      %v3753 = vmax.f32 %v3721, 0.0
      %v3754 = vmax.f32 %v3722, 0.0
      %v3755 = vmax.f32 %v3723, 0.0
      %v3756 = vmax.f32 %v3724, 0.0
      %v3757 = vmax.f32 %v3725, 0.0
      %v3758 = vmax.f32 %v3726, 0.0
      %v3759 = vmax.f32 %v3727, 0.0
      %v3760 = vmax.f32 %v3728, 0.0
      %v3761 = vmax.f32 %v3729, 0.0
      %v3762 = vmax.f32 %v3730, 0.0
      %v3763 = vmax.f32 %v3731, 0.0
      %v3764 = vmax.f32 %v3732, 0.0
      %v3765 = vmax.f32 %v3733, 0.0
      %v3766 = vmax.f32 %v3734, 0.0
      %v3767 = vmax.f32 %v3735, 0.0
      %v3768 = vmax.f32 %v3736, 0.0
      %v3769 = vmax.f32 %v3737, 0.0
      %v3770 = vmax.f32 %v3738, 0.0
      %v3771 = vmax.f32 %v3739, 0.0
      %v3772 = vmax.f32 %v3740, 0.0
      %v3773 = vmax.f32 %v3741, 0.0
      %v3774 = vmax.f32 %v3742, 0.0
      %v3775 = vmax.f32 %v3743, 0.0
      %v3776 = vmax.f32 %v3744, 0.0
      %v3777 = vmax.f32 %v3745, 0.0
      %v3778 = vmax.f32 %v3746, 0.0
      %v3779 = vmax.f32 %v3747, 0.0
      %v3780 = vmax.f32 %v3748, 0.0
      %v3781 = vmax.f32 %v3749, 0.0
      %v3782 = vpack.c.bf16 %v3751, %v3750
      %v3783 = vpack.c.bf16 %v3753, %v3752
      %v3784 = vpack.c.bf16 %v3755, %v3754
      %v3785 = vpack.c.bf16 %v3757, %v3756
      %v3786 = vpack.c.bf16 %v3759, %v3758
      %v3787 = vpack.c.bf16 %v3761, %v3760
      %v3788 = vpack.c.bf16 %v3763, %v3762
      %v3789 = vpack.c.bf16 %v3765, %v3764
      %v3790 = vpack.c.bf16 %v3767, %v3766
      %v3791 = vpack.c.bf16 %v3769, %v3768
      %v3792 = vpack.c.bf16 %v3771, %v3770
      %v3793 = vpack.c.bf16 %v3773, %v3772
      %v3794 = vpack.c.bf16 %v3775, %v3774
      %v3795 = vpack.c.bf16 %v3777, %v3776
      %v3796 = vpack.c.bf16 %v3779, %v3778
      %v3797 = vpack.c.bf16 %v3781, %v3780
      %v3814 = vunpack.c.l.b16 %v3782
      %v3815 = vunpack.c.h.b16 %v3782
      %v3816 = vunpack.c.l.b16 %v3783
      %v3817 = vunpack.c.h.b16 %v3783
      %v3818 = vunpack.c.l.b16 %v3784
      %v3819 = vunpack.c.h.b16 %v3784
      %v3820 = vunpack.c.l.b16 %v3785
      %v3821 = vunpack.c.h.b16 %v3785
      %v3822 = vunpack.c.l.b16 %v3786
      %v3823 = vunpack.c.h.b16 %v3786
      %v3824 = vunpack.c.l.b16 %v3787
      %v3825 = vunpack.c.h.b16 %v3787
      %v3826 = vunpack.c.l.b16 %v3788
      %v3827 = vunpack.c.h.b16 %v3788
      %v3828 = vunpack.c.l.b16 %v3789
      %v3829 = vunpack.c.h.b16 %v3789
      %v3830 = vunpack.c.l.b16 %v3790
      %v3831 = vunpack.c.h.b16 %v3790
      %v3832 = vunpack.c.l.b16 %v3791
      %v3833 = vunpack.c.h.b16 %v3791
      %v3834 = vunpack.c.l.b16 %v3792
      %v3835 = vunpack.c.h.b16 %v3792
      %v3836 = vunpack.c.l.b16 %v3793
      %v3837 = vunpack.c.h.b16 %v3793
      %v3838 = vunpack.c.l.b16 %v3794
      %v3839 = vunpack.c.h.b16 %v3794
      %v3840 = vunpack.c.l.b16 %v3795
      %v3841 = vunpack.c.h.b16 %v3795
      %v3842 = vunpack.c.l.b16 %v3796
      %v3843 = vunpack.c.h.b16 %v3796
      %v3844 = vunpack.c.l.b16 %v3797
      %v3845 = vunpack.c.h.b16 %v3797
      %v3846 = vpack.c.b16 %v3814, %v3814
      %v3847 = vpack.c.b16 %v3815, %v3815
      %v3848 = vpack.c.b16 %v3816, %v3816
      %v3849 = vpack.c.b16 %v3817, %v3817
      %v3850 = vpack.c.b16 %v3818, %v3818
      %v3851 = vpack.c.b16 %v3819, %v3819
      %v3852 = vpack.c.b16 %v3820, %v3820
      %v3853 = vpack.c.b16 %v3821, %v3821
      %v3854 = vpack.c.b16 %v3822, %v3822
      %v3855 = vpack.c.b16 %v3823, %v3823
      %v3856 = vpack.c.b16 %v3824, %v3824
      %v3857 = vpack.c.b16 %v3825, %v3825
      %v3858 = vpack.c.b16 %v3826, %v3826
      %v3859 = vpack.c.b16 %v3827, %v3827
      %v3860 = vpack.c.b16 %v3828, %v3828
      %v3861 = vpack.c.b16 %v3829, %v3829
      %v3862 = vpack.c.b16 %v3830, %v3830
      %v3863 = vpack.c.b16 %v3831, %v3831
      %v3864 = vpack.c.b16 %v3832, %v3832
      %v3865 = vpack.c.b16 %v3833, %v3833
      %v3866 = vpack.c.b16 %v3834, %v3834
      %v3867 = vpack.c.b16 %v3835, %v3835
      %v3868 = vpack.c.b16 %v3836, %v3836
      %v3869 = vpack.c.b16 %v3837, %v3837
      %v3870 = vpack.c.b16 %v3838, %v3838
      %v3871 = vpack.c.b16 %v3839, %v3839
      %v3872 = vpack.c.b16 %v3840, %v3840
      %v3873 = vpack.c.b16 %v3841, %v3841
      %v3874 = vpack.c.b16 %v3842, %v3842
      %v3875 = vpack.c.b16 %v3843, %v3843
      %v3876 = vpack.c.b16 %v3844, %v3844
      %v3877 = vpack.c.b16 %v3845, %v3845
      %3910 = vst [vmem:[%s170] sm:$0xf] %v3846
      %3911 = vst [vmem:[%s170 + $0x4] sm:$0xf] %v3847
      %3912 = vst [vmem:[%s170 + $0x8] sm:$0xf] %v3848
      %3913 = vst [vmem:[%s170 + $0xc] sm:$0xf] %v3849
      %3914 = vst [vmem:[%s170 + $0x10] sm:$0xf] %v3850
      %3915 = vst [vmem:[%s170 + $0x14] sm:$0xf] %v3851
      %3916 = vst [vmem:[%s170 + $0x18] sm:$0xf] %v3852
      %3917 = vst [vmem:[%s170 + $0x1c] sm:$0xf] %v3853
      %3918 = vst [vmem:[%s170 + $0x20] sm:$0xf] %v3854
      %3919 = vst [vmem:[%s170 + $0x24] sm:$0xf] %v3855
      %3920 = vst [vmem:[%s170 + $0x28] sm:$0xf] %v3856
      %3921 = vst [vmem:[%s170 + $0x2c] sm:$0xf] %v3857
      %3922 = vst [vmem:[%s170 + $0x30] sm:$0xf] %v3858
      %3923 = vst [vmem:[%s170 + $0x34] sm:$0xf] %v3859
      %3924 = vst [vmem:[%s170 + $0x38] sm:$0xf] %v3860
      %3925 = vst [vmem:[%s170 + $0x3c] sm:$0xf] %v3861
      %3926 = vst [vmem:[%s170 + $0x40] sm:$0xf] %v3862
      %3927 = vst [vmem:[%s170 + $0x44] sm:$0xf] %v3863
      %3928 = vst [vmem:[%s170 + $0x48] sm:$0xf] %v3864
      %3929 = vst [vmem:[%s170 + $0x4c] sm:$0xf] %v3865
      %3930 = vst [vmem:[%s170 + $0x50] sm:$0xf] %v3866
      %3931 = vst [vmem:[%s170 + $0x54] sm:$0xf] %v3867
      %3932 = vst [vmem:[%s170 + $0x58] sm:$0xf] %v3868
      %3933 = vst [vmem:[%s170 + $0x5c] sm:$0xf] %v3869
      %3934 = vst [vmem:[%s170 + $0x60] sm:$0xf] %v3870
      %3935 = vst [vmem:[%s170 + $0x64] sm:$0xf] %v3871
      %3936 = vst [vmem:[%s170 + $0x68] sm:$0xf] %v3872
      %3937 = vst [vmem:[%s170 + $0x6c] sm:$0xf] %v3873
      %3938 = vst [vmem:[%s170 + $0x70] sm:$0xf] %v3874
      %3939 = vst [vmem:[%s170 + $0x74] sm:$0xf] %v3875
      %3940 = vst [vmem:[%s170 + $0x78] sm:$0xf] %v3876
      %3941 = vst [vmem:[%s170 + $0x7c] sm:$0xf] %v3877
      %p3942 = scmp.lt.s32.totalorder %s14, 3
      %s3943 = scalar_select %p3942, %s14, 3
      %s3944 = smul.addr %s3943, 32
      %s3945 = smul.addr %s3944, 4
      %s3946 = scalar_lea.vmem %s3, %s3945
      // Predicated region
      $region33: #{dense_layer_forward.6} parent=31 // pred_check
        %p3947 = pneg %p100
      $region34: #{dense_layer_forward.6} parent=31 // pred_check_branch
        %3949 = sbr.rel (%p3947) target = $region36
      $region35: #{dense_layer_forward.6} parent=31 // pred_region
        _
      $region36: #{dense_layer_forward.6} parent=31 // pred_fallthru
        _
    $region32: #{dense_layer_forward.6} parent=5 // pred_fallthru
      _
    %p3950 = scmp.le.s32.totalorder 2, %s9
    // Predicated region
    $region37: #{dense_layer_forward.6} parent=5 // pred_check
      %p3951 = pneg %p3950
    $region38: #{dense_layer_forward.6} parent=5 // pred_check_branch
      %3953 = sbr.rel (%p3951) target = $region40
    $region39: #{dense_layer_forward.6} parent=5 // pred_region
      %s3954 = ssub.s32 %s9, 2
      // Predicated region
      $region41: #{dense_layer_forward.6} parent=39 // pred_check
        %p3955 = pneg %p106
      $region42: #{dense_layer_forward.6} parent=39 // pred_check_branch
        %3957 = sbr.rel (%p3955) target = $region44
      $region43: #{dense_layer_forward.6} parent=39 // pred_region
        %p3958 = scmp.lt.s32.totalorder %s15, 3
        %s3959 = scalar_select %p3958, %s15, 3
        %s3960 = smul.addr %s3959, 32
        %s3961 = smul.addr %s3960, 4
        %s3962 = scalar_lea.vmem %s3, %s3961
      $region44: #{dense_layer_forward.6} parent=39 // pred_fallthru
        _
    $region40: #{dense_layer_forward.6} parent=5 // pred_fallthru
      _
  $region6: #{dense_layer_forward.6} parent=0 // loop_footer
    %s13 = sadd.s32 1, %s9
  $region7: #{dense_layer_forward.6} parent=0 // loop_footer_branch
    %8 = sbr.rel target = $region3
  $region8: #{dense_layer_forward.6} parent=0 // loop_exit
    _

// kernel: dense_layer_forward.9
$region0: #{dense_layer_forward.9}
  #allocation0 [shape = 'u32[]', space=smem, size = 0x4, offset = 0x4, fixed_abs, tag = 'smem constant byte address 0x4 - core index']
  #allocation1 [shape = 'u32[144,128]{1,0:T(1,128)}', space=vmem, size = 0x12000, scoped, tag = 'internal scratch']
  %s0 = inlined_call_operand.vmem [shape: bf16[512,128], index: 0, kind: input, shape index: {}]
  %s1 = inlined_call_operand.vmem [shape: bf16[512,128], index: 1, kind: input, shape index: {}]
  %s2 = inlined_call_operand.vmem [shape: bf16[512,128], index: 2, kind: input, shape index: {}]
  %s3 = inlined_call_operand.vmem [shape: bf16[3,128,128], index: 3, kind: input, shape index: {}]
  %s4 = inlined_call_operand.vmem [shape: f32[1,128], index: 4, kind: input, shape index: {}]
  %s5 = inlined_call_operand.vmem [shape: bf16[512,128], index: 5, kind: output, shape index: {}]
  %s6 = sld [smem:[#allocation0]]
  $region53: #{dense_layer_forward.9} parent=0
    _
  %s8 = ssub.s32 1, %s6
  %s9 = scalar_select 0, %s8, %s6
  loop: start=0, step=1, limit=4
  $region2: #{dense_layer_forward.9} parent=0 // loop_pre_header
    _
  $region3: #{dense_layer_forward.9} parent=0 // loop_header
    %s11 = sphi 0, %s15
    %p12 = scmp.ge.s32.totalorder %s11, 4
    %s21 = sphi 0, %s23
    %s24 = sphi 0, %s21
    %s25 = sphi 0, %s24
    %s41 = sphi 0, %s25
    %s47 = sphi 0, %s49
    %s50 = sphi 0, %s47
    %s51 = sphi 0, %s50
    %s67 = sphi 0, %s51
    %s73 = sphi 0, %s75
    %s76 = sphi 0, %s73
    %s77 = sphi 0, %s76
    %s93 = sphi 0, %s77
    %s97 = sphi 0, %s97
    %s99 = sphi 0, %s97
    %s100 = sphi 0, %s99
    %s114 = sphi 0, %s100
    %s118 = sphi 0, %s118
    %s120 = sphi 0, %s118
    %s121 = sphi 0, %s120
    %s135 = sphi 0, %s121
    %s141 = sphi 0, %s143
    %s144 = sphi 0, %s141
    %s145 = sphi 0, %s144
    %s161 = sphi 0, %s145
  $region4: #{dense_layer_forward.9} parent=0 // loop_header_branch
    %14 = sbr.rel (%p12) target = $region8
  $region5: #{dense_layer_forward.9} parent=0 // loop_body
    %s16 = ssub.s32 %s11, 1
    %s17 = ssub.s32 %s11, 2
    %s18 = sadd.s32 %s11, 1
    %s19 = ssub.s32 %s11, %s18
    %p20 = scmp.eq.s32.totalorder %s19, 0
    %s22 = sadd.s32 %s21, 1
    %s23 = scalar_select %p20, %s21, %s22
    %p26 = pneg %p20
    %p27 = scmp.eq.s32.totalorder %s11, 1
    %p28 = por %p26, %p27
    %p29 = scmp.ne.s32.totalorder %s21, %s24
    %p30 = scmp.eq.s32.totalorder %s11, 0
    %p31 = por %p29, %p30
    %p32 = scmp.ne.s32.totalorder %s21, %s24
    %p33 = scmp.eq.s32.totalorder %s16, 1
    %p34 = por %p32, %p33
    %p35 = scmp.ne.s32.totalorder %s24, %s25
    %p36 = scmp.eq.s32.totalorder %s16, 0
    %p37 = por %p35, %p36
    %p38 = scmp.ne.s32.totalorder %s24, %s25
    %p39 = scmp.eq.s32.totalorder %s17, 1
    %p40 = por %p38, %p39
    %p42 = scmp.ne.s32.totalorder %s25, %s41
    %p43 = scmp.eq.s32.totalorder %s17, 0
    %p44 = por %p42, %p43
    %s45 = ssub.s32 %s11, %s18
    %p46 = scmp.eq.s32.totalorder %s45, 0
    %s48 = sadd.s32 %s47, 1
    %s49 = scalar_select %p46, %s47, %s48
    %p52 = pneg %p46
    %p53 = scmp.eq.s32.totalorder %s11, 1
    %p54 = por %p52, %p53
    %p55 = scmp.ne.s32.totalorder %s47, %s50
    %p56 = scmp.eq.s32.totalorder %s11, 0
    %p57 = por %p55, %p56
    %p58 = scmp.ne.s32.totalorder %s47, %s50
    %p59 = scmp.eq.s32.totalorder %s16, 1
    %p60 = por %p58, %p59
    %p61 = scmp.ne.s32.totalorder %s50, %s51
    %p62 = scmp.eq.s32.totalorder %s16, 0
    %p63 = por %p61, %p62
    %p64 = scmp.ne.s32.totalorder %s50, %s51
    %p65 = scmp.eq.s32.totalorder %s17, 1
    %p66 = por %p64, %p65
    %p68 = scmp.ne.s32.totalorder %s51, %s67
    %p69 = scmp.eq.s32.totalorder %s17, 0
    %p70 = por %p68, %p69
    %s71 = ssub.s32 %s11, %s18
    %p72 = scmp.eq.s32.totalorder %s71, 0
    %s74 = sadd.s32 %s73, 1
    %s75 = scalar_select %p72, %s73, %s74
    %p78 = pneg %p72
    %p79 = scmp.eq.s32.totalorder %s11, 1
    %p80 = por %p78, %p79
    %p81 = scmp.ne.s32.totalorder %s73, %s76
    %p82 = scmp.eq.s32.totalorder %s11, 0
    %p83 = por %p81, %p82
    %p84 = scmp.ne.s32.totalorder %s73, %s76
    %p85 = scmp.eq.s32.totalorder %s16, 1
    %p86 = por %p84, %p85
    %p87 = scmp.ne.s32.totalorder %s76, %s77
    %p88 = scmp.eq.s32.totalorder %s16, 0
    %p89 = por %p87, %p88
    %p90 = scmp.ne.s32.totalorder %s76, %s77
    %p91 = scmp.eq.s32.totalorder %s17, 1
    %p92 = por %p90, %p91
    %p94 = scmp.ne.s32.totalorder %s77, %s93
    %p95 = scmp.eq.s32.totalorder %s17, 0
    %p96 = por %p94, %p95
    %s98 = sadd.s32 %s97, 1
    %p101 = scmp.eq.s32.totalorder %s11, 1
    %p102 = scmp.ne.s32.totalorder %s97, %s99
    %p103 = scmp.eq.s32.totalorder %s11, 0
    %p104 = por %p102, %p103
    %p105 = scmp.ne.s32.totalorder %s97, %s99
    %p106 = scmp.eq.s32.totalorder %s16, 1
    %p107 = por %p105, %p106
    %p108 = scmp.ne.s32.totalorder %s99, %s100
    %p109 = scmp.eq.s32.totalorder %s16, 0
    %p110 = por %p108, %p109
    %p111 = scmp.ne.s32.totalorder %s99, %s100
    %p112 = scmp.eq.s32.totalorder %s17, 1
    %p113 = por %p111, %p112
    %p115 = scmp.ne.s32.totalorder %s100, %s114
    %p116 = scmp.eq.s32.totalorder %s17, 0
    %p117 = por %p115, %p116
    %s119 = sadd.s32 %s118, 1
    %p122 = scmp.eq.s32.totalorder %s11, 1
    %p123 = scmp.ne.s32.totalorder %s118, %s120
    %p124 = scmp.eq.s32.totalorder %s11, 0
    %p125 = por %p123, %p124
    %p126 = scmp.ne.s32.totalorder %s118, %s120
    %p127 = scmp.eq.s32.totalorder %s16, 1
    %p128 = por %p126, %p127
    %p129 = scmp.ne.s32.totalorder %s120, %s121
    %p130 = scmp.eq.s32.totalorder %s16, 0
    %p131 = por %p129, %p130
    %p132 = scmp.ne.s32.totalorder %s120, %s121
    %p133 = scmp.eq.s32.totalorder %s17, 1
    %p134 = por %p132, %p133
    %p136 = scmp.ne.s32.totalorder %s121, %s135
    %p137 = scmp.eq.s32.totalorder %s17, 0
    %p138 = por %p136, %p137
    %s139 = ssub.s32 %s11, %s18
    %p140 = scmp.eq.s32.totalorder %s139, 0
    %s142 = sadd.s32 %s141, 1
    %s143 = scalar_select %p140, %s141, %s142
    %p146 = pneg %p140
    %p147 = scmp.eq.s32.totalorder %s11, 1
    %p148 = por %p146, %p147
    %p149 = scmp.ne.s32.totalorder %s141, %s144
    %p150 = scmp.eq.s32.totalorder %s11, 0
    %p151 = por %p149, %p150
    %p152 = scmp.ne.s32.totalorder %s141, %s144
    %p153 = scmp.eq.s32.totalorder %s16, 1
    %p154 = por %p152, %p153
    %p155 = scmp.ne.s32.totalorder %s144, %s145
    %p156 = scmp.eq.s32.totalorder %s16, 0
    %p157 = por %p155, %p156
    %p158 = scmp.ne.s32.totalorder %s144, %s145
    %p159 = scmp.eq.s32.totalorder %s17, 1
    %p160 = por %p158, %p159
    %p162 = scmp.ne.s32.totalorder %s145, %s161
    %p163 = scmp.eq.s32.totalorder %s17, 0
    %p164 = por %p162, %p163
    %p165 = scmp.le.s32.totalorder 1, %s11
    %p166 = scmp.lt.s32.totalorder %s11, 3
    %p167 = pnand %p165, %p166
    %p168 = pneg %p167
    // Predicated region
    $region9: #{dense_layer_forward.9} parent=5 // pred_check
      _
    $region10: #{dense_layer_forward.9} parent=5 // pred_check_branch
      %170 = sbr.rel (%p167) target = $region12
    $region11: #{dense_layer_forward.9} parent=5 // pred_region
      %s171 = ssub.s32 %s11, 1
      // Predicated region
      $region13: #{dense_layer_forward.9} parent=11 // pred_check
        %p172 = pneg %p110
      $region14: #{dense_layer_forward.9} parent=11 // pred_check_branch
        %174 = sbr.rel (%p172) target = $region16
      $region15: #{dense_layer_forward.9} parent=11 // pred_region
        _
      $region16: #{dense_layer_forward.9} parent=11 // pred_fallthru
        _
      // Predicated region
      $region17: #{dense_layer_forward.9} parent=11 // pred_check
        %p175 = pneg %p131
      $region18: #{dense_layer_forward.9} parent=11 // pred_check_branch
        %177 = sbr.rel (%p175) target = $region20
      $region19: #{dense_layer_forward.9} parent=11 // pred_region
        _
      $region20: #{dense_layer_forward.9} parent=11 // pred_fallthru
        _
    $region12: #{dense_layer_forward.9} parent=5 // pred_fallthru
      _
    %p178 = scmp.lt.s32.totalorder %s11, 2
    // Predicated region
    $region21: #{dense_layer_forward.9} parent=5 // pred_check
      %p179 = pneg %p178
    $region22: #{dense_layer_forward.9} parent=5 // pred_check_branch
      %181 = sbr.rel (%p179) target = $region24
    $region23: #{dense_layer_forward.9} parent=5 // pred_region
      // Predicated region
      $region25: #{dense_layer_forward.9} parent=23 // pred_check
        %p182 = pneg %p31
      $region26: #{dense_layer_forward.9} parent=23 // pred_check_branch
        %184 = sbr.rel (%p182) target = $region28
      $region27: #{dense_layer_forward.9} parent=23 // pred_region
        %s185 = smul.u32 32, %s11
        %p186 = scmp.lt.s32.totalorder %s185, 63
        %s187 = scalar_select %p186, %s185, 63
        %s188 = smul.addr %s187, 4
        %s189 = scalar_lea.vmem %s0, %s188
        %s190 = smul.u32 32, %s11
      $region28: #{dense_layer_forward.9} parent=23 // pred_fallthru
        _
      // Predicated region
      $region29: #{dense_layer_forward.9} parent=23 // pred_check
        %p191 = pneg %p57
      $region30: #{dense_layer_forward.9} parent=23 // pred_check_branch
        %193 = sbr.rel (%p191) target = $region32
      $region31: #{dense_layer_forward.9} parent=23 // pred_region
        %s194 = smul.u32 32, %s11
        %p195 = scmp.lt.s32.totalorder %s194, 63
        %s196 = scalar_select %p195, %s194, 63
        %s197 = smul.addr %s196, 4
        %s198 = scalar_lea.vmem %s1, %s197
        %s199 = smul.u32 32, %s11
      $region32: #{dense_layer_forward.9} parent=23 // pred_fallthru
        _
      // Predicated region
      $region33: #{dense_layer_forward.9} parent=23 // pred_check
        %p200 = pneg %p83
      $region34: #{dense_layer_forward.9} parent=23 // pred_check_branch
        %202 = sbr.rel (%p200) target = $region36
      $region35: #{dense_layer_forward.9} parent=23 // pred_region
        %s203 = smul.u32 32, %s11
        %p204 = scmp.lt.s32.totalorder %s203, 63
        %s205 = scalar_select %p204, %s203, 63
        %s206 = smul.addr %s205, 4
        %s207 = scalar_lea.vmem %s2, %s206
        %s208 = smul.u32 32, %s11
      $region36: #{dense_layer_forward.9} parent=23 // pred_fallthru
        _
    $region24: #{dense_layer_forward.9} parent=5 // pred_fallthru
      _
    %p209 = scmp.le.s32.totalorder 1, %s11
    %p210 = scmp.lt.s32.totalorder %s11, 3
    %p211 = pnand %p209, %p210
    %p212 = pneg %p211
    // Predicated region
    $region37: #{dense_layer_forward.9} parent=5 // pred_check
      _
    $region38: #{dense_layer_forward.9} parent=5 // pred_check_branch
      %214 = sbr.rel (%p211) target = $region40
    $region39: #{dense_layer_forward.9} parent=5 // pred_region
      %s215 = ssub.s32 %s11, 1
      %s216 = smul.u32 32, %s16
      %p217 = scmp.lt.s32.totalorder %s216, 63
      %s218 = scalar_select %p217, %s216, 63
      %s219 = smul.addr %s218, 4
      %s220 = scalar_lea.vmem %s0, %s219
      %p221 = pneg %p37
      %p222 = pneg %p34
      %s223 = smul.u32 32, %s16
      %p224 = scmp.lt.s32.totalorder %s223, 63
      %s225 = scalar_select %p224, %s223, 63
      %s226 = smul.addr %s225, 4
      %s227 = scalar_lea.vmem %s1, %s226
      %p228 = pneg %p63
      %p229 = pneg %p60
      %s230 = smul.u32 32, %s16
      %p231 = scmp.lt.s32.totalorder %s230, 63
      %s232 = scalar_select %p231, %s230, 63
      %s233 = smul.addr %s232, 4
      %s234 = scalar_lea.vmem %s2, %s233
      %p235 = pneg %p89
      %p236 = pneg %p86
      %p237 = pneg %p110
      %p238 = pneg %p107
      %p239 = pneg %p131
      %p240 = pneg %p128
      %p241 = pneg %p157
      %p242 = pneg %p154
      %s243 = smul.u32 32, %s16
      %p244 = scmp.lt.s32.totalorder %s243, 63
      %s245 = scalar_select %p244, %s243, 63
      %s246 = smul.addr %s245, 4
      %s247 = scalar_lea.vmem %s5, %s246
      %s248 = smul.u32 32, %s16
      %p249 = scmp.lt.s32.totalorder %s248, 63
      %s250 = scalar_select %p249, %s248, 63
      %s251 = smul.addr %s250, 4
      %s252 = scalar_lea.vmem %s0, %s251
      %s253 = smul.u32 32, %s16
      %s254 = smul.u32 32, %s16
      %p255 = scmp.lt.s32.totalorder %s254, 63
      %s256 = scalar_select %p255, %s254, 63
      %s257 = smul.addr %s256, 4
      %s258 = scalar_lea.vmem %s1, %s257
      %s259 = smul.u32 32, %s16
      %s260 = smul.u32 32, %s16
      %p261 = scmp.lt.s32.totalorder %s260, 63
      %s262 = scalar_select %p261, %s260, 63
      %s263 = smul.addr %s262, 4
      %s264 = scalar_lea.vmem %s2, %s263
      %s265 = smul.u32 32, %s16
      %s266 = smul.u32 32, %s16
      %p267 = scmp.lt.s32.totalorder %s266, 63
      %s268 = scalar_select %p267, %s266, 63
      %s269 = smul.addr %s268, 4
      %s270 = scalar_lea.vmem %s5, %s269
      %s271 = smul.u32 32, %s16
      %v273 = vld [vmem:[%s252] sm:$0xf]
      %v274 = vld [vmem:[%s252 + $0x4] sm:$0xf]
      %v275 = vld [vmem:[%s252 + $0x8] sm:$0xf]
      %v276 = vld [vmem:[%s252 + $0xc] sm:$0xf]
      %v277 = vld [vmem:[%s252 + $0x10] sm:$0xf]
      %v278 = vld [vmem:[%s252 + $0x14] sm:$0xf]
      %v279 = vld [vmem:[%s252 + $0x18] sm:$0xf]
      %v280 = vld [vmem:[%s252 + $0x1c] sm:$0xf]
      %v281 = vld [vmem:[%s252 + $0x20] sm:$0xf]
      %v282 = vld [vmem:[%s252 + $0x24] sm:$0xf]
      %v283 = vld [vmem:[%s252 + $0x28] sm:$0xf]
      %v284 = vld [vmem:[%s252 + $0x2c] sm:$0xf]
      %v285 = vld [vmem:[%s252 + $0x30] sm:$0xf]
      %v286 = vld [vmem:[%s252 + $0x34] sm:$0xf]
      %v287 = vld [vmem:[%s252 + $0x38] sm:$0xf]
      %v288 = vld [vmem:[%s252 + $0x3c] sm:$0xf]
      %v289 = vld [vmem:[%s252 + $0x40] sm:$0xf]
      %v290 = vld [vmem:[%s252 + $0x44] sm:$0xf]
      %v291 = vld [vmem:[%s252 + $0x48] sm:$0xf]
      %v292 = vld [vmem:[%s252 + $0x4c] sm:$0xf]
      %v293 = vld [vmem:[%s252 + $0x50] sm:$0xf]
      %v294 = vld [vmem:[%s252 + $0x54] sm:$0xf]
      %v295 = vld [vmem:[%s252 + $0x58] sm:$0xf]
      %v296 = vld [vmem:[%s252 + $0x5c] sm:$0xf]
      %v297 = vld [vmem:[%s252 + $0x60] sm:$0xf]
      %v298 = vld [vmem:[%s252 + $0x64] sm:$0xf]
      %v299 = vld [vmem:[%s252 + $0x68] sm:$0xf]
      %v300 = vld [vmem:[%s252 + $0x6c] sm:$0xf]
      %v301 = vld [vmem:[%s252 + $0x70] sm:$0xf]
      %v302 = vld [vmem:[%s252 + $0x74] sm:$0xf]
      %v303 = vld [vmem:[%s252 + $0x78] sm:$0xf]
      %v304 = vld [vmem:[%s252 + $0x7c] sm:$0xf]
      %v305 = vld [vmem:[%s3] sm:$0xf]
      %v306 = vld [vmem:[%s3 + $0x4] sm:$0xf]
      %v307 = vld [vmem:[%s3 + $0x8] sm:$0xf]
      %v308 = vld [vmem:[%s3 + $0xc] sm:$0xf]
      %v309 = vld [vmem:[%s3 + $0x10] sm:$0xf]
      %v310 = vld [vmem:[%s3 + $0x14] sm:$0xf]
      %v311 = vld [vmem:[%s3 + $0x18] sm:$0xf]
      %v312 = vld [vmem:[%s3 + $0x1c] sm:$0xf]
      %v313 = vld [vmem:[%s3 + $0x20] sm:$0xf]
      %v314 = vld [vmem:[%s3 + $0x24] sm:$0xf]
      %v315 = vld [vmem:[%s3 + $0x28] sm:$0xf]
      %v316 = vld [vmem:[%s3 + $0x2c] sm:$0xf]
      %v317 = vld [vmem:[%s3 + $0x30] sm:$0xf]
      %v318 = vld [vmem:[%s3 + $0x34] sm:$0xf]
      %v319 = vld [vmem:[%s3 + $0x38] sm:$0xf]
      %v320 = vld [vmem:[%s3 + $0x3c] sm:$0xf]
      %v321 = vld [vmem:[%s258] sm:$0xf]
      %v322 = vld [vmem:[%s258 + $0x4] sm:$0xf]
      %v323 = vld [vmem:[%s258 + $0x8] sm:$0xf]
      %v324 = vld [vmem:[%s258 + $0xc] sm:$0xf]
      %v325 = vld [vmem:[%s258 + $0x10] sm:$0xf]
      %v326 = vld [vmem:[%s258 + $0x14] sm:$0xf]
      %v327 = vld [vmem:[%s258 + $0x18] sm:$0xf]
      %v328 = vld [vmem:[%s258 + $0x1c] sm:$0xf]
      %v329 = vld [vmem:[%s258 + $0x20] sm:$0xf]
      %v330 = vld [vmem:[%s258 + $0x24] sm:$0xf]
      %v331 = vld [vmem:[%s258 + $0x28] sm:$0xf]
      %v332 = vld [vmem:[%s258 + $0x2c] sm:$0xf]
      %v333 = vld [vmem:[%s258 + $0x30] sm:$0xf]
      %v334 = vld [vmem:[%s258 + $0x34] sm:$0xf]
      %v335 = vld [vmem:[%s258 + $0x38] sm:$0xf]
      %v336 = vld [vmem:[%s258 + $0x3c] sm:$0xf]
      %v337 = vld [vmem:[%s258 + $0x40] sm:$0xf]
      %v338 = vld [vmem:[%s258 + $0x44] sm:$0xf]
      %v339 = vld [vmem:[%s258 + $0x48] sm:$0xf]
      %v340 = vld [vmem:[%s258 + $0x4c] sm:$0xf]
      %v341 = vld [vmem:[%s258 + $0x50] sm:$0xf]
      %v342 = vld [vmem:[%s258 + $0x54] sm:$0xf]
      %v343 = vld [vmem:[%s258 + $0x58] sm:$0xf]
      %v344 = vld [vmem:[%s258 + $0x5c] sm:$0xf]
      %v345 = vld [vmem:[%s258 + $0x60] sm:$0xf]
      %v346 = vld [vmem:[%s258 + $0x64] sm:$0xf]
      %v347 = vld [vmem:[%s258 + $0x68] sm:$0xf]
      %v348 = vld [vmem:[%s258 + $0x6c] sm:$0xf]
      %v349 = vld [vmem:[%s258 + $0x70] sm:$0xf]
      %v350 = vld [vmem:[%s258 + $0x74] sm:$0xf]
      %v351 = vld [vmem:[%s258 + $0x78] sm:$0xf]
      %v352 = vld [vmem:[%s258 + $0x7c] sm:$0xf]
      %s353 = scalar_lea.vmem %s3, 64
      %v354 = vld [vmem:[%s353] sm:$0xf]
      %v355 = vld [vmem:[%s353 + $0x4] sm:$0xf]
      %v356 = vld [vmem:[%s353 + $0x8] sm:$0xf]
      %v357 = vld [vmem:[%s353 + $0xc] sm:$0xf]
      %v358 = vld [vmem:[%s353 + $0x10] sm:$0xf]
      %v359 = vld [vmem:[%s353 + $0x14] sm:$0xf]
      %v360 = vld [vmem:[%s353 + $0x18] sm:$0xf]
      %v361 = vld [vmem:[%s353 + $0x1c] sm:$0xf]
      %v362 = vld [vmem:[%s353 + $0x20] sm:$0xf]
      %v363 = vld [vmem:[%s353 + $0x24] sm:$0xf]
      %v364 = vld [vmem:[%s353 + $0x28] sm:$0xf]
      %v365 = vld [vmem:[%s353 + $0x2c] sm:$0xf]
      %v366 = vld [vmem:[%s353 + $0x30] sm:$0xf]
      %v367 = vld [vmem:[%s353 + $0x34] sm:$0xf]
      %v368 = vld [vmem:[%s353 + $0x38] sm:$0xf]
      %v369 = vld [vmem:[%s353 + $0x3c] sm:$0xf]
      %v402 = vunpack.c.l.b16 %v321
      %v403 = vunpack.c.l.b16 %v322
      %v404 = vunpack.c.l.b16 %v323
      %v405 = vunpack.c.l.b16 %v324
      %v406 = vunpack.c.l.b16 %v325
      %v407 = vunpack.c.l.b16 %v326
      %v408 = vunpack.c.l.b16 %v327
      %v409 = vunpack.c.l.b16 %v328
      %v410 = vunpack.c.l.b16 %v329
      %v411 = vunpack.c.l.b16 %v330
      %v412 = vunpack.c.l.b16 %v331
      %v413 = vunpack.c.l.b16 %v332
      %v414 = vunpack.c.l.b16 %v333
      %v415 = vunpack.c.l.b16 %v334
      %v416 = vunpack.c.l.b16 %v335
      %v417 = vunpack.c.l.b16 %v336
      %v418 = vunpack.c.l.b16 %v337
      %v419 = vunpack.c.l.b16 %v338
      %v420 = vunpack.c.l.b16 %v339
      %v421 = vunpack.c.l.b16 %v340
      %v422 = vunpack.c.l.b16 %v341
      %v423 = vunpack.c.l.b16 %v342
      %v424 = vunpack.c.l.b16 %v343
      %v425 = vunpack.c.l.b16 %v344
      %v426 = vunpack.c.l.b16 %v345
      %v427 = vunpack.c.l.b16 %v346
      %v428 = vunpack.c.l.b16 %v347
      %v429 = vunpack.c.l.b16 %v348
      %v430 = vunpack.c.l.b16 %v349
      %v431 = vunpack.c.l.b16 %v350
      %v432 = vunpack.c.l.b16 %v351
      %v433 = vunpack.c.l.b16 %v352
      %v434 = vpack.c.b16 %v403, %v402
      %v435 = vpack.c.b16 %v405, %v404
      %v436 = vpack.c.b16 %v407, %v406
      %v437 = vpack.c.b16 %v409, %v408
      %v438 = vpack.c.b16 %v411, %v410
      %v439 = vpack.c.b16 %v413, %v412
      %v440 = vpack.c.b16 %v415, %v414
      %v441 = vpack.c.b16 %v417, %v416
      %v442 = vpack.c.b16 %v419, %v418
      %v443 = vpack.c.b16 %v421, %v420
      %v444 = vpack.c.b16 %v423, %v422
      %v445 = vpack.c.b16 %v425, %v424
      %v446 = vpack.c.b16 %v427, %v426
      %v447 = vpack.c.b16 %v429, %v428
      %v448 = vpack.c.b16 %v431, %v430
      %v449 = vpack.c.b16 %v433, %v432
      %v482 = vunpack.c.l.b16 %v354
      %v483 = vunpack.c.l.b16 %v355
      %v484 = vunpack.c.l.b16 %v356
      %v485 = vunpack.c.l.b16 %v357
      %v486 = vunpack.c.l.b16 %v358
      %v487 = vunpack.c.l.b16 %v359
      %v488 = vunpack.c.l.b16 %v360
      %v489 = vunpack.c.l.b16 %v361
      %v490 = vunpack.c.l.b16 %v362
      %v491 = vunpack.c.l.b16 %v363
      %v492 = vunpack.c.l.b16 %v364
      %v493 = vunpack.c.l.b16 %v365
      %v494 = vunpack.c.l.b16 %v366
      %v495 = vunpack.c.l.b16 %v367
      %v496 = vunpack.c.l.b16 %v368
      %v497 = vunpack.c.l.b16 %v369
      %v498 = vpack.c.b16 %v483, %v482
      %v499 = vpack.c.b16 %v485, %v484
      %v500 = vpack.c.b16 %v487, %v486
      %v501 = vpack.c.b16 %v489, %v488
      %v502 = vpack.c.b16 %v491, %v490
      %v503 = vpack.c.b16 %v493, %v492
      %v504 = vpack.c.b16 %v495, %v494
      %v505 = vpack.c.b16 %v497, %v496
      %514 = vmatprep.subr.bf16.mxu0 0
      %515 = vmatpush1.bf16.msra.mxu0 %v498
      %516 = vmatprep.subr.bf16.mxu0 0
      %517 = vmatpush1.bf16.msra.mxu0 %v499
      %518 = vmatprep.subr.bf16.mxu0 0
      %519 = vmatpush1.bf16.msra.mxu0 %v500
      %520 = vmatprep.subr.bf16.mxu0 0
      %521 = vmatpush1.bf16.msra.mxu0 %v501
      %522 = vmatprep.subr.bf16.mxu0 0
      %523 = vmatpush1.bf16.msra.mxu0 %v502
      %524 = vmatprep.subr.bf16.mxu0 0
      %525 = vmatpush1.bf16.msra.mxu0 %v503
      %526 = vmatprep.subr.bf16.mxu0 0
      %527 = vmatpush1.bf16.msra.mxu0 %v504
      %528 = vmatprep.subr.bf16.mxu0 0
      %529 = vmatpush1.bf16.msra.mxu0 %v505
      %530 = vmatprep.subr.bf16.mxu0 0
      %531 = vmatpush1.bf16.msra.mxu0 0
      %532 = vmatprep.subr.bf16.mxu0 0
      %533 = vmatpush1.bf16.msra.mxu0 0
      %534 = vmatprep.subr.bf16.mxu0 0
      %535 = vmatpush1.bf16.msra.mxu0 0
      %536 = vmatprep.subr.bf16.mxu0 0
      %537 = vmatpush1.bf16.msra.mxu0 0
      %538 = vmatprep.subr.bf16.mxu0 0
      %539 = vmatpush1.bf16.msra.mxu0 0
      %540 = vmatprep.subr.bf16.mxu0 0
      %541 = vmatpush1.bf16.msra.mxu0 0
      %542 = vmatprep.subr.bf16.mxu0 0
      %543 = vmatpush1.bf16.msra.mxu0 0
      %544 = vmatprep.subr.bf16.mxu0 0
      %545 = vmatpush1.bf16.msra.mxu0 0
      %546 = vmatprep.mubr.bf16.mxu0 0
      %547 = vmatmul.mubr.bf16.gmra.mrb[0].mxu0 %v434
      %v548 = vpop.f32.mrb[0].mxu0
      %v549 = vadd.f32 0.0, %v548
      %v550 = vpop.f32.mrb[0].mxu0
      %v551 = vpop.f32.mrb[0].mxu0
      %v552 = vadd.f32 0.0, %v551
      %v553 = vpop.f32.mrb[0].mxu0
      %554 = vmatprep.mubr.bf16.mxu0 0
      %555 = vmatmul.mubr.bf16.gmra.mrb[0].mxu0 %v435
      %v556 = vpop.f32.mrb[0].mxu0
      %v557 = vadd.f32 0.0, %v556
      %v558 = vpop.f32.mrb[0].mxu0
      %v559 = vpop.f32.mrb[0].mxu0
      %v560 = vadd.f32 0.0, %v559
      %v561 = vpop.f32.mrb[0].mxu0
      %562 = vmatprep.mubr.bf16.mxu0 0
      %563 = vmatmul.mubr.bf16.gmra.mrb[0].mxu0 %v436
      %v564 = vpop.f32.mrb[0].mxu0
      %v565 = vadd.f32 0.0, %v564
      %v566 = vpop.f32.mrb[0].mxu0
      %v567 = vpop.f32.mrb[0].mxu0
      %v568 = vadd.f32 0.0, %v567
      %v569 = vpop.f32.mrb[0].mxu0
      %570 = vmatprep.mubr.bf16.mxu0 0
      %571 = vmatmul.mubr.bf16.gmra.mrb[0].mxu0 %v437
      %v572 = vpop.f32.mrb[0].mxu0
      %v573 = vadd.f32 0.0, %v572
      %v574 = vpop.f32.mrb[0].mxu0
      %v575 = vpop.f32.mrb[0].mxu0
      %v576 = vadd.f32 0.0, %v575
      %v577 = vpop.f32.mrb[0].mxu0
      %578 = vmatprep.mubr.bf16.mxu0 0
      %579 = vmatmul.mubr.bf16.gmra.mrb[0].mxu0 %v438
      %v580 = vpop.f32.mrb[0].mxu0
      %v581 = vadd.f32 0.0, %v580
      %v582 = vpop.f32.mrb[0].mxu0
      %v583 = vpop.f32.mrb[0].mxu0
      %v584 = vadd.f32 0.0, %v583
      %v585 = vpop.f32.mrb[0].mxu0
      %586 = vmatprep.mubr.bf16.mxu0 0
      %587 = vmatmul.mubr.bf16.gmra.mrb[0].mxu0 %v439
      %v588 = vpop.f32.mrb[0].mxu0
      %v589 = vadd.f32 0.0, %v588
      %v590 = vpop.f32.mrb[0].mxu0
      %v591 = vpop.f32.mrb[0].mxu0
      %v592 = vadd.f32 0.0, %v591
      %v593 = vpop.f32.mrb[0].mxu0
      %594 = vmatprep.mubr.bf16.mxu0 0
      %595 = vmatmul.mubr.bf16.gmra.mrb[0].mxu0 %v440
      %v596 = vpop.f32.mrb[0].mxu0
      %v597 = vadd.f32 0.0, %v596
      %v598 = vpop.f32.mrb[0].mxu0
      %v599 = vpop.f32.mrb[0].mxu0
      %v600 = vadd.f32 0.0, %v599
      %v601 = vpop.f32.mrb[0].mxu0
      %602 = vmatprep.mubr.bf16.mxu0 0
      %603 = vmatmul.mubr.bf16.gmra.mrb[0].mxu0 %v441
      %v604 = vpop.f32.mrb[0].mxu0
      %v605 = vadd.f32 0.0, %v604
      %v606 = vpop.f32.mrb[0].mxu0
      %v607 = vpop.f32.mrb[0].mxu0
      %v608 = vadd.f32 0.0, %v607
      %v609 = vpop.f32.mrb[0].mxu0
      %610 = vmatprep.mubr.bf16.mxu0 0
      %611 = vmatmul.mubr.bf16.gmra.mrb[0].mxu0 %v442
      %v612 = vpop.f32.mrb[0].mxu0
      %v613 = vadd.f32 0.0, %v612
      %v614 = vpop.f32.mrb[0].mxu0
      %v615 = vpop.f32.mrb[0].mxu0
      %v616 = vadd.f32 0.0, %v615
      %v617 = vpop.f32.mrb[0].mxu0
      %618 = vmatprep.mubr.bf16.mxu0 0
      %619 = vmatmul.mubr.bf16.gmra.mrb[0].mxu0 %v443
      %v620 = vpop.f32.mrb[0].mxu0
      %v621 = vadd.f32 0.0, %v620
      %v622 = vpop.f32.mrb[0].mxu0
      %v623 = vpop.f32.mrb[0].mxu0
      %v624 = vadd.f32 0.0, %v623
      %v625 = vpop.f32.mrb[0].mxu0
      %626 = vmatprep.mubr.bf16.mxu0 0
      %627 = vmatmul.mubr.bf16.gmra.mrb[0].mxu0 %v444
      %v628 = vpop.f32.mrb[0].mxu0
      %v629 = vadd.f32 0.0, %v628
      %v630 = vpop.f32.mrb[0].mxu0
      %v631 = vpop.f32.mrb[0].mxu0
      %v632 = vadd.f32 0.0, %v631
      %v633 = vpop.f32.mrb[0].mxu0
      %634 = vmatprep.mubr.bf16.mxu0 0
      %635 = vmatmul.mubr.bf16.gmra.mrb[0].mxu0 %v445
      %v636 = vpop.f32.mrb[0].mxu0
      %v637 = vadd.f32 0.0, %v636
      %v638 = vpop.f32.mrb[0].mxu0
      %v639 = vpop.f32.mrb[0].mxu0
      %v640 = vadd.f32 0.0, %v639
      %v641 = vpop.f32.mrb[0].mxu0
      %642 = vmatprep.mubr.bf16.mxu0 0
      %643 = vmatmul.mubr.bf16.gmra.mrb[0].mxu0 %v446
      %v644 = vpop.f32.mrb[0].mxu0
      %v645 = vadd.f32 0.0, %v644
      %v646 = vpop.f32.mrb[0].mxu0
      %v647 = vpop.f32.mrb[0].mxu0
      %v648 = vadd.f32 0.0, %v647
      %v649 = vpop.f32.mrb[0].mxu0
      %650 = vmatprep.mubr.bf16.mxu0 0
      %651 = vmatmul.mubr.bf16.gmra.mrb[0].mxu0 %v447
      %v652 = vpop.f32.mrb[0].mxu0
      %v653 = vadd.f32 0.0, %v652
      %v654 = vpop.f32.mrb[0].mxu0
      %v655 = vpop.f32.mrb[0].mxu0
      %v656 = vadd.f32 0.0, %v655
      %v657 = vpop.f32.mrb[0].mxu0
      %658 = vmatprep.mubr.bf16.mxu0 0
      %659 = vmatmul.mubr.bf16.gmra.mrb[0].mxu0 %v448
      %v660 = vpop.f32.mrb[0].mxu0
      %v661 = vadd.f32 0.0, %v660
      %v662 = vpop.f32.mrb[0].mxu0
      %v663 = vpop.f32.mrb[0].mxu0
      %v664 = vadd.f32 0.0, %v663
      %v665 = vpop.f32.mrb[0].mxu0
      %666 = vmatprep.mubr.bf16.mxu0 0
      %667 = vmatmul.mubr.bf16.gmra.mrb[0].mxu0 %v449
      %v668 = vpop.f32.mrb[0].mxu0
      %v669 = vadd.f32 0.0, %v668
      %v670 = vpop.f32.mrb[0].mxu0
      %v671 = vpop.f32.mrb[0].mxu0
      %v672 = vadd.f32 0.0, %v671
      %v673 = vpop.f32.mrb[0].mxu0
      %674 = vdwg.mxu0
      %v707 = vunpack.c.l.b16 %v273
      %v708 = vunpack.c.l.b16 %v274
      %v709 = vunpack.c.l.b16 %v275
      %v710 = vunpack.c.l.b16 %v276
      %v711 = vunpack.c.l.b16 %v277
      %v712 = vunpack.c.l.b16 %v278
      %v713 = vunpack.c.l.b16 %v279
      %v714 = vunpack.c.l.b16 %v280
      %v715 = vunpack.c.l.b16 %v281
      %v716 = vunpack.c.l.b16 %v282
      %v717 = vunpack.c.l.b16 %v283
      %v718 = vunpack.c.l.b16 %v284
      %v719 = vunpack.c.l.b16 %v285
      %v720 = vunpack.c.l.b16 %v286
      %v721 = vunpack.c.l.b16 %v287
      %v722 = vunpack.c.l.b16 %v288
      %v723 = vunpack.c.l.b16 %v289
      %v724 = vunpack.c.l.b16 %v290
      %v725 = vunpack.c.l.b16 %v291
      %v726 = vunpack.c.l.b16 %v292
      %v727 = vunpack.c.l.b16 %v293
      %v728 = vunpack.c.l.b16 %v294
      %v729 = vunpack.c.l.b16 %v295
      %v730 = vunpack.c.l.b16 %v296
      %v731 = vunpack.c.l.b16 %v297
      %v732 = vunpack.c.l.b16 %v298
      %v733 = vunpack.c.l.b16 %v299
      %v734 = vunpack.c.l.b16 %v300
      %v735 = vunpack.c.l.b16 %v301
      %v736 = vunpack.c.l.b16 %v302
      %v737 = vunpack.c.l.b16 %v303
      %v738 = vunpack.c.l.b16 %v304
      %v739 = vpack.c.b16 %v708, %v707
      %v740 = vpack.c.b16 %v710, %v709
      %v741 = vpack.c.b16 %v712, %v711
      %v742 = vpack.c.b16 %v714, %v713
      %v743 = vpack.c.b16 %v716, %v715
      %v744 = vpack.c.b16 %v718, %v717
      %v745 = vpack.c.b16 %v720, %v719
      %v746 = vpack.c.b16 %v722, %v721
      %v747 = vpack.c.b16 %v724, %v723
      %v748 = vpack.c.b16 %v726, %v725
      %v749 = vpack.c.b16 %v728, %v727
      %v750 = vpack.c.b16 %v730, %v729
      %v751 = vpack.c.b16 %v732, %v731
      %v752 = vpack.c.b16 %v734, %v733
      %v753 = vpack.c.b16 %v736, %v735
      %v754 = vpack.c.b16 %v738, %v737
      %v787 = vunpack.c.l.b16 %v305
      %v788 = vunpack.c.l.b16 %v306
      %v789 = vunpack.c.l.b16 %v307
      %v790 = vunpack.c.l.b16 %v308
      %v791 = vunpack.c.l.b16 %v309
      %v792 = vunpack.c.l.b16 %v310
      %v793 = vunpack.c.l.b16 %v311
      %v794 = vunpack.c.l.b16 %v312
      %v795 = vunpack.c.l.b16 %v313
      %v796 = vunpack.c.l.b16 %v314
      %v797 = vunpack.c.l.b16 %v315
      %v798 = vunpack.c.l.b16 %v316
      %v799 = vunpack.c.l.b16 %v317
      %v800 = vunpack.c.l.b16 %v318
      %v801 = vunpack.c.l.b16 %v319
      %v802 = vunpack.c.l.b16 %v320
      %v803 = vpack.c.b16 %v788, %v787
      %v804 = vpack.c.b16 %v790, %v789
      %v805 = vpack.c.b16 %v792, %v791
      %v806 = vpack.c.b16 %v794, %v793
      %v807 = vpack.c.b16 %v796, %v795
      %v808 = vpack.c.b16 %v798, %v797
      %v809 = vpack.c.b16 %v800, %v799
      %v810 = vpack.c.b16 %v802, %v801
      %819 = vmatprep.subr.bf16.mxu0 0
      %820 = vmatpush1.bf16.msra.mxu0 %v803
      %821 = vmatprep.subr.bf16.mxu0 0
      %822 = vmatpush1.bf16.msra.mxu0 %v804
      %823 = vmatprep.subr.bf16.mxu0 0
      %824 = vmatpush1.bf16.msra.mxu0 %v805
      %825 = vmatprep.subr.bf16.mxu0 0
      %826 = vmatpush1.bf16.msra.mxu0 %v806
      %827 = vmatprep.subr.bf16.mxu0 0
      %828 = vmatpush1.bf16.msra.mxu0 %v807
      %829 = vmatprep.subr.bf16.mxu0 0
      %830 = vmatpush1.bf16.msra.mxu0 %v808
      %831 = vmatprep.subr.bf16.mxu0 0
      %832 = vmatpush1.bf16.msra.mxu0 %v809
      %833 = vmatprep.subr.bf16.mxu0 0
      %834 = vmatpush1.bf16.msra.mxu0 %v810
      %835 = vmatprep.subr.bf16.mxu0 0
      %836 = vmatpush1.bf16.msra.mxu0 0
      %837 = vmatprep.subr.bf16.mxu0 0
      %838 = vmatpush1.bf16.msra.mxu0 0
      %839 = vmatprep.subr.bf16.mxu0 0
      %840 = vmatpush1.bf16.msra.mxu0 0
      %841 = vmatprep.subr.bf16.mxu0 0
      %842 = vmatpush1.bf16.msra.mxu0 0
      %843 = vmatprep.subr.bf16.mxu0 0
      %844 = vmatpush1.bf16.msra.mxu0 0
      %845 = vmatprep.subr.bf16.mxu0 0
      %846 = vmatpush1.bf16.msra.mxu0 0
      %847 = vmatprep.subr.bf16.mxu0 0
      %848 = vmatpush1.bf16.msra.mxu0 0
      %849 = vmatprep.subr.bf16.mxu0 0
      %850 = vmatpush1.bf16.msra.mxu0 0
      %851 = vmatprep.mubr.bf16.mxu0 0
      %852 = vmatmul.mubr.bf16.gmra.mrb[0].mxu0 %v739
      %v853 = vpop.f32.mrb[0].mxu0
      %v854 = vadd.f32 %v549, %v853
      %v855 = vpop.f32.mrb[0].mxu0
      %v856 = vpop.f32.mrb[0].mxu0
      %v857 = vadd.f32 %v552, %v856
      %v858 = vpop.f32.mrb[0].mxu0
      %859 = vmatprep.mubr.bf16.mxu0 0
      %860 = vmatmul.mubr.bf16.gmra.mrb[0].mxu0 %v740
      %v861 = vpop.f32.mrb[0].mxu0
      %v862 = vadd.f32 %v557, %v861
      %v863 = vpop.f32.mrb[0].mxu0
      %v864 = vpop.f32.mrb[0].mxu0
      %v865 = vadd.f32 %v560, %v864
      %v866 = vpop.f32.mrb[0].mxu0
      %867 = vmatprep.mubr.bf16.mxu0 0
      %868 = vmatmul.mubr.bf16.gmra.mrb[0].mxu0 %v741
      %v869 = vpop.f32.mrb[0].mxu0
      %v870 = vadd.f32 %v565, %v869
      %v871 = vpop.f32.mrb[0].mxu0
      %v872 = vpop.f32.mrb[0].mxu0
      %v873 = vadd.f32 %v568, %v872
      %v874 = vpop.f32.mrb[0].mxu0
      %875 = vmatprep.mubr.bf16.mxu0 0
      %876 = vmatmul.mubr.bf16.gmra.mrb[0].mxu0 %v742
      %v877 = vpop.f32.mrb[0].mxu0
      %v878 = vadd.f32 %v573, %v877
      %v879 = vpop.f32.mrb[0].mxu0
      %v880 = vpop.f32.mrb[0].mxu0
      %v881 = vadd.f32 %v576, %v880
      %v882 = vpop.f32.mrb[0].mxu0
      %883 = vmatprep.mubr.bf16.mxu0 0
      %884 = vmatmul.mubr.bf16.gmra.mrb[0].mxu0 %v743
      %v885 = vpop.f32.mrb[0].mxu0
      %v886 = vadd.f32 %v581, %v885
      %v887 = vpop.f32.mrb[0].mxu0
      %v888 = vpop.f32.mrb[0].mxu0
      %v889 = vadd.f32 %v584, %v888
      %v890 = vpop.f32.mrb[0].mxu0
      %891 = vmatprep.mubr.bf16.mxu0 0
      %892 = vmatmul.mubr.bf16.gmra.mrb[0].mxu0 %v744
      %v893 = vpop.f32.mrb[0].mxu0
      %v894 = vadd.f32 %v589, %v893
      %v895 = vpop.f32.mrb[0].mxu0
      %v896 = vpop.f32.mrb[0].mxu0
      %v897 = vadd.f32 %v592, %v896
      %v898 = vpop.f32.mrb[0].mxu0
      %899 = vmatprep.mubr.bf16.mxu0 0
      %900 = vmatmul.mubr.bf16.gmra.mrb[0].mxu0 %v745
      %v901 = vpop.f32.mrb[0].mxu0
      %v902 = vadd.f32 %v597, %v901
      %v903 = vpop.f32.mrb[0].mxu0
      %v904 = vpop.f32.mrb[0].mxu0
      %v905 = vadd.f32 %v600, %v904
      %v906 = vpop.f32.mrb[0].mxu0
      %907 = vmatprep.mubr.bf16.mxu0 0
      %908 = vmatmul.mubr.bf16.gmra.mrb[0].mxu0 %v746
      %v909 = vpop.f32.mrb[0].mxu0
      %v910 = vadd.f32 %v605, %v909
      %v911 = vpop.f32.mrb[0].mxu0
      %v912 = vpop.f32.mrb[0].mxu0
      %v913 = vadd.f32 %v608, %v912
      %v914 = vpop.f32.mrb[0].mxu0
      %915 = vmatprep.mubr.bf16.mxu0 0
      %916 = vmatmul.mubr.bf16.gmra.mrb[0].mxu0 %v747
      %v917 = vpop.f32.mrb[0].mxu0
      %v918 = vadd.f32 %v613, %v917
      %v919 = vpop.f32.mrb[0].mxu0
      %v920 = vpop.f32.mrb[0].mxu0
      %v921 = vadd.f32 %v616, %v920
      %v922 = vpop.f32.mrb[0].mxu0
      %923 = vmatprep.mubr.bf16.mxu0 0
      %924 = vmatmul.mubr.bf16.gmra.mrb[0].mxu0 %v748
      %v925 = vpop.f32.mrb[0].mxu0
      %v926 = vadd.f32 %v621, %v925
      %v927 = vpop.f32.mrb[0].mxu0
      %v928 = vpop.f32.mrb[0].mxu0
      %v929 = vadd.f32 %v624, %v928
      %v930 = vpop.f32.mrb[0].mxu0
      %931 = vmatprep.mubr.bf16.mxu0 0
      %932 = vmatmul.mubr.bf16.gmra.mrb[0].mxu0 %v749
      %v933 = vpop.f32.mrb[0].mxu0
      %v934 = vadd.f32 %v629, %v933
      %v935 = vpop.f32.mrb[0].mxu0
      %v936 = vpop.f32.mrb[0].mxu0
      %v937 = vadd.f32 %v632, %v936
      %v938 = vpop.f32.mrb[0].mxu0
      %939 = vmatprep.mubr.bf16.mxu0 0
      %940 = vmatmul.mubr.bf16.gmra.mrb[0].mxu0 %v750
      %v941 = vpop.f32.mrb[0].mxu0
      %v942 = vadd.f32 %v637, %v941
      %v943 = vpop.f32.mrb[0].mxu0
      %v944 = vpop.f32.mrb[0].mxu0
      %v945 = vadd.f32 %v640, %v944
      %v946 = vpop.f32.mrb[0].mxu0
      %947 = vmatprep.mubr.bf16.mxu0 0
      %948 = vmatmul.mubr.bf16.gmra.mrb[0].mxu0 %v751
      %v949 = vpop.f32.mrb[0].mxu0
      %v950 = vadd.f32 %v645, %v949
      %v951 = vpop.f32.mrb[0].mxu0
      %v952 = vpop.f32.mrb[0].mxu0
      %v953 = vadd.f32 %v648, %v952
      %v954 = vpop.f32.mrb[0].mxu0
      %955 = vmatprep.mubr.bf16.mxu0 0
      %956 = vmatmul.mubr.bf16.gmra.mrb[0].mxu0 %v752
      %v957 = vpop.f32.mrb[0].mxu0
      %v958 = vadd.f32 %v653, %v957
      %v959 = vpop.f32.mrb[0].mxu0
      %v960 = vpop.f32.mrb[0].mxu0
      %v961 = vadd.f32 %v656, %v960
      %v962 = vpop.f32.mrb[0].mxu0
      %963 = vmatprep.mubr.bf16.mxu0 0
      %964 = vmatmul.mubr.bf16.gmra.mrb[0].mxu0 %v753
      %v965 = vpop.f32.mrb[0].mxu0
      %v966 = vadd.f32 %v661, %v965
      %v967 = vpop.f32.mrb[0].mxu0
      %v968 = vpop.f32.mrb[0].mxu0
      %v969 = vadd.f32 %v664, %v968
      %v970 = vpop.f32.mrb[0].mxu0
      %971 = vmatprep.mubr.bf16.mxu0 0
      %972 = vmatmul.mubr.bf16.gmra.mrb[0].mxu0 %v754
      %v973 = vpop.f32.mrb[0].mxu0
      %v974 = vadd.f32 %v669, %v973
      %v975 = vpop.f32.mrb[0].mxu0
      %v976 = vpop.f32.mrb[0].mxu0
      %v977 = vadd.f32 %v672, %v976
      %v978 = vpop.f32.mrb[0].mxu0
      %979 = vdwg.mxu0
      %v980 = vld [vmem:[%s264] sm:$0xf]
      %v981 = vld [vmem:[%s264 + $0x4] sm:$0xf]
      %v982 = vld [vmem:[%s264 + $0x8] sm:$0xf]
      %v983 = vld [vmem:[%s264 + $0xc] sm:$0xf]
      %v984 = vld [vmem:[%s264 + $0x10] sm:$0xf]
      %v985 = vld [vmem:[%s264 + $0x14] sm:$0xf]
      %v986 = vld [vmem:[%s264 + $0x18] sm:$0xf]
      %v987 = vld [vmem:[%s264 + $0x1c] sm:$0xf]
      %v988 = vld [vmem:[%s264 + $0x20] sm:$0xf]
      %v989 = vld [vmem:[%s264 + $0x24] sm:$0xf]
      %v990 = vld [vmem:[%s264 + $0x28] sm:$0xf]
      %v991 = vld [vmem:[%s264 + $0x2c] sm:$0xf]
      %v992 = vld [vmem:[%s264 + $0x30] sm:$0xf]
      %v993 = vld [vmem:[%s264 + $0x34] sm:$0xf]
      %v994 = vld [vmem:[%s264 + $0x38] sm:$0xf]
      %v995 = vld [vmem:[%s264 + $0x3c] sm:$0xf]
      %v996 = vld [vmem:[%s264 + $0x40] sm:$0xf]
      %v997 = vld [vmem:[%s264 + $0x44] sm:$0xf]
      %v998 = vld [vmem:[%s264 + $0x48] sm:$0xf]
      %v999 = vld [vmem:[%s264 + $0x4c] sm:$0xf]
      %v1000 = vld [vmem:[%s264 + $0x50] sm:$0xf]
      %v1001 = vld [vmem:[%s264 + $0x54] sm:$0xf]
      %v1002 = vld [vmem:[%s264 + $0x58] sm:$0xf]
      %v1003 = vld [vmem:[%s264 + $0x5c] sm:$0xf]
      %v1004 = vld [vmem:[%s264 + $0x60] sm:$0xf]
      %v1005 = vld [vmem:[%s264 + $0x64] sm:$0xf]
      %v1006 = vld [vmem:[%s264 + $0x68] sm:$0xf]
      %v1007 = vld [vmem:[%s264 + $0x6c] sm:$0xf]
      %v1008 = vld [vmem:[%s264 + $0x70] sm:$0xf]
      %v1009 = vld [vmem:[%s264 + $0x74] sm:$0xf]
      %v1010 = vld [vmem:[%s264 + $0x78] sm:$0xf]
      %v1011 = vld [vmem:[%s264 + $0x7c] sm:$0xf]
      %s1012 = scalar_lea.vmem %s3, 128
      %v1013 = vld [vmem:[%s1012] sm:$0xf]
      %v1014 = vld [vmem:[%s1012 + $0x4] sm:$0xf]
      %v1015 = vld [vmem:[%s1012 + $0x8] sm:$0xf]
      %v1016 = vld [vmem:[%s1012 + $0xc] sm:$0xf]
      %v1017 = vld [vmem:[%s1012 + $0x10] sm:$0xf]
      %v1018 = vld [vmem:[%s1012 + $0x14] sm:$0xf]
      %v1019 = vld [vmem:[%s1012 + $0x18] sm:$0xf]
      %v1020 = vld [vmem:[%s1012 + $0x1c] sm:$0xf]
      %v1021 = vld [vmem:[%s1012 + $0x20] sm:$0xf]
      %v1022 = vld [vmem:[%s1012 + $0x24] sm:$0xf]
      %v1023 = vld [vmem:[%s1012 + $0x28] sm:$0xf]
      %v1024 = vld [vmem:[%s1012 + $0x2c] sm:$0xf]
      %v1025 = vld [vmem:[%s1012 + $0x30] sm:$0xf]
      %v1026 = vld [vmem:[%s1012 + $0x34] sm:$0xf]
      %v1027 = vld [vmem:[%s1012 + $0x38] sm:$0xf]
      %v1028 = vld [vmem:[%s1012 + $0x3c] sm:$0xf]
      %v1061 = vunpack.c.l.b16 %v980
      %v1062 = vunpack.c.l.b16 %v981
      %v1063 = vunpack.c.l.b16 %v982
      %v1064 = vunpack.c.l.b16 %v983
      %v1065 = vunpack.c.l.b16 %v984
      %v1066 = vunpack.c.l.b16 %v985
      %v1067 = vunpack.c.l.b16 %v986
      %v1068 = vunpack.c.l.b16 %v987
      %v1069 = vunpack.c.l.b16 %v988
      %v1070 = vunpack.c.l.b16 %v989
      %v1071 = vunpack.c.l.b16 %v990
      %v1072 = vunpack.c.l.b16 %v991
      %v1073 = vunpack.c.l.b16 %v992
      %v1074 = vunpack.c.l.b16 %v993
      %v1075 = vunpack.c.l.b16 %v994
      %v1076 = vunpack.c.l.b16 %v995
      %v1077 = vunpack.c.l.b16 %v996
      %v1078 = vunpack.c.l.b16 %v997
      %v1079 = vunpack.c.l.b16 %v998
      %v1080 = vunpack.c.l.b16 %v999
      %v1081 = vunpack.c.l.b16 %v1000
      %v1082 = vunpack.c.l.b16 %v1001
      %v1083 = vunpack.c.l.b16 %v1002
      %v1084 = vunpack.c.l.b16 %v1003
      %v1085 = vunpack.c.l.b16 %v1004
      %v1086 = vunpack.c.l.b16 %v1005
      %v1087 = vunpack.c.l.b16 %v1006
      %v1088 = vunpack.c.l.b16 %v1007
      %v1089 = vunpack.c.l.b16 %v1008
      %v1090 = vunpack.c.l.b16 %v1009
      %v1091 = vunpack.c.l.b16 %v1010
      %v1092 = vunpack.c.l.b16 %v1011
      %v1093 = vpack.c.b16 %v1062, %v1061
      %v1094 = vpack.c.b16 %v1064, %v1063
      %v1095 = vpack.c.b16 %v1066, %v1065
      %v1096 = vpack.c.b16 %v1068, %v1067
      %v1097 = vpack.c.b16 %v1070, %v1069
      %v1098 = vpack.c.b16 %v1072, %v1071
      %v1099 = vpack.c.b16 %v1074, %v1073
      %v1100 = vpack.c.b16 %v1076, %v1075
      %v1101 = vpack.c.b16 %v1078, %v1077
      %v1102 = vpack.c.b16 %v1080, %v1079
      %v1103 = vpack.c.b16 %v1082, %v1081
      %v1104 = vpack.c.b16 %v1084, %v1083
      %v1105 = vpack.c.b16 %v1086, %v1085
      %v1106 = vpack.c.b16 %v1088, %v1087
      %v1107 = vpack.c.b16 %v1090, %v1089
      %v1108 = vpack.c.b16 %v1092, %v1091
      %v1141 = vunpack.c.l.b16 %v1013
      %v1142 = vunpack.c.l.b16 %v1014
      %v1143 = vunpack.c.l.b16 %v1015
      %v1144 = vunpack.c.l.b16 %v1016
      %v1145 = vunpack.c.l.b16 %v1017
      %v1146 = vunpack.c.l.b16 %v1018
      %v1147 = vunpack.c.l.b16 %v1019
      %v1148 = vunpack.c.l.b16 %v1020
      %v1149 = vunpack.c.l.b16 %v1021
      %v1150 = vunpack.c.l.b16 %v1022
      %v1151 = vunpack.c.l.b16 %v1023
      %v1152 = vunpack.c.l.b16 %v1024
      %v1153 = vunpack.c.l.b16 %v1025
      %v1154 = vunpack.c.l.b16 %v1026
      %v1155 = vunpack.c.l.b16 %v1027
      %v1156 = vunpack.c.l.b16 %v1028
      %v1157 = vpack.c.b16 %v1142, %v1141
      %v1158 = vpack.c.b16 %v1144, %v1143
      %v1159 = vpack.c.b16 %v1146, %v1145
      %v1160 = vpack.c.b16 %v1148, %v1147
      %v1161 = vpack.c.b16 %v1150, %v1149
      %v1162 = vpack.c.b16 %v1152, %v1151
      %v1163 = vpack.c.b16 %v1154, %v1153
      %v1164 = vpack.c.b16 %v1156, %v1155
      %1173 = vmatprep.subr.bf16.mxu0 0
      %1174 = vmatpush1.bf16.msra.mxu0 %v1157
      %1175 = vmatprep.subr.bf16.mxu0 0
      %1176 = vmatpush1.bf16.msra.mxu0 %v1158
      %1177 = vmatprep.subr.bf16.mxu0 0
      %1178 = vmatpush1.bf16.msra.mxu0 %v1159
      %1179 = vmatprep.subr.bf16.mxu0 0
      %1180 = vmatpush1.bf16.msra.mxu0 %v1160
      %1181 = vmatprep.subr.bf16.mxu0 0
      %1182 = vmatpush1.bf16.msra.mxu0 %v1161
      %1183 = vmatprep.subr.bf16.mxu0 0
      %1184 = vmatpush1.bf16.msra.mxu0 %v1162
      %1185 = vmatprep.subr.bf16.mxu0 0
      %1186 = vmatpush1.bf16.msra.mxu0 %v1163
      %1187 = vmatprep.subr.bf16.mxu0 0
      %1188 = vmatpush1.bf16.msra.mxu0 %v1164
      %1189 = vmatprep.subr.bf16.mxu0 0
      %1190 = vmatpush1.bf16.msra.mxu0 0
      %1191 = vmatprep.subr.bf16.mxu0 0
      %1192 = vmatpush1.bf16.msra.mxu0 0
      %1193 = vmatprep.subr.bf16.mxu0 0
      %1194 = vmatpush1.bf16.msra.mxu0 0
      %1195 = vmatprep.subr.bf16.mxu0 0
      %1196 = vmatpush1.bf16.msra.mxu0 0
      %1197 = vmatprep.subr.bf16.mxu0 0
      %1198 = vmatpush1.bf16.msra.mxu0 0
      %1199 = vmatprep.subr.bf16.mxu0 0
      %1200 = vmatpush1.bf16.msra.mxu0 0
      %1201 = vmatprep.subr.bf16.mxu0 0
      %1202 = vmatpush1.bf16.msra.mxu0 0
      %1203 = vmatprep.subr.bf16.mxu0 0
      %1204 = vmatpush1.bf16.msra.mxu0 0
      %1205 = vmatprep.mubr.bf16.mxu0 0
      %1206 = vmatmul.mubr.bf16.gmra.mrb[0].mxu0 %v1093
      %v1207 = vpop.f32.mrb[0].mxu0
      %v1208 = vadd.f32 0.0, %v1207
      %v1209 = vpop.f32.mrb[0].mxu0
      %v1210 = vpop.f32.mrb[0].mxu0
      %v1211 = vadd.f32 0.0, %v1210
      %v1212 = vpop.f32.mrb[0].mxu0
      %1213 = vmatprep.mubr.bf16.mxu0 0
      %1214 = vmatmul.mubr.bf16.gmra.mrb[0].mxu0 %v1094
      %v1215 = vpop.f32.mrb[0].mxu0
      %v1216 = vadd.f32 0.0, %v1215
      %v1217 = vpop.f32.mrb[0].mxu0
      %v1218 = vpop.f32.mrb[0].mxu0
      %v1219 = vadd.f32 0.0, %v1218
      %v1220 = vpop.f32.mrb[0].mxu0
      %1221 = vmatprep.mubr.bf16.mxu0 0
      %1222 = vmatmul.mubr.bf16.gmra.mrb[0].mxu0 %v1095
      %v1223 = vpop.f32.mrb[0].mxu0
      %v1224 = vadd.f32 0.0, %v1223
      %v1225 = vpop.f32.mrb[0].mxu0
      %v1226 = vpop.f32.mrb[0].mxu0
      %v1227 = vadd.f32 0.0, %v1226
      %v1228 = vpop.f32.mrb[0].mxu0
      %1229 = vmatprep.mubr.bf16.mxu0 0
      %1230 = vmatmul.mubr.bf16.gmra.mrb[0].mxu0 %v1096
      %v1231 = vpop.f32.mrb[0].mxu0
      %v1232 = vadd.f32 0.0, %v1231
      %v1233 = vpop.f32.mrb[0].mxu0
      %v1234 = vpop.f32.mrb[0].mxu0
      %v1235 = vadd.f32 0.0, %v1234
      %v1236 = vpop.f32.mrb[0].mxu0
      %1237 = vmatprep.mubr.bf16.mxu0 0
      %1238 = vmatmul.mubr.bf16.gmra.mrb[0].mxu0 %v1097
      %v1239 = vpop.f32.mrb[0].mxu0
      %v1240 = vadd.f32 0.0, %v1239
      %v1241 = vpop.f32.mrb[0].mxu0
      %v1242 = vpop.f32.mrb[0].mxu0
      %v1243 = vadd.f32 0.0, %v1242
      %v1244 = vpop.f32.mrb[0].mxu0
      %1245 = vmatprep.mubr.bf16.mxu0 0
      %1246 = vmatmul.mubr.bf16.gmra.mrb[0].mxu0 %v1098
      %v1247 = vpop.f32.mrb[0].mxu0
      %v1248 = vadd.f32 0.0, %v1247
      %v1249 = vpop.f32.mrb[0].mxu0
      %v1250 = vpop.f32.mrb[0].mxu0
      %v1251 = vadd.f32 0.0, %v1250
      %v1252 = vpop.f32.mrb[0].mxu0
      %1253 = vmatprep.mubr.bf16.mxu0 0
      %1254 = vmatmul.mubr.bf16.gmra.mrb[0].mxu0 %v1099
      %v1255 = vpop.f32.mrb[0].mxu0
      %v1256 = vadd.f32 0.0, %v1255
      %v1257 = vpop.f32.mrb[0].mxu0
      %v1258 = vpop.f32.mrb[0].mxu0
      %v1259 = vadd.f32 0.0, %v1258
      %v1260 = vpop.f32.mrb[0].mxu0
      %1261 = vmatprep.mubr.bf16.mxu0 0
      %1262 = vmatmul.mubr.bf16.gmra.mrb[0].mxu0 %v1100
      %v1263 = vpop.f32.mrb[0].mxu0
      %v1264 = vadd.f32 0.0, %v1263
      %v1265 = vpop.f32.mrb[0].mxu0
      %v1266 = vpop.f32.mrb[0].mxu0
      %v1267 = vadd.f32 0.0, %v1266
      %v1268 = vpop.f32.mrb[0].mxu0
      %1269 = vmatprep.mubr.bf16.mxu0 0
      %1270 = vmatmul.mubr.bf16.gmra.mrb[0].mxu0 %v1101
      %v1271 = vpop.f32.mrb[0].mxu0
      %v1272 = vadd.f32 0.0, %v1271
      %v1273 = vpop.f32.mrb[0].mxu0
      %v1274 = vpop.f32.mrb[0].mxu0
      %v1275 = vadd.f32 0.0, %v1274
      %v1276 = vpop.f32.mrb[0].mxu0
      %1277 = vmatprep.mubr.bf16.mxu0 0
      %1278 = vmatmul.mubr.bf16.gmra.mrb[0].mxu0 %v1102
      %v1279 = vpop.f32.mrb[0].mxu0
      %v1280 = vadd.f32 0.0, %v1279
      %v1281 = vpop.f32.mrb[0].mxu0
      %v1282 = vpop.f32.mrb[0].mxu0
      %v1283 = vadd.f32 0.0, %v1282
      %v1284 = vpop.f32.mrb[0].mxu0
      %1285 = vmatprep.mubr.bf16.mxu0 0
      %1286 = vmatmul.mubr.bf16.gmra.mrb[0].mxu0 %v1103
      %v1287 = vpop.f32.mrb[0].mxu0
      %v1288 = vadd.f32 0.0, %v1287
      %v1289 = vpop.f32.mrb[0].mxu0
      %v1290 = vpop.f32.mrb[0].mxu0
      %v1291 = vadd.f32 0.0, %v1290
      %v1292 = vpop.f32.mrb[0].mxu0
      %1293 = vmatprep.mubr.bf16.mxu0 0
      %1294 = vmatmul.mubr.bf16.gmra.mrb[0].mxu0 %v1104
      %v1295 = vpop.f32.mrb[0].mxu0
      %v1296 = vadd.f32 0.0, %v1295
      %v1297 = vpop.f32.mrb[0].mxu0
      %v1298 = vpop.f32.mrb[0].mxu0
      %v1299 = vadd.f32 0.0, %v1298
      %v1300 = vpop.f32.mrb[0].mxu0
      %1301 = vmatprep.mubr.bf16.mxu0 0
      %1302 = vmatmul.mubr.bf16.gmra.mrb[0].mxu0 %v1105
      %v1303 = vpop.f32.mrb[0].mxu0
      %v1304 = vadd.f32 0.0, %v1303
      %v1305 = vpop.f32.mrb[0].mxu0
      %v1306 = vpop.f32.mrb[0].mxu0
      %v1307 = vadd.f32 0.0, %v1306
      %v1308 = vpop.f32.mrb[0].mxu0
      %1309 = vmatprep.mubr.bf16.mxu0 0
      %1310 = vmatmul.mubr.bf16.gmra.mrb[0].mxu0 %v1106
      %v1311 = vpop.f32.mrb[0].mxu0
      %v1312 = vadd.f32 0.0, %v1311
      %v1313 = vpop.f32.mrb[0].mxu0
      %v1314 = vpop.f32.mrb[0].mxu0
      %v1315 = vadd.f32 0.0, %v1314
      %v1316 = vpop.f32.mrb[0].mxu0
      %1317 = vmatprep.mubr.bf16.mxu0 0
      %1318 = vmatmul.mubr.bf16.gmra.mrb[0].mxu0 %v1107
      %v1319 = vpop.f32.mrb[0].mxu0
      %v1320 = vadd.f32 0.0, %v1319
      %v1321 = vpop.f32.mrb[0].mxu0
      %v1322 = vpop.f32.mrb[0].mxu0
      %v1323 = vadd.f32 0.0, %v1322
      %v1324 = vpop.f32.mrb[0].mxu0
      %1325 = vmatprep.mubr.bf16.mxu0 0
      %1326 = vmatmul.mubr.bf16.gmra.mrb[0].mxu0 %v1108
      %v1327 = vpop.f32.mrb[0].mxu0
      %v1328 = vadd.f32 0.0, %v1327
      %v1329 = vpop.f32.mrb[0].mxu0
      %v1330 = vpop.f32.mrb[0].mxu0
      %v1331 = vadd.f32 0.0, %v1330
      %v1332 = vpop.f32.mrb[0].mxu0
      %1333 = vdwg.mxu0
      %v1334 = vadd.f32 %v854, %v1208
      %v1335 = vadd.f32 %v857, %v1211
      %v1336 = vadd.f32 %v862, %v1216
      %v1337 = vadd.f32 %v865, %v1219
      %v1338 = vadd.f32 %v870, %v1224
      %v1339 = vadd.f32 %v873, %v1227
      %v1340 = vadd.f32 %v878, %v1232
      %v1341 = vadd.f32 %v881, %v1235
      %v1342 = vadd.f32 %v886, %v1240
      %v1343 = vadd.f32 %v889, %v1243
      %v1344 = vadd.f32 %v894, %v1248
      %v1345 = vadd.f32 %v897, %v1251
      %v1346 = vadd.f32 %v902, %v1256
      %v1347 = vadd.f32 %v905, %v1259
      %v1348 = vadd.f32 %v910, %v1264
      %v1349 = vadd.f32 %v913, %v1267
      %v1350 = vadd.f32 %v918, %v1272
      %v1351 = vadd.f32 %v921, %v1275
      %v1352 = vadd.f32 %v926, %v1280
      %v1353 = vadd.f32 %v929, %v1283
      %v1354 = vadd.f32 %v934, %v1288
      %v1355 = vadd.f32 %v937, %v1291
      %v1356 = vadd.f32 %v942, %v1296
      %v1357 = vadd.f32 %v945, %v1299
      %v1358 = vadd.f32 %v950, %v1304
      %v1359 = vadd.f32 %v953, %v1307
      %v1360 = vadd.f32 %v958, %v1312
      %v1361 = vadd.f32 %v961, %v1315
      %v1362 = vadd.f32 %v966, %v1320
      %v1363 = vadd.f32 %v969, %v1323
      %v1364 = vadd.f32 %v974, %v1328
      %v1365 = vadd.f32 %v977, %v1331
      %v1366 = vld [vmem:[%s4] sm:$0x1]
      %v1368 = vlaneseq
      %v1369 = vshrl.u32 %v1368, 7
      %v1370 = vsub.s32 0, %v1369
      %v1371 = vrot.slane %v1366, %v1370
      %v1373 = vadd.f32 %v1334, %v1371
      %v1374 = vadd.f32 %v1335, %v1371
      %v1375 = vadd.f32 %v1336, %v1371
      %v1376 = vadd.f32 %v1337, %v1371
      %v1377 = vadd.f32 %v1338, %v1371
      %v1378 = vadd.f32 %v1339, %v1371
      %v1379 = vadd.f32 %v1340, %v1371
      %v1380 = vadd.f32 %v1341, %v1371
      %v1381 = vadd.f32 %v1342, %v1371
      %v1382 = vadd.f32 %v1343, %v1371
      %v1383 = vadd.f32 %v1344, %v1371
      %v1384 = vadd.f32 %v1345, %v1371
      %v1385 = vadd.f32 %v1346, %v1371
      %v1386 = vadd.f32 %v1347, %v1371
      %v1387 = vadd.f32 %v1348, %v1371
      %v1388 = vadd.f32 %v1349, %v1371
      %v1389 = vadd.f32 %v1350, %v1371
      %v1390 = vadd.f32 %v1351, %v1371
      %v1391 = vadd.f32 %v1352, %v1371
      %v1392 = vadd.f32 %v1353, %v1371
      %v1393 = vadd.f32 %v1354, %v1371
      %v1394 = vadd.f32 %v1355, %v1371
      %v1395 = vadd.f32 %v1356, %v1371
      %v1396 = vadd.f32 %v1357, %v1371
      %v1397 = vadd.f32 %v1358, %v1371
      %v1398 = vadd.f32 %v1359, %v1371
      %v1399 = vadd.f32 %v1360, %v1371
      %v1400 = vadd.f32 %v1361, %v1371
      %v1401 = vadd.f32 %v1362, %v1371
      %v1402 = vadd.f32 %v1363, %v1371
      %v1403 = vadd.f32 %v1364, %v1371
      %v1404 = vadd.f32 %v1365, %v1371
      %v1405 = vmax.f32 %v1373, 0.0
      %v1406 = vmax.f32 %v1374, 0.0
      %v1407 = vmax.f32 %v1375, 0.0
      %v1408 = vmax.f32 %v1376, 0.0
      %v1409 = vmax.f32 %v1377, 0.0
      %v1410 = vmax.f32 %v1378, 0.0
      %v1411 = vmax.f32 %v1379, 0.0
      %v1412 = vmax.f32 %v1380, 0.0
      %v1413 = vmax.f32 %v1381, 0.0
      %v1414 = vmax.f32 %v1382, 0.0
      %v1415 = vmax.f32 %v1383, 0.0
      %v1416 = vmax.f32 %v1384, 0.0
      %v1417 = vmax.f32 %v1385, 0.0
      %v1418 = vmax.f32 %v1386, 0.0
      %v1419 = vmax.f32 %v1387, 0.0
      %v1420 = vmax.f32 %v1388, 0.0
      %v1421 = vmax.f32 %v1389, 0.0
      %v1422 = vmax.f32 %v1390, 0.0
      %v1423 = vmax.f32 %v1391, 0.0
      %v1424 = vmax.f32 %v1392, 0.0
      %v1425 = vmax.f32 %v1393, 0.0
      %v1426 = vmax.f32 %v1394, 0.0
      %v1427 = vmax.f32 %v1395, 0.0
      %v1428 = vmax.f32 %v1396, 0.0
      %v1429 = vmax.f32 %v1397, 0.0
      %v1430 = vmax.f32 %v1398, 0.0
      %v1431 = vmax.f32 %v1399, 0.0
      %v1432 = vmax.f32 %v1400, 0.0
      %v1433 = vmax.f32 %v1401, 0.0
      %v1434 = vmax.f32 %v1402, 0.0
      %v1435 = vmax.f32 %v1403, 0.0
      %v1436 = vmax.f32 %v1404, 0.0
      %v1437 = vpack.c.bf16 %v1406, %v1405
      %v1438 = vpack.c.bf16 %v1408, %v1407
      %v1439 = vpack.c.bf16 %v1410, %v1409
      %v1440 = vpack.c.bf16 %v1412, %v1411
      %v1441 = vpack.c.bf16 %v1414, %v1413
      %v1442 = vpack.c.bf16 %v1416, %v1415
      %v1443 = vpack.c.bf16 %v1418, %v1417
      %v1444 = vpack.c.bf16 %v1420, %v1419
      %v1445 = vpack.c.bf16 %v1422, %v1421
      %v1446 = vpack.c.bf16 %v1424, %v1423
      %v1447 = vpack.c.bf16 %v1426, %v1425
      %v1448 = vpack.c.bf16 %v1428, %v1427
      %v1449 = vpack.c.bf16 %v1430, %v1429
      %v1450 = vpack.c.bf16 %v1432, %v1431
      %v1451 = vpack.c.bf16 %v1434, %v1433
      %v1452 = vpack.c.bf16 %v1436, %v1435
      %v1469 = vunpack.c.l.b16 %v1437
      %v1470 = vunpack.c.h.b16 %v1437
      %v1471 = vunpack.c.l.b16 %v1438
      %v1472 = vunpack.c.h.b16 %v1438
      %v1473 = vunpack.c.l.b16 %v1439
      %v1474 = vunpack.c.h.b16 %v1439
      %v1475 = vunpack.c.l.b16 %v1440
      %v1476 = vunpack.c.h.b16 %v1440
      %v1477 = vunpack.c.l.b16 %v1441
      %v1478 = vunpack.c.h.b16 %v1441
      %v1479 = vunpack.c.l.b16 %v1442
      %v1480 = vunpack.c.h.b16 %v1442
      %v1481 = vunpack.c.l.b16 %v1443
      %v1482 = vunpack.c.h.b16 %v1443
      %v1483 = vunpack.c.l.b16 %v1444
      %v1484 = vunpack.c.h.b16 %v1444
      %v1485 = vunpack.c.l.b16 %v1445
      %v1486 = vunpack.c.h.b16 %v1445
      %v1487 = vunpack.c.l.b16 %v1446
      %v1488 = vunpack.c.h.b16 %v1446
      %v1489 = vunpack.c.l.b16 %v1447
      %v1490 = vunpack.c.h.b16 %v1447
      %v1491 = vunpack.c.l.b16 %v1448
      %v1492 = vunpack.c.h.b16 %v1448
      %v1493 = vunpack.c.l.b16 %v1449
      %v1494 = vunpack.c.h.b16 %v1449
      %v1495 = vunpack.c.l.b16 %v1450
      %v1496 = vunpack.c.h.b16 %v1450
      %v1497 = vunpack.c.l.b16 %v1451
      %v1498 = vunpack.c.h.b16 %v1451
      %v1499 = vunpack.c.l.b16 %v1452
      %v1500 = vunpack.c.h.b16 %v1452
      %v1501 = vpack.c.b16 %v1469, %v1469
      %v1502 = vpack.c.b16 %v1470, %v1470
      %v1503 = vpack.c.b16 %v1471, %v1471
      %v1504 = vpack.c.b16 %v1472, %v1472
      %v1505 = vpack.c.b16 %v1473, %v1473
      %v1506 = vpack.c.b16 %v1474, %v1474
      %v1507 = vpack.c.b16 %v1475, %v1475
      %v1508 = vpack.c.b16 %v1476, %v1476
      %v1509 = vpack.c.b16 %v1477, %v1477
      %v1510 = vpack.c.b16 %v1478, %v1478
      %v1511 = vpack.c.b16 %v1479, %v1479
      %v1512 = vpack.c.b16 %v1480, %v1480
      %v1513 = vpack.c.b16 %v1481, %v1481
      %v1514 = vpack.c.b16 %v1482, %v1482
      %v1515 = vpack.c.b16 %v1483, %v1483
      %v1516 = vpack.c.b16 %v1484, %v1484
      %v1517 = vpack.c.b16 %v1485, %v1485
      %v1518 = vpack.c.b16 %v1486, %v1486
      %v1519 = vpack.c.b16 %v1487, %v1487
      %v1520 = vpack.c.b16 %v1488, %v1488
      %v1521 = vpack.c.b16 %v1489, %v1489
      %v1522 = vpack.c.b16 %v1490, %v1490
      %v1523 = vpack.c.b16 %v1491, %v1491
      %v1524 = vpack.c.b16 %v1492, %v1492
      %v1525 = vpack.c.b16 %v1493, %v1493
      %v1526 = vpack.c.b16 %v1494, %v1494
      %v1527 = vpack.c.b16 %v1495, %v1495
      %v1528 = vpack.c.b16 %v1496, %v1496
      %v1529 = vpack.c.b16 %v1497, %v1497
      %v1530 = vpack.c.b16 %v1498, %v1498
      %v1531 = vpack.c.b16 %v1499, %v1499
      %v1532 = vpack.c.b16 %v1500, %v1500
      %1565 = vst [vmem:[%s270] sm:$0xf] %v1501
      %1566 = vst [vmem:[%s270 + $0x4] sm:$0xf] %v1502
      %1567 = vst [vmem:[%s270 + $0x8] sm:$0xf] %v1503
      %1568 = vst [vmem:[%s270 + $0xc] sm:$0xf] %v1504
      %1569 = vst [vmem:[%s270 + $0x10] sm:$0xf] %v1505
      %1570 = vst [vmem:[%s270 + $0x14] sm:$0xf] %v1506
      %1571 = vst [vmem:[%s270 + $0x18] sm:$0xf] %v1507
      %1572 = vst [vmem:[%s270 + $0x1c] sm:$0xf] %v1508
      %1573 = vst [vmem:[%s270 + $0x20] sm:$0xf] %v1509
      %1574 = vst [vmem:[%s270 + $0x24] sm:$0xf] %v1510
      %1575 = vst [vmem:[%s270 + $0x28] sm:$0xf] %v1511
      %1576 = vst [vmem:[%s270 + $0x2c] sm:$0xf] %v1512
      %1577 = vst [vmem:[%s270 + $0x30] sm:$0xf] %v1513
      %1578 = vst [vmem:[%s270 + $0x34] sm:$0xf] %v1514
      %1579 = vst [vmem:[%s270 + $0x38] sm:$0xf] %v1515
      %1580 = vst [vmem:[%s270 + $0x3c] sm:$0xf] %v1516
      %1581 = vst [vmem:[%s270 + $0x40] sm:$0xf] %v1517
      %1582 = vst [vmem:[%s270 + $0x44] sm:$0xf] %v1518
      %1583 = vst [vmem:[%s270 + $0x48] sm:$0xf] %v1519
      %1584 = vst [vmem:[%s270 + $0x4c] sm:$0xf] %v1520
      %1585 = vst [vmem:[%s270 + $0x50] sm:$0xf] %v1521
      %1586 = vst [vmem:[%s270 + $0x54] sm:$0xf] %v1522
      %1587 = vst [vmem:[%s270 + $0x58] sm:$0xf] %v1523
      %1588 = vst [vmem:[%s270 + $0x5c] sm:$0xf] %v1524
      %1589 = vst [vmem:[%s270 + $0x60] sm:$0xf] %v1525
      %1590 = vst [vmem:[%s270 + $0x64] sm:$0xf] %v1526
      %1591 = vst [vmem:[%s270 + $0x68] sm:$0xf] %v1527
      %1592 = vst [vmem:[%s270 + $0x6c] sm:$0xf] %v1528
      %1593 = vst [vmem:[%s270 + $0x70] sm:$0xf] %v1529
      %1594 = vst [vmem:[%s270 + $0x74] sm:$0xf] %v1530
      %1595 = vst [vmem:[%s270 + $0x78] sm:$0xf] %v1531
      %1596 = vst [vmem:[%s270 + $0x7c] sm:$0xf] %v1532
      %s1597 = smul.u32 32, %s16
      %p1598 = scmp.lt.s32.totalorder %s1597, 63
      %s1599 = scalar_select %p1598, %s1597, 63
      %s1600 = smul.addr %s1599, 4
      %s1601 = scalar_lea.vmem %s5, %s1600
      // Predicated region
      $region41: #{dense_layer_forward.9} parent=39 // pred_check
        %p1602 = pneg %p154
      $region42: #{dense_layer_forward.9} parent=39 // pred_check_branch
        %1604 = sbr.rel (%p1602) target = $region44
      $region43: #{dense_layer_forward.9} parent=39 // pred_region
        %s1605 = smul.u32 32, %s16
      $region44: #{dense_layer_forward.9} parent=39 // pred_fallthru
        _
    $region40: #{dense_layer_forward.9} parent=5 // pred_fallthru
      _
    %p1606 = scmp.le.s32.totalorder 2, %s11
    // Predicated region
    $region45: #{dense_layer_forward.9} parent=5 // pred_check
      %p1607 = pneg %p1606
    $region46: #{dense_layer_forward.9} parent=5 // pred_check_branch
      %1609 = sbr.rel (%p1607) target = $region48
    $region47: #{dense_layer_forward.9} parent=5 // pred_region
      %s1610 = ssub.s32 %s11, 2
      // Predicated region
      $region49: #{dense_layer_forward.9} parent=47 // pred_check
        %p1611 = pneg %p160
      $region50: #{dense_layer_forward.9} parent=47 // pred_check_branch
        %1613 = sbr.rel (%p1611) target = $region52
      $region51: #{dense_layer_forward.9} parent=47 // pred_region
        %s1614 = smul.u32 32, %s17
        %p1615 = scmp.lt.s32.totalorder %s1614, 63
        %s1616 = scalar_select %p1615, %s1614, 63
        %s1617 = smul.addr %s1616, 4
        %s1618 = scalar_lea.vmem %s5, %s1617
      $region52: #{dense_layer_forward.9} parent=47 // pred_fallthru
        _
    $region48: #{dense_layer_forward.9} parent=5 // pred_fallthru
      _
  $region6: #{dense_layer_forward.9} parent=0 // loop_footer
    %s15 = sadd.s32 1, %s11
  $region7: #{dense_layer_forward.9} parent=0 // loop_footer_branch
    %10 = sbr.rel target = $region3
  $region8: #{dense_layer_forward.9} parent=0 // loop_exit
    _

</llo_original>
